<compile_context>
chip_gen: v7x
topology: tpu7x:2x2x1
jax: 0.10.0
libtpu: 0.0.40
codegen_flags: <defaults>
</compile_context>

<pallas_src>
import functools

import jax
import jax.numpy as jnp
from jax.experimental import pallas as pl
from jax.experimental.pallas import tpu as pltpu

IN_DIM = 300   # fixed by the module definition
SEQ = 14       # conv stack: 14 -> 13 (k=2,d=1) -> 9 (k=3,d=2) -> 1 (k=3,d=4)
BN_EPS = 1e-5


def _round_up(v, m):
    return ((v + m - 1) // m) * m


def _prelu(x, a):
    return jnp.where(x >= 0, x, a * x)


# ----------------------------------------------------------------------------
# Kernel
# ----------------------------------------------------------------------------
def _qcnn_kernel(x_ref,
                 w1_ref, b1_ref, w2_ref, b2_ref, w3_ref, b3_ref,
                 fcw_ref, fcb_ref, alphas_ref,
                 wi_ref, bi_ref, wh_ref, bhn_ref,
                 out_ref, *, nsplit):
    dot = functools.partial(jnp.dot, preferred_element_type=jnp.float32)
    tb = x_ref.shape[1] // SEQ          # batch tile (multiple of 8)
    hp = out_ref.shape[1]               # padded hidden size (multiple of 128)
    cdt = x_ref.dtype                   # MXU operand dtype (bf16 or f32)

    # Rows 0..7*tb-1 hold even seq positions 0,2,...,12; rows 7*tb..14*tb-1 hold
    # odd positions 1,3,...,13 (batch-minor within each position block).
    x2d = x_ref[0]                                      # (SEQ*tb, C)

    # --- conv stack, trimmed to the receptive field of the single conv3 output.
    # conv1 only at the 7 even positions: output e uses x[2e] and x[2e+1].
    h1 = (dot(x2d[0:7 * tb], w1_ref[0])
          + dot(x2d[7 * tb:14 * tb], w1_ref[1])
          + b1_ref[...])
    h1 = _prelu(h1, alphas_ref[0]).astype(cdt)          # (7*tb, C)

    # conv2 only at positions {0,4,8} (q = 0..2): uses conv1 even-index blocks
    # {2q, 2q+1, 2q+2}; conv3 tap q consumes conv2 position 4q.
    h3 = b3_ref[...]
    for q in range(3):
        acc = b2_ref[...]
        for k in range(3):
            e = 2 * q + k
            acc = acc + dot(h1[e * tb:(e + 1) * tb], w2_ref[k])
        acc = _prelu(acc, alphas_ref[1]).astype(cdt)    # (tb, C)
        h3 = h3 + dot(acc, w3_ref[q])
    h3 = _prelu(h3, alphas_ref[2])                      # (tb, C) == conv.squeeze(2)

    # --- fc1 -> (folded, inference) BatchNorm1d -> PReLU => GRU initial hidden.
    hh = _prelu(dot(h3.astype(cdt), fcw_ref[...]) + fcb_ref[...], alphas_ref[3])

    # --- GRU: hoist ALL 14 input projections (gate order r, z, n) into one
    # (SEQ*tb, C) @ (C, 3*hp) matmul.  bi already contains bh_r/bh_z (folded).
    # (For very large num_hid this temp could be stored in `cdt` to halve VMEM.)
    x_proj = dot(x2d, wi_ref[...]) + bi_ref[...]        # (SEQ*tb, 3*hp), f32
    wh = wh_ref[...]
    bhn = bhn_ref[...]                                  # (1, hp) n-gate hidden bias

    # Fully unrolled recurrence.  Optionally split the batch tile into nsplit
    # independent sub-tile recurrences: the chains are data-independent, so the
    # scheduler hides one chain's EUP/VPU latency under the other's MXU work.
    sub = tb // nsplit
    hs = [hh[i * sub:(i + 1) * sub] for i in range(nsplit)]
    for t in range(SEQ):
        blk = (t // 2) if t % 2 == 0 else 7 + t // 2    # even/odd row ordering
        base = blk * tb
        for i in range(nsplit):
            h_i = hs[i]
            gx = x_proj[base + i * sub: base + (i + 1) * sub]     # (sub, 3*hp)
            gh = dot(h_i.astype(cdt), wh)                         # (sub, 3*hp)
            r = jax.nn.sigmoid(gx[:, 0:hp] + gh[:, 0:hp])
            z = jax.nn.sigmoid(gx[:, hp:2 * hp] + gh[:, hp:2 * hp])
            n = jnp.tanh(gx[:, 2 * hp:] + r * (gh[:, 2 * hp:] + bhn))
            hs[i] = (1.0 - z) * n + z * h_i
    out_ref[...] = hs[0] if nsplit == 1 else jnp.concatenate(hs, axis=0)


# ----------------------------------------------------------------------------
# Single-buffer (pl.Buffered(1)) support probe — run once, cached.
# ----------------------------------------------------------------------------
_SINGLE_BUFFER_OK = None


def _single_buffer_supported():
    """Probe whether pipeline_mode=pl.Buffered(1) works on this runtime."""
    global _SINGLE_BUFFER_OK
    if _SINGLE_BUFFER_OK is not None:
        return _SINGLE_BUFFER_OK
    try:
        def _k(x_ref, w_ref, o_ref):
            o_ref[...] = x_ref[...] + w_ref[0]

        f = pl.pallas_call(
            _k,
            out_shape=jax.ShapeDtypeStruct((16, 128), jnp.float32),
            grid=(2,),
            in_specs=[
                pl.BlockSpec((8, 128), lambda i: (i, 0)),
                pl.BlockSpec((2, 8, 128), lambda i: (0, 0, 0),
                             pipeline_mode=pl.Buffered(1)),
            ],
            out_specs=pl.BlockSpec((8, 128), lambda i: (i, 0)),
        )
        out = jax.block_until_ready(
            f(jnp.zeros((16, 128), jnp.float32), jnp.ones((2, 8, 128), jnp.float32)))
        _SINGLE_BUFFER_OK = bool(jnp.all(out == 1.0))
    except Exception:
        _SINGLE_BUFFER_OK = False
    return _SINGLE_BUFFER_OK


# ----------------------------------------------------------------------------
# Parameter preparation (folding + gate padding)
# ----------------------------------------------------------------------------
def _prepare_params(p, mxu_dtype):
    C = IN_DIM
    H = p["fcw"].shape[1]
    Hp = _round_up(H, 128)
    dH = Hp - H

    def padg(a, axes):
        if dH == 0:
            return a
        pads = [(0, 0)] * a.ndim
        for ax in axes:
            pads[ax] = (0, dH)
        return jnp.pad(a, pads)

    # fc1 with the inference BatchNorm scale/shift folded in (exact for eval).
    fcw = padg(p["fcw"] * p["bns"], [1]).astype(mxu_dtype)               # (C, Hp)
    fcb = padg(p["fcb"] * p["bns"] + p["bnb"], [1])                      # (1, Hp)

    # GRU weights, gate-blocked [r, z, n]; pad each gate block to Hp so all gate
    # column slices are 128-lane aligned and the output store is dense.
    bi3 = p["bi"].reshape(3, H)
    bh3 = p["bh"].reshape(3, H)
    # r/z hidden biases fold exactly into the hoisted input bias; the n-gate
    # hidden bias stays inside the r*(Wh h + bh_n) term (PyTorch GRU formula).
    bi3 = bi3.at[:2].add(bh3[:2])
    bi = padg(bi3, [1]).reshape(1, 3 * Hp)                               # f32
    bh_n = padg(bh3[2:3], [1])                                           # (1, Hp)
    wi = padg(p["wi"].reshape(C, 3, H), [2]).reshape(C, 3 * Hp).astype(mxu_dtype)
    wh = padg(p["wh"].reshape(H, 3, H), [0, 2]).reshape(Hp, 3 * Hp).astype(mxu_dtype)

    return dict(
        w1=p["w1"].astype(mxu_dtype), b1=p["b1"],
        w2=p["w2"].astype(mxu_dtype), b2=p["b2"],
        w3=p["w3"].astype(mxu_dtype), b3=p["b3"],
        fcw=fcw, fcb=fcb, alphas=p["alphas"],
        wi=wi, bi=bi, wh=wh, bh_n=bh_n, H=H, Hp=Hp)


def _vmem_limit_bytes(tb, Hp, mxu_bytes, weight_bufs):
    """Rough per-tile VMEM estimate -> explicit scoped-VMEM request."""
    f32 = 4
    C, S = IN_DIM, SEQ
    x_tile = 2 * S * tb * C * mxu_bytes                        # double-buffered input
    out_tile = 2 * tb * Hp * f32                               # double-buffered output
    weights = weight_bufs * mxu_bytes * (8 * C * C + C * Hp + C * 3 * Hp + Hp * 3 * Hp)
    biases = weight_bufs * f32 * (3 * C + 5 * Hp)
    x_proj = S * tb * 3 * Hp * f32                             # hoisted GRU projections
    conv_tmp = 2 * 11 * tb * C * f32                           # conv temps + casts
    est = int(1.4 * (x_tile + out_tile + weights + biases + x_proj + conv_tmp))
    est += 2 << 20
    # Never below the default scoped budget; stay inside v7x's 64 MiB VMEM.
    return max(32 << 20, min(est, 60 << 20))


# ----------------------------------------------------------------------------
# Wrapper
# ----------------------------------------------------------------------------
def qcnn_forward(x, p, *, tb=None, mxu_dtype=jnp.bfloat16):
    """Pallas forward pass.  x: (B, SEQ, IN_DIM) f32 -> (B, num_hid) f32."""
    B, S, C = x.shape
    assert S == SEQ and C == IN_DIM
    prm = _prepare_params(p, mxu_dtype)
    H, Hp = prm["H"], prm["Hp"]
    mxu_bytes = jnp.dtype(mxu_dtype).itemsize

    if tb is None:
        # Fill the MXU M dim but (a) never exceed 128 rows so B >= 256 yields a
        # grid of >= 2 "parallel" steps for v7x's two TensorCores, and (b) bound
        # the hoisted (SEQ*tb, 3*Hp) f32 x_proj temp to ~16 MiB of VMEM.
        xproj_cap = max(8, ((16 << 20) // (SEQ * 3 * Hp * 4) // 8) * 8)
        tb = max(8, min(128, _round_up(B, 8), xproj_cap))
    assert tb % 8 == 0
    b_pad = _round_up(B, tb)
    nb = b_pad // tb

    # Cast MXU operands once in the wrapper (halves x/weight DMA for bf16).
    xc = x.astype(mxu_dtype)
    if b_pad != B:
        xc = jnp.pad(xc, ((0, b_pad - B), (0, 0), (0, 0)))
    # (b_pad,S,C) -> (nb,S,tb,C) with the seq axis permuted to
    # [0,2,...,12, 1,3,...,13] (even positions first) -> (nb, S*tb, C).
    # Every conv tap / GRU timestep then reads a dense, sublane-aligned slice,
    # and conv1 only touches the 7 even positions it actually needs.
    perm = list(range(0, SEQ, 2)) + list(range(1, SEQ, 2))
    x_tiled = (xc.reshape(nb, tb, S, C)
                 .transpose(0, 2, 1, 3)[:, perm]
                 .reshape(nb, S * tb, C))

    # Split the recurrence into two independent sub-tiles when alignment allows
    # and the per-step gate matmul is small (latency-bound regime).
    nsplit = 2 if (tb % 16 == 0 and Hp <= 256) else 1

    use_sb = _single_buffer_supported()

    def const_spec(arr):
        nd = arr.ndim
        if use_sb:
            return pl.BlockSpec(arr.shape, lambda b, _nd=nd: (0,) * _nd,
                                pipeline_mode=pl.Buffered(1))
        return pl.BlockSpec(arr.shape, lambda b, _nd=nd: (0,) * _nd)

    in_specs = [
        pl.BlockSpec((1, S * tb, C), lambda b: (b, 0, 0)),      # x tile (pipelined)
        const_spec(prm["w1"]), const_spec(prm["b1"]),
        const_spec(prm["w2"]), const_spec(prm["b2"]),
        const_spec(prm["w3"]), const_spec(prm["b3"]),
        const_spec(prm["fcw"]), const_spec(prm["fcb"]),
        pl.BlockSpec((4,), lambda b: (0,),
                     memory_space=pltpu.MemorySpace.SMEM),      # PReLU alphas
        const_spec(prm["wi"]), const_spec(prm["bi"]),
        const_spec(prm["wh"]), const_spec(prm["bh_n"]),
    ]
    args = (x_tiled, prm["w1"], prm["b1"], prm["w2"], prm["b2"], prm["w3"],
            prm["b3"], prm["fcw"], prm["fcb"], prm["alphas"],
            prm["wi"], prm["bi"], prm["wh"], prm["bh_n"])

    out = pl.pallas_call(
        functools.partial(_qcnn_kernel, nsplit=nsplit),
        out_shape=jax.ShapeDtypeStruct((b_pad, Hp), jnp.float32),
        grid=(nb,),
        in_specs=in_specs,
        out_specs=pl.BlockSpec((tb, Hp), lambda b: (b, 0)),
        compiler_params=pltpu.CompilerParams(
            dimension_semantics=("parallel",),
            vmem_limit_bytes=_vmem_limit_bytes(tb, Hp, mxu_bytes,
                                               1 if use_sb else 2)),
    )(*args)
    return out[:B, :H]


# ----------------------------------------------------------------------------
# Parameters (PyTorch-layout equivalents) and pure-JAX reference
# ----------------------------------------------------------------------------
def init_params(key, num_hid):
    ks = jax.random.split(key, 12)

    def rnd(k, shape, scale=0.08):
        return (scale * jax.random.normal(k, shape)).astype(jnp.float32)

    p = {}
    # Conv1d weights: PyTorch layout is (C_out, C_in, K); stored as (K, C_in, C_out).
    p["w1"] = rnd(ks[0], (2, IN_DIM, IN_DIM))
    p["b1"] = rnd(ks[1], (1, IN_DIM))
    p["w2"] = rnd(ks[2], (3, IN_DIM, IN_DIM))
    p["b2"] = rnd(ks[3], (1, IN_DIM))
    p["w3"] = rnd(ks[4], (3, IN_DIM, IN_DIM))
    p["b3"] = rnd(ks[5], (1, IN_DIM))
    # fc1: Linear(in_dim, num_hid); stored pre-transposed (in_dim, num_hid).
    p["fcw"] = rnd(ks[6], (IN_DIM, num_hid))
    p["fcb"] = rnd(ks[7], (1, num_hid))
    # BatchNorm1d(num_hid), PyTorch defaults, folded to inference scale/shift.
    gamma = jnp.ones((1, num_hid), jnp.float32)
    beta = jnp.zeros((1, num_hid), jnp.float32)
    running_mean = jnp.zeros((1, num_hid), jnp.float32)
    running_var = jnp.ones((1, num_hid), jnp.float32)
    scale = gamma * jax.lax.rsqrt(running_var + BN_EPS)
    p["bns"] = scale
    p["bnb"] = beta - running_mean * scale
    # PReLU default init (0.25) for conv1/conv2/conv3/fc1 activations.
    p["alphas"] = jnp.full((4,), 0.25, jnp.float32)
    # GRU (1 layer, unidirectional).  PyTorch weight_ih_l0 (3H, in) / weight_hh_l0
    # (3H, H) in gate order [r, z, n]; stored pre-transposed: wi = W_ih.T,
    # wh = W_hh.T, bi = b_ih, bh = b_hh.
    p["wi"] = rnd(ks[8], (IN_DIM, 3 * num_hid))
    p["wh"] = rnd(ks[9], (num_hid, 3 * num_hid))
    p["bi"] = rnd(ks[10], (1, 3 * num_hid))
    p["bh"] = rnd(ks[11], (1, 3 * num_hid))
    return p


def reference_forward(x, p, mxu_dtype=jnp.float32):
    """Pure-JAX reference (unfused, full conv stack, PyTorch GRU formula)."""
    H = p["fcw"].shape[1]

    def mm(a, b):
        return jnp.dot(a.astype(mxu_dtype), b.astype(mxu_dtype),
                       preferred_element_type=jnp.float32)

    def prelu(v, a):
        return jnp.where(v >= 0, v, a * v)

    def conv(h, w, b, dil):
        K = w.shape[0]
        L = h.shape[1] - (K - 1) * dil
        acc = jnp.zeros((h.shape[0], L, w.shape[2]), jnp.float32)
        for k in range(K):
            acc = acc + jnp.einsum(
                "blc,cd->bld",
                h[:, k * dil:k * dil + L, :].astype(mxu_dtype),
                w[k].astype(mxu_dtype),
                preferred_element_type=jnp.float32)
        return acc + b

    a = p["alphas"]
    h = prelu(conv(x, p["w1"], p["b1"], 1), a[0])
    h = prelu(conv(h, p["w2"], p["b2"], 2), a[1])
    h = prelu(conv(h, p["w3"], p["b3"], 4), a[2])          # (B, 1, 300)
    f = mm(h[:, 0, :], p["fcw"]) + p["fcb"]
    f = f * p["bns"] + p["bnb"]                            # fc1 -> bn1 -> PReLU
    hh = prelu(f, a[3])                                    # (B, H) GRU init hidden
    for t in range(SEQ):
        gx = mm(x[:, t, :], p["wi"]) + p["bi"]
        gh = mm(hh, p["wh"]) + p["bh"]
        r = jax.nn.sigmoid(gx[:, 0:H] + gh[:, 0:H])
        z = jax.nn.sigmoid(gx[:, H:2 * H] + gh[:, H:2 * H])
        n = jnp.tanh(gx[:, 2 * H:] + r * gh[:, 2 * H:])
        hh = (1.0 - z) * n + z * hh
    return hh


if __name__ == "__main__":
    key = jax.random.PRNGKey(0)
    kx, kp, kx2, kp2 = jax.random.split(key, 4)

    # --- Config 1: small module-scale test (batch=2, num_hid=128).
    batch, num_hid = 2, 128
    x = jax.random.normal(kx, (batch, SEQ, IN_DIM), jnp.float32)
    params = init_params(kp, num_hid)

    # Exact-f32 MXU path vs the unfused f32 reference.
    fwd_f32 = jax.jit(functools.partial(qcnn_forward, mxu_dtype=jnp.float32))
    out_f32 = jax.block_until_ready(fwd_f32(x, params))
    ref_f32 = reference_forward(x, params, mxu_dtype=jnp.float32)
    assert out_f32.shape == (batch, num_hid)
    assert jnp.allclose(out_f32, ref_f32, atol=5e-4, rtol=5e-4), float(
        jnp.max(jnp.abs(out_f32 - ref_f32)))

    # bf16-MXU perf path vs a reference with the same operand-dtype policy
    # (looser tolerance: the kernel folds BN into fc1 *before* the bf16 cast).
    fwd_bf16 = jax.jit(qcnn_forward)
    out_bf16 = jax.block_until_ready(fwd_bf16(x, params))
    ref_bf16 = reference_forward(x, params, mxu_dtype=jnp.bfloat16)
    assert out_bf16.shape == (batch, num_hid)
    assert jnp.allclose(out_bf16, ref_bf16, atol=1e-2, rtol=1e-2), float(
        jnp.max(jnp.abs(out_bf16 - ref_bf16)))

    # --- Config 2: multi-tile grid + batch padding + non-128 num_hid (gate
    # padding) + split recurrence (tb=16 -> two 8-row sub-tiles).
    batch2, num_hid2 = 40, 72
    x2 = jax.random.normal(kx2, (batch2, SEQ, IN_DIM), jnp.float32)
    params2 = init_params(kp2, num_hid2)
    fwd2 = jax.jit(functools.partial(qcnn_forward, tb=16, mxu_dtype=jnp.float32))
    out2 = jax.block_until_ready(fwd2(x2, params2))
    ref2 = reference_forward(x2, params2, mxu_dtype=jnp.float32)
    assert out2.shape == (batch2, num_hid2)
    assert jnp.allclose(out2, ref2, atol=5e-4, rtol=5e-4), float(
        jnp.max(jnp.abs(out2 - ref2)))

    print("KERNEL_OK")
</pallas_src>

<mosaic_0001>
module attributes {stable_mosaic.version = 11 : i64} {
  func.func @_qcnn_kernel(%arg0: i32, %arg1: memref<1x112x300xf32, #tpu.memory_space<vmem>>, %arg2: memref<2x300x300xf32, #tpu.memory_space<vmem>>, %arg3: memref<1x300xf32, #tpu.memory_space<vmem>>, %arg4: memref<3x300x300xf32, #tpu.memory_space<vmem>>, %arg5: memref<1x300xf32, #tpu.memory_space<vmem>>, %arg6: memref<3x300x300xf32, #tpu.memory_space<vmem>>, %arg7: memref<1x300xf32, #tpu.memory_space<vmem>>, %arg8: memref<300x128xf32, #tpu.memory_space<vmem>>, %arg9: memref<1x128xf32, #tpu.memory_space<vmem>>, %arg10: memref<4xf32, #tpu.memory_space<smem>>, %arg11: memref<300x384xf32, #tpu.memory_space<vmem>>, %arg12: memref<1x384xf32, #tpu.memory_space<vmem>>, %arg13: memref<128x384xf32, #tpu.memory_space<vmem>>, %arg14: memref<1x128xf32, #tpu.memory_space<vmem>>, %arg15: memref<8x128xf32, #tpu.memory_space<vmem>>) attributes {dimension_semantics = [#tpu.dimension_semantics<parallel>], iteration_bounds = array<i64: 1>, scalar_prefetch = 0 : i64, scratch_operands = 0 : i64, tpu.core_type = #tpu.core_type<tc>, window_params = [{transform_indices = @transform_0, window_bounds = array<i64: 1, 112, 300>}, {pipeline_mode = #tpu.pipeline_mode<synchronous>, transform_indices = @transform_1, window_bounds = array<i64: 2, 300, 300>}, {pipeline_mode = #tpu.pipeline_mode<synchronous>, transform_indices = @transform_2, window_bounds = array<i64: 1, 300>}, {pipeline_mode = #tpu.pipeline_mode<synchronous>, transform_indices = @transform_3, window_bounds = array<i64: 3, 300, 300>}, {pipeline_mode = #tpu.pipeline_mode<synchronous>, transform_indices = @transform_4, window_bounds = array<i64: 1, 300>}, {pipeline_mode = #tpu.pipeline_mode<synchronous>, transform_indices = @transform_5, window_bounds = array<i64: 3, 300, 300>}, {pipeline_mode = #tpu.pipeline_mode<synchronous>, transform_indices = @transform_6, window_bounds = array<i64: 1, 300>}, {pipeline_mode = #tpu.pipeline_mode<synchronous>, transform_indices = @transform_7, window_bounds = array<i64: 300, 128>}, {pipeline_mode = #tpu.pipeline_mode<synchronous>, transform_indices = @transform_8, window_bounds = array<i64: 1, 128>}, {transform_indices = @transform_9, window_bounds = array<i64: 4>}, {pipeline_mode = #tpu.pipeline_mode<synchronous>, transform_indices = @transform_10, window_bounds = array<i64: 300, 384>}, {pipeline_mode = #tpu.pipeline_mode<synchronous>, transform_indices = @transform_11, window_bounds = array<i64: 1, 384>}, {pipeline_mode = #tpu.pipeline_mode<synchronous>, transform_indices = @transform_12, window_bounds = array<i64: 128, 384>}, {pipeline_mode = #tpu.pipeline_mode<synchronous>, transform_indices = @transform_13, window_bounds = array<i64: 1, 128>}, {transform_indices = @transform_14, window_bounds = array<i64: 8, 128>}]} {
    %c0 = arith.constant 0 : index
    %c0_0 = arith.constant 0 : index
    %c0_1 = arith.constant 0 : index
    %0 = vector.load %arg1[%c0, %c0_0, %c0_1] : memref<1x112x300xf32, #tpu.memory_space<vmem>>, vector<1x112x300xf32>
    %1 = vector.shape_cast %0 : vector<1x112x300xf32> to vector<112x300xf32>
    %2 = vector.extract_strided_slice %1 {offsets = [0, 0], sizes = [56, 300], strides = [1, 1]} : vector<112x300xf32> to vector<56x300xf32>
    %c0_2 = arith.constant 0 : index
    %c0_3 = arith.constant 0 : index
    %c0_4 = arith.constant 0 : index
    %3 = vector.load %arg2[%c0_2, %c0_3, %c0_4] : memref<2x300x300xf32, #tpu.memory_space<vmem>>, vector<1x300x300xf32>
    %4 = vector.shape_cast %3 : vector<1x300x300xf32> to vector<300x300xf32>
    %cst = arith.constant dense<0.000000e+00> : vector<56x300xf32>
    %5 = tpu.matmul %2, %4, %cst {dimension_numbers = #tpu.dot_dimension_numbers<[1], [0], [0], [1], [0, 0, 1, 1], [], []>} : vector<56x300xf32>, vector<300x300xf32>, vector<56x300xf32> -> vector<56x300xf32>
    %6 = vector.extract_strided_slice %1 {offsets = [56, 0], sizes = [56, 300], strides = [1, 1]} : vector<112x300xf32> to vector<56x300xf32>
    %c1 = arith.constant 1 : index
    %c0_5 = arith.constant 0 : index
    %c0_6 = arith.constant 0 : index
    %7 = vector.load %arg2[%c1, %c0_5, %c0_6] : memref<2x300x300xf32, #tpu.memory_space<vmem>>, vector<1x300x300xf32>
    %8 = vector.shape_cast %7 : vector<1x300x300xf32> to vector<300x300xf32>
    %cst_7 = arith.constant dense<0.000000e+00> : vector<56x300xf32>
    %9 = tpu.matmul %6, %8, %cst_7 {dimension_numbers = #tpu.dot_dimension_numbers<[1], [0], [0], [1], [0, 0, 1, 1], [], []>} : vector<56x300xf32>, vector<300x300xf32>, vector<56x300xf32> -> vector<56x300xf32>
    %10 = arith.addf %5, %9 : vector<56x300xf32>
    %c0_8 = arith.constant 0 : index
    %c0_9 = arith.constant 0 : index
    %11 = vector.load %arg3[%c0_8, %c0_9] : memref<1x300xf32, #tpu.memory_space<vmem>>, vector<1x300xf32>
    %12 = vector.broadcast %11 : vector<1x300xf32> to vector<56x300xf32>
    %13 = arith.addf %10, %12 : vector<56x300xf32>
    %c0_10 = arith.constant 0 : index
    %14 = memref.load %arg10[%c0_10] : memref<4xf32, #tpu.memory_space<smem>>
    %cst_11 = arith.constant 0.000000e+00 : f32
    %15 = vector.broadcast %cst_11 : f32 to vector<56x300xf32>
    %16 = arith.cmpf oge, %13, %15 : vector<56x300xf32>
    %17 = vector.broadcast %14 : f32 to vector<56x300xf32>
    %18 = arith.mulf %17, %13 : vector<56x300xf32>
    %19 = arith.select %16, %13, %18 : vector<56x300xi1>, vector<56x300xf32>
    %c0_12 = arith.constant 0 : index
    %c0_13 = arith.constant 0 : index
    %20 = vector.load %arg7[%c0_12, %c0_13] : memref<1x300xf32, #tpu.memory_space<vmem>>, vector<1x300xf32>
    %c0_14 = arith.constant 0 : index
    %c0_15 = arith.constant 0 : index
    %21 = vector.load %arg5[%c0_14, %c0_15] : memref<1x300xf32, #tpu.memory_space<vmem>>, vector<1x300xf32>
    %22 = vector.extract_strided_slice %19 {offsets = [0, 0], sizes = [8, 300], strides = [1, 1]} : vector<56x300xf32> to vector<8x300xf32>
    %c0_16 = arith.constant 0 : index
    %c0_17 = arith.constant 0 : index
    %c0_18 = arith.constant 0 : index
    %23 = vector.load %arg4[%c0_16, %c0_17, %c0_18] : memref<3x300x300xf32, #tpu.memory_space<vmem>>, vector<1x300x300xf32>
    %24 = vector.shape_cast %23 : vector<1x300x300xf32> to vector<300x300xf32>
    %cst_19 = arith.constant dense<0.000000e+00> : vector<8x300xf32>
    %25 = tpu.matmul %22, %24, %cst_19 {dimension_numbers = #tpu.dot_dimension_numbers<[1], [0], [0], [1], [0, 0, 1, 1], [], []>} : vector<8x300xf32>, vector<300x300xf32>, vector<8x300xf32> -> vector<8x300xf32>
    %26 = vector.broadcast %21 : vector<1x300xf32> to vector<8x300xf32>
    %27 = arith.addf %26, %25 : vector<8x300xf32>
    %28 = vector.extract_strided_slice %19 {offsets = [8, 0], sizes = [8, 300], strides = [1, 1]} : vector<56x300xf32> to vector<8x300xf32>
    %c1_20 = arith.constant 1 : index
    %c0_21 = arith.constant 0 : index
    %c0_22 = arith.constant 0 : index
    %29 = vector.load %arg4[%c1_20, %c0_21, %c0_22] : memref<3x300x300xf32, #tpu.memory_space<vmem>>, vector<1x300x300xf32>
    %30 = vector.shape_cast %29 : vector<1x300x300xf32> to vector<300x300xf32>
    %cst_23 = arith.constant dense<0.000000e+00> : vector<8x300xf32>
    %31 = tpu.matmul %28, %30, %cst_23 {dimension_numbers = #tpu.dot_dimension_numbers<[1], [0], [0], [1], [0, 0, 1, 1], [], []>} : vector<8x300xf32>, vector<300x300xf32>, vector<8x300xf32> -> vector<8x300xf32>
    %32 = arith.addf %27, %31 : vector<8x300xf32>
    %33 = vector.extract_strided_slice %19 {offsets = [16, 0], sizes = [8, 300], strides = [1, 1]} : vector<56x300xf32> to vector<8x300xf32>
    %c2 = arith.constant 2 : index
    %c0_24 = arith.constant 0 : index
    %c0_25 = arith.constant 0 : index
    %34 = vector.load %arg4[%c2, %c0_24, %c0_25] : memref<3x300x300xf32, #tpu.memory_space<vmem>>, vector<1x300x300xf32>
    %35 = vector.shape_cast %34 : vector<1x300x300xf32> to vector<300x300xf32>
    %cst_26 = arith.constant dense<0.000000e+00> : vector<8x300xf32>
    %36 = tpu.matmul %33, %35, %cst_26 {dimension_numbers = #tpu.dot_dimension_numbers<[1], [0], [0], [1], [0, 0, 1, 1], [], []>} : vector<8x300xf32>, vector<300x300xf32>, vector<8x300xf32> -> vector<8x300xf32>
    %37 = arith.addf %32, %36 : vector<8x300xf32>
    %c1_27 = arith.constant 1 : index
    %38 = memref.load %arg10[%c1_27] : memref<4xf32, #tpu.memory_space<smem>>
    %cst_28 = arith.constant 0.000000e+00 : f32
    %39 = vector.broadcast %cst_28 : f32 to vector<8x300xf32>
    %40 = arith.cmpf oge, %37, %39 : vector<8x300xf32>
    %41 = vector.broadcast %38 : f32 to vector<8x300xf32>
    %42 = arith.mulf %41, %37 : vector<8x300xf32>
    %43 = arith.select %40, %37, %42 : vector<8x300xi1>, vector<8x300xf32>
    %c0_29 = arith.constant 0 : index
    %c0_30 = arith.constant 0 : index
    %c0_31 = arith.constant 0 : index
    %44 = vector.load %arg6[%c0_29, %c0_30, %c0_31] : memref<3x300x300xf32, #tpu.memory_space<vmem>>, vector<1x300x300xf32>
    %45 = vector.shape_cast %44 : vector<1x300x300xf32> to vector<300x300xf32>
    %cst_32 = arith.constant dense<0.000000e+00> : vector<8x300xf32>
    %46 = tpu.matmul %43, %45, %cst_32 {dimension_numbers = #tpu.dot_dimension_numbers<[1], [0], [0], [1], [0, 0, 1, 1], [], []>} : vector<8x300xf32>, vector<300x300xf32>, vector<8x300xf32> -> vector<8x300xf32>
    %47 = vector.broadcast %20 : vector<1x300xf32> to vector<8x300xf32>
    %48 = arith.addf %47, %46 : vector<8x300xf32>
    %c0_33 = arith.constant 0 : index
    %c0_34 = arith.constant 0 : index
    %49 = vector.load %arg5[%c0_33, %c0_34] : memref<1x300xf32, #tpu.memory_space<vmem>>, vector<1x300xf32>
    %50 = vector.extract_strided_slice %19 {offsets = [16, 0], sizes = [8, 300], strides = [1, 1]} : vector<56x300xf32> to vector<8x300xf32>
    %c0_35 = arith.constant 0 : index
    %c0_36 = arith.constant 0 : index
    %c0_37 = arith.constant 0 : index
    %51 = vector.load %arg4[%c0_35, %c0_36, %c0_37] : memref<3x300x300xf32, #tpu.memory_space<vmem>>, vector<1x300x300xf32>
    %52 = vector.shape_cast %51 : vector<1x300x300xf32> to vector<300x300xf32>
    %cst_38 = arith.constant dense<0.000000e+00> : vector<8x300xf32>
    %53 = tpu.matmul %50, %52, %cst_38 {dimension_numbers = #tpu.dot_dimension_numbers<[1], [0], [0], [1], [0, 0, 1, 1], [], []>} : vector<8x300xf32>, vector<300x300xf32>, vector<8x300xf32> -> vector<8x300xf32>
    %54 = vector.broadcast %49 : vector<1x300xf32> to vector<8x300xf32>
    %55 = arith.addf %54, %53 : vector<8x300xf32>
    %56 = vector.extract_strided_slice %19 {offsets = [24, 0], sizes = [8, 300], strides = [1, 1]} : vector<56x300xf32> to vector<8x300xf32>
    %c1_39 = arith.constant 1 : index
    %c0_40 = arith.constant 0 : index
    %c0_41 = arith.constant 0 : index
    %57 = vector.load %arg4[%c1_39, %c0_40, %c0_41] : memref<3x300x300xf32, #tpu.memory_space<vmem>>, vector<1x300x300xf32>
    %58 = vector.shape_cast %57 : vector<1x300x300xf32> to vector<300x300xf32>
    %cst_42 = arith.constant dense<0.000000e+00> : vector<8x300xf32>
    %59 = tpu.matmul %56, %58, %cst_42 {dimension_numbers = #tpu.dot_dimension_numbers<[1], [0], [0], [1], [0, 0, 1, 1], [], []>} : vector<8x300xf32>, vector<300x300xf32>, vector<8x300xf32> -> vector<8x300xf32>
    %60 = arith.addf %55, %59 : vector<8x300xf32>
    %61 = vector.extract_strided_slice %19 {offsets = [32, 0], sizes = [8, 300], strides = [1, 1]} : vector<56x300xf32> to vector<8x300xf32>
    %c2_43 = arith.constant 2 : index
    %c0_44 = arith.constant 0 : index
    %c0_45 = arith.constant 0 : index
    %62 = vector.load %arg4[%c2_43, %c0_44, %c0_45] : memref<3x300x300xf32, #tpu.memory_space<vmem>>, vector<1x300x300xf32>
    %63 = vector.shape_cast %62 : vector<1x300x300xf32> to vector<300x300xf32>
    %cst_46 = arith.constant dense<0.000000e+00> : vector<8x300xf32>
    %64 = tpu.matmul %61, %63, %cst_46 {dimension_numbers = #tpu.dot_dimension_numbers<[1], [0], [0], [1], [0, 0, 1, 1], [], []>} : vector<8x300xf32>, vector<300x300xf32>, vector<8x300xf32> -> vector<8x300xf32>
    %65 = arith.addf %60, %64 : vector<8x300xf32>
    %c1_47 = arith.constant 1 : index
    %66 = memref.load %arg10[%c1_47] : memref<4xf32, #tpu.memory_space<smem>>
    %cst_48 = arith.constant 0.000000e+00 : f32
    %67 = vector.broadcast %cst_48 : f32 to vector<8x300xf32>
    %68 = arith.cmpf oge, %65, %67 : vector<8x300xf32>
    %69 = vector.broadcast %66 : f32 to vector<8x300xf32>
    %70 = arith.mulf %69, %65 : vector<8x300xf32>
    %71 = arith.select %68, %65, %70 : vector<8x300xi1>, vector<8x300xf32>
    %c1_49 = arith.constant 1 : index
    %c0_50 = arith.constant 0 : index
    %c0_51 = arith.constant 0 : index
    %72 = vector.load %arg6[%c1_49, %c0_50, %c0_51] : memref<3x300x300xf32, #tpu.memory_space<vmem>>, vector<1x300x300xf32>
    %73 = vector.shape_cast %72 : vector<1x300x300xf32> to vector<300x300xf32>
    %cst_52 = arith.constant dense<0.000000e+00> : vector<8x300xf32>
    %74 = tpu.matmul %71, %73, %cst_52 {dimension_numbers = #tpu.dot_dimension_numbers<[1], [0], [0], [1], [0, 0, 1, 1], [], []>} : vector<8x300xf32>, vector<300x300xf32>, vector<8x300xf32> -> vector<8x300xf32>
    %75 = arith.addf %48, %74 : vector<8x300xf32>
    %c0_53 = arith.constant 0 : index
    %c0_54 = arith.constant 0 : index
    %76 = vector.load %arg5[%c0_53, %c0_54] : memref<1x300xf32, #tpu.memory_space<vmem>>, vector<1x300xf32>
    %77 = vector.extract_strided_slice %19 {offsets = [32, 0], sizes = [8, 300], strides = [1, 1]} : vector<56x300xf32> to vector<8x300xf32>
    %c0_55 = arith.constant 0 : index
    %c0_56 = arith.constant 0 : index
    %c0_57 = arith.constant 0 : index
    %78 = vector.load %arg4[%c0_55, %c0_56, %c0_57] : memref<3x300x300xf32, #tpu.memory_space<vmem>>, vector<1x300x300xf32>
    %79 = vector.shape_cast %78 : vector<1x300x300xf32> to vector<300x300xf32>
    %cst_58 = arith.constant dense<0.000000e+00> : vector<8x300xf32>
    %80 = tpu.matmul %77, %79, %cst_58 {dimension_numbers = #tpu.dot_dimension_numbers<[1], [0], [0], [1], [0, 0, 1, 1], [], []>} : vector<8x300xf32>, vector<300x300xf32>, vector<8x300xf32> -> vector<8x300xf32>
    %81 = vector.broadcast %76 : vector<1x300xf32> to vector<8x300xf32>
    %82 = arith.addf %81, %80 : vector<8x300xf32>
    %83 = vector.extract_strided_slice %19 {offsets = [40, 0], sizes = [8, 300], strides = [1, 1]} : vector<56x300xf32> to vector<8x300xf32>
    %c1_59 = arith.constant 1 : index
    %c0_60 = arith.constant 0 : index
    %c0_61 = arith.constant 0 : index
    %84 = vector.load %arg4[%c1_59, %c0_60, %c0_61] : memref<3x300x300xf32, #tpu.memory_space<vmem>>, vector<1x300x300xf32>
    %85 = vector.shape_cast %84 : vector<1x300x300xf32> to vector<300x300xf32>
    %cst_62 = arith.constant dense<0.000000e+00> : vector<8x300xf32>
    %86 = tpu.matmul %83, %85, %cst_62 {dimension_numbers = #tpu.dot_dimension_numbers<[1], [0], [0], [1], [0, 0, 1, 1], [], []>} : vector<8x300xf32>, vector<300x300xf32>, vector<8x300xf32> -> vector<8x300xf32>
    %87 = arith.addf %82, %86 : vector<8x300xf32>
    %88 = vector.extract_strided_slice %19 {offsets = [48, 0], sizes = [8, 300], strides = [1, 1]} : vector<56x300xf32> to vector<8x300xf32>
    %c2_63 = arith.constant 2 : index
    %c0_64 = arith.constant 0 : index
    %c0_65 = arith.constant 0 : index
    %89 = vector.load %arg4[%c2_63, %c0_64, %c0_65] : memref<3x300x300xf32, #tpu.memory_space<vmem>>, vector<1x300x300xf32>
    %90 = vector.shape_cast %89 : vector<1x300x300xf32> to vector<300x300xf32>
    %cst_66 = arith.constant dense<0.000000e+00> : vector<8x300xf32>
    %91 = tpu.matmul %88, %90, %cst_66 {dimension_numbers = #tpu.dot_dimension_numbers<[1], [0], [0], [1], [0, 0, 1, 1], [], []>} : vector<8x300xf32>, vector<300x300xf32>, vector<8x300xf32> -> vector<8x300xf32>
    %92 = arith.addf %87, %91 : vector<8x300xf32>
    %c1_67 = arith.constant 1 : index
    %93 = memref.load %arg10[%c1_67] : memref<4xf32, #tpu.memory_space<smem>>
    %cst_68 = arith.constant 0.000000e+00 : f32
    %94 = vector.broadcast %cst_68 : f32 to vector<8x300xf32>
    %95 = arith.cmpf oge, %92, %94 : vector<8x300xf32>
    %96 = vector.broadcast %93 : f32 to vector<8x300xf32>
    %97 = arith.mulf %96, %92 : vector<8x300xf32>
    %98 = arith.select %95, %92, %97 : vector<8x300xi1>, vector<8x300xf32>
    %c2_69 = arith.constant 2 : index
    %c0_70 = arith.constant 0 : index
    %c0_71 = arith.constant 0 : index
    %99 = vector.load %arg6[%c2_69, %c0_70, %c0_71] : memref<3x300x300xf32, #tpu.memory_space<vmem>>, vector<1x300x300xf32>
    %100 = vector.shape_cast %99 : vector<1x300x300xf32> to vector<300x300xf32>
    %cst_72 = arith.constant dense<0.000000e+00> : vector<8x300xf32>
    %101 = tpu.matmul %98, %100, %cst_72 {dimension_numbers = #tpu.dot_dimension_numbers<[1], [0], [0], [1], [0, 0, 1, 1], [], []>} : vector<8x300xf32>, vector<300x300xf32>, vector<8x300xf32> -> vector<8x300xf32>
    %102 = arith.addf %75, %101 : vector<8x300xf32>
    %c2_73 = arith.constant 2 : index
    %103 = memref.load %arg10[%c2_73] : memref<4xf32, #tpu.memory_space<smem>>
    %cst_74 = arith.constant 0.000000e+00 : f32
    %104 = vector.broadcast %cst_74 : f32 to vector<8x300xf32>
    %105 = arith.cmpf oge, %102, %104 : vector<8x300xf32>
    %106 = vector.broadcast %103 : f32 to vector<8x300xf32>
    %107 = arith.mulf %106, %102 : vector<8x300xf32>
    %108 = arith.select %105, %102, %107 : vector<8x300xi1>, vector<8x300xf32>
    %c0_75 = arith.constant 0 : index
    %c0_76 = arith.constant 0 : index
    %109 = vector.load %arg8[%c0_75, %c0_76] : memref<300x128xf32, #tpu.memory_space<vmem>>, vector<300x128xf32>
    %cst_77 = arith.constant dense<0.000000e+00> : vector<8x128xf32>
    %110 = tpu.matmul %108, %109, %cst_77 {dimension_numbers = #tpu.dot_dimension_numbers<[1], [0], [0], [1], [0, 0, 1, 1], [], []>} : vector<8x300xf32>, vector<300x128xf32>, vector<8x128xf32> -> vector<8x128xf32>
    %c0_78 = arith.constant 0 : index
    %c0_79 = arith.constant 0 : index
    %111 = vector.load %arg9[%c0_78, %c0_79] : memref<1x128xf32, #tpu.memory_space<vmem>>, vector<1x128xf32>
    %112 = vector.broadcast %111 : vector<1x128xf32> to vector<8x128xf32>
    %113 = arith.addf %110, %112 : vector<8x128xf32>
    %c3 = arith.constant 3 : index
    %114 = memref.load %arg10[%c3] : memref<4xf32, #tpu.memory_space<smem>>
    %cst_80 = arith.constant 0.000000e+00 : f32
    %115 = vector.broadcast %cst_80 : f32 to vector<8x128xf32>
    %116 = arith.cmpf oge, %113, %115 : vector<8x128xf32>
    %117 = vector.broadcast %114 : f32 to vector<8x128xf32>
    %118 = arith.mulf %117, %113 : vector<8x128xf32>
    %119 = arith.select %116, %113, %118 : vector<8x128xi1>, vector<8x128xf32>
    %c0_81 = arith.constant 0 : index
    %c0_82 = arith.constant 0 : index
    %120 = vector.load %arg11[%c0_81, %c0_82] : memref<300x384xf32, #tpu.memory_space<vmem>>, vector<300x384xf32>
    %cst_83 = arith.constant dense<0.000000e+00> : vector<112x384xf32>
    %121 = tpu.matmul %1, %120, %cst_83 {dimension_numbers = #tpu.dot_dimension_numbers<[1], [0], [0], [1], [0, 0, 1, 1], [], []>} : vector<112x300xf32>, vector<300x384xf32>, vector<112x384xf32> -> vector<112x384xf32>
    %c0_84 = arith.constant 0 : index
    %c0_85 = arith.constant 0 : index
    %122 = vector.load %arg12[%c0_84, %c0_85] : memref<1x384xf32, #tpu.memory_space<vmem>>, vector<1x384xf32>
    %123 = vector.broadcast %122 : vector<1x384xf32> to vector<112x384xf32>
    %124 = arith.addf %121, %123 : vector<112x384xf32>
    %c0_86 = arith.constant 0 : index
    %c0_87 = arith.constant 0 : index
    %125 = vector.load %arg13[%c0_86, %c0_87] : memref<128x384xf32, #tpu.memory_space<vmem>>, vector<128x384xf32>
    %c0_88 = arith.constant 0 : index
    %c0_89 = arith.constant 0 : index
    %126 = vector.load %arg14[%c0_88, %c0_89] : memref<1x128xf32, #tpu.memory_space<vmem>>, vector<1x128xf32>
    %127 = vector.extract_strided_slice %124 {offsets = [0, 0], sizes = [8, 384], strides = [1, 1]} : vector<112x384xf32> to vector<8x384xf32>
    %cst_90 = arith.constant dense<0.000000e+00> : vector<8x384xf32>
    %128 = tpu.matmul %119, %125, %cst_90 {dimension_numbers = #tpu.dot_dimension_numbers<[1], [0], [0], [1], [0, 0, 1, 1], [], []>} : vector<8x128xf32>, vector<128x384xf32>, vector<8x384xf32> -> vector<8x384xf32>
    %129 = vector.extract_strided_slice %127 {offsets = [0, 0], sizes = [8, 128], strides = [1, 1]} : vector<8x384xf32> to vector<8x128xf32>
    %130 = vector.extract_strided_slice %128 {offsets = [0, 0], sizes = [8, 128], strides = [1, 1]} : vector<8x384xf32> to vector<8x128xf32>
    %131 = arith.addf %129, %130 : vector<8x128xf32>
    %132 = arith.negf %131 : vector<8x128xf32>
    %133 = math.exp %132 : vector<8x128xf32>
    %cst_91 = arith.constant 1.000000e+00 : f32
    %134 = vector.broadcast %cst_91 : f32 to vector<8x128xf32>
    %135 = arith.addf %134, %133 : vector<8x128xf32>
    %136 = arith.divf %134, %135 : vector<8x128xf32>
    %137 = vector.extract_strided_slice %127 {offsets = [0, 128], sizes = [8, 128], strides = [1, 1]} : vector<8x384xf32> to vector<8x128xf32>
    %138 = vector.extract_strided_slice %128 {offsets = [0, 128], sizes = [8, 128], strides = [1, 1]} : vector<8x384xf32> to vector<8x128xf32>
    %139 = arith.addf %137, %138 : vector<8x128xf32>
    %140 = arith.negf %139 : vector<8x128xf32>
    %141 = math.exp %140 : vector<8x128xf32>
    %cst_92 = arith.constant 1.000000e+00 : f32
    %142 = vector.broadcast %cst_92 : f32 to vector<8x128xf32>
    %143 = arith.addf %142, %141 : vector<8x128xf32>
    %144 = arith.divf %142, %143 : vector<8x128xf32>
    %145 = vector.extract_strided_slice %127 {offsets = [0, 256], sizes = [8, 128], strides = [1, 1]} : vector<8x384xf32> to vector<8x128xf32>
    %146 = vector.extract_strided_slice %128 {offsets = [0, 256], sizes = [8, 128], strides = [1, 1]} : vector<8x384xf32> to vector<8x128xf32>
    %147 = vector.broadcast %126 : vector<1x128xf32> to vector<8x128xf32>
    %148 = arith.addf %146, %147 : vector<8x128xf32>
    %149 = arith.mulf %136, %148 : vector<8x128xf32>
    %150 = arith.addf %145, %149 : vector<8x128xf32>
    %151 = math.tanh %150 : vector<8x128xf32>
    %cst_93 = arith.constant 1.000000e+00 : f32
    %152 = vector.broadcast %cst_93 : f32 to vector<8x128xf32>
    %153 = arith.subf %152, %144 : vector<8x128xf32>
    %154 = arith.mulf %153, %151 : vector<8x128xf32>
    %155 = arith.mulf %144, %119 : vector<8x128xf32>
    %156 = arith.addf %154, %155 : vector<8x128xf32>
    %157 = vector.extract_strided_slice %124 {offsets = [56, 0], sizes = [8, 384], strides = [1, 1]} : vector<112x384xf32> to vector<8x384xf32>
    %cst_94 = arith.constant dense<0.000000e+00> : vector<8x384xf32>
    %158 = tpu.matmul %156, %125, %cst_94 {dimension_numbers = #tpu.dot_dimension_numbers<[1], [0], [0], [1], [0, 0, 1, 1], [], []>} : vector<8x128xf32>, vector<128x384xf32>, vector<8x384xf32> -> vector<8x384xf32>
    %159 = vector.extract_strided_slice %157 {offsets = [0, 0], sizes = [8, 128], strides = [1, 1]} : vector<8x384xf32> to vector<8x128xf32>
    %160 = vector.extract_strided_slice %158 {offsets = [0, 0], sizes = [8, 128], strides = [1, 1]} : vector<8x384xf32> to vector<8x128xf32>
    %161 = arith.addf %159, %160 : vector<8x128xf32>
    %162 = arith.negf %161 : vector<8x128xf32>
    %163 = math.exp %162 : vector<8x128xf32>
    %cst_95 = arith.constant 1.000000e+00 : f32
    %164 = vector.broadcast %cst_95 : f32 to vector<8x128xf32>
    %165 = arith.addf %164, %163 : vector<8x128xf32>
    %166 = arith.divf %164, %165 : vector<8x128xf32>
    %167 = vector.extract_strided_slice %157 {offsets = [0, 128], sizes = [8, 128], strides = [1, 1]} : vector<8x384xf32> to vector<8x128xf32>
    %168 = vector.extract_strided_slice %158 {offsets = [0, 128], sizes = [8, 128], strides = [1, 1]} : vector<8x384xf32> to vector<8x128xf32>
    %169 = arith.addf %167, %168 : vector<8x128xf32>
    %170 = arith.negf %169 : vector<8x128xf32>
    %171 = math.exp %170 : vector<8x128xf32>
    %cst_96 = arith.constant 1.000000e+00 : f32
    %172 = vector.broadcast %cst_96 : f32 to vector<8x128xf32>
    %173 = arith.addf %172, %171 : vector<8x128xf32>
    %174 = arith.divf %172, %173 : vector<8x128xf32>
    %175 = vector.extract_strided_slice %157 {offsets = [0, 256], sizes = [8, 128], strides = [1, 1]} : vector<8x384xf32> to vector<8x128xf32>
    %176 = vector.extract_strided_slice %158 {offsets = [0, 256], sizes = [8, 128], strides = [1, 1]} : vector<8x384xf32> to vector<8x128xf32>
    %177 = vector.broadcast %126 : vector<1x128xf32> to vector<8x128xf32>
    %178 = arith.addf %176, %177 : vector<8x128xf32>
    %179 = arith.mulf %166, %178 : vector<8x128xf32>
    %180 = arith.addf %175, %179 : vector<8x128xf32>
    %181 = math.tanh %180 : vector<8x128xf32>
    %cst_97 = arith.constant 1.000000e+00 : f32
    %182 = vector.broadcast %cst_97 : f32 to vector<8x128xf32>
    %183 = arith.subf %182, %174 : vector<8x128xf32>
    %184 = arith.mulf %183, %181 : vector<8x128xf32>
    %185 = arith.mulf %174, %156 : vector<8x128xf32>
    %186 = arith.addf %184, %185 : vector<8x128xf32>
    %187 = vector.extract_strided_slice %124 {offsets = [8, 0], sizes = [8, 384], strides = [1, 1]} : vector<112x384xf32> to vector<8x384xf32>
    %cst_98 = arith.constant dense<0.000000e+00> : vector<8x384xf32>
    %188 = tpu.matmul %186, %125, %cst_98 {dimension_numbers = #tpu.dot_dimension_numbers<[1], [0], [0], [1], [0, 0, 1, 1], [], []>} : vector<8x128xf32>, vector<128x384xf32>, vector<8x384xf32> -> vector<8x384xf32>
    %189 = vector.extract_strided_slice %187 {offsets = [0, 0], sizes = [8, 128], strides = [1, 1]} : vector<8x384xf32> to vector<8x128xf32>
    %190 = vector.extract_strided_slice %188 {offsets = [0, 0], sizes = [8, 128], strides = [1, 1]} : vector<8x384xf32> to vector<8x128xf32>
    %191 = arith.addf %189, %190 : vector<8x128xf32>
    %192 = arith.negf %191 : vector<8x128xf32>
    %193 = math.exp %192 : vector<8x128xf32>
    %cst_99 = arith.constant 1.000000e+00 : f32
    %194 = vector.broadcast %cst_99 : f32 to vector<8x128xf32>
    %195 = arith.addf %194, %193 : vector<8x128xf32>
    %196 = arith.divf %194, %195 : vector<8x128xf32>
    %197 = vector.extract_strided_slice %187 {offsets = [0, 128], sizes = [8, 128], strides = [1, 1]} : vector<8x384xf32> to vector<8x128xf32>
    %198 = vector.extract_strided_slice %188 {offsets = [0, 128], sizes = [8, 128], strides = [1, 1]} : vector<8x384xf32> to vector<8x128xf32>
    %199 = arith.addf %197, %198 : vector<8x128xf32>
    %200 = arith.negf %199 : vector<8x128xf32>
    %201 = math.exp %200 : vector<8x128xf32>
    %cst_100 = arith.constant 1.000000e+00 : f32
    %202 = vector.broadcast %cst_100 : f32 to vector<8x128xf32>
    %203 = arith.addf %202, %201 : vector<8x128xf32>
    %204 = arith.divf %202, %203 : vector<8x128xf32>
    %205 = vector.extract_strided_slice %187 {offsets = [0, 256], sizes = [8, 128], strides = [1, 1]} : vector<8x384xf32> to vector<8x128xf32>
    %206 = vector.extract_strided_slice %188 {offsets = [0, 256], sizes = [8, 128], strides = [1, 1]} : vector<8x384xf32> to vector<8x128xf32>
    %207 = vector.broadcast %126 : vector<1x128xf32> to vector<8x128xf32>
    %208 = arith.addf %206, %207 : vector<8x128xf32>
    %209 = arith.mulf %196, %208 : vector<8x128xf32>
    %210 = arith.addf %205, %209 : vector<8x128xf32>
    %211 = math.tanh %210 : vector<8x128xf32>
    %cst_101 = arith.constant 1.000000e+00 : f32
    %212 = vector.broadcast %cst_101 : f32 to vector<8x128xf32>
    %213 = arith.subf %212, %204 : vector<8x128xf32>
    %214 = arith.mulf %213, %211 : vector<8x128xf32>
    %215 = arith.mulf %204, %186 : vector<8x128xf32>
    %216 = arith.addf %214, %215 : vector<8x128xf32>
    %217 = vector.extract_strided_slice %124 {offsets = [64, 0], sizes = [8, 384], strides = [1, 1]} : vector<112x384xf32> to vector<8x384xf32>
    %cst_102 = arith.constant dense<0.000000e+00> : vector<8x384xf32>
    %218 = tpu.matmul %216, %125, %cst_102 {dimension_numbers = #tpu.dot_dimension_numbers<[1], [0], [0], [1], [0, 0, 1, 1], [], []>} : vector<8x128xf32>, vector<128x384xf32>, vector<8x384xf32> -> vector<8x384xf32>
    %219 = vector.extract_strided_slice %217 {offsets = [0, 0], sizes = [8, 128], strides = [1, 1]} : vector<8x384xf32> to vector<8x128xf32>
    %220 = vector.extract_strided_slice %218 {offsets = [0, 0], sizes = [8, 128], strides = [1, 1]} : vector<8x384xf32> to vector<8x128xf32>
    %221 = arith.addf %219, %220 : vector<8x128xf32>
    %222 = arith.negf %221 : vector<8x128xf32>
    %223 = math.exp %222 : vector<8x128xf32>
    %cst_103 = arith.constant 1.000000e+00 : f32
    %224 = vector.broadcast %cst_103 : f32 to vector<8x128xf32>
    %225 = arith.addf %224, %223 : vector<8x128xf32>
    %226 = arith.divf %224, %225 : vector<8x128xf32>
    %227 = vector.extract_strided_slice %217 {offsets = [0, 128], sizes = [8, 128], strides = [1, 1]} : vector<8x384xf32> to vector<8x128xf32>
    %228 = vector.extract_strided_slice %218 {offsets = [0, 128], sizes = [8, 128], strides = [1, 1]} : vector<8x384xf32> to vector<8x128xf32>
    %229 = arith.addf %227, %228 : vector<8x128xf32>
    %230 = arith.negf %229 : vector<8x128xf32>
    %231 = math.exp %230 : vector<8x128xf32>
    %cst_104 = arith.constant 1.000000e+00 : f32
    %232 = vector.broadcast %cst_104 : f32 to vector<8x128xf32>
    %233 = arith.addf %232, %231 : vector<8x128xf32>
    %234 = arith.divf %232, %233 : vector<8x128xf32>
    %235 = vector.extract_strided_slice %217 {offsets = [0, 256], sizes = [8, 128], strides = [1, 1]} : vector<8x384xf32> to vector<8x128xf32>
    %236 = vector.extract_strided_slice %218 {offsets = [0, 256], sizes = [8, 128], strides = [1, 1]} : vector<8x384xf32> to vector<8x128xf32>
    %237 = vector.broadcast %126 : vector<1x128xf32> to vector<8x128xf32>
    %238 = arith.addf %236, %237 : vector<8x128xf32>
    %239 = arith.mulf %226, %238 : vector<8x128xf32>
    %240 = arith.addf %235, %239 : vector<8x128xf32>
    %241 = math.tanh %240 : vector<8x128xf32>
    %cst_105 = arith.constant 1.000000e+00 : f32
    %242 = vector.broadcast %cst_105 : f32 to vector<8x128xf32>
    %243 = arith.subf %242, %234 : vector<8x128xf32>
    %244 = arith.mulf %243, %241 : vector<8x128xf32>
    %245 = arith.mulf %234, %216 : vector<8x128xf32>
    %246 = arith.addf %244, %245 : vector<8x128xf32>
    %247 = vector.extract_strided_slice %124 {offsets = [16, 0], sizes = [8, 384], strides = [1, 1]} : vector<112x384xf32> to vector<8x384xf32>
    %cst_106 = arith.constant dense<0.000000e+00> : vector<8x384xf32>
    %248 = tpu.matmul %246, %125, %cst_106 {dimension_numbers = #tpu.dot_dimension_numbers<[1], [0], [0], [1], [0, 0, 1, 1], [], []>} : vector<8x128xf32>, vector<128x384xf32>, vector<8x384xf32> -> vector<8x384xf32>
    %249 = vector.extract_strided_slice %247 {offsets = [0, 0], sizes = [8, 128], strides = [1, 1]} : vector<8x384xf32> to vector<8x128xf32>
    %250 = vector.extract_strided_slice %248 {offsets = [0, 0], sizes = [8, 128], strides = [1, 1]} : vector<8x384xf32> to vector<8x128xf32>
    %251 = arith.addf %249, %250 : vector<8x128xf32>
    %252 = arith.negf %251 : vector<8x128xf32>
    %253 = math.exp %252 : vector<8x128xf32>
    %cst_107 = arith.constant 1.000000e+00 : f32
    %254 = vector.broadcast %cst_107 : f32 to vector<8x128xf32>
    %255 = arith.addf %254, %253 : vector<8x128xf32>
    %256 = arith.divf %254, %255 : vector<8x128xf32>
    %257 = vector.extract_strided_slice %247 {offsets = [0, 128], sizes = [8, 128], strides = [1, 1]} : vector<8x384xf32> to vector<8x128xf32>
    %258 = vector.extract_strided_slice %248 {offsets = [0, 128], sizes = [8, 128], strides = [1, 1]} : vector<8x384xf32> to vector<8x128xf32>
    %259 = arith.addf %257, %258 : vector<8x128xf32>
    %260 = arith.negf %259 : vector<8x128xf32>
    %261 = math.exp %260 : vector<8x128xf32>
    %cst_108 = arith.constant 1.000000e+00 : f32
    %262 = vector.broadcast %cst_108 : f32 to vector<8x128xf32>
    %263 = arith.addf %262, %261 : vector<8x128xf32>
    %264 = arith.divf %262, %263 : vector<8x128xf32>
    %265 = vector.extract_strided_slice %247 {offsets = [0, 256], sizes = [8, 128], strides = [1, 1]} : vector<8x384xf32> to vector<8x128xf32>
    %266 = vector.extract_strided_slice %248 {offsets = [0, 256], sizes = [8, 128], strides = [1, 1]} : vector<8x384xf32> to vector<8x128xf32>
    %267 = vector.broadcast %126 : vector<1x128xf32> to vector<8x128xf32>
    %268 = arith.addf %266, %267 : vector<8x128xf32>
    %269 = arith.mulf %256, %268 : vector<8x128xf32>
    %270 = arith.addf %265, %269 : vector<8x128xf32>
    %271 = math.tanh %270 : vector<8x128xf32>
    %cst_109 = arith.constant 1.000000e+00 : f32
    %272 = vector.broadcast %cst_109 : f32 to vector<8x128xf32>
    %273 = arith.subf %272, %264 : vector<8x128xf32>
    %274 = arith.mulf %273, %271 : vector<8x128xf32>
    %275 = arith.mulf %264, %246 : vector<8x128xf32>
    %276 = arith.addf %274, %275 : vector<8x128xf32>
    %277 = vector.extract_strided_slice %124 {offsets = [72, 0], sizes = [8, 384], strides = [1, 1]} : vector<112x384xf32> to vector<8x384xf32>
    %cst_110 = arith.constant dense<0.000000e+00> : vector<8x384xf32>
    %278 = tpu.matmul %276, %125, %cst_110 {dimension_numbers = #tpu.dot_dimension_numbers<[1], [0], [0], [1], [0, 0, 1, 1], [], []>} : vector<8x128xf32>, vector<128x384xf32>, vector<8x384xf32> -> vector<8x384xf32>
    %279 = vector.extract_strided_slice %277 {offsets = [0, 0], sizes = [8, 128], strides = [1, 1]} : vector<8x384xf32> to vector<8x128xf32>
    %280 = vector.extract_strided_slice %278 {offsets = [0, 0], sizes = [8, 128], strides = [1, 1]} : vector<8x384xf32> to vector<8x128xf32>
    %281 = arith.addf %279, %280 : vector<8x128xf32>
    %282 = arith.negf %281 : vector<8x128xf32>
    %283 = math.exp %282 : vector<8x128xf32>
    %cst_111 = arith.constant 1.000000e+00 : f32
    %284 = vector.broadcast %cst_111 : f32 to vector<8x128xf32>
    %285 = arith.addf %284, %283 : vector<8x128xf32>
    %286 = arith.divf %284, %285 : vector<8x128xf32>
    %287 = vector.extract_strided_slice %277 {offsets = [0, 128], sizes = [8, 128], strides = [1, 1]} : vector<8x384xf32> to vector<8x128xf32>
    %288 = vector.extract_strided_slice %278 {offsets = [0, 128], sizes = [8, 128], strides = [1, 1]} : vector<8x384xf32> to vector<8x128xf32>
    %289 = arith.addf %287, %288 : vector<8x128xf32>
    %290 = arith.negf %289 : vector<8x128xf32>
    %291 = math.exp %290 : vector<8x128xf32>
    %cst_112 = arith.constant 1.000000e+00 : f32
    %292 = vector.broadcast %cst_112 : f32 to vector<8x128xf32>
    %293 = arith.addf %292, %291 : vector<8x128xf32>
    %294 = arith.divf %292, %293 : vector<8x128xf32>
    %295 = vector.extract_strided_slice %277 {offsets = [0, 256], sizes = [8, 128], strides = [1, 1]} : vector<8x384xf32> to vector<8x128xf32>
    %296 = vector.extract_strided_slice %278 {offsets = [0, 256], sizes = [8, 128], strides = [1, 1]} : vector<8x384xf32> to vector<8x128xf32>
    %297 = vector.broadcast %126 : vector<1x128xf32> to vector<8x128xf32>
    %298 = arith.addf %296, %297 : vector<8x128xf32>
    %299 = arith.mulf %286, %298 : vector<8x128xf32>
    %300 = arith.addf %295, %299 : vector<8x128xf32>
    %301 = math.tanh %300 : vector<8x128xf32>
    %cst_113 = arith.constant 1.000000e+00 : f32
    %302 = vector.broadcast %cst_113 : f32 to vector<8x128xf32>
    %303 = arith.subf %302, %294 : vector<8x128xf32>
    %304 = arith.mulf %303, %301 : vector<8x128xf32>
    %305 = arith.mulf %294, %276 : vector<8x128xf32>
    %306 = arith.addf %304, %305 : vector<8x128xf32>
    %307 = vector.extract_strided_slice %124 {offsets = [24, 0], sizes = [8, 384], strides = [1, 1]} : vector<112x384xf32> to vector<8x384xf32>
    %cst_114 = arith.constant dense<0.000000e+00> : vector<8x384xf32>
    %308 = tpu.matmul %306, %125, %cst_114 {dimension_numbers = #tpu.dot_dimension_numbers<[1], [0], [0], [1], [0, 0, 1, 1], [], []>} : vector<8x128xf32>, vector<128x384xf32>, vector<8x384xf32> -> vector<8x384xf32>
    %309 = vector.extract_strided_slice %307 {offsets = [0, 0], sizes = [8, 128], strides = [1, 1]} : vector<8x384xf32> to vector<8x128xf32>
    %310 = vector.extract_strided_slice %308 {offsets = [0, 0], sizes = [8, 128], strides = [1, 1]} : vector<8x384xf32> to vector<8x128xf32>
    %311 = arith.addf %309, %310 : vector<8x128xf32>
    %312 = arith.negf %311 : vector<8x128xf32>
    %313 = math.exp %312 : vector<8x128xf32>
    %cst_115 = arith.constant 1.000000e+00 : f32
    %314 = vector.broadcast %cst_115 : f32 to vector<8x128xf32>
    %315 = arith.addf %314, %313 : vector<8x128xf32>
    %316 = arith.divf %314, %315 : vector<8x128xf32>
    %317 = vector.extract_strided_slice %307 {offsets = [0, 128], sizes = [8, 128], strides = [1, 1]} : vector<8x384xf32> to vector<8x128xf32>
    %318 = vector.extract_strided_slice %308 {offsets = [0, 128], sizes = [8, 128], strides = [1, 1]} : vector<8x384xf32> to vector<8x128xf32>
    %319 = arith.addf %317, %318 : vector<8x128xf32>
    %320 = arith.negf %319 : vector<8x128xf32>
    %321 = math.exp %320 : vector<8x128xf32>
    %cst_116 = arith.constant 1.000000e+00 : f32
    %322 = vector.broadcast %cst_116 : f32 to vector<8x128xf32>
    %323 = arith.addf %322, %321 : vector<8x128xf32>
    %324 = arith.divf %322, %323 : vector<8x128xf32>
    %325 = vector.extract_strided_slice %307 {offsets = [0, 256], sizes = [8, 128], strides = [1, 1]} : vector<8x384xf32> to vector<8x128xf32>
    %326 = vector.extract_strided_slice %308 {offsets = [0, 256], sizes = [8, 128], strides = [1, 1]} : vector<8x384xf32> to vector<8x128xf32>
    %327 = vector.broadcast %126 : vector<1x128xf32> to vector<8x128xf32>
    %328 = arith.addf %326, %327 : vector<8x128xf32>
    %329 = arith.mulf %316, %328 : vector<8x128xf32>
    %330 = arith.addf %325, %329 : vector<8x128xf32>
    %331 = math.tanh %330 : vector<8x128xf32>
    %cst_117 = arith.constant 1.000000e+00 : f32
    %332 = vector.broadcast %cst_117 : f32 to vector<8x128xf32>
    %333 = arith.subf %332, %324 : vector<8x128xf32>
    %334 = arith.mulf %333, %331 : vector<8x128xf32>
    %335 = arith.mulf %324, %306 : vector<8x128xf32>
    %336 = arith.addf %334, %335 : vector<8x128xf32>
    %337 = vector.extract_strided_slice %124 {offsets = [80, 0], sizes = [8, 384], strides = [1, 1]} : vector<112x384xf32> to vector<8x384xf32>
    %cst_118 = arith.constant dense<0.000000e+00> : vector<8x384xf32>
    %338 = tpu.matmul %336, %125, %cst_118 {dimension_numbers = #tpu.dot_dimension_numbers<[1], [0], [0], [1], [0, 0, 1, 1], [], []>} : vector<8x128xf32>, vector<128x384xf32>, vector<8x384xf32> -> vector<8x384xf32>
    %339 = vector.extract_strided_slice %337 {offsets = [0, 0], sizes = [8, 128], strides = [1, 1]} : vector<8x384xf32> to vector<8x128xf32>
    %340 = vector.extract_strided_slice %338 {offsets = [0, 0], sizes = [8, 128], strides = [1, 1]} : vector<8x384xf32> to vector<8x128xf32>
    %341 = arith.addf %339, %340 : vector<8x128xf32>
    %342 = arith.negf %341 : vector<8x128xf32>
    %343 = math.exp %342 : vector<8x128xf32>
    %cst_119 = arith.constant 1.000000e+00 : f32
    %344 = vector.broadcast %cst_119 : f32 to vector<8x128xf32>
    %345 = arith.addf %344, %343 : vector<8x128xf32>
    %346 = arith.divf %344, %345 : vector<8x128xf32>
    %347 = vector.extract_strided_slice %337 {offsets = [0, 128], sizes = [8, 128], strides = [1, 1]} : vector<8x384xf32> to vector<8x128xf32>
    %348 = vector.extract_strided_slice %338 {offsets = [0, 128], sizes = [8, 128], strides = [1, 1]} : vector<8x384xf32> to vector<8x128xf32>
    %349 = arith.addf %347, %348 : vector<8x128xf32>
    %350 = arith.negf %349 : vector<8x128xf32>
    %351 = math.exp %350 : vector<8x128xf32>
    %cst_120 = arith.constant 1.000000e+00 : f32
    %352 = vector.broadcast %cst_120 : f32 to vector<8x128xf32>
    %353 = arith.addf %352, %351 : vector<8x128xf32>
    %354 = arith.divf %352, %353 : vector<8x128xf32>
    %355 = vector.extract_strided_slice %337 {offsets = [0, 256], sizes = [8, 128], strides = [1, 1]} : vector<8x384xf32> to vector<8x128xf32>
    %356 = vector.extract_strided_slice %338 {offsets = [0, 256], sizes = [8, 128], strides = [1, 1]} : vector<8x384xf32> to vector<8x128xf32>
    %357 = vector.broadcast %126 : vector<1x128xf32> to vector<8x128xf32>
    %358 = arith.addf %356, %357 : vector<8x128xf32>
    %359 = arith.mulf %346, %358 : vector<8x128xf32>
    %360 = arith.addf %355, %359 : vector<8x128xf32>
    %361 = math.tanh %360 : vector<8x128xf32>
    %cst_121 = arith.constant 1.000000e+00 : f32
    %362 = vector.broadcast %cst_121 : f32 to vector<8x128xf32>
    %363 = arith.subf %362, %354 : vector<8x128xf32>
    %364 = arith.mulf %363, %361 : vector<8x128xf32>
    %365 = arith.mulf %354, %336 : vector<8x128xf32>
    %366 = arith.addf %364, %365 : vector<8x128xf32>
    %367 = vector.extract_strided_slice %124 {offsets = [32, 0], sizes = [8, 384], strides = [1, 1]} : vector<112x384xf32> to vector<8x384xf32>
    %cst_122 = arith.constant dense<0.000000e+00> : vector<8x384xf32>
    %368 = tpu.matmul %366, %125, %cst_122 {dimension_numbers = #tpu.dot_dimension_numbers<[1], [0], [0], [1], [0, 0, 1, 1], [], []>} : vector<8x128xf32>, vector<128x384xf32>, vector<8x384xf32> -> vector<8x384xf32>
    %369 = vector.extract_strided_slice %367 {offsets = [0, 0], sizes = [8, 128], strides = [1, 1]} : vector<8x384xf32> to vector<8x128xf32>
    %370 = vector.extract_strided_slice %368 {offsets = [0, 0], sizes = [8, 128], strides = [1, 1]} : vector<8x384xf32> to vector<8x128xf32>
    %371 = arith.addf %369, %370 : vector<8x128xf32>
    %372 = arith.negf %371 : vector<8x128xf32>
    %373 = math.exp %372 : vector<8x128xf32>
    %cst_123 = arith.constant 1.000000e+00 : f32
    %374 = vector.broadcast %cst_123 : f32 to vector<8x128xf32>
    %375 = arith.addf %374, %373 : vector<8x128xf32>
    %376 = arith.divf %374, %375 : vector<8x128xf32>
    %377 = vector.extract_strided_slice %367 {offsets = [0, 128], sizes = [8, 128], strides = [1, 1]} : vector<8x384xf32> to vector<8x128xf32>
    %378 = vector.extract_strided_slice %368 {offsets = [0, 128], sizes = [8, 128], strides = [1, 1]} : vector<8x384xf32> to vector<8x128xf32>
    %379 = arith.addf %377, %378 : vector<8x128xf32>
    %380 = arith.negf %379 : vector<8x128xf32>
    %381 = math.exp %380 : vector<8x128xf32>
    %cst_124 = arith.constant 1.000000e+00 : f32
    %382 = vector.broadcast %cst_124 : f32 to vector<8x128xf32>
    %383 = arith.addf %382, %381 : vector<8x128xf32>
    %384 = arith.divf %382, %383 : vector<8x128xf32>
    %385 = vector.extract_strided_slice %367 {offsets = [0, 256], sizes = [8, 128], strides = [1, 1]} : vector<8x384xf32> to vector<8x128xf32>
    %386 = vector.extract_strided_slice %368 {offsets = [0, 256], sizes = [8, 128], strides = [1, 1]} : vector<8x384xf32> to vector<8x128xf32>
    %387 = vector.broadcast %126 : vector<1x128xf32> to vector<8x128xf32>
    %388 = arith.addf %386, %387 : vector<8x128xf32>
    %389 = arith.mulf %376, %388 : vector<8x128xf32>
    %390 = arith.addf %385, %389 : vector<8x128xf32>
    %391 = math.tanh %390 : vector<8x128xf32>
    %cst_125 = arith.constant 1.000000e+00 : f32
    %392 = vector.broadcast %cst_125 : f32 to vector<8x128xf32>
    %393 = arith.subf %392, %384 : vector<8x128xf32>
    %394 = arith.mulf %393, %391 : vector<8x128xf32>
    %395 = arith.mulf %384, %366 : vector<8x128xf32>
    %396 = arith.addf %394, %395 : vector<8x128xf32>
    %397 = vector.extract_strided_slice %124 {offsets = [88, 0], sizes = [8, 384], strides = [1, 1]} : vector<112x384xf32> to vector<8x384xf32>
    %cst_126 = arith.constant dense<0.000000e+00> : vector<8x384xf32>
    %398 = tpu.matmul %396, %125, %cst_126 {dimension_numbers = #tpu.dot_dimension_numbers<[1], [0], [0], [1], [0, 0, 1, 1], [], []>} : vector<8x128xf32>, vector<128x384xf32>, vector<8x384xf32> -> vector<8x384xf32>
    %399 = vector.extract_strided_slice %397 {offsets = [0, 0], sizes = [8, 128], strides = [1, 1]} : vector<8x384xf32> to vector<8x128xf32>
    %400 = vector.extract_strided_slice %398 {offsets = [0, 0], sizes = [8, 128], strides = [1, 1]} : vector<8x384xf32> to vector<8x128xf32>
    %401 = arith.addf %399, %400 : vector<8x128xf32>
    %402 = arith.negf %401 : vector<8x128xf32>
    %403 = math.exp %402 : vector<8x128xf32>
    %cst_127 = arith.constant 1.000000e+00 : f32
    %404 = vector.broadcast %cst_127 : f32 to vector<8x128xf32>
    %405 = arith.addf %404, %403 : vector<8x128xf32>
    %406 = arith.divf %404, %405 : vector<8x128xf32>
    %407 = vector.extract_strided_slice %397 {offsets = [0, 128], sizes = [8, 128], strides = [1, 1]} : vector<8x384xf32> to vector<8x128xf32>
    %408 = vector.extract_strided_slice %398 {offsets = [0, 128], sizes = [8, 128], strides = [1, 1]} : vector<8x384xf32> to vector<8x128xf32>
    %409 = arith.addf %407, %408 : vector<8x128xf32>
    %410 = arith.negf %409 : vector<8x128xf32>
    %411 = math.exp %410 : vector<8x128xf32>
    %cst_128 = arith.constant 1.000000e+00 : f32
    %412 = vector.broadcast %cst_128 : f32 to vector<8x128xf32>
    %413 = arith.addf %412, %411 : vector<8x128xf32>
    %414 = arith.divf %412, %413 : vector<8x128xf32>
    %415 = vector.extract_strided_slice %397 {offsets = [0, 256], sizes = [8, 128], strides = [1, 1]} : vector<8x384xf32> to vector<8x128xf32>
    %416 = vector.extract_strided_slice %398 {offsets = [0, 256], sizes = [8, 128], strides = [1, 1]} : vector<8x384xf32> to vector<8x128xf32>
    %417 = vector.broadcast %126 : vector<1x128xf32> to vector<8x128xf32>
    %418 = arith.addf %416, %417 : vector<8x128xf32>
    %419 = arith.mulf %406, %418 : vector<8x128xf32>
    %420 = arith.addf %415, %419 : vector<8x128xf32>
    %421 = math.tanh %420 : vector<8x128xf32>
    %cst_129 = arith.constant 1.000000e+00 : f32
    %422 = vector.broadcast %cst_129 : f32 to vector<8x128xf32>
    %423 = arith.subf %422, %414 : vector<8x128xf32>
    %424 = arith.mulf %423, %421 : vector<8x128xf32>
    %425 = arith.mulf %414, %396 : vector<8x128xf32>
    %426 = arith.addf %424, %425 : vector<8x128xf32>
    %427 = vector.extract_strided_slice %124 {offsets = [40, 0], sizes = [8, 384], strides = [1, 1]} : vector<112x384xf32> to vector<8x384xf32>
    %cst_130 = arith.constant dense<0.000000e+00> : vector<8x384xf32>
    %428 = tpu.matmul %426, %125, %cst_130 {dimension_numbers = #tpu.dot_dimension_numbers<[1], [0], [0], [1], [0, 0, 1, 1], [], []>} : vector<8x128xf32>, vector<128x384xf32>, vector<8x384xf32> -> vector<8x384xf32>
    %429 = vector.extract_strided_slice %427 {offsets = [0, 0], sizes = [8, 128], strides = [1, 1]} : vector<8x384xf32> to vector<8x128xf32>
    %430 = vector.extract_strided_slice %428 {offsets = [0, 0], sizes = [8, 128], strides = [1, 1]} : vector<8x384xf32> to vector<8x128xf32>
    %431 = arith.addf %429, %430 : vector<8x128xf32>
    %432 = arith.negf %431 : vector<8x128xf32>
    %433 = math.exp %432 : vector<8x128xf32>
    %cst_131 = arith.constant 1.000000e+00 : f32
    %434 = vector.broadcast %cst_131 : f32 to vector<8x128xf32>
    %435 = arith.addf %434, %433 : vector<8x128xf32>
    %436 = arith.divf %434, %435 : vector<8x128xf32>
    %437 = vector.extract_strided_slice %427 {offsets = [0, 128], sizes = [8, 128], strides = [1, 1]} : vector<8x384xf32> to vector<8x128xf32>
    %438 = vector.extract_strided_slice %428 {offsets = [0, 128], sizes = [8, 128], strides = [1, 1]} : vector<8x384xf32> to vector<8x128xf32>
    %439 = arith.addf %437, %438 : vector<8x128xf32>
    %440 = arith.negf %439 : vector<8x128xf32>
    %441 = math.exp %440 : vector<8x128xf32>
    %cst_132 = arith.constant 1.000000e+00 : f32
    %442 = vector.broadcast %cst_132 : f32 to vector<8x128xf32>
    %443 = arith.addf %442, %441 : vector<8x128xf32>
    %444 = arith.divf %442, %443 : vector<8x128xf32>
    %445 = vector.extract_strided_slice %427 {offsets = [0, 256], sizes = [8, 128], strides = [1, 1]} : vector<8x384xf32> to vector<8x128xf32>
    %446 = vector.extract_strided_slice %428 {offsets = [0, 256], sizes = [8, 128], strides = [1, 1]} : vector<8x384xf32> to vector<8x128xf32>
    %447 = vector.broadcast %126 : vector<1x128xf32> to vector<8x128xf32>
    %448 = arith.addf %446, %447 : vector<8x128xf32>
    %449 = arith.mulf %436, %448 : vector<8x128xf32>
    %450 = arith.addf %445, %449 : vector<8x128xf32>
    %451 = math.tanh %450 : vector<8x128xf32>
    %cst_133 = arith.constant 1.000000e+00 : f32
    %452 = vector.broadcast %cst_133 : f32 to vector<8x128xf32>
    %453 = arith.subf %452, %444 : vector<8x128xf32>
    %454 = arith.mulf %453, %451 : vector<8x128xf32>
    %455 = arith.mulf %444, %426 : vector<8x128xf32>
    %456 = arith.addf %454, %455 : vector<8x128xf32>
    %457 = vector.extract_strided_slice %124 {offsets = [96, 0], sizes = [8, 384], strides = [1, 1]} : vector<112x384xf32> to vector<8x384xf32>
    %cst_134 = arith.constant dense<0.000000e+00> : vector<8x384xf32>
    %458 = tpu.matmul %456, %125, %cst_134 {dimension_numbers = #tpu.dot_dimension_numbers<[1], [0], [0], [1], [0, 0, 1, 1], [], []>} : vector<8x128xf32>, vector<128x384xf32>, vector<8x384xf32> -> vector<8x384xf32>
    %459 = vector.extract_strided_slice %457 {offsets = [0, 0], sizes = [8, 128], strides = [1, 1]} : vector<8x384xf32> to vector<8x128xf32>
    %460 = vector.extract_strided_slice %458 {offsets = [0, 0], sizes = [8, 128], strides = [1, 1]} : vector<8x384xf32> to vector<8x128xf32>
    %461 = arith.addf %459, %460 : vector<8x128xf32>
    %462 = arith.negf %461 : vector<8x128xf32>
    %463 = math.exp %462 : vector<8x128xf32>
    %cst_135 = arith.constant 1.000000e+00 : f32
    %464 = vector.broadcast %cst_135 : f32 to vector<8x128xf32>
    %465 = arith.addf %464, %463 : vector<8x128xf32>
    %466 = arith.divf %464, %465 : vector<8x128xf32>
    %467 = vector.extract_strided_slice %457 {offsets = [0, 128], sizes = [8, 128], strides = [1, 1]} : vector<8x384xf32> to vector<8x128xf32>
    %468 = vector.extract_strided_slice %458 {offsets = [0, 128], sizes = [8, 128], strides = [1, 1]} : vector<8x384xf32> to vector<8x128xf32>
    %469 = arith.addf %467, %468 : vector<8x128xf32>
    %470 = arith.negf %469 : vector<8x128xf32>
    %471 = math.exp %470 : vector<8x128xf32>
    %cst_136 = arith.constant 1.000000e+00 : f32
    %472 = vector.broadcast %cst_136 : f32 to vector<8x128xf32>
    %473 = arith.addf %472, %471 : vector<8x128xf32>
    %474 = arith.divf %472, %473 : vector<8x128xf32>
    %475 = vector.extract_strided_slice %457 {offsets = [0, 256], sizes = [8, 128], strides = [1, 1]} : vector<8x384xf32> to vector<8x128xf32>
    %476 = vector.extract_strided_slice %458 {offsets = [0, 256], sizes = [8, 128], strides = [1, 1]} : vector<8x384xf32> to vector<8x128xf32>
    %477 = vector.broadcast %126 : vector<1x128xf32> to vector<8x128xf32>
    %478 = arith.addf %476, %477 : vector<8x128xf32>
    %479 = arith.mulf %466, %478 : vector<8x128xf32>
    %480 = arith.addf %475, %479 : vector<8x128xf32>
    %481 = math.tanh %480 : vector<8x128xf32>
    %cst_137 = arith.constant 1.000000e+00 : f32
    %482 = vector.broadcast %cst_137 : f32 to vector<8x128xf32>
    %483 = arith.subf %482, %474 : vector<8x128xf32>
    %484 = arith.mulf %483, %481 : vector<8x128xf32>
    %485 = arith.mulf %474, %456 : vector<8x128xf32>
    %486 = arith.addf %484, %485 : vector<8x128xf32>
    %487 = vector.extract_strided_slice %124 {offsets = [48, 0], sizes = [8, 384], strides = [1, 1]} : vector<112x384xf32> to vector<8x384xf32>
    %cst_138 = arith.constant dense<0.000000e+00> : vector<8x384xf32>
    %488 = tpu.matmul %486, %125, %cst_138 {dimension_numbers = #tpu.dot_dimension_numbers<[1], [0], [0], [1], [0, 0, 1, 1], [], []>} : vector<8x128xf32>, vector<128x384xf32>, vector<8x384xf32> -> vector<8x384xf32>
    %489 = vector.extract_strided_slice %487 {offsets = [0, 0], sizes = [8, 128], strides = [1, 1]} : vector<8x384xf32> to vector<8x128xf32>
    %490 = vector.extract_strided_slice %488 {offsets = [0, 0], sizes = [8, 128], strides = [1, 1]} : vector<8x384xf32> to vector<8x128xf32>
    %491 = arith.addf %489, %490 : vector<8x128xf32>
    %492 = arith.negf %491 : vector<8x128xf32>
    %493 = math.exp %492 : vector<8x128xf32>
    %cst_139 = arith.constant 1.000000e+00 : f32
    %494 = vector.broadcast %cst_139 : f32 to vector<8x128xf32>
    %495 = arith.addf %494, %493 : vector<8x128xf32>
    %496 = arith.divf %494, %495 : vector<8x128xf32>
    %497 = vector.extract_strided_slice %487 {offsets = [0, 128], sizes = [8, 128], strides = [1, 1]} : vector<8x384xf32> to vector<8x128xf32>
    %498 = vector.extract_strided_slice %488 {offsets = [0, 128], sizes = [8, 128], strides = [1, 1]} : vector<8x384xf32> to vector<8x128xf32>
    %499 = arith.addf %497, %498 : vector<8x128xf32>
    %500 = arith.negf %499 : vector<8x128xf32>
    %501 = math.exp %500 : vector<8x128xf32>
    %cst_140 = arith.constant 1.000000e+00 : f32
    %502 = vector.broadcast %cst_140 : f32 to vector<8x128xf32>
    %503 = arith.addf %502, %501 : vector<8x128xf32>
    %504 = arith.divf %502, %503 : vector<8x128xf32>
    %505 = vector.extract_strided_slice %487 {offsets = [0, 256], sizes = [8, 128], strides = [1, 1]} : vector<8x384xf32> to vector<8x128xf32>
    %506 = vector.extract_strided_slice %488 {offsets = [0, 256], sizes = [8, 128], strides = [1, 1]} : vector<8x384xf32> to vector<8x128xf32>
    %507 = vector.broadcast %126 : vector<1x128xf32> to vector<8x128xf32>
    %508 = arith.addf %506, %507 : vector<8x128xf32>
    %509 = arith.mulf %496, %508 : vector<8x128xf32>
    %510 = arith.addf %505, %509 : vector<8x128xf32>
    %511 = math.tanh %510 : vector<8x128xf32>
    %cst_141 = arith.constant 1.000000e+00 : f32
    %512 = vector.broadcast %cst_141 : f32 to vector<8x128xf32>
    %513 = arith.subf %512, %504 : vector<8x128xf32>
    %514 = arith.mulf %513, %511 : vector<8x128xf32>
    %515 = arith.mulf %504, %486 : vector<8x128xf32>
    %516 = arith.addf %514, %515 : vector<8x128xf32>
    %517 = vector.extract_strided_slice %124 {offsets = [104, 0], sizes = [8, 384], strides = [1, 1]} : vector<112x384xf32> to vector<8x384xf32>
    %cst_142 = arith.constant dense<0.000000e+00> : vector<8x384xf32>
    %518 = tpu.matmul %516, %125, %cst_142 {dimension_numbers = #tpu.dot_dimension_numbers<[1], [0], [0], [1], [0, 0, 1, 1], [], []>} : vector<8x128xf32>, vector<128x384xf32>, vector<8x384xf32> -> vector<8x384xf32>
    %519 = vector.extract_strided_slice %517 {offsets = [0, 0], sizes = [8, 128], strides = [1, 1]} : vector<8x384xf32> to vector<8x128xf32>
    %520 = vector.extract_strided_slice %518 {offsets = [0, 0], sizes = [8, 128], strides = [1, 1]} : vector<8x384xf32> to vector<8x128xf32>
    %521 = arith.addf %519, %520 : vector<8x128xf32>
    %522 = arith.negf %521 : vector<8x128xf32>
    %523 = math.exp %522 : vector<8x128xf32>
    %cst_143 = arith.constant 1.000000e+00 : f32
    %524 = vector.broadcast %cst_143 : f32 to vector<8x128xf32>
    %525 = arith.addf %524, %523 : vector<8x128xf32>
    %526 = arith.divf %524, %525 : vector<8x128xf32>
    %527 = vector.extract_strided_slice %517 {offsets = [0, 128], sizes = [8, 128], strides = [1, 1]} : vector<8x384xf32> to vector<8x128xf32>
    %528 = vector.extract_strided_slice %518 {offsets = [0, 128], sizes = [8, 128], strides = [1, 1]} : vector<8x384xf32> to vector<8x128xf32>
    %529 = arith.addf %527, %528 : vector<8x128xf32>
    %530 = arith.negf %529 : vector<8x128xf32>
    %531 = math.exp %530 : vector<8x128xf32>
    %cst_144 = arith.constant 1.000000e+00 : f32
    %532 = vector.broadcast %cst_144 : f32 to vector<8x128xf32>
    %533 = arith.addf %532, %531 : vector<8x128xf32>
    %534 = arith.divf %532, %533 : vector<8x128xf32>
    %535 = vector.extract_strided_slice %517 {offsets = [0, 256], sizes = [8, 128], strides = [1, 1]} : vector<8x384xf32> to vector<8x128xf32>
    %536 = vector.extract_strided_slice %518 {offsets = [0, 256], sizes = [8, 128], strides = [1, 1]} : vector<8x384xf32> to vector<8x128xf32>
    %537 = vector.broadcast %126 : vector<1x128xf32> to vector<8x128xf32>
    %538 = arith.addf %536, %537 : vector<8x128xf32>
    %539 = arith.mulf %526, %538 : vector<8x128xf32>
    %540 = arith.addf %535, %539 : vector<8x128xf32>
    %541 = math.tanh %540 : vector<8x128xf32>
    %cst_145 = arith.constant 1.000000e+00 : f32
    %542 = vector.broadcast %cst_145 : f32 to vector<8x128xf32>
    %543 = arith.subf %542, %534 : vector<8x128xf32>
    %544 = arith.mulf %543, %541 : vector<8x128xf32>
    %545 = arith.mulf %534, %516 : vector<8x128xf32>
    %546 = arith.addf %544, %545 : vector<8x128xf32>
    %c0_146 = arith.constant 0 : index
    %c0_147 = arith.constant 0 : index
    %547 = vector.load %arg15[%c0_146, %c0_147] : memref<8x128xf32, #tpu.memory_space<vmem>>, vector<8x128xf32>
    tpu.vector_store %arg15[%c0_146, %c0_147], %546 {strides = array<i32>} : memref<8x128xf32, #tpu.memory_space<vmem>>, vector<8x128xf32>,
    return
  }
  func.func @transform_0(%arg0: i32) -> (i32, i32, i32) {
    %c0_i32 = arith.constant 0 : i32
    %c0_i32_0 = arith.constant 0 : i32
    %c0_i32_1 = arith.constant 0 : i32
    return %arg0, %c0_i32, %c0_i32_0 : i32, i32, i32
  }
  func.func @transform_1(%arg0: i32) -> (i32, i32, i32) {
    %c0_i32 = arith.constant 0 : i32
    %c0_i32_0 = arith.constant 0 : i32
    %c0_i32_1 = arith.constant 0 : i32
    %c0_i32_2 = arith.constant 0 : i32
    return %c0_i32, %c0_i32_0, %c0_i32_1 : i32, i32, i32
  }
  func.func @transform_2(%arg0: i32) -> (i32, i32) {
    %c0_i32 = arith.constant 0 : i32
    %c0_i32_0 = arith.constant 0 : i32
    %c0_i32_1 = arith.constant 0 : i32
    return %c0_i32, %c0_i32_0 : i32, i32
  }
  func.func @transform_3(%arg0: i32) -> (i32, i32, i32) {
    %c0_i32 = arith.constant 0 : i32
    %c0_i32_0 = arith.constant 0 : i32
    %c0_i32_1 = arith.constant 0 : i32
    %c0_i32_2 = arith.constant 0 : i32
    return %c0_i32, %c0_i32_0, %c0_i32_1 : i32, i32, i32
  }
  func.func @transform_4(%arg0: i32) -> (i32, i32) {
    %c0_i32 = arith.constant 0 : i32
    %c0_i32_0 = arith.constant 0 : i32
    %c0_i32_1 = arith.constant 0 : i32
    return %c0_i32, %c0_i32_0 : i32, i32
  }
  func.func @transform_5(%arg0: i32) -> (i32, i32, i32) {
    %c0_i32 = arith.constant 0 : i32
    %c0_i32_0 = arith.constant 0 : i32
    %c0_i32_1 = arith.constant 0 : i32
    %c0_i32_2 = arith.constant 0 : i32
    return %c0_i32, %c0_i32_0, %c0_i32_1 : i32, i32, i32
  }
  func.func @transform_6(%arg0: i32) -> (i32, i32) {
    %c0_i32 = arith.constant 0 : i32
    %c0_i32_0 = arith.constant 0 : i32
    %c0_i32_1 = arith.constant 0 : i32
    return %c0_i32, %c0_i32_0 : i32, i32
  }
  func.func @transform_7(%arg0: i32) -> (i32, i32) {
    %c0_i32 = arith.constant 0 : i32
    %c0_i32_0 = arith.constant 0 : i32
    %c0_i32_1 = arith.constant 0 : i32
    return %c0_i32, %c0_i32_0 : i32, i32
  }
  func.func @transform_8(%arg0: i32) -> (i32, i32) {
    %c0_i32 = arith.constant 0 : i32
    %c0_i32_0 = arith.constant 0 : i32
    %c0_i32_1 = arith.constant 0 : i32
    return %c0_i32, %c0_i32_0 : i32, i32
  }
  func.func @transform_9(%arg0: i32) -> i32 {
    %c0_i32 = arith.constant 0 : i32
    %c0_i32_0 = arith.constant 0 : i32
    return %c0_i32 : i32
  }
  func.func @transform_10(%arg0: i32) -> (i32, i32) {
    %c0_i32 = arith.constant 0 : i32
    %c0_i32_0 = arith.constant 0 : i32
    %c0_i32_1 = arith.constant 0 : i32
    return %c0_i32, %c0_i32_0 : i32, i32
  }
  func.func @transform_11(%arg0: i32) -> (i32, i32) {
    %c0_i32 = arith.constant 0 : i32
    %c0_i32_0 = arith.constant 0 : i32
    %c0_i32_1 = arith.constant 0 : i32
    return %c0_i32, %c0_i32_0 : i32, i32
  }
  func.func @transform_12(%arg0: i32) -> (i32, i32) {
    %c0_i32 = arith.constant 0 : i32
    %c0_i32_0 = arith.constant 0 : i32
    %c0_i32_1 = arith.constant 0 : i32
    return %c0_i32, %c0_i32_0 : i32, i32
  }
  func.func @transform_13(%arg0: i32) -> (i32, i32) {
    %c0_i32 = arith.constant 0 : i32
    %c0_i32_0 = arith.constant 0 : i32
    %c0_i32_1 = arith.constant 0 : i32
    return %c0_i32, %c0_i32_0 : i32, i32
  }
  func.func @transform_14(%arg0: i32) -> (i32, i32) {
    %c0_i32 = arith.constant 0 : i32
    %c0_i32_0 = arith.constant 0 : i32
    return %arg0, %c0_i32 : i32, i32
  }
}

</mosaic_0001>

<llo_original>
// kernel: qcnn_forward.1
$region0: #{qcnn_forward.1}
  #allocation0 [shape = 'u32[]', space=smem, size = 0x4, offset = 0x4, fixed_abs, tag = 'smem constant byte address 0x4 - core index']
  #allocation1 [shape = 'u32[144,128]{1,0:T(1,128)}', space=vmem, size = 0x12000, scoped, tag = 'internal scratch']
  %s0 = inlined_call_operand.vmem [shape: f32[1,112,300], index: 0, kind: input, shape index: {}]
  %s1 = inlined_call_operand.vmem [shape: f32[2,300,300], index: 1, kind: input, shape index: {}]
  %s2 = inlined_call_operand.vmem [shape: f32[1,300], index: 2, kind: input, shape index: {}]
  %s3 = inlined_call_operand.vmem [shape: f32[3,300,300], index: 3, kind: input, shape index: {}]
  %s4 = inlined_call_operand.vmem [shape: f32[1,300], index: 4, kind: input, shape index: {}]
  %s5 = inlined_call_operand.hbm [shape: f32[3,300,300], index: 5, kind: input, shape index: {}]
  %s6 = inlined_call_operand.vmem [shape: f32[1,300], index: 6, kind: input, shape index: {}]
  %s7 = inlined_call_operand.vmem [shape: f32[300,128], index: 7, kind: input, shape index: {}]
  %s8 = inlined_call_operand.vmem [shape: f32[1,128], index: 8, kind: input, shape index: {}]
  %s9 = inlined_call_operand.vmem [shape: f32[4], index: 9, kind: input, shape index: {}]
  %s10 = inlined_call_operand.vmem [shape: f32[300,384], index: 10, kind: input, shape index: {}]
  %s11 = inlined_call_operand.vmem [shape: f32[1,384], index: 11, kind: input, shape index: {}]
  %s12 = inlined_call_operand.vmem [shape: f32[128,384], index: 12, kind: input, shape index: {}]
  %s13 = inlined_call_operand.vmem [shape: f32[1,128], index: 13, kind: input, shape index: {}]
  %s14 = inlined_call_operand.vmem [shape: f32[8,128], index: 14, kind: output, shape index: {}]
  %s15 = sld [smem:[#allocation0]]
  $region74: #{qcnn_forward.1} parent=0
    _
  %s17 = ssub.s32 1, %s15
  %s18 = scalar_select 0, %s17, %s15
  $region1: #{qcnn_forward.1} parent=0
    #allocation2 [shape = 'u8[1400832]{0}', space=vmem, size = 0x156000, scoped, tag = 'input window, operand 5, single buffered']
    #allocation3 [shape = 's32[1]{0}', space=sflag, size = 0x4, scoped, tag = 'scoped memory for qcnn_forward.1']
    #allocation4 [shape = 's32[1]{0}', space=sflag, size = 0x4, scoped, tag = 'scoped memory for qcnn_forward.1']
    #allocation5 [shape = 'u8[512]{0}', space=smem, size = 0x200, scoped, tag = 'input window, operand 9, single buffered']
    %19 = vsyncpa [#allocation3], 0
    %20 = vsyncpa [#allocation4], 0
    // Predicated region
    $region2: #{qcnn_forward.1} parent=1 // pred_check
      _
    $region3: #{qcnn_forward.1} parent=1 // pred_check_branch
      %22 = sbr.rel (0) target = $region5
    $region4: #{qcnn_forward.1} parent=1 // pred_region
      _
    $region5: #{qcnn_forward.1} parent=1 // pred_fallthru
      _
    // Predicated region
    $region6: #{qcnn_forward.1} parent=1 // pred_check
      _
    $region7: #{qcnn_forward.1} parent=1 // pred_check_branch
      %24 = sbr.rel (0) target = $region9
    $region8: #{qcnn_forward.1} parent=1 // pred_region
      _
    $region9: #{qcnn_forward.1} parent=1 // pred_fallthru
      _
    // Predicated region
    $region10: #{qcnn_forward.1} parent=1 // pred_check
      _
    $region11: #{qcnn_forward.1} parent=1 // pred_check_branch
      %26 = sbr.rel (0) target = $region13
    $region12: #{qcnn_forward.1} parent=1 // pred_region
      _
    $region13: #{qcnn_forward.1} parent=1 // pred_fallthru
      _
    // Predicated region
    $region14: #{qcnn_forward.1} parent=1 // pred_check
      _
    $region15: #{qcnn_forward.1} parent=1 // pred_check_branch
      %28 = sbr.rel (0) target = $region17
    $region16: #{qcnn_forward.1} parent=1 // pred_region
      _
    $region17: #{qcnn_forward.1} parent=1 // pred_fallthru
      _
    // Predicated region
    $region18: #{qcnn_forward.1} parent=1 // pred_check
      _
    $region19: #{qcnn_forward.1} parent=1 // pred_check_branch
      %30 = sbr.rel (0) target = $region21
    $region20: #{qcnn_forward.1} parent=1 // pred_region
      _
    $region21: #{qcnn_forward.1} parent=1 // pred_fallthru
      _
    // Predicated region
    $region22: #{qcnn_forward.1} parent=1 // pred_check
      _
    $region23: #{qcnn_forward.1} parent=1 // pred_check_branch
      %32 = sbr.rel (0) target = $region25
    $region24: #{qcnn_forward.1} parent=1 // pred_region
      %s34 = ssub.s32 43776, 43776
      %35 = vsyncadd [#allocation3], %s34
      %s36 = sshll.u32 [#allocation2], 4
      %s37 = int_to_ptr.vmem [resolvable:$true] %s36
      %42 = dma.hbm_to_vmem [thread:$0]  %s5, 43776, %s37, [#allocation3], 384, 384, 24
    $region25: #{qcnn_forward.1} parent=1 // pred_fallthru
      _
    // Predicated region
    $region26: #{qcnn_forward.1} parent=1 // pred_check
      _
    $region27: #{qcnn_forward.1} parent=1 // pred_check_branch
      %44 = sbr.rel (0) target = $region29
    $region28: #{qcnn_forward.1} parent=1 // pred_region
      _
    $region29: #{qcnn_forward.1} parent=1 // pred_fallthru
      _
    // Predicated region
    $region30: #{qcnn_forward.1} parent=1 // pred_check
      _
    $region31: #{qcnn_forward.1} parent=1 // pred_check_branch
      %46 = sbr.rel (0) target = $region33
    $region32: #{qcnn_forward.1} parent=1 // pred_region
      _
    $region33: #{qcnn_forward.1} parent=1 // pred_fallthru
      _
    // Predicated region
    $region34: #{qcnn_forward.1} parent=1 // pred_check
      _
    $region35: #{qcnn_forward.1} parent=1 // pred_check_branch
      %48 = sbr.rel (0) target = $region37
    $region36: #{qcnn_forward.1} parent=1 // pred_region
      _
    $region37: #{qcnn_forward.1} parent=1 // pred_fallthru
      _
    // Predicated region
    $region38: #{qcnn_forward.1} parent=1 // pred_check
      _
    $region39: #{qcnn_forward.1} parent=1 // pred_check_branch
      %50 = sbr.rel (0) target = $region41
    $region40: #{qcnn_forward.1} parent=1 // pred_region
      %s52 = ssub.s32 16, 16
      %53 = vsyncadd [#allocation4], %s52
      %s55 = sshll.u32 %s9, 4
      %s56 = int_to_ptr.vmem [resolvable:$true] %s55
      %58 = dma.vmem_to_smem %s56, 16, [#allocation5], [#allocation4]
    $region41: #{qcnn_forward.1} parent=1 // pred_fallthru
      _
    // Predicated region
    $region42: #{qcnn_forward.1} parent=1 // pred_check
      _
    $region43: #{qcnn_forward.1} parent=1 // pred_check_branch
      %60 = sbr.rel (0) target = $region45
    $region44: #{qcnn_forward.1} parent=1 // pred_region
      _
    $region45: #{qcnn_forward.1} parent=1 // pred_fallthru
      _
    // Predicated region
    $region46: #{qcnn_forward.1} parent=1 // pred_check
      _
    $region47: #{qcnn_forward.1} parent=1 // pred_check_branch
      %62 = sbr.rel (0) target = $region49
    $region48: #{qcnn_forward.1} parent=1 // pred_region
      _
    $region49: #{qcnn_forward.1} parent=1 // pred_fallthru
      _
    // Predicated region
    $region50: #{qcnn_forward.1} parent=1 // pred_check
      _
    $region51: #{qcnn_forward.1} parent=1 // pred_check_branch
      %64 = sbr.rel (0) target = $region53
    $region52: #{qcnn_forward.1} parent=1 // pred_region
      _
    $region53: #{qcnn_forward.1} parent=1 // pred_fallthru
      _
    // Predicated region
    $region54: #{qcnn_forward.1} parent=1 // pred_check
      _
    $region55: #{qcnn_forward.1} parent=1 // pred_check_branch
      %66 = sbr.rel (0) target = $region57
    $region56: #{qcnn_forward.1} parent=1 // pred_region
      _
    $region57: #{qcnn_forward.1} parent=1 // pred_fallthru
      _
    // Predicated region
    $region58: #{qcnn_forward.1} parent=1 // pred_check
      _
    $region59: #{qcnn_forward.1} parent=1 // pred_check_branch
      %68 = sbr.rel (0) target = $region61
    $region60: #{qcnn_forward.1} parent=1 // pred_region
      %69 = dma.done [#allocation3], 43776
    $region61: #{qcnn_forward.1} parent=1 // pred_fallthru
      _
    // Predicated region
    $region62: #{qcnn_forward.1} parent=1 // pred_check
      _
    $region63: #{qcnn_forward.1} parent=1 // pred_check_branch
      %71 = sbr.rel (0) target = $region65
    $region64: #{qcnn_forward.1} parent=1 // pred_region
      %72 = dma.done [#allocation4], 16
    $region65: #{qcnn_forward.1} parent=1 // pred_fallthru
      _
    %73 = sfence
    %v74 = vld [vmem:[%s0] sm:$0xff]
    %v75 = vld [vmem:[%s0 + $0x8] sm:$0xff]
    %v76 = vld [vmem:[%s0 + $0x10] sm:$0xff]
    %v77 = vld [vmem:[%s0 + $0x18] sm:$0xff]
    %v78 = vld [vmem:[%s0 + $0x20] sm:$0xff]
    %v79 = vld [vmem:[%s0 + $0x28] sm:$0xff]
    %v80 = vld [vmem:[%s0 + $0x30] sm:$0xff]
    %v81 = vld [vmem:[%s0 + $0x38] sm:$0xff]
    %v82 = vld [vmem:[%s0 + $0x40] sm:$0xff]
    %v83 = vld [vmem:[%s0 + $0x48] sm:$0xff]
    %v84 = vld [vmem:[%s0 + $0x50] sm:$0xff]
    %v85 = vld [vmem:[%s0 + $0x58] sm:$0xff]
    %v86 = vld [vmem:[%s0 + $0x60] sm:$0xff]
    %v87 = vld [vmem:[%s0 + $0x68] sm:$0xff]
    %v88 = vld [vmem:[%s0 + $0x70] sm:$0xff]
    %v89 = vld [vmem:[%s0 + $0x78] sm:$0xff]
    %v90 = vld [vmem:[%s0 + $0x80] sm:$0xff]
    %v91 = vld [vmem:[%s0 + $0x88] sm:$0xff]
    %v92 = vld [vmem:[%s0 + $0x90] sm:$0xff]
    %v93 = vld [vmem:[%s0 + $0x98] sm:$0xff]
    %v94 = vld [vmem:[%s0 + $0xa0] sm:$0xff]
    %v95 = vld [vmem:[%s0 + $0xa8] sm:$0xff]
    %v96 = vld [vmem:[%s0 + $0xb0] sm:$0xff]
    %v97 = vld [vmem:[%s0 + $0xb8] sm:$0xff]
    %v98 = vld [vmem:[%s0 + $0xc0] sm:$0xff]
    %v99 = vld [vmem:[%s0 + $0xc8] sm:$0xff]
    %v100 = vld [vmem:[%s0 + $0xd0] sm:$0xff]
    %v101 = vld [vmem:[%s0 + $0xd8] sm:$0xff]
    %v102 = vld [vmem:[%s0 + $0xe0] sm:$0xff]
    %v103 = vld [vmem:[%s0 + $0xe8] sm:$0xff]
    %v104 = vld [vmem:[%s0 + $0xf0] sm:$0xff]
    %v105 = vld [vmem:[%s0 + $0xf8] sm:$0xff]
    %v106 = vld [vmem:[%s0 + $0x100] sm:$0xff]
    %v107 = vld [vmem:[%s0 + $0x108] sm:$0xff]
    %v108 = vld [vmem:[%s0 + $0x110] sm:$0xff]
    %v109 = vld [vmem:[%s0 + $0x118] sm:$0xff]
    %v110 = vld [vmem:[%s0 + $0x120] sm:$0xff]
    %v111 = vld [vmem:[%s0 + $0x128] sm:$0xff]
    %v112 = vld [vmem:[%s0 + $0x130] sm:$0xff]
    %v113 = vld [vmem:[%s0 + $0x138] sm:$0xff]
    %v114 = vld [vmem:[%s0 + $0x140] sm:$0xff]
    %v115 = vld [vmem:[%s0 + $0x148] sm:$0xff]
    %v116 = vld [vmem:[%s1] sm:$0xff]
    %v117 = vld [vmem:[%s1 + $0x8] sm:$0xff]
    %v118 = vld [vmem:[%s1 + $0x10] sm:$0xff]
    %v119 = vld [vmem:[%s1 + $0x18] sm:$0xff]
    %v120 = vld [vmem:[%s1 + $0x20] sm:$0xff]
    %v121 = vld [vmem:[%s1 + $0x28] sm:$0xff]
    %v122 = vld [vmem:[%s1 + $0x30] sm:$0xff]
    %v123 = vld [vmem:[%s1 + $0x38] sm:$0xff]
    %v124 = vld [vmem:[%s1 + $0x40] sm:$0xff]
    %v125 = vld [vmem:[%s1 + $0x48] sm:$0xff]
    %v126 = vld [vmem:[%s1 + $0x50] sm:$0xff]
    %v127 = vld [vmem:[%s1 + $0x58] sm:$0xff]
    %v128 = vld [vmem:[%s1 + $0x60] sm:$0xff]
    %v129 = vld [vmem:[%s1 + $0x68] sm:$0xff]
    %v130 = vld [vmem:[%s1 + $0x70] sm:$0xff]
    %v131 = vld [vmem:[%s1 + $0x78] sm:$0xff]
    %v132 = vld [vmem:[%s1 + $0x80] sm:$0xff]
    %v133 = vld [vmem:[%s1 + $0x88] sm:$0xff]
    %v134 = vld [vmem:[%s1 + $0x90] sm:$0xff]
    %v135 = vld [vmem:[%s1 + $0x98] sm:$0xff]
    %v136 = vld [vmem:[%s1 + $0xa0] sm:$0xff]
    %v137 = vld [vmem:[%s1 + $0xa8] sm:$0xff]
    %v138 = vld [vmem:[%s1 + $0xb0] sm:$0xff]
    %v139 = vld [vmem:[%s1 + $0xb8] sm:$0xff]
    %v140 = vld [vmem:[%s1 + $0xc0] sm:$0xff]
    %v141 = vld [vmem:[%s1 + $0xc8] sm:$0xff]
    %v142 = vld [vmem:[%s1 + $0xd0] sm:$0xff]
    %v143 = vld [vmem:[%s1 + $0xd8] sm:$0xff]
    %v144 = vld [vmem:[%s1 + $0xe0] sm:$0xff]
    %v145 = vld [vmem:[%s1 + $0xe8] sm:$0xff]
    %v146 = vld [vmem:[%s1 + $0xf0] sm:$0xff]
    %v147 = vld [vmem:[%s1 + $0xf8] sm:$0xff]
    %v148 = vld [vmem:[%s1 + $0x100] sm:$0xff]
    %v149 = vld [vmem:[%s1 + $0x108] sm:$0xff]
    %v150 = vld [vmem:[%s1 + $0x110] sm:$0xff]
    %v151 = vld [vmem:[%s1 + $0x118] sm:$0xff]
    %v152 = vld [vmem:[%s1 + $0x120] sm:$0xff]
    %v153 = vld [vmem:[%s1 + $0x128] sm:$0xff]
    %v154 = vld [vmem:[%s1 + $0x130] sm:$0xff]
    %v155 = vld [vmem:[%s1 + $0x138] sm:$0xff]
    %v156 = vld [vmem:[%s1 + $0x140] sm:$0xff]
    %v157 = vld [vmem:[%s1 + $0x148] sm:$0xff]
    %v158 = vld [vmem:[%s1 + $0x150] sm:$0xff]
    %v159 = vld [vmem:[%s1 + $0x158] sm:$0xff]
    %v160 = vld [vmem:[%s1 + $0x160] sm:$0xff]
    %v161 = vld [vmem:[%s1 + $0x168] sm:$0xff]
    %v162 = vld [vmem:[%s1 + $0x170] sm:$0xff]
    %v163 = vld [vmem:[%s1 + $0x178] sm:$0xff]
    %v164 = vld [vmem:[%s1 + $0x180] sm:$0xff]
    %v165 = vld [vmem:[%s1 + $0x188] sm:$0xff]
    %v166 = vld [vmem:[%s1 + $0x190] sm:$0xff]
    %v167 = vld [vmem:[%s1 + $0x198] sm:$0xff]
    %v168 = vld [vmem:[%s1 + $0x1a0] sm:$0xff]
    %v169 = vld [vmem:[%s1 + $0x1a8] sm:$0xff]
    %v170 = vld [vmem:[%s1 + $0x1b0] sm:$0xff]
    %v171 = vld [vmem:[%s1 + $0x1b8] sm:$0xff]
    %v172 = vld [vmem:[%s1 + $0x1c0] sm:$0xff]
    %v173 = vld [vmem:[%s1 + $0x1c8] sm:$0xff]
    %v174 = vld [vmem:[%s1 + $0x1d0] sm:$0xff]
    %v175 = vld [vmem:[%s1 + $0x1d8] sm:$0xff]
    %v176 = vld [vmem:[%s1 + $0x1e0] sm:$0xff]
    %v177 = vld [vmem:[%s1 + $0x1e8] sm:$0xff]
    %v178 = vld [vmem:[%s1 + $0x1f0] sm:$0xff]
    %v179 = vld [vmem:[%s1 + $0x1f8] sm:$0xff]
    %v180 = vld [vmem:[%s1 + $0x200] sm:$0xff]
    %v181 = vld [vmem:[%s1 + $0x208] sm:$0xff]
    %v182 = vld [vmem:[%s1 + $0x210] sm:$0xff]
    %v183 = vld [vmem:[%s1 + $0x218] sm:$0xff]
    %v184 = vld [vmem:[%s1 + $0x220] sm:$0xff]
    %v185 = vld [vmem:[%s1 + $0x228] sm:$0xff]
    %v186 = vld [vmem:[%s1 + $0x230] sm:$0xff]
    %v187 = vld [vmem:[%s1 + $0x238] sm:$0xff]
    %v188 = vld [vmem:[%s1 + $0x240] sm:$0xff]
    %v189 = vld [vmem:[%s1 + $0x248] sm:$0xff]
    %v190 = vld [vmem:[%s1 + $0x250] sm:$0xff]
    %v191 = vld [vmem:[%s1 + $0x258] sm:$0xff]
    %v192 = vld [vmem:[%s1 + $0x260] sm:$0xff]
    %v193 = vld [vmem:[%s1 + $0x268] sm:$0xff]
    %v194 = vld [vmem:[%s1 + $0x270] sm:$0xff]
    %v195 = vld [vmem:[%s1 + $0x278] sm:$0xff]
    %v196 = vld [vmem:[%s1 + $0x280] sm:$0xff]
    %v197 = vld [vmem:[%s1 + $0x288] sm:$0xff]
    %v198 = vld [vmem:[%s1 + $0x290] sm:$0xff]
    %v199 = vld [vmem:[%s1 + $0x298] sm:$0xff]
    %v200 = vld [vmem:[%s1 + $0x2a0] sm:$0xff]
    %v201 = vld [vmem:[%s1 + $0x2a8] sm:$0xff]
    %v202 = vld [vmem:[%s1 + $0x2b0] sm:$0xff]
    %v203 = vld [vmem:[%s1 + $0x2b8] sm:$0xff]
    %v204 = vld [vmem:[%s1 + $0x2c0] sm:$0xff]
    %v205 = vld [vmem:[%s1 + $0x2c8] sm:$0xff]
    %v206 = vld [vmem:[%s1 + $0x2d0] sm:$0xff]
    %v207 = vld [vmem:[%s1 + $0x2d8] sm:$0xff]
    %v208 = vld [vmem:[%s1 + $0x2e0] sm:$0xff]
    %v209 = vld [vmem:[%s1 + $0x2e8] sm:$0xff]
    %v210 = vld [vmem:[%s1 + $0x2f0] sm:$0xff]
    %v211 = vld [vmem:[%s1 + $0x2f8] sm:$0xff]
    %v212 = vld [vmem:[%s1 + $0x300] sm:$0xff]
    %v213 = vld [vmem:[%s1 + $0x308] sm:$0xff]
    %v214 = vld [vmem:[%s1 + $0x310] sm:$0xff]
    %v215 = vld [vmem:[%s1 + $0x318] sm:$0xff]
    %v216 = vld [vmem:[%s1 + $0x320] sm:$0xff]
    %v217 = vld [vmem:[%s1 + $0x328] sm:$0xff]
    %v218 = vld [vmem:[%s1 + $0x330] sm:$0xff]
    %v219 = vld [vmem:[%s1 + $0x338] sm:$0xff]
    %v220 = vld [vmem:[%s1 + $0x340] sm:$0xff]
    %v221 = vld [vmem:[%s1 + $0x348] sm:$0xff]
    %v222 = vld [vmem:[%s1 + $0x350] sm:$0xff]
    %v223 = vld [vmem:[%s1 + $0x358] sm:$0xff]
    %v224 = vld [vmem:[%s1 + $0x360] sm:$0xff]
    %v225 = vld [vmem:[%s1 + $0x368] sm:$0xff]
    %v226 = vld [vmem:[%s1 + $0x370] sm:$0xff]
    %v227 = vld [vmem:[%s1 + $0x378] sm:$0xf]
    %v228 = vld [vmem:[%s1 + $0x380] sm:$0xf]
    %v229 = vld [vmem:[%s1 + $0x388] sm:$0xf]
    %s230 = scalar_lea.vmem %s1, 912
    %v231 = vld [vmem:[%s230] sm:$0xff]
    %v232 = vld [vmem:[%s230 + $0x8] sm:$0xff]
    %v233 = vld [vmem:[%s230 + $0x10] sm:$0xff]
    %v234 = vld [vmem:[%s230 + $0x18] sm:$0xff]
    %v235 = vld [vmem:[%s230 + $0x20] sm:$0xff]
    %v236 = vld [vmem:[%s230 + $0x28] sm:$0xff]
    %v237 = vld [vmem:[%s230 + $0x30] sm:$0xff]
    %v238 = vld [vmem:[%s230 + $0x38] sm:$0xff]
    %v239 = vld [vmem:[%s230 + $0x40] sm:$0xff]
    %v240 = vld [vmem:[%s230 + $0x48] sm:$0xff]
    %v241 = vld [vmem:[%s230 + $0x50] sm:$0xff]
    %v242 = vld [vmem:[%s230 + $0x58] sm:$0xff]
    %v243 = vld [vmem:[%s230 + $0x60] sm:$0xff]
    %v244 = vld [vmem:[%s230 + $0x68] sm:$0xff]
    %v245 = vld [vmem:[%s230 + $0x70] sm:$0xff]
    %v246 = vld [vmem:[%s230 + $0x78] sm:$0xff]
    %v247 = vld [vmem:[%s230 + $0x80] sm:$0xff]
    %v248 = vld [vmem:[%s230 + $0x88] sm:$0xff]
    %v249 = vld [vmem:[%s230 + $0x90] sm:$0xff]
    %v250 = vld [vmem:[%s230 + $0x98] sm:$0xff]
    %v251 = vld [vmem:[%s230 + $0xa0] sm:$0xff]
    %v252 = vld [vmem:[%s230 + $0xa8] sm:$0xff]
    %v253 = vld [vmem:[%s230 + $0xb0] sm:$0xff]
    %v254 = vld [vmem:[%s230 + $0xb8] sm:$0xff]
    %v255 = vld [vmem:[%s230 + $0xc0] sm:$0xff]
    %v256 = vld [vmem:[%s230 + $0xc8] sm:$0xff]
    %v257 = vld [vmem:[%s230 + $0xd0] sm:$0xff]
    %v258 = vld [vmem:[%s230 + $0xd8] sm:$0xff]
    %v259 = vld [vmem:[%s230 + $0xe0] sm:$0xff]
    %v260 = vld [vmem:[%s230 + $0xe8] sm:$0xff]
    %v261 = vld [vmem:[%s230 + $0xf0] sm:$0xff]
    %v262 = vld [vmem:[%s230 + $0xf8] sm:$0xff]
    %v263 = vld [vmem:[%s230 + $0x100] sm:$0xff]
    %v264 = vld [vmem:[%s230 + $0x108] sm:$0xff]
    %v265 = vld [vmem:[%s230 + $0x110] sm:$0xff]
    %v266 = vld [vmem:[%s230 + $0x118] sm:$0xff]
    %v267 = vld [vmem:[%s230 + $0x120] sm:$0xff]
    %v268 = vld [vmem:[%s230 + $0x128] sm:$0xff]
    %v269 = vld [vmem:[%s230 + $0x130] sm:$0xff]
    %v270 = vld [vmem:[%s230 + $0x138] sm:$0xff]
    %v271 = vld [vmem:[%s230 + $0x140] sm:$0xff]
    %v272 = vld [vmem:[%s230 + $0x148] sm:$0xff]
    %v273 = vld [vmem:[%s230 + $0x150] sm:$0xff]
    %v274 = vld [vmem:[%s230 + $0x158] sm:$0xff]
    %v275 = vld [vmem:[%s230 + $0x160] sm:$0xff]
    %v276 = vld [vmem:[%s230 + $0x168] sm:$0xff]
    %v277 = vld [vmem:[%s230 + $0x170] sm:$0xff]
    %v278 = vld [vmem:[%s230 + $0x178] sm:$0xff]
    %v279 = vld [vmem:[%s230 + $0x180] sm:$0xff]
    %v280 = vld [vmem:[%s230 + $0x188] sm:$0xff]
    %v281 = vld [vmem:[%s230 + $0x190] sm:$0xff]
    %v282 = vld [vmem:[%s230 + $0x198] sm:$0xff]
    %v283 = vld [vmem:[%s230 + $0x1a0] sm:$0xff]
    %v284 = vld [vmem:[%s230 + $0x1a8] sm:$0xff]
    %v285 = vld [vmem:[%s230 + $0x1b0] sm:$0xff]
    %v286 = vld [vmem:[%s230 + $0x1b8] sm:$0xff]
    %v287 = vld [vmem:[%s230 + $0x1c0] sm:$0xff]
    %v288 = vld [vmem:[%s230 + $0x1c8] sm:$0xff]
    %v289 = vld [vmem:[%s230 + $0x1d0] sm:$0xff]
    %v290 = vld [vmem:[%s230 + $0x1d8] sm:$0xff]
    %v291 = vld [vmem:[%s230 + $0x1e0] sm:$0xff]
    %v292 = vld [vmem:[%s230 + $0x1e8] sm:$0xff]
    %v293 = vld [vmem:[%s230 + $0x1f0] sm:$0xff]
    %v294 = vld [vmem:[%s230 + $0x1f8] sm:$0xff]
    %v295 = vld [vmem:[%s230 + $0x200] sm:$0xff]
    %v296 = vld [vmem:[%s230 + $0x208] sm:$0xff]
    %v297 = vld [vmem:[%s230 + $0x210] sm:$0xff]
    %v298 = vld [vmem:[%s230 + $0x218] sm:$0xff]
    %v299 = vld [vmem:[%s230 + $0x220] sm:$0xff]
    %v300 = vld [vmem:[%s230 + $0x228] sm:$0xff]
    %v301 = vld [vmem:[%s230 + $0x230] sm:$0xff]
    %v302 = vld [vmem:[%s230 + $0x238] sm:$0xff]
    %v303 = vld [vmem:[%s230 + $0x240] sm:$0xff]
    %v304 = vld [vmem:[%s230 + $0x248] sm:$0xff]
    %v305 = vld [vmem:[%s230 + $0x250] sm:$0xff]
    %v306 = vld [vmem:[%s230 + $0x258] sm:$0xff]
    %v307 = vld [vmem:[%s230 + $0x260] sm:$0xff]
    %v308 = vld [vmem:[%s230 + $0x268] sm:$0xff]
    %v309 = vld [vmem:[%s230 + $0x270] sm:$0xff]
    %v310 = vld [vmem:[%s230 + $0x278] sm:$0xff]
    %v311 = vld [vmem:[%s230 + $0x280] sm:$0xff]
    %v312 = vld [vmem:[%s230 + $0x288] sm:$0xff]
    %v313 = vld [vmem:[%s230 + $0x290] sm:$0xff]
    %v314 = vld [vmem:[%s230 + $0x298] sm:$0xff]
    %v315 = vld [vmem:[%s230 + $0x2a0] sm:$0xff]
    %v316 = vld [vmem:[%s230 + $0x2a8] sm:$0xff]
    %v317 = vld [vmem:[%s230 + $0x2b0] sm:$0xff]
    %v318 = vld [vmem:[%s230 + $0x2b8] sm:$0xff]
    %v319 = vld [vmem:[%s230 + $0x2c0] sm:$0xff]
    %v320 = vld [vmem:[%s230 + $0x2c8] sm:$0xff]
    %v321 = vld [vmem:[%s230 + $0x2d0] sm:$0xff]
    %v322 = vld [vmem:[%s230 + $0x2d8] sm:$0xff]
    %v323 = vld [vmem:[%s230 + $0x2e0] sm:$0xff]
    %v324 = vld [vmem:[%s230 + $0x2e8] sm:$0xff]
    %v325 = vld [vmem:[%s230 + $0x2f0] sm:$0xff]
    %v326 = vld [vmem:[%s230 + $0x2f8] sm:$0xff]
    %v327 = vld [vmem:[%s230 + $0x300] sm:$0xff]
    %v328 = vld [vmem:[%s230 + $0x308] sm:$0xff]
    %v329 = vld [vmem:[%s230 + $0x310] sm:$0xff]
    %v330 = vld [vmem:[%s230 + $0x318] sm:$0xff]
    %v331 = vld [vmem:[%s230 + $0x320] sm:$0xff]
    %v332 = vld [vmem:[%s230 + $0x328] sm:$0xff]
    %v333 = vld [vmem:[%s230 + $0x330] sm:$0xff]
    %v334 = vld [vmem:[%s230 + $0x338] sm:$0xff]
    %v335 = vld [vmem:[%s230 + $0x340] sm:$0xff]
    %v336 = vld [vmem:[%s230 + $0x348] sm:$0xff]
    %v337 = vld [vmem:[%s230 + $0x350] sm:$0xff]
    %v338 = vld [vmem:[%s230 + $0x358] sm:$0xff]
    %v339 = vld [vmem:[%s230 + $0x360] sm:$0xff]
    %v340 = vld [vmem:[%s230 + $0x368] sm:$0xff]
    %v341 = vld [vmem:[%s230 + $0x370] sm:$0xff]
    %v342 = vld [vmem:[%s230 + $0x378] sm:$0xf]
    %v343 = vld [vmem:[%s230 + $0x380] sm:$0xf]
    %v344 = vld [vmem:[%s230 + $0x388] sm:$0xf]
    %vm345 = vcmask 359424
    %v347 = vsel %vm345, %v97, 0
    %v350 = vsel %vm345, %v100, 0
    %v353 = vsel %vm345, %v103, 0
    %v356 = vsel %vm345, %v106, 0
    %v359 = vsel %vm345, %v109, 0
    %v362 = vsel %vm345, %v112, 0
    %v365 = vsel %vm345, %v115, 0
    %vm367 = vcmask 1043456
    %v369 = vsel %vm367, %v342, 0
    %v372 = vsel %vm367, %v343, 0
    %v375 = vsel %vm367, %v344, 0
    %377 = vmatprep.subr.mxu0 %v232
    %378 = vmatpush1.msra.mxu0 %v231
    %379 = vmatprep.subr.mxu0 %v235
    %380 = vmatpush1.msra.mxu0 %v234
    %381 = vmatprep.subr.mxu0 %v238
    %382 = vmatpush1.msra.mxu0 %v237
    %383 = vmatprep.subr.mxu0 %v241
    %384 = vmatpush1.msra.mxu0 %v240
    %385 = vmatprep.subr.mxu0 %v244
    %386 = vmatpush1.msra.mxu0 %v243
    %387 = vmatprep.subr.mxu0 %v247
    %388 = vmatpush1.msra.mxu0 %v246
    %389 = vmatprep.subr.mxu0 %v250
    %390 = vmatpush1.msra.mxu0 %v249
    %391 = vmatprep.subr.mxu0 %v253
    %392 = vmatpush1.msra.mxu0 %v252
    %393 = vmatprep.subr.mxu0 %v256
    %394 = vmatpush1.msra.mxu0 %v255
    %395 = vmatprep.subr.mxu0 %v259
    %396 = vmatpush1.msra.mxu0 %v258
    %397 = vmatprep.subr.mxu0 %v262
    %398 = vmatpush1.msra.mxu0 %v261
    %399 = vmatprep.subr.mxu0 %v265
    %400 = vmatpush1.msra.mxu0 %v264
    %401 = vmatprep.subr.mxu0 %v268
    %402 = vmatpush1.msra.mxu0 %v267
    %403 = vmatprep.subr.mxu0 %v271
    %404 = vmatpush1.msra.mxu0 %v270
    %405 = vmatprep.subr.mxu0 %v274
    %406 = vmatpush1.msra.mxu0 %v273
    %407 = vmatprep.subr.mxu0 %v277
    %408 = vmatpush1.msra.mxu0 %v276
    %409 = vmatprep.subr.mxu0 %v280
    %410 = vmatpush1.msra.mxu0 %v279
    %411 = vmatprep.subr.mxu0 %v283
    %412 = vmatpush1.msra.mxu0 %v282
    %413 = vmatprep.subr.mxu0 %v286
    %414 = vmatpush1.msra.mxu0 %v285
    %415 = vmatprep.subr.mxu0 %v289
    %416 = vmatpush1.msra.mxu0 %v288
    %417 = vmatprep.subr.mxu0 %v292
    %418 = vmatpush1.msra.mxu0 %v291
    %419 = vmatprep.subr.mxu0 %v295
    %420 = vmatpush1.msra.mxu0 %v294
    %421 = vmatprep.subr.mxu0 %v298
    %422 = vmatpush1.msra.mxu0 %v297
    %423 = vmatprep.subr.mxu0 %v301
    %424 = vmatpush1.msra.mxu0 %v300
    %425 = vmatprep.subr.mxu0 %v304
    %426 = vmatpush1.msra.mxu0 %v303
    %427 = vmatprep.subr.mxu0 %v307
    %428 = vmatpush1.msra.mxu0 %v306
    %429 = vmatprep.subr.mxu0 %v310
    %430 = vmatpush1.msra.mxu0 %v309
    %431 = vmatprep.subr.mxu0 %v313
    %432 = vmatpush1.msra.mxu0 %v312
    %433 = vmatprep.subr.mxu0 %v316
    %434 = vmatpush1.msra.mxu0 %v315
    %435 = vmatprep.subr.mxu0 %v319
    %436 = vmatpush1.msra.mxu0 %v318
    %437 = vmatprep.subr.mxu0 %v322
    %438 = vmatpush1.msra.mxu0 %v321
    %439 = vmatprep.subr.mxu0 %v325
    %440 = vmatpush1.msra.mxu0 %v324
    %441 = vmatprep.mubr.f32.mxu0 %v96
    %442 = vmatmul.mubr.f32.gmra.mrb[0].mxu0 %v95
    %v443 = vpop.f32.mrb[0].mxu0
    %v444 = vadd.f32 0.0, %v443
    %v445 = vpop.f32.mrb[0].mxu0
    %v446 = vadd.f32 0.0, %v445
    %447 = vmatprep.mubr.f32.mxu0 %v99
    %448 = vmatmul.mubr.f32.gmra.mrb[0].mxu0 %v98
    %v449 = vpop.f32.mrb[0].mxu0
    %v450 = vadd.f32 0.0, %v449
    %v451 = vpop.f32.mrb[0].mxu0
    %v452 = vadd.f32 0.0, %v451
    %453 = vmatprep.mubr.f32.mxu0 %v102
    %454 = vmatmul.mubr.f32.gmra.mrb[0].mxu0 %v101
    %v455 = vpop.f32.mrb[0].mxu0
    %v456 = vadd.f32 0.0, %v455
    %v457 = vpop.f32.mrb[0].mxu0
    %v458 = vadd.f32 0.0, %v457
    %459 = vmatprep.mubr.f32.mxu0 %v105
    %460 = vmatmul.mubr.f32.gmra.mrb[0].mxu0 %v104
    %v461 = vpop.f32.mrb[0].mxu0
    %v462 = vadd.f32 0.0, %v461
    %v463 = vpop.f32.mrb[0].mxu0
    %v464 = vadd.f32 0.0, %v463
    %465 = vmatprep.mubr.f32.mxu0 %v108
    %466 = vmatmul.mubr.f32.gmra.mrb[0].mxu0 %v107
    %v467 = vpop.f32.mrb[0].mxu0
    %v468 = vadd.f32 0.0, %v467
    %v469 = vpop.f32.mrb[0].mxu0
    %v470 = vadd.f32 0.0, %v469
    %471 = vmatprep.mubr.f32.mxu0 %v111
    %472 = vmatmul.mubr.f32.gmra.mrb[0].mxu0 %v110
    %v473 = vpop.f32.mrb[0].mxu0
    %v474 = vadd.f32 0.0, %v473
    %v475 = vpop.f32.mrb[0].mxu0
    %v476 = vadd.f32 0.0, %v475
    %477 = vmatprep.mubr.f32.mxu0 %v114
    %478 = vmatmul.mubr.f32.gmra.mrb[0].mxu0 %v113
    %v479 = vpop.f32.mrb[0].mxu0
    %v480 = vadd.f32 0.0, %v479
    %v481 = vpop.f32.mrb[0].mxu0
    %v482 = vadd.f32 0.0, %v481
    %483 = vdwg.mxu0
    %484 = vmatprep.subr.mxu0 %v328
    %485 = vmatpush1.msra.mxu0 %v327
    %486 = vmatprep.subr.mxu0 %v331
    %487 = vmatpush1.msra.mxu0 %v330
    %488 = vmatprep.subr.mxu0 %v334
    %489 = vmatpush1.msra.mxu0 %v333
    %490 = vmatprep.subr.mxu0 %v337
    %491 = vmatpush1.msra.mxu0 %v336
    %492 = vmatprep.subr.mxu0 %v340
    %493 = vmatpush1.msra.mxu0 %v339
    %494 = vmatprep.subr.mxu0 %v372
    %495 = vmatpush1.msra.mxu0 %v369
    %496 = vmatprep.subr.mxu0 0.0
    %497 = vmatpush1.msra.mxu0 0.0
    %498 = vmatprep.subr.mxu0 0.0
    %499 = vmatpush1.msra.mxu0 0.0
    %500 = vmatprep.subr.mxu0 0.0
    %501 = vmatpush1.msra.mxu0 0.0
    %502 = vmatprep.subr.mxu0 0.0
    %503 = vmatpush1.msra.mxu0 0.0
    %504 = vmatprep.subr.mxu0 0.0
    %505 = vmatpush1.msra.mxu0 0.0
    %506 = vmatprep.subr.mxu0 0.0
    %507 = vmatpush1.msra.mxu0 0.0
    %508 = vmatprep.subr.mxu0 0.0
    %509 = vmatpush1.msra.mxu0 0.0
    %510 = vmatprep.subr.mxu0 0.0
    %511 = vmatpush1.msra.mxu0 0.0
    %512 = vmatprep.subr.mxu0 0.0
    %513 = vmatpush1.msra.mxu0 0.0
    %514 = vmatprep.subr.mxu0 0.0
    %515 = vmatpush1.msra.mxu0 0.0
    %516 = vmatprep.subr.mxu0 0.0
    %517 = vmatpush1.msra.mxu0 0.0
    %518 = vmatprep.subr.mxu0 0.0
    %519 = vmatpush1.msra.mxu0 0.0
    %520 = vmatprep.subr.mxu0 0.0
    %521 = vmatpush1.msra.mxu0 0.0
    %522 = vmatprep.subr.mxu0 0.0
    %523 = vmatpush1.msra.mxu0 0.0
    %524 = vmatprep.subr.mxu0 0.0
    %525 = vmatpush1.msra.mxu0 0.0
    %526 = vmatprep.subr.mxu0 0.0
    %527 = vmatpush1.msra.mxu0 0.0
    %528 = vmatprep.subr.mxu0 0.0
    %529 = vmatpush1.msra.mxu0 0.0
    %530 = vmatprep.subr.mxu0 0.0
    %531 = vmatpush1.msra.mxu0 0.0
    %532 = vmatprep.subr.mxu0 0.0
    %533 = vmatpush1.msra.mxu0 0.0
    %534 = vmatprep.subr.mxu0 0.0
    %535 = vmatpush1.msra.mxu0 0.0
    %536 = vmatprep.subr.mxu0 0.0
    %537 = vmatpush1.msra.mxu0 0.0
    %538 = vmatprep.subr.mxu0 0.0
    %539 = vmatpush1.msra.mxu0 0.0
    %540 = vmatprep.subr.mxu0 0.0
    %541 = vmatpush1.msra.mxu0 0.0
    %542 = vmatprep.subr.mxu0 0.0
    %543 = vmatpush1.msra.mxu0 0.0
    %544 = vmatprep.subr.mxu0 0.0
    %545 = vmatpush1.msra.mxu0 0.0
    %546 = vmatprep.subr.mxu0 0.0
    %547 = vmatpush1.msra.mxu0 0.0
    %548 = vmatprep.mubr.f32.mxu0 0.0
    %549 = vmatmul.mubr.f32.gmra.mrb[0].mxu0 %v347
    %v550 = vpop.f32.mrb[0].mxu0
    %v551 = vadd.f32 %v444, %v550
    %v552 = vpop.f32.mrb[0].mxu0
    %v553 = vadd.f32 %v446, %v552
    %554 = vmatprep.mubr.f32.mxu0 0.0
    %555 = vmatmul.mubr.f32.gmra.mrb[0].mxu0 %v350
    %v556 = vpop.f32.mrb[0].mxu0
    %v557 = vadd.f32 %v450, %v556
    %v558 = vpop.f32.mrb[0].mxu0
    %v559 = vadd.f32 %v452, %v558
    %560 = vmatprep.mubr.f32.mxu0 0.0
    %561 = vmatmul.mubr.f32.gmra.mrb[0].mxu0 %v353
    %v562 = vpop.f32.mrb[0].mxu0
    %v563 = vadd.f32 %v456, %v562
    %v564 = vpop.f32.mrb[0].mxu0
    %v565 = vadd.f32 %v458, %v564
    %566 = vmatprep.mubr.f32.mxu0 0.0
    %567 = vmatmul.mubr.f32.gmra.mrb[0].mxu0 %v356
    %v568 = vpop.f32.mrb[0].mxu0
    %v569 = vadd.f32 %v462, %v568
    %v570 = vpop.f32.mrb[0].mxu0
    %v571 = vadd.f32 %v464, %v570
    %572 = vmatprep.mubr.f32.mxu0 0.0
    %573 = vmatmul.mubr.f32.gmra.mrb[0].mxu0 %v359
    %v574 = vpop.f32.mrb[0].mxu0
    %v575 = vadd.f32 %v468, %v574
    %v576 = vpop.f32.mrb[0].mxu0
    %v577 = vadd.f32 %v470, %v576
    %578 = vmatprep.mubr.f32.mxu0 0.0
    %579 = vmatmul.mubr.f32.gmra.mrb[0].mxu0 %v362
    %v580 = vpop.f32.mrb[0].mxu0
    %v581 = vadd.f32 %v474, %v580
    %v582 = vpop.f32.mrb[0].mxu0
    %v583 = vadd.f32 %v476, %v582
    %584 = vmatprep.mubr.f32.mxu0 0.0
    %585 = vmatmul.mubr.f32.gmra.mrb[0].mxu0 %v365
    %v586 = vpop.f32.mrb[0].mxu0
    %v587 = vadd.f32 %v480, %v586
    %v588 = vpop.f32.mrb[0].mxu0
    %v589 = vadd.f32 %v482, %v588
    %590 = vdwg.mxu0
    %591 = vmatprep.subr.mxu0 0.0
    %592 = vmatpush1.msra.mxu0 %v233
    %593 = vmatprep.subr.mxu0 0.0
    %594 = vmatpush1.msra.mxu0 %v236
    %595 = vmatprep.subr.mxu0 0.0
    %596 = vmatpush1.msra.mxu0 %v239
    %597 = vmatprep.subr.mxu0 0.0
    %598 = vmatpush1.msra.mxu0 %v242
    %599 = vmatprep.subr.mxu0 0.0
    %600 = vmatpush1.msra.mxu0 %v245
    %601 = vmatprep.subr.mxu0 0.0
    %602 = vmatpush1.msra.mxu0 %v248
    %603 = vmatprep.subr.mxu0 0.0
    %604 = vmatpush1.msra.mxu0 %v251
    %605 = vmatprep.subr.mxu0 0.0
    %606 = vmatpush1.msra.mxu0 %v254
    %607 = vmatprep.subr.mxu0 0.0
    %608 = vmatpush1.msra.mxu0 %v257
    %609 = vmatprep.subr.mxu0 0.0
    %610 = vmatpush1.msra.mxu0 %v260
    %611 = vmatprep.subr.mxu0 0.0
    %612 = vmatpush1.msra.mxu0 %v263
    %613 = vmatprep.subr.mxu0 0.0
    %614 = vmatpush1.msra.mxu0 %v266
    %615 = vmatprep.subr.mxu0 0.0
    %616 = vmatpush1.msra.mxu0 %v269
    %617 = vmatprep.subr.mxu0 0.0
    %618 = vmatpush1.msra.mxu0 %v272
    %619 = vmatprep.subr.mxu0 0.0
    %620 = vmatpush1.msra.mxu0 %v275
    %621 = vmatprep.subr.mxu0 0.0
    %622 = vmatpush1.msra.mxu0 %v278
    %623 = vmatprep.subr.mxu0 0.0
    %624 = vmatpush1.msra.mxu0 %v281
    %625 = vmatprep.subr.mxu0 0.0
    %626 = vmatpush1.msra.mxu0 %v284
    %627 = vmatprep.subr.mxu0 0.0
    %628 = vmatpush1.msra.mxu0 %v287
    %629 = vmatprep.subr.mxu0 0.0
    %630 = vmatpush1.msra.mxu0 %v290
    %631 = vmatprep.subr.mxu0 0.0
    %632 = vmatpush1.msra.mxu0 %v293
    %633 = vmatprep.subr.mxu0 0.0
    %634 = vmatpush1.msra.mxu0 %v296
    %635 = vmatprep.subr.mxu0 0.0
    %636 = vmatpush1.msra.mxu0 %v299
    %637 = vmatprep.subr.mxu0 0.0
    %638 = vmatpush1.msra.mxu0 %v302
    %639 = vmatprep.subr.mxu0 0.0
    %640 = vmatpush1.msra.mxu0 %v305
    %641 = vmatprep.subr.mxu0 0.0
    %642 = vmatpush1.msra.mxu0 %v308
    %643 = vmatprep.subr.mxu0 0.0
    %644 = vmatpush1.msra.mxu0 %v311
    %645 = vmatprep.subr.mxu0 0.0
    %646 = vmatpush1.msra.mxu0 %v314
    %647 = vmatprep.subr.mxu0 0.0
    %648 = vmatpush1.msra.mxu0 %v317
    %649 = vmatprep.subr.mxu0 0.0
    %650 = vmatpush1.msra.mxu0 %v320
    %651 = vmatprep.subr.mxu0 0.0
    %652 = vmatpush1.msra.mxu0 %v323
    %653 = vmatprep.subr.mxu0 0.0
    %654 = vmatpush1.msra.mxu0 %v326
    %655 = vmatprep.mubr.f32.mxu0 %v96
    %656 = vmatmul.mubr.f32.gmra.mrb[0].mxu0 %v95
    %v657 = vpop.f32.mrb[0].mxu0
    %v658 = vadd.f32 0.0, %v657
    %v659 = vpop.f32.mrb[0].mxu0
    %660 = vmatprep.mubr.f32.mxu0 %v99
    %661 = vmatmul.mubr.f32.gmra.mrb[0].mxu0 %v98
    %v662 = vpop.f32.mrb[0].mxu0
    %v663 = vadd.f32 0.0, %v662
    %v664 = vpop.f32.mrb[0].mxu0
    %665 = vmatprep.mubr.f32.mxu0 %v102
    %666 = vmatmul.mubr.f32.gmra.mrb[0].mxu0 %v101
    %v667 = vpop.f32.mrb[0].mxu0
    %v668 = vadd.f32 0.0, %v667
    %v669 = vpop.f32.mrb[0].mxu0
    %670 = vmatprep.mubr.f32.mxu0 %v105
    %671 = vmatmul.mubr.f32.gmra.mrb[0].mxu0 %v104
    %v672 = vpop.f32.mrb[0].mxu0
    %v673 = vadd.f32 0.0, %v672
    %v674 = vpop.f32.mrb[0].mxu0
    %675 = vmatprep.mubr.f32.mxu0 %v108
    %676 = vmatmul.mubr.f32.gmra.mrb[0].mxu0 %v107
    %v677 = vpop.f32.mrb[0].mxu0
    %v678 = vadd.f32 0.0, %v677
    %v679 = vpop.f32.mrb[0].mxu0
    %680 = vmatprep.mubr.f32.mxu0 %v111
    %681 = vmatmul.mubr.f32.gmra.mrb[0].mxu0 %v110
    %v682 = vpop.f32.mrb[0].mxu0
    %v683 = vadd.f32 0.0, %v682
    %v684 = vpop.f32.mrb[0].mxu0
    %685 = vmatprep.mubr.f32.mxu0 %v114
    %686 = vmatmul.mubr.f32.gmra.mrb[0].mxu0 %v113
    %v687 = vpop.f32.mrb[0].mxu0
    %v688 = vadd.f32 0.0, %v687
    %v689 = vpop.f32.mrb[0].mxu0
    %690 = vdwg.mxu0
    %691 = vmatprep.subr.mxu0 0.0
    %692 = vmatpush1.msra.mxu0 %v329
    %693 = vmatprep.subr.mxu0 0.0
    %694 = vmatpush1.msra.mxu0 %v332
    %695 = vmatprep.subr.mxu0 0.0
    %696 = vmatpush1.msra.mxu0 %v335
    %697 = vmatprep.subr.mxu0 0.0
    %698 = vmatpush1.msra.mxu0 %v338
    %699 = vmatprep.subr.mxu0 0.0
    %700 = vmatpush1.msra.mxu0 %v341
    %701 = vmatprep.subr.mxu0 0.0
    %702 = vmatpush1.msra.mxu0 %v375
    %703 = vmatprep.subr.mxu0 0.0
    %704 = vmatpush1.msra.mxu0 0.0
    %705 = vmatprep.subr.mxu0 0.0
    %706 = vmatpush1.msra.mxu0 0.0
    %707 = vmatprep.subr.mxu0 0.0
    %708 = vmatpush1.msra.mxu0 0.0
    %709 = vmatprep.subr.mxu0 0.0
    %710 = vmatpush1.msra.mxu0 0.0
    %711 = vmatprep.subr.mxu0 0.0
    %712 = vmatpush1.msra.mxu0 0.0
    %713 = vmatprep.subr.mxu0 0.0
    %714 = vmatpush1.msra.mxu0 0.0
    %715 = vmatprep.subr.mxu0 0.0
    %716 = vmatpush1.msra.mxu0 0.0
    %717 = vmatprep.subr.mxu0 0.0
    %718 = vmatpush1.msra.mxu0 0.0
    %719 = vmatprep.subr.mxu0 0.0
    %720 = vmatpush1.msra.mxu0 0.0
    %721 = vmatprep.subr.mxu0 0.0
    %722 = vmatpush1.msra.mxu0 0.0
    %723 = vmatprep.subr.mxu0 0.0
    %724 = vmatpush1.msra.mxu0 0.0
    %725 = vmatprep.subr.mxu0 0.0
    %726 = vmatpush1.msra.mxu0 0.0
    %727 = vmatprep.subr.mxu0 0.0
    %728 = vmatpush1.msra.mxu0 0.0
    %729 = vmatprep.subr.mxu0 0.0
    %730 = vmatpush1.msra.mxu0 0.0
    %731 = vmatprep.subr.mxu0 0.0
    %732 = vmatpush1.msra.mxu0 0.0
    %733 = vmatprep.subr.mxu0 0.0
    %734 = vmatpush1.msra.mxu0 0.0
    %735 = vmatprep.subr.mxu0 0.0
    %736 = vmatpush1.msra.mxu0 0.0
    %737 = vmatprep.subr.mxu0 0.0
    %738 = vmatpush1.msra.mxu0 0.0
    %739 = vmatprep.subr.mxu0 0.0
    %740 = vmatpush1.msra.mxu0 0.0
    %741 = vmatprep.subr.mxu0 0.0
    %742 = vmatpush1.msra.mxu0 0.0
    %743 = vmatprep.subr.mxu0 0.0
    %744 = vmatpush1.msra.mxu0 0.0
    %745 = vmatprep.subr.mxu0 0.0
    %746 = vmatpush1.msra.mxu0 0.0
    %747 = vmatprep.subr.mxu0 0.0
    %748 = vmatpush1.msra.mxu0 0.0
    %749 = vmatprep.subr.mxu0 0.0
    %750 = vmatpush1.msra.mxu0 0.0
    %751 = vmatprep.subr.mxu0 0.0
    %752 = vmatpush1.msra.mxu0 0.0
    %753 = vmatprep.subr.mxu0 0.0
    %754 = vmatpush1.msra.mxu0 0.0
    %755 = vmatprep.mubr.f32.mxu0 0.0
    %756 = vmatmul.mubr.f32.gmra.mrb[0].mxu0 %v347
    %v757 = vpop.f32.mrb[0].mxu0
    %v758 = vadd.f32 %v658, %v757
    %v759 = vpop.f32.mrb[0].mxu0
    %760 = vmatprep.mubr.f32.mxu0 0.0
    %761 = vmatmul.mubr.f32.gmra.mrb[0].mxu0 %v350
    %v762 = vpop.f32.mrb[0].mxu0
    %v763 = vadd.f32 %v663, %v762
    %v764 = vpop.f32.mrb[0].mxu0
    %765 = vmatprep.mubr.f32.mxu0 0.0
    %766 = vmatmul.mubr.f32.gmra.mrb[0].mxu0 %v353
    %v767 = vpop.f32.mrb[0].mxu0
    %v768 = vadd.f32 %v668, %v767
    %v769 = vpop.f32.mrb[0].mxu0
    %770 = vmatprep.mubr.f32.mxu0 0.0
    %771 = vmatmul.mubr.f32.gmra.mrb[0].mxu0 %v356
    %v772 = vpop.f32.mrb[0].mxu0
    %v773 = vadd.f32 %v673, %v772
    %v774 = vpop.f32.mrb[0].mxu0
    %775 = vmatprep.mubr.f32.mxu0 0.0
    %776 = vmatmul.mubr.f32.gmra.mrb[0].mxu0 %v359
    %v777 = vpop.f32.mrb[0].mxu0
    %v778 = vadd.f32 %v678, %v777
    %v779 = vpop.f32.mrb[0].mxu0
    %780 = vmatprep.mubr.f32.mxu0 0.0
    %781 = vmatmul.mubr.f32.gmra.mrb[0].mxu0 %v362
    %v782 = vpop.f32.mrb[0].mxu0
    %v783 = vadd.f32 %v683, %v782
    %v784 = vpop.f32.mrb[0].mxu0
    %785 = vmatprep.mubr.f32.mxu0 0.0
    %786 = vmatmul.mubr.f32.gmra.mrb[0].mxu0 %v365
    %v787 = vpop.f32.mrb[0].mxu0
    %v788 = vadd.f32 %v688, %v787
    %v789 = vpop.f32.mrb[0].mxu0
    %790 = vdwg.mxu0
    %v792 = vsel %vm345, %v76, 0
    %v795 = vsel %vm345, %v79, 0
    %v798 = vsel %vm345, %v82, 0
    %v801 = vsel %vm345, %v85, 0
    %v804 = vsel %vm345, %v88, 0
    %v807 = vsel %vm345, %v91, 0
    %v810 = vsel %vm345, %v94, 0
    %v813 = vsel %vm367, %v227, 0
    %v816 = vsel %vm367, %v228, 0
    %v819 = vsel %vm367, %v229, 0
    %821 = vmatprep.subr.mxu0 %v117
    %822 = vmatpush1.msra.mxu0 %v116
    %823 = vmatprep.subr.mxu0 %v120
    %824 = vmatpush1.msra.mxu0 %v119
    %825 = vmatprep.subr.mxu0 %v123
    %826 = vmatpush1.msra.mxu0 %v122
    %827 = vmatprep.subr.mxu0 %v126
    %828 = vmatpush1.msra.mxu0 %v125
    %829 = vmatprep.subr.mxu0 %v129
    %830 = vmatpush1.msra.mxu0 %v128
    %831 = vmatprep.subr.mxu0 %v132
    %832 = vmatpush1.msra.mxu0 %v131
    %833 = vmatprep.subr.mxu0 %v135
    %834 = vmatpush1.msra.mxu0 %v134
    %835 = vmatprep.subr.mxu0 %v138
    %836 = vmatpush1.msra.mxu0 %v137
    %837 = vmatprep.subr.mxu0 %v141
    %838 = vmatpush1.msra.mxu0 %v140
    %839 = vmatprep.subr.mxu0 %v144
    %840 = vmatpush1.msra.mxu0 %v143
    %841 = vmatprep.subr.mxu0 %v147
    %842 = vmatpush1.msra.mxu0 %v146
    %843 = vmatprep.subr.mxu0 %v150
    %844 = vmatpush1.msra.mxu0 %v149
    %845 = vmatprep.subr.mxu0 %v153
    %846 = vmatpush1.msra.mxu0 %v152
    %847 = vmatprep.subr.mxu0 %v156
    %848 = vmatpush1.msra.mxu0 %v155
    %849 = vmatprep.subr.mxu0 %v159
    %850 = vmatpush1.msra.mxu0 %v158
    %851 = vmatprep.subr.mxu0 %v162
    %852 = vmatpush1.msra.mxu0 %v161
    %853 = vmatprep.subr.mxu0 %v165
    %854 = vmatpush1.msra.mxu0 %v164
    %855 = vmatprep.subr.mxu0 %v168
    %856 = vmatpush1.msra.mxu0 %v167
    %857 = vmatprep.subr.mxu0 %v171
    %858 = vmatpush1.msra.mxu0 %v170
    %859 = vmatprep.subr.mxu0 %v174
    %860 = vmatpush1.msra.mxu0 %v173
    %861 = vmatprep.subr.mxu0 %v177
    %862 = vmatpush1.msra.mxu0 %v176
    %863 = vmatprep.subr.mxu0 %v180
    %864 = vmatpush1.msra.mxu0 %v179
    %865 = vmatprep.subr.mxu0 %v183
    %866 = vmatpush1.msra.mxu0 %v182
    %867 = vmatprep.subr.mxu0 %v186
    %868 = vmatpush1.msra.mxu0 %v185
    %869 = vmatprep.subr.mxu0 %v189
    %870 = vmatpush1.msra.mxu0 %v188
    %871 = vmatprep.subr.mxu0 %v192
    %872 = vmatpush1.msra.mxu0 %v191
    %873 = vmatprep.subr.mxu0 %v195
    %874 = vmatpush1.msra.mxu0 %v194
    %875 = vmatprep.subr.mxu0 %v198
    %876 = vmatpush1.msra.mxu0 %v197
    %877 = vmatprep.subr.mxu0 %v201
    %878 = vmatpush1.msra.mxu0 %v200
    %879 = vmatprep.subr.mxu0 %v204
    %880 = vmatpush1.msra.mxu0 %v203
    %881 = vmatprep.subr.mxu0 %v207
    %882 = vmatpush1.msra.mxu0 %v206
    %883 = vmatprep.subr.mxu0 %v210
    %884 = vmatpush1.msra.mxu0 %v209
    %885 = vmatprep.mubr.f32.mxu0 %v75
    %886 = vmatmul.mubr.f32.gmra.mrb[0].mxu0 %v74
    %v887 = vpop.f32.mrb[0].mxu0
    %v888 = vadd.f32 %v551, %v887
    %v889 = vpop.f32.mrb[0].mxu0
    %v890 = vadd.f32 %v553, %v889
    %891 = vmatprep.mubr.f32.mxu0 %v78
    %892 = vmatmul.mubr.f32.gmra.mrb[0].mxu0 %v77
    %v893 = vpop.f32.mrb[0].mxu0
    %v894 = vadd.f32 %v557, %v893
    %v895 = vpop.f32.mrb[0].mxu0
    %v896 = vadd.f32 %v559, %v895
    %897 = vmatprep.mubr.f32.mxu0 %v81
    %898 = vmatmul.mubr.f32.gmra.mrb[0].mxu0 %v80
    %v899 = vpop.f32.mrb[0].mxu0
    %v900 = vadd.f32 %v563, %v899
    %v901 = vpop.f32.mrb[0].mxu0
    %v902 = vadd.f32 %v565, %v901
    %903 = vmatprep.mubr.f32.mxu0 %v84
    %904 = vmatmul.mubr.f32.gmra.mrb[0].mxu0 %v83
    %v905 = vpop.f32.mrb[0].mxu0
    %v906 = vadd.f32 %v569, %v905
    %v907 = vpop.f32.mrb[0].mxu0
    %v908 = vadd.f32 %v571, %v907
    %909 = vmatprep.mubr.f32.mxu0 %v87
    %910 = vmatmul.mubr.f32.gmra.mrb[0].mxu0 %v86
    %v911 = vpop.f32.mrb[0].mxu0
    %v912 = vadd.f32 %v575, %v911
    %v913 = vpop.f32.mrb[0].mxu0
    %v914 = vadd.f32 %v577, %v913
    %915 = vmatprep.mubr.f32.mxu0 %v90
    %916 = vmatmul.mubr.f32.gmra.mrb[0].mxu0 %v89
    %v917 = vpop.f32.mrb[0].mxu0
    %v918 = vadd.f32 %v581, %v917
    %v919 = vpop.f32.mrb[0].mxu0
    %v920 = vadd.f32 %v583, %v919
    %921 = vmatprep.mubr.f32.mxu0 %v93
    %922 = vmatmul.mubr.f32.gmra.mrb[0].mxu0 %v92
    %v923 = vpop.f32.mrb[0].mxu0
    %v924 = vadd.f32 %v587, %v923
    %v925 = vpop.f32.mrb[0].mxu0
    %v926 = vadd.f32 %v589, %v925
    %927 = vdwg.mxu0
    %928 = vmatprep.subr.mxu0 %v213
    %929 = vmatpush1.msra.mxu0 %v212
    %930 = vmatprep.subr.mxu0 %v216
    %931 = vmatpush1.msra.mxu0 %v215
    %932 = vmatprep.subr.mxu0 %v219
    %933 = vmatpush1.msra.mxu0 %v218
    %934 = vmatprep.subr.mxu0 %v222
    %935 = vmatpush1.msra.mxu0 %v221
    %936 = vmatprep.subr.mxu0 %v225
    %937 = vmatpush1.msra.mxu0 %v224
    %938 = vmatprep.subr.mxu0 %v816
    %939 = vmatpush1.msra.mxu0 %v813
    %940 = vmatprep.subr.mxu0 0.0
    %941 = vmatpush1.msra.mxu0 0.0
    %942 = vmatprep.subr.mxu0 0.0
    %943 = vmatpush1.msra.mxu0 0.0
    %944 = vmatprep.subr.mxu0 0.0
    %945 = vmatpush1.msra.mxu0 0.0
    %946 = vmatprep.subr.mxu0 0.0
    %947 = vmatpush1.msra.mxu0 0.0
    %948 = vmatprep.subr.mxu0 0.0
    %949 = vmatpush1.msra.mxu0 0.0
    %950 = vmatprep.subr.mxu0 0.0
    %951 = vmatpush1.msra.mxu0 0.0
    %952 = vmatprep.subr.mxu0 0.0
    %953 = vmatpush1.msra.mxu0 0.0
    %954 = vmatprep.subr.mxu0 0.0
    %955 = vmatpush1.msra.mxu0 0.0
    %956 = vmatprep.subr.mxu0 0.0
    %957 = vmatpush1.msra.mxu0 0.0
    %958 = vmatprep.subr.mxu0 0.0
    %959 = vmatpush1.msra.mxu0 0.0
    %960 = vmatprep.subr.mxu0 0.0
    %961 = vmatpush1.msra.mxu0 0.0
    %962 = vmatprep.subr.mxu0 0.0
    %963 = vmatpush1.msra.mxu0 0.0
    %964 = vmatprep.subr.mxu0 0.0
    %965 = vmatpush1.msra.mxu0 0.0
    %966 = vmatprep.subr.mxu0 0.0
    %967 = vmatpush1.msra.mxu0 0.0
    %968 = vmatprep.subr.mxu0 0.0
    %969 = vmatpush1.msra.mxu0 0.0
    %970 = vmatprep.subr.mxu0 0.0
    %971 = vmatpush1.msra.mxu0 0.0
    %972 = vmatprep.subr.mxu0 0.0
    %973 = vmatpush1.msra.mxu0 0.0
    %974 = vmatprep.subr.mxu0 0.0
    %975 = vmatpush1.msra.mxu0 0.0
    %976 = vmatprep.subr.mxu0 0.0
    %977 = vmatpush1.msra.mxu0 0.0
    %978 = vmatprep.subr.mxu0 0.0
    %979 = vmatpush1.msra.mxu0 0.0
    %980 = vmatprep.subr.mxu0 0.0
    %981 = vmatpush1.msra.mxu0 0.0
    %982 = vmatprep.subr.mxu0 0.0
    %983 = vmatpush1.msra.mxu0 0.0
    %984 = vmatprep.subr.mxu0 0.0
    %985 = vmatpush1.msra.mxu0 0.0
    %986 = vmatprep.subr.mxu0 0.0
    %987 = vmatpush1.msra.mxu0 0.0
    %988 = vmatprep.subr.mxu0 0.0
    %989 = vmatpush1.msra.mxu0 0.0
    %990 = vmatprep.subr.mxu0 0.0
    %991 = vmatpush1.msra.mxu0 0.0
    %992 = vmatprep.mubr.f32.mxu0 0.0
    %993 = vmatmul.mubr.f32.gmra.mrb[0].mxu0 %v792
    %v994 = vpop.f32.mrb[0].mxu0
    %v995 = vadd.f32 %v888, %v994
    %v996 = vpop.f32.mrb[0].mxu0
    %v997 = vadd.f32 %v890, %v996
    %998 = vmatprep.mubr.f32.mxu0 0.0
    %999 = vmatmul.mubr.f32.gmra.mrb[0].mxu0 %v795
    %v1000 = vpop.f32.mrb[0].mxu0
    %v1001 = vadd.f32 %v894, %v1000
    %v1002 = vpop.f32.mrb[0].mxu0
    %v1003 = vadd.f32 %v896, %v1002
    %1004 = vmatprep.mubr.f32.mxu0 0.0
    %1005 = vmatmul.mubr.f32.gmra.mrb[0].mxu0 %v798
    %v1006 = vpop.f32.mrb[0].mxu0
    %v1007 = vadd.f32 %v900, %v1006
    %v1008 = vpop.f32.mrb[0].mxu0
    %v1009 = vadd.f32 %v902, %v1008
    %1010 = vmatprep.mubr.f32.mxu0 0.0
    %1011 = vmatmul.mubr.f32.gmra.mrb[0].mxu0 %v801
    %v1012 = vpop.f32.mrb[0].mxu0
    %v1013 = vadd.f32 %v906, %v1012
    %v1014 = vpop.f32.mrb[0].mxu0
    %v1015 = vadd.f32 %v908, %v1014
    %1016 = vmatprep.mubr.f32.mxu0 0.0
    %1017 = vmatmul.mubr.f32.gmra.mrb[0].mxu0 %v804
    %v1018 = vpop.f32.mrb[0].mxu0
    %v1019 = vadd.f32 %v912, %v1018
    %v1020 = vpop.f32.mrb[0].mxu0
    %v1021 = vadd.f32 %v914, %v1020
    %1022 = vmatprep.mubr.f32.mxu0 0.0
    %1023 = vmatmul.mubr.f32.gmra.mrb[0].mxu0 %v807
    %v1024 = vpop.f32.mrb[0].mxu0
    %v1025 = vadd.f32 %v918, %v1024
    %v1026 = vpop.f32.mrb[0].mxu0
    %v1027 = vadd.f32 %v920, %v1026
    %1028 = vmatprep.mubr.f32.mxu0 0.0
    %1029 = vmatmul.mubr.f32.gmra.mrb[0].mxu0 %v810
    %v1030 = vpop.f32.mrb[0].mxu0
    %v1031 = vadd.f32 %v924, %v1030
    %v1032 = vpop.f32.mrb[0].mxu0
    %v1033 = vadd.f32 %v926, %v1032
    %1034 = vdwg.mxu0
    %1035 = vmatprep.subr.mxu0 0.0
    %1036 = vmatpush1.msra.mxu0 %v118
    %1037 = vmatprep.subr.mxu0 0.0
    %1038 = vmatpush1.msra.mxu0 %v121
    %1039 = vmatprep.subr.mxu0 0.0
    %1040 = vmatpush1.msra.mxu0 %v124
    %1041 = vmatprep.subr.mxu0 0.0
    %1042 = vmatpush1.msra.mxu0 %v127
    %1043 = vmatprep.subr.mxu0 0.0
    %1044 = vmatpush1.msra.mxu0 %v130
    %1045 = vmatprep.subr.mxu0 0.0
    %1046 = vmatpush1.msra.mxu0 %v133
    %1047 = vmatprep.subr.mxu0 0.0
    %1048 = vmatpush1.msra.mxu0 %v136
    %1049 = vmatprep.subr.mxu0 0.0
    %1050 = vmatpush1.msra.mxu0 %v139
    %1051 = vmatprep.subr.mxu0 0.0
    %1052 = vmatpush1.msra.mxu0 %v142
    %1053 = vmatprep.subr.mxu0 0.0
    %1054 = vmatpush1.msra.mxu0 %v145
    %1055 = vmatprep.subr.mxu0 0.0
    %1056 = vmatpush1.msra.mxu0 %v148
    %1057 = vmatprep.subr.mxu0 0.0
    %1058 = vmatpush1.msra.mxu0 %v151
    %1059 = vmatprep.subr.mxu0 0.0
    %1060 = vmatpush1.msra.mxu0 %v154
    %1061 = vmatprep.subr.mxu0 0.0
    %1062 = vmatpush1.msra.mxu0 %v157
    %1063 = vmatprep.subr.mxu0 0.0
    %1064 = vmatpush1.msra.mxu0 %v160
    %1065 = vmatprep.subr.mxu0 0.0
    %1066 = vmatpush1.msra.mxu0 %v163
    %1067 = vmatprep.subr.mxu0 0.0
    %1068 = vmatpush1.msra.mxu0 %v166
    %1069 = vmatprep.subr.mxu0 0.0
    %1070 = vmatpush1.msra.mxu0 %v169
    %1071 = vmatprep.subr.mxu0 0.0
    %1072 = vmatpush1.msra.mxu0 %v172
    %1073 = vmatprep.subr.mxu0 0.0
    %1074 = vmatpush1.msra.mxu0 %v175
    %1075 = vmatprep.subr.mxu0 0.0
    %1076 = vmatpush1.msra.mxu0 %v178
    %1077 = vmatprep.subr.mxu0 0.0
    %1078 = vmatpush1.msra.mxu0 %v181
    %1079 = vmatprep.subr.mxu0 0.0
    %1080 = vmatpush1.msra.mxu0 %v184
    %1081 = vmatprep.subr.mxu0 0.0
    %1082 = vmatpush1.msra.mxu0 %v187
    %1083 = vmatprep.subr.mxu0 0.0
    %1084 = vmatpush1.msra.mxu0 %v190
    %1085 = vmatprep.subr.mxu0 0.0
    %1086 = vmatpush1.msra.mxu0 %v193
    %1087 = vmatprep.subr.mxu0 0.0
    %1088 = vmatpush1.msra.mxu0 %v196
    %1089 = vmatprep.subr.mxu0 0.0
    %1090 = vmatpush1.msra.mxu0 %v199
    %1091 = vmatprep.subr.mxu0 0.0
    %1092 = vmatpush1.msra.mxu0 %v202
    %1093 = vmatprep.subr.mxu0 0.0
    %1094 = vmatpush1.msra.mxu0 %v205
    %1095 = vmatprep.subr.mxu0 0.0
    %1096 = vmatpush1.msra.mxu0 %v208
    %1097 = vmatprep.subr.mxu0 0.0
    %1098 = vmatpush1.msra.mxu0 %v211
    %1099 = vmatprep.mubr.f32.mxu0 %v75
    %1100 = vmatmul.mubr.f32.gmra.mrb[0].mxu0 %v74
    %v1101 = vpop.f32.mrb[0].mxu0
    %v1102 = vadd.f32 %v758, %v1101
    %v1103 = vpop.f32.mrb[0].mxu0
    %1104 = vmatprep.mubr.f32.mxu0 %v78
    %1105 = vmatmul.mubr.f32.gmra.mrb[0].mxu0 %v77
    %v1106 = vpop.f32.mrb[0].mxu0
    %v1107 = vadd.f32 %v763, %v1106
    %v1108 = vpop.f32.mrb[0].mxu0
    %1109 = vmatprep.mubr.f32.mxu0 %v81
    %1110 = vmatmul.mubr.f32.gmra.mrb[0].mxu0 %v80
    %v1111 = vpop.f32.mrb[0].mxu0
    %v1112 = vadd.f32 %v768, %v1111
    %v1113 = vpop.f32.mrb[0].mxu0
    %1114 = vmatprep.mubr.f32.mxu0 %v84
    %1115 = vmatmul.mubr.f32.gmra.mrb[0].mxu0 %v83
    %v1116 = vpop.f32.mrb[0].mxu0
    %v1117 = vadd.f32 %v773, %v1116
    %v1118 = vpop.f32.mrb[0].mxu0
    %1119 = vmatprep.mubr.f32.mxu0 %v87
    %1120 = vmatmul.mubr.f32.gmra.mrb[0].mxu0 %v86
    %v1121 = vpop.f32.mrb[0].mxu0
    %v1122 = vadd.f32 %v778, %v1121
    %v1123 = vpop.f32.mrb[0].mxu0
    %1124 = vmatprep.mubr.f32.mxu0 %v90
    %1125 = vmatmul.mubr.f32.gmra.mrb[0].mxu0 %v89
    %v1126 = vpop.f32.mrb[0].mxu0
    %v1127 = vadd.f32 %v783, %v1126
    %v1128 = vpop.f32.mrb[0].mxu0
    %1129 = vmatprep.mubr.f32.mxu0 %v93
    %1130 = vmatmul.mubr.f32.gmra.mrb[0].mxu0 %v92
    %v1131 = vpop.f32.mrb[0].mxu0
    %v1132 = vadd.f32 %v788, %v1131
    %v1133 = vpop.f32.mrb[0].mxu0
    %1134 = vdwg.mxu0
    %1135 = vmatprep.subr.mxu0 0.0
    %1136 = vmatpush1.msra.mxu0 %v214
    %1137 = vmatprep.subr.mxu0 0.0
    %1138 = vmatpush1.msra.mxu0 %v217
    %1139 = vmatprep.subr.mxu0 0.0
    %1140 = vmatpush1.msra.mxu0 %v220
    %1141 = vmatprep.subr.mxu0 0.0
    %1142 = vmatpush1.msra.mxu0 %v223
    %1143 = vmatprep.subr.mxu0 0.0
    %1144 = vmatpush1.msra.mxu0 %v226
    %1145 = vmatprep.subr.mxu0 0.0
    %1146 = vmatpush1.msra.mxu0 %v819
    %1147 = vmatprep.subr.mxu0 0.0
    %1148 = vmatpush1.msra.mxu0 0.0
    %1149 = vmatprep.subr.mxu0 0.0
    %1150 = vmatpush1.msra.mxu0 0.0
    %1151 = vmatprep.subr.mxu0 0.0
    %1152 = vmatpush1.msra.mxu0 0.0
    %1153 = vmatprep.subr.mxu0 0.0
    %1154 = vmatpush1.msra.mxu0 0.0
    %1155 = vmatprep.subr.mxu0 0.0
    %1156 = vmatpush1.msra.mxu0 0.0
    %1157 = vmatprep.subr.mxu0 0.0
    %1158 = vmatpush1.msra.mxu0 0.0
    %1159 = vmatprep.subr.mxu0 0.0
    %1160 = vmatpush1.msra.mxu0 0.0
    %1161 = vmatprep.subr.mxu0 0.0
    %1162 = vmatpush1.msra.mxu0 0.0
    %1163 = vmatprep.subr.mxu0 0.0
    %1164 = vmatpush1.msra.mxu0 0.0
    %1165 = vmatprep.subr.mxu0 0.0
    %1166 = vmatpush1.msra.mxu0 0.0
    %1167 = vmatprep.subr.mxu0 0.0
    %1168 = vmatpush1.msra.mxu0 0.0
    %1169 = vmatprep.subr.mxu0 0.0
    %1170 = vmatpush1.msra.mxu0 0.0
    %1171 = vmatprep.subr.mxu0 0.0
    %1172 = vmatpush1.msra.mxu0 0.0
    %1173 = vmatprep.subr.mxu0 0.0
    %1174 = vmatpush1.msra.mxu0 0.0
    %1175 = vmatprep.subr.mxu0 0.0
    %1176 = vmatpush1.msra.mxu0 0.0
    %1177 = vmatprep.subr.mxu0 0.0
    %1178 = vmatpush1.msra.mxu0 0.0
    %1179 = vmatprep.subr.mxu0 0.0
    %1180 = vmatpush1.msra.mxu0 0.0
    %1181 = vmatprep.subr.mxu0 0.0
    %1182 = vmatpush1.msra.mxu0 0.0
    %1183 = vmatprep.subr.mxu0 0.0
    %1184 = vmatpush1.msra.mxu0 0.0
    %1185 = vmatprep.subr.mxu0 0.0
    %1186 = vmatpush1.msra.mxu0 0.0
    %1187 = vmatprep.subr.mxu0 0.0
    %1188 = vmatpush1.msra.mxu0 0.0
    %1189 = vmatprep.subr.mxu0 0.0
    %1190 = vmatpush1.msra.mxu0 0.0
    %1191 = vmatprep.subr.mxu0 0.0
    %1192 = vmatpush1.msra.mxu0 0.0
    %1193 = vmatprep.subr.mxu0 0.0
    %1194 = vmatpush1.msra.mxu0 0.0
    %1195 = vmatprep.subr.mxu0 0.0
    %1196 = vmatpush1.msra.mxu0 0.0
    %1197 = vmatprep.subr.mxu0 0.0
    %1198 = vmatpush1.msra.mxu0 0.0
    %1199 = vmatprep.mubr.f32.mxu0 0.0
    %1200 = vmatmul.mubr.f32.gmra.mrb[0].mxu0 %v792
    %v1201 = vpop.f32.mrb[0].mxu0
    %v1202 = vadd.f32 %v1102, %v1201
    %v1203 = vpop.f32.mrb[0].mxu0
    %1204 = vmatprep.mubr.f32.mxu0 0.0
    %1205 = vmatmul.mubr.f32.gmra.mrb[0].mxu0 %v795
    %v1206 = vpop.f32.mrb[0].mxu0
    %v1207 = vadd.f32 %v1107, %v1206
    %v1208 = vpop.f32.mrb[0].mxu0
    %1209 = vmatprep.mubr.f32.mxu0 0.0
    %1210 = vmatmul.mubr.f32.gmra.mrb[0].mxu0 %v798
    %v1211 = vpop.f32.mrb[0].mxu0
    %v1212 = vadd.f32 %v1112, %v1211
    %v1213 = vpop.f32.mrb[0].mxu0
    %1214 = vmatprep.mubr.f32.mxu0 0.0
    %1215 = vmatmul.mubr.f32.gmra.mrb[0].mxu0 %v801
    %v1216 = vpop.f32.mrb[0].mxu0
    %v1217 = vadd.f32 %v1117, %v1216
    %v1218 = vpop.f32.mrb[0].mxu0
    %1219 = vmatprep.mubr.f32.mxu0 0.0
    %1220 = vmatmul.mubr.f32.gmra.mrb[0].mxu0 %v804
    %v1221 = vpop.f32.mrb[0].mxu0
    %v1222 = vadd.f32 %v1122, %v1221
    %v1223 = vpop.f32.mrb[0].mxu0
    %1224 = vmatprep.mubr.f32.mxu0 0.0
    %1225 = vmatmul.mubr.f32.gmra.mrb[0].mxu0 %v807
    %v1226 = vpop.f32.mrb[0].mxu0
    %v1227 = vadd.f32 %v1127, %v1226
    %v1228 = vpop.f32.mrb[0].mxu0
    %1229 = vmatprep.mubr.f32.mxu0 0.0
    %1230 = vmatmul.mubr.f32.gmra.mrb[0].mxu0 %v810
    %v1231 = vpop.f32.mrb[0].mxu0
    %v1232 = vadd.f32 %v1132, %v1231
    %v1233 = vpop.f32.mrb[0].mxu0
    %1234 = vdwg.mxu0
    %v1235 = vld [vmem:[%s2] sm:$0x7]
    %v1237 = vlaneseq
    %v1238 = vshrl.u32 %v1237, 7
    %v1239 = vsub.s32 0, %v1238
    %v1240 = vrot.slane %v1235, %v1239
    %v1241 = vlaneseq
    %v1242 = vshrl.u32 %v1241, 7
    %v1243 = vsub.s32 1, %v1242
    %v1244 = vrot.slane %v1235, %v1243
    %v1245 = vlaneseq
    %v1246 = vshrl.u32 %v1245, 7
    %v1247 = vsub.s32 2, %v1246
    %v1248 = vrot.slane %v1235, %v1247
    %v1252 = vadd.f32 %v995, %v1240
    %v1253 = vadd.f32 %v997, %v1244
    %v1254 = vadd.f32 %v1202, %v1248
    %v1255 = vadd.f32 %v1001, %v1240
    %v1256 = vadd.f32 %v1003, %v1244
    %v1257 = vadd.f32 %v1207, %v1248
    %v1258 = vadd.f32 %v1007, %v1240
    %v1259 = vadd.f32 %v1009, %v1244
    %v1260 = vadd.f32 %v1212, %v1248
    %v1261 = vadd.f32 %v1013, %v1240
    %v1262 = vadd.f32 %v1015, %v1244
    %v1263 = vadd.f32 %v1217, %v1248
    %v1264 = vadd.f32 %v1019, %v1240
    %v1265 = vadd.f32 %v1021, %v1244
    %v1266 = vadd.f32 %v1222, %v1248
    %v1267 = vadd.f32 %v1025, %v1240
    %v1268 = vadd.f32 %v1027, %v1244
    %v1269 = vadd.f32 %v1227, %v1248
    %v1270 = vadd.f32 %v1031, %v1240
    %v1271 = vadd.f32 %v1033, %v1244
    %v1272 = vadd.f32 %v1232, %v1248
    %s1273 = sld [smem:[#allocation5]]
    %vm1274 = vcmp.ge.f32.partialorder %v1252, 0.0
    %vm1275 = vcmp.ge.f32.partialorder %v1253, 0.0
    %vm1276 = vcmp.ge.f32.partialorder %v1254, 0.0
    %vm1277 = vcmp.ge.f32.partialorder %v1255, 0.0
    %vm1278 = vcmp.ge.f32.partialorder %v1256, 0.0
    %vm1279 = vcmp.ge.f32.partialorder %v1257, 0.0
    %vm1280 = vcmp.ge.f32.partialorder %v1258, 0.0
    %vm1281 = vcmp.ge.f32.partialorder %v1259, 0.0
    %vm1282 = vcmp.ge.f32.partialorder %v1260, 0.0
    %vm1283 = vcmp.ge.f32.partialorder %v1261, 0.0
    %vm1284 = vcmp.ge.f32.partialorder %v1262, 0.0
    %vm1285 = vcmp.ge.f32.partialorder %v1263, 0.0
    %vm1286 = vcmp.ge.f32.partialorder %v1264, 0.0
    %vm1287 = vcmp.ge.f32.partialorder %v1265, 0.0
    %vm1288 = vcmp.ge.f32.partialorder %v1266, 0.0
    %vm1289 = vcmp.ge.f32.partialorder %v1267, 0.0
    %vm1290 = vcmp.ge.f32.partialorder %v1268, 0.0
    %vm1291 = vcmp.ge.f32.partialorder %v1269, 0.0
    %vm1292 = vcmp.ge.f32.partialorder %v1270, 0.0
    %vm1293 = vcmp.ge.f32.partialorder %v1271, 0.0
    %vm1294 = vcmp.ge.f32.partialorder %v1272, 0.0
    %v1295 = vstv %s1273
    %v1296 = vmul.f32 %v1295, %v1252
    %v1297 = vmul.f32 %v1295, %v1253
    %v1298 = vmul.f32 %v1295, %v1254
    %v1299 = vmul.f32 %v1295, %v1255
    %v1300 = vmul.f32 %v1295, %v1256
    %v1301 = vmul.f32 %v1295, %v1257
    %v1302 = vmul.f32 %v1295, %v1258
    %v1303 = vmul.f32 %v1295, %v1259
    %v1304 = vmul.f32 %v1295, %v1260
    %v1305 = vmul.f32 %v1295, %v1261
    %v1306 = vmul.f32 %v1295, %v1262
    %v1307 = vmul.f32 %v1295, %v1263
    %v1308 = vmul.f32 %v1295, %v1264
    %v1309 = vmul.f32 %v1295, %v1265
    %v1310 = vmul.f32 %v1295, %v1266
    %v1311 = vmul.f32 %v1295, %v1267
    %v1312 = vmul.f32 %v1295, %v1268
    %v1313 = vmul.f32 %v1295, %v1269
    %v1314 = vmul.f32 %v1295, %v1270
    %v1315 = vmul.f32 %v1295, %v1271
    %v1316 = vmul.f32 %v1295, %v1272
    %v1317 = vsel %vm1274, %v1252, %v1296
    %v1318 = vsel %vm1275, %v1253, %v1297
    %v1319 = vsel %vm1276, %v1254, %v1298
    %v1320 = vsel %vm1277, %v1255, %v1299
    %v1321 = vsel %vm1278, %v1256, %v1300
    %v1322 = vsel %vm1279, %v1257, %v1301
    %v1323 = vsel %vm1280, %v1258, %v1302
    %v1324 = vsel %vm1281, %v1259, %v1303
    %v1325 = vsel %vm1282, %v1260, %v1304
    %v1326 = vsel %vm1283, %v1261, %v1305
    %v1327 = vsel %vm1284, %v1262, %v1306
    %v1328 = vsel %vm1285, %v1263, %v1307
    %v1329 = vsel %vm1286, %v1264, %v1308
    %v1330 = vsel %vm1287, %v1265, %v1309
    %v1331 = vsel %vm1288, %v1266, %v1310
    %v1332 = vsel %vm1289, %v1267, %v1311
    %v1333 = vsel %vm1290, %v1268, %v1312
    %v1334 = vsel %vm1291, %v1269, %v1313
    %v1335 = vsel %vm1292, %v1270, %v1314
    %v1336 = vsel %vm1293, %v1271, %v1315
    %v1337 = vsel %vm1294, %v1272, %v1316
    %v1338 = vld [vmem:[%s6] sm:$0x7]
    %v1339 = vld [vmem:[%s4] sm:$0x7]
    %v1340 = vld [vmem:[%s3] sm:$0xff]
    %v1341 = vld [vmem:[%s3 + $0x8] sm:$0xff]
    %v1342 = vld [vmem:[%s3 + $0x10] sm:$0xff]
    %v1343 = vld [vmem:[%s3 + $0x18] sm:$0xff]
    %v1344 = vld [vmem:[%s3 + $0x20] sm:$0xff]
    %v1345 = vld [vmem:[%s3 + $0x28] sm:$0xff]
    %v1346 = vld [vmem:[%s3 + $0x30] sm:$0xff]
    %v1347 = vld [vmem:[%s3 + $0x38] sm:$0xff]
    %v1348 = vld [vmem:[%s3 + $0x40] sm:$0xff]
    %v1349 = vld [vmem:[%s3 + $0x48] sm:$0xff]
    %v1350 = vld [vmem:[%s3 + $0x50] sm:$0xff]
    %v1351 = vld [vmem:[%s3 + $0x58] sm:$0xff]
    %v1352 = vld [vmem:[%s3 + $0x60] sm:$0xff]
    %v1353 = vld [vmem:[%s3 + $0x68] sm:$0xff]
    %v1354 = vld [vmem:[%s3 + $0x70] sm:$0xff]
    %v1355 = vld [vmem:[%s3 + $0x78] sm:$0xff]
    %v1356 = vld [vmem:[%s3 + $0x80] sm:$0xff]
    %v1357 = vld [vmem:[%s3 + $0x88] sm:$0xff]
    %v1358 = vld [vmem:[%s3 + $0x90] sm:$0xff]
    %v1359 = vld [vmem:[%s3 + $0x98] sm:$0xff]
    %v1360 = vld [vmem:[%s3 + $0xa0] sm:$0xff]
    %v1361 = vld [vmem:[%s3 + $0xa8] sm:$0xff]
    %v1362 = vld [vmem:[%s3 + $0xb0] sm:$0xff]
    %v1363 = vld [vmem:[%s3 + $0xb8] sm:$0xff]
    %v1364 = vld [vmem:[%s3 + $0xc0] sm:$0xff]
    %v1365 = vld [vmem:[%s3 + $0xc8] sm:$0xff]
    %v1366 = vld [vmem:[%s3 + $0xd0] sm:$0xff]
    %v1367 = vld [vmem:[%s3 + $0xd8] sm:$0xff]
    %v1368 = vld [vmem:[%s3 + $0xe0] sm:$0xff]
    %v1369 = vld [vmem:[%s3 + $0xe8] sm:$0xff]
    %v1370 = vld [vmem:[%s3 + $0xf0] sm:$0xff]
    %v1371 = vld [vmem:[%s3 + $0xf8] sm:$0xff]
    %v1372 = vld [vmem:[%s3 + $0x100] sm:$0xff]
    %v1373 = vld [vmem:[%s3 + $0x108] sm:$0xff]
    %v1374 = vld [vmem:[%s3 + $0x110] sm:$0xff]
    %v1375 = vld [vmem:[%s3 + $0x118] sm:$0xff]
    %v1376 = vld [vmem:[%s3 + $0x120] sm:$0xff]
    %v1377 = vld [vmem:[%s3 + $0x128] sm:$0xff]
    %v1378 = vld [vmem:[%s3 + $0x130] sm:$0xff]
    %v1379 = vld [vmem:[%s3 + $0x138] sm:$0xff]
    %v1380 = vld [vmem:[%s3 + $0x140] sm:$0xff]
    %v1381 = vld [vmem:[%s3 + $0x148] sm:$0xff]
    %v1382 = vld [vmem:[%s3 + $0x150] sm:$0xff]
    %v1383 = vld [vmem:[%s3 + $0x158] sm:$0xff]
    %v1384 = vld [vmem:[%s3 + $0x160] sm:$0xff]
    %v1385 = vld [vmem:[%s3 + $0x168] sm:$0xff]
    %v1386 = vld [vmem:[%s3 + $0x170] sm:$0xff]
    %v1387 = vld [vmem:[%s3 + $0x178] sm:$0xff]
    %v1388 = vld [vmem:[%s3 + $0x180] sm:$0xff]
    %v1389 = vld [vmem:[%s3 + $0x188] sm:$0xff]
    %v1390 = vld [vmem:[%s3 + $0x190] sm:$0xff]
    %v1391 = vld [vmem:[%s3 + $0x198] sm:$0xff]
    %v1392 = vld [vmem:[%s3 + $0x1a0] sm:$0xff]
    %v1393 = vld [vmem:[%s3 + $0x1a8] sm:$0xff]
    %v1394 = vld [vmem:[%s3 + $0x1b0] sm:$0xff]
    %v1395 = vld [vmem:[%s3 + $0x1b8] sm:$0xff]
    %v1396 = vld [vmem:[%s3 + $0x1c0] sm:$0xff]
    %v1397 = vld [vmem:[%s3 + $0x1c8] sm:$0xff]
    %v1398 = vld [vmem:[%s3 + $0x1d0] sm:$0xff]
    %v1399 = vld [vmem:[%s3 + $0x1d8] sm:$0xff]
    %v1400 = vld [vmem:[%s3 + $0x1e0] sm:$0xff]
    %v1401 = vld [vmem:[%s3 + $0x1e8] sm:$0xff]
    %v1402 = vld [vmem:[%s3 + $0x1f0] sm:$0xff]
    %v1403 = vld [vmem:[%s3 + $0x1f8] sm:$0xff]
    %v1404 = vld [vmem:[%s3 + $0x200] sm:$0xff]
    %v1405 = vld [vmem:[%s3 + $0x208] sm:$0xff]
    %v1406 = vld [vmem:[%s3 + $0x210] sm:$0xff]
    %v1407 = vld [vmem:[%s3 + $0x218] sm:$0xff]
    %v1408 = vld [vmem:[%s3 + $0x220] sm:$0xff]
    %v1409 = vld [vmem:[%s3 + $0x228] sm:$0xff]
    %v1410 = vld [vmem:[%s3 + $0x230] sm:$0xff]
    %v1411 = vld [vmem:[%s3 + $0x238] sm:$0xff]
    %v1412 = vld [vmem:[%s3 + $0x240] sm:$0xff]
    %v1413 = vld [vmem:[%s3 + $0x248] sm:$0xff]
    %v1414 = vld [vmem:[%s3 + $0x250] sm:$0xff]
    %v1415 = vld [vmem:[%s3 + $0x258] sm:$0xff]
    %v1416 = vld [vmem:[%s3 + $0x260] sm:$0xff]
    %v1417 = vld [vmem:[%s3 + $0x268] sm:$0xff]
    %v1418 = vld [vmem:[%s3 + $0x270] sm:$0xff]
    %v1419 = vld [vmem:[%s3 + $0x278] sm:$0xff]
    %v1420 = vld [vmem:[%s3 + $0x280] sm:$0xff]
    %v1421 = vld [vmem:[%s3 + $0x288] sm:$0xff]
    %v1422 = vld [vmem:[%s3 + $0x290] sm:$0xff]
    %v1423 = vld [vmem:[%s3 + $0x298] sm:$0xff]
    %v1424 = vld [vmem:[%s3 + $0x2a0] sm:$0xff]
    %v1425 = vld [vmem:[%s3 + $0x2a8] sm:$0xff]
    %v1426 = vld [vmem:[%s3 + $0x2b0] sm:$0xff]
    %v1427 = vld [vmem:[%s3 + $0x2b8] sm:$0xff]
    %v1428 = vld [vmem:[%s3 + $0x2c0] sm:$0xff]
    %v1429 = vld [vmem:[%s3 + $0x2c8] sm:$0xff]
    %v1430 = vld [vmem:[%s3 + $0x2d0] sm:$0xff]
    %v1431 = vld [vmem:[%s3 + $0x2d8] sm:$0xff]
    %v1432 = vld [vmem:[%s3 + $0x2e0] sm:$0xff]
    %v1433 = vld [vmem:[%s3 + $0x2e8] sm:$0xff]
    %v1434 = vld [vmem:[%s3 + $0x2f0] sm:$0xff]
    %v1435 = vld [vmem:[%s3 + $0x2f8] sm:$0xff]
    %v1436 = vld [vmem:[%s3 + $0x300] sm:$0xff]
    %v1437 = vld [vmem:[%s3 + $0x308] sm:$0xff]
    %v1438 = vld [vmem:[%s3 + $0x310] sm:$0xff]
    %v1439 = vld [vmem:[%s3 + $0x318] sm:$0xff]
    %v1440 = vld [vmem:[%s3 + $0x320] sm:$0xff]
    %v1441 = vld [vmem:[%s3 + $0x328] sm:$0xff]
    %v1442 = vld [vmem:[%s3 + $0x330] sm:$0xff]
    %v1443 = vld [vmem:[%s3 + $0x338] sm:$0xff]
    %v1444 = vld [vmem:[%s3 + $0x340] sm:$0xff]
    %v1445 = vld [vmem:[%s3 + $0x348] sm:$0xff]
    %v1446 = vld [vmem:[%s3 + $0x350] sm:$0xff]
    %v1447 = vld [vmem:[%s3 + $0x358] sm:$0xff]
    %v1448 = vld [vmem:[%s3 + $0x360] sm:$0xff]
    %v1449 = vld [vmem:[%s3 + $0x368] sm:$0xff]
    %v1450 = vld [vmem:[%s3 + $0x370] sm:$0xff]
    %v1451 = vld [vmem:[%s3 + $0x378] sm:$0xf]
    %v1452 = vld [vmem:[%s3 + $0x380] sm:$0xf]
    %v1453 = vld [vmem:[%s3 + $0x388] sm:$0xf]
    %v1455 = vsel %vm345, %v1319, 0
    %v1458 = vsel %vm367, %v1451, 0
    %v1461 = vsel %vm367, %v1452, 0
    %v1464 = vsel %vm367, %v1453, 0
    %1466 = vmatprep.subr.mxu0 %v1341
    %1467 = vmatpush1.msra.mxu0 %v1340
    %1468 = vmatprep.subr.mxu0 %v1344
    %1469 = vmatpush1.msra.mxu0 %v1343
    %1470 = vmatprep.subr.mxu0 %v1347
    %1471 = vmatpush1.msra.mxu0 %v1346
    %1472 = vmatprep.subr.mxu0 %v1350
    %1473 = vmatpush1.msra.mxu0 %v1349
    %1474 = vmatprep.subr.mxu0 %v1353
    %1475 = vmatpush1.msra.mxu0 %v1352
    %1476 = vmatprep.subr.mxu0 %v1356
    %1477 = vmatpush1.msra.mxu0 %v1355
    %1478 = vmatprep.subr.mxu0 %v1359
    %1479 = vmatpush1.msra.mxu0 %v1358
    %1480 = vmatprep.subr.mxu0 %v1362
    %1481 = vmatpush1.msra.mxu0 %v1361
    %1482 = vmatprep.subr.mxu0 %v1365
    %1483 = vmatpush1.msra.mxu0 %v1364
    %1484 = vmatprep.subr.mxu0 %v1368
    %1485 = vmatpush1.msra.mxu0 %v1367
    %1486 = vmatprep.subr.mxu0 %v1371
    %1487 = vmatpush1.msra.mxu0 %v1370
    %1488 = vmatprep.subr.mxu0 %v1374
    %1489 = vmatpush1.msra.mxu0 %v1373
    %1490 = vmatprep.subr.mxu0 %v1377
    %1491 = vmatpush1.msra.mxu0 %v1376
    %1492 = vmatprep.subr.mxu0 %v1380
    %1493 = vmatpush1.msra.mxu0 %v1379
    %1494 = vmatprep.subr.mxu0 %v1383
    %1495 = vmatpush1.msra.mxu0 %v1382
    %1496 = vmatprep.subr.mxu0 %v1386
    %1497 = vmatpush1.msra.mxu0 %v1385
    %1498 = vmatprep.subr.mxu0 %v1389
    %1499 = vmatpush1.msra.mxu0 %v1388
    %1500 = vmatprep.subr.mxu0 %v1392
    %1501 = vmatpush1.msra.mxu0 %v1391
    %1502 = vmatprep.subr.mxu0 %v1395
    %1503 = vmatpush1.msra.mxu0 %v1394
    %1504 = vmatprep.subr.mxu0 %v1398
    %1505 = vmatpush1.msra.mxu0 %v1397
    %1506 = vmatprep.subr.mxu0 %v1401
    %1507 = vmatpush1.msra.mxu0 %v1400
    %1508 = vmatprep.subr.mxu0 %v1404
    %1509 = vmatpush1.msra.mxu0 %v1403
    %1510 = vmatprep.subr.mxu0 %v1407
    %1511 = vmatpush1.msra.mxu0 %v1406
    %1512 = vmatprep.subr.mxu0 %v1410
    %1513 = vmatpush1.msra.mxu0 %v1409
    %1514 = vmatprep.subr.mxu0 %v1413
    %1515 = vmatpush1.msra.mxu0 %v1412
    %1516 = vmatprep.subr.mxu0 %v1416
    %1517 = vmatpush1.msra.mxu0 %v1415
    %1518 = vmatprep.subr.mxu0 %v1419
    %1519 = vmatpush1.msra.mxu0 %v1418
    %1520 = vmatprep.subr.mxu0 %v1422
    %1521 = vmatpush1.msra.mxu0 %v1421
    %1522 = vmatprep.subr.mxu0 %v1425
    %1523 = vmatpush1.msra.mxu0 %v1424
    %1524 = vmatprep.subr.mxu0 %v1428
    %1525 = vmatpush1.msra.mxu0 %v1427
    %1526 = vmatprep.subr.mxu0 %v1431
    %1527 = vmatpush1.msra.mxu0 %v1430
    %1528 = vmatprep.subr.mxu0 %v1434
    %1529 = vmatpush1.msra.mxu0 %v1433
    %1530 = vmatprep.mubr.f32.mxu0 %v1318
    %1531 = vmatmul.mubr.f32.gmra.mrb[0].mxu0 %v1317
    %v1532 = vpop.f32.mrb[0].mxu0
    %v1533 = vadd.f32 0.0, %v1532
    %v1534 = vpop.f32.mrb[0].mxu0
    %v1535 = vadd.f32 0.0, %v1534
    %1536 = vdwg.mxu0
    %1537 = vmatprep.subr.mxu0 %v1437
    %1538 = vmatpush1.msra.mxu0 %v1436
    %1539 = vmatprep.subr.mxu0 %v1440
    %1540 = vmatpush1.msra.mxu0 %v1439
    %1541 = vmatprep.subr.mxu0 %v1443
    %1542 = vmatpush1.msra.mxu0 %v1442
    %1543 = vmatprep.subr.mxu0 %v1446
    %1544 = vmatpush1.msra.mxu0 %v1445
    %1545 = vmatprep.subr.mxu0 %v1449
    %1546 = vmatpush1.msra.mxu0 %v1448
    %1547 = vmatprep.subr.mxu0 %v1461
    %1548 = vmatpush1.msra.mxu0 %v1458
    %1549 = vmatprep.subr.mxu0 0.0
    %1550 = vmatpush1.msra.mxu0 0.0
    %1551 = vmatprep.subr.mxu0 0.0
    %1552 = vmatpush1.msra.mxu0 0.0
    %1553 = vmatprep.subr.mxu0 0.0
    %1554 = vmatpush1.msra.mxu0 0.0
    %1555 = vmatprep.subr.mxu0 0.0
    %1556 = vmatpush1.msra.mxu0 0.0
    %1557 = vmatprep.subr.mxu0 0.0
    %1558 = vmatpush1.msra.mxu0 0.0
    %1559 = vmatprep.subr.mxu0 0.0
    %1560 = vmatpush1.msra.mxu0 0.0
    %1561 = vmatprep.subr.mxu0 0.0
    %1562 = vmatpush1.msra.mxu0 0.0
    %1563 = vmatprep.subr.mxu0 0.0
    %1564 = vmatpush1.msra.mxu0 0.0
    %1565 = vmatprep.subr.mxu0 0.0
    %1566 = vmatpush1.msra.mxu0 0.0
    %1567 = vmatprep.subr.mxu0 0.0
    %1568 = vmatpush1.msra.mxu0 0.0
    %1569 = vmatprep.subr.mxu0 0.0
    %1570 = vmatpush1.msra.mxu0 0.0
    %1571 = vmatprep.subr.mxu0 0.0
    %1572 = vmatpush1.msra.mxu0 0.0
    %1573 = vmatprep.subr.mxu0 0.0
    %1574 = vmatpush1.msra.mxu0 0.0
    %1575 = vmatprep.subr.mxu0 0.0
    %1576 = vmatpush1.msra.mxu0 0.0
    %1577 = vmatprep.subr.mxu0 0.0
    %1578 = vmatpush1.msra.mxu0 0.0
    %1579 = vmatprep.subr.mxu0 0.0
    %1580 = vmatpush1.msra.mxu0 0.0
    %1581 = vmatprep.subr.mxu0 0.0
    %1582 = vmatpush1.msra.mxu0 0.0
    %1583 = vmatprep.subr.mxu0 0.0
    %1584 = vmatpush1.msra.mxu0 0.0
    %1585 = vmatprep.subr.mxu0 0.0
    %1586 = vmatpush1.msra.mxu0 0.0
    %1587 = vmatprep.subr.mxu0 0.0
    %1588 = vmatpush1.msra.mxu0 0.0
    %1589 = vmatprep.subr.mxu0 0.0
    %1590 = vmatpush1.msra.mxu0 0.0
    %1591 = vmatprep.subr.mxu0 0.0
    %1592 = vmatpush1.msra.mxu0 0.0
    %1593 = vmatprep.subr.mxu0 0.0
    %1594 = vmatpush1.msra.mxu0 0.0
    %1595 = vmatprep.subr.mxu0 0.0
    %1596 = vmatpush1.msra.mxu0 0.0
    %1597 = vmatprep.subr.mxu0 0.0
    %1598 = vmatpush1.msra.mxu0 0.0
    %1599 = vmatprep.subr.mxu0 0.0
    %1600 = vmatpush1.msra.mxu0 0.0
    %1601 = vmatprep.mubr.f32.mxu0 0.0
    %1602 = vmatmul.mubr.f32.gmra.mrb[0].mxu0 %v1455
    %v1603 = vpop.f32.mrb[0].mxu0
    %v1604 = vadd.f32 %v1533, %v1603
    %v1605 = vpop.f32.mrb[0].mxu0
    %v1606 = vadd.f32 %v1535, %v1605
    %1607 = vdwg.mxu0
    %1608 = vmatprep.subr.mxu0 0.0
    %1609 = vmatpush1.msra.mxu0 %v1342
    %1610 = vmatprep.subr.mxu0 0.0
    %1611 = vmatpush1.msra.mxu0 %v1345
    %1612 = vmatprep.subr.mxu0 0.0
    %1613 = vmatpush1.msra.mxu0 %v1348
    %1614 = vmatprep.subr.mxu0 0.0
    %1615 = vmatpush1.msra.mxu0 %v1351
    %1616 = vmatprep.subr.mxu0 0.0
    %1617 = vmatpush1.msra.mxu0 %v1354
    %1618 = vmatprep.subr.mxu0 0.0
    %1619 = vmatpush1.msra.mxu0 %v1357
    %1620 = vmatprep.subr.mxu0 0.0
    %1621 = vmatpush1.msra.mxu0 %v1360
    %1622 = vmatprep.subr.mxu0 0.0
    %1623 = vmatpush1.msra.mxu0 %v1363
    %1624 = vmatprep.subr.mxu0 0.0
    %1625 = vmatpush1.msra.mxu0 %v1366
    %1626 = vmatprep.subr.mxu0 0.0
    %1627 = vmatpush1.msra.mxu0 %v1369
    %1628 = vmatprep.subr.mxu0 0.0
    %1629 = vmatpush1.msra.mxu0 %v1372
    %1630 = vmatprep.subr.mxu0 0.0
    %1631 = vmatpush1.msra.mxu0 %v1375
    %1632 = vmatprep.subr.mxu0 0.0
    %1633 = vmatpush1.msra.mxu0 %v1378
    %1634 = vmatprep.subr.mxu0 0.0
    %1635 = vmatpush1.msra.mxu0 %v1381
    %1636 = vmatprep.subr.mxu0 0.0
    %1637 = vmatpush1.msra.mxu0 %v1384
    %1638 = vmatprep.subr.mxu0 0.0
    %1639 = vmatpush1.msra.mxu0 %v1387
    %1640 = vmatprep.subr.mxu0 0.0
    %1641 = vmatpush1.msra.mxu0 %v1390
    %1642 = vmatprep.subr.mxu0 0.0
    %1643 = vmatpush1.msra.mxu0 %v1393
    %1644 = vmatprep.subr.mxu0 0.0
    %1645 = vmatpush1.msra.mxu0 %v1396
    %1646 = vmatprep.subr.mxu0 0.0
    %1647 = vmatpush1.msra.mxu0 %v1399
    %1648 = vmatprep.subr.mxu0 0.0
    %1649 = vmatpush1.msra.mxu0 %v1402
    %1650 = vmatprep.subr.mxu0 0.0
    %1651 = vmatpush1.msra.mxu0 %v1405
    %1652 = vmatprep.subr.mxu0 0.0
    %1653 = vmatpush1.msra.mxu0 %v1408
    %1654 = vmatprep.subr.mxu0 0.0
    %1655 = vmatpush1.msra.mxu0 %v1411
    %1656 = vmatprep.subr.mxu0 0.0
    %1657 = vmatpush1.msra.mxu0 %v1414
    %1658 = vmatprep.subr.mxu0 0.0
    %1659 = vmatpush1.msra.mxu0 %v1417
    %1660 = vmatprep.subr.mxu0 0.0
    %1661 = vmatpush1.msra.mxu0 %v1420
    %1662 = vmatprep.subr.mxu0 0.0
    %1663 = vmatpush1.msra.mxu0 %v1423
    %1664 = vmatprep.subr.mxu0 0.0
    %1665 = vmatpush1.msra.mxu0 %v1426
    %1666 = vmatprep.subr.mxu0 0.0
    %1667 = vmatpush1.msra.mxu0 %v1429
    %1668 = vmatprep.subr.mxu0 0.0
    %1669 = vmatpush1.msra.mxu0 %v1432
    %1670 = vmatprep.subr.mxu0 0.0
    %1671 = vmatpush1.msra.mxu0 %v1435
    %1672 = vmatprep.mubr.f32.mxu0 %v1318
    %1673 = vmatmul.mubr.f32.gmra.mrb[0].mxu0 %v1317
    %v1674 = vpop.f32.mrb[0].mxu0
    %v1675 = vadd.f32 0.0, %v1674
    %v1676 = vpop.f32.mrb[0].mxu0
    %1677 = vdwg.mxu0
    %1678 = vmatprep.subr.mxu0 0.0
    %1679 = vmatpush1.msra.mxu0 %v1438
    %1680 = vmatprep.subr.mxu0 0.0
    %1681 = vmatpush1.msra.mxu0 %v1441
    %1682 = vmatprep.subr.mxu0 0.0
    %1683 = vmatpush1.msra.mxu0 %v1444
    %1684 = vmatprep.subr.mxu0 0.0
    %1685 = vmatpush1.msra.mxu0 %v1447
    %1686 = vmatprep.subr.mxu0 0.0
    %1687 = vmatpush1.msra.mxu0 %v1450
    %1688 = vmatprep.subr.mxu0 0.0
    %1689 = vmatpush1.msra.mxu0 %v1464
    %1690 = vmatprep.subr.mxu0 0.0
    %1691 = vmatpush1.msra.mxu0 0.0
    %1692 = vmatprep.subr.mxu0 0.0
    %1693 = vmatpush1.msra.mxu0 0.0
    %1694 = vmatprep.subr.mxu0 0.0
    %1695 = vmatpush1.msra.mxu0 0.0
    %1696 = vmatprep.subr.mxu0 0.0
    %1697 = vmatpush1.msra.mxu0 0.0
    %1698 = vmatprep.subr.mxu0 0.0
    %1699 = vmatpush1.msra.mxu0 0.0
    %1700 = vmatprep.subr.mxu0 0.0
    %1701 = vmatpush1.msra.mxu0 0.0
    %1702 = vmatprep.subr.mxu0 0.0
    %1703 = vmatpush1.msra.mxu0 0.0
    %1704 = vmatprep.subr.mxu0 0.0
    %1705 = vmatpush1.msra.mxu0 0.0
    %1706 = vmatprep.subr.mxu0 0.0
    %1707 = vmatpush1.msra.mxu0 0.0
    %1708 = vmatprep.subr.mxu0 0.0
    %1709 = vmatpush1.msra.mxu0 0.0
    %1710 = vmatprep.subr.mxu0 0.0
    %1711 = vmatpush1.msra.mxu0 0.0
    %1712 = vmatprep.subr.mxu0 0.0
    %1713 = vmatpush1.msra.mxu0 0.0
    %1714 = vmatprep.subr.mxu0 0.0
    %1715 = vmatpush1.msra.mxu0 0.0
    %1716 = vmatprep.subr.mxu0 0.0
    %1717 = vmatpush1.msra.mxu0 0.0
    %1718 = vmatprep.subr.mxu0 0.0
    %1719 = vmatpush1.msra.mxu0 0.0
    %1720 = vmatprep.subr.mxu0 0.0
    %1721 = vmatpush1.msra.mxu0 0.0
    %1722 = vmatprep.subr.mxu0 0.0
    %1723 = vmatpush1.msra.mxu0 0.0
    %1724 = vmatprep.subr.mxu0 0.0
    %1725 = vmatpush1.msra.mxu0 0.0
    %1726 = vmatprep.subr.mxu0 0.0
    %1727 = vmatpush1.msra.mxu0 0.0
    %1728 = vmatprep.subr.mxu0 0.0
    %1729 = vmatpush1.msra.mxu0 0.0
    %1730 = vmatprep.subr.mxu0 0.0
    %1731 = vmatpush1.msra.mxu0 0.0
    %1732 = vmatprep.subr.mxu0 0.0
    %1733 = vmatpush1.msra.mxu0 0.0
    %1734 = vmatprep.subr.mxu0 0.0
    %1735 = vmatpush1.msra.mxu0 0.0
    %1736 = vmatprep.subr.mxu0 0.0
    %1737 = vmatpush1.msra.mxu0 0.0
    %1738 = vmatprep.subr.mxu0 0.0
    %1739 = vmatpush1.msra.mxu0 0.0
    %1740 = vmatprep.subr.mxu0 0.0
    %1741 = vmatpush1.msra.mxu0 0.0
    %1742 = vmatprep.mubr.f32.mxu0 0.0
    %1743 = vmatmul.mubr.f32.gmra.mrb[0].mxu0 %v1455
    %v1744 = vpop.f32.mrb[0].mxu0
    %v1745 = vadd.f32 %v1675, %v1744
    %v1746 = vpop.f32.mrb[0].mxu0
    %1747 = vdwg.mxu0
    %v1749 = vlaneseq
    %v1750 = vshrl.u32 %v1749, 7
    %v1751 = vsub.s32 0, %v1750
    %v1752 = vrot.slane %v1339, %v1751
    %v1753 = vlaneseq
    %v1754 = vshrl.u32 %v1753, 7
    %v1755 = vsub.s32 1, %v1754
    %v1756 = vrot.slane %v1339, %v1755
    %v1757 = vlaneseq
    %v1758 = vshrl.u32 %v1757, 7
    %v1759 = vsub.s32 2, %v1758
    %v1760 = vrot.slane %v1339, %v1759
    %v1764 = vadd.f32 %v1752, %v1604
    %v1765 = vadd.f32 %v1756, %v1606
    %v1766 = vadd.f32 %v1760, %v1745
    %s1767 = scalar_lea.vmem %s3, 912
    %v1768 = vld [vmem:[%s1767] sm:$0xff]
    %v1769 = vld [vmem:[%s1767 + $0x8] sm:$0xff]
    %v1770 = vld [vmem:[%s1767 + $0x10] sm:$0xff]
    %v1771 = vld [vmem:[%s1767 + $0x18] sm:$0xff]
    %v1772 = vld [vmem:[%s1767 + $0x20] sm:$0xff]
    %v1773 = vld [vmem:[%s1767 + $0x28] sm:$0xff]
    %v1774 = vld [vmem:[%s1767 + $0x30] sm:$0xff]
    %v1775 = vld [vmem:[%s1767 + $0x38] sm:$0xff]
    %v1776 = vld [vmem:[%s1767 + $0x40] sm:$0xff]
    %v1777 = vld [vmem:[%s1767 + $0x48] sm:$0xff]
    %v1778 = vld [vmem:[%s1767 + $0x50] sm:$0xff]
    %v1779 = vld [vmem:[%s1767 + $0x58] sm:$0xff]
    %v1780 = vld [vmem:[%s1767 + $0x60] sm:$0xff]
    %v1781 = vld [vmem:[%s1767 + $0x68] sm:$0xff]
    %v1782 = vld [vmem:[%s1767 + $0x70] sm:$0xff]
    %v1783 = vld [vmem:[%s1767 + $0x78] sm:$0xff]
    %v1784 = vld [vmem:[%s1767 + $0x80] sm:$0xff]
    %v1785 = vld [vmem:[%s1767 + $0x88] sm:$0xff]
    %v1786 = vld [vmem:[%s1767 + $0x90] sm:$0xff]
    %v1787 = vld [vmem:[%s1767 + $0x98] sm:$0xff]
    %v1788 = vld [vmem:[%s1767 + $0xa0] sm:$0xff]
    %v1789 = vld [vmem:[%s1767 + $0xa8] sm:$0xff]
    %v1790 = vld [vmem:[%s1767 + $0xb0] sm:$0xff]
    %v1791 = vld [vmem:[%s1767 + $0xb8] sm:$0xff]
    %v1792 = vld [vmem:[%s1767 + $0xc0] sm:$0xff]
    %v1793 = vld [vmem:[%s1767 + $0xc8] sm:$0xff]
    %v1794 = vld [vmem:[%s1767 + $0xd0] sm:$0xff]
    %v1795 = vld [vmem:[%s1767 + $0xd8] sm:$0xff]
    %v1796 = vld [vmem:[%s1767 + $0xe0] sm:$0xff]
    %v1797 = vld [vmem:[%s1767 + $0xe8] sm:$0xff]
    %v1798 = vld [vmem:[%s1767 + $0xf0] sm:$0xff]
    %v1799 = vld [vmem:[%s1767 + $0xf8] sm:$0xff]
    %v1800 = vld [vmem:[%s1767 + $0x100] sm:$0xff]
    %v1801 = vld [vmem:[%s1767 + $0x108] sm:$0xff]
    %v1802 = vld [vmem:[%s1767 + $0x110] sm:$0xff]
    %v1803 = vld [vmem:[%s1767 + $0x118] sm:$0xff]
    %v1804 = vld [vmem:[%s1767 + $0x120] sm:$0xff]
    %v1805 = vld [vmem:[%s1767 + $0x128] sm:$0xff]
    %v1806 = vld [vmem:[%s1767 + $0x130] sm:$0xff]
    %v1807 = vld [vmem:[%s1767 + $0x138] sm:$0xff]
    %v1808 = vld [vmem:[%s1767 + $0x140] sm:$0xff]
    %v1809 = vld [vmem:[%s1767 + $0x148] sm:$0xff]
    %v1810 = vld [vmem:[%s1767 + $0x150] sm:$0xff]
    %v1811 = vld [vmem:[%s1767 + $0x158] sm:$0xff]
    %v1812 = vld [vmem:[%s1767 + $0x160] sm:$0xff]
    %v1813 = vld [vmem:[%s1767 + $0x168] sm:$0xff]
    %v1814 = vld [vmem:[%s1767 + $0x170] sm:$0xff]
    %v1815 = vld [vmem:[%s1767 + $0x178] sm:$0xff]
    %v1816 = vld [vmem:[%s1767 + $0x180] sm:$0xff]
    %v1817 = vld [vmem:[%s1767 + $0x188] sm:$0xff]
    %v1818 = vld [vmem:[%s1767 + $0x190] sm:$0xff]
    %v1819 = vld [vmem:[%s1767 + $0x198] sm:$0xff]
    %v1820 = vld [vmem:[%s1767 + $0x1a0] sm:$0xff]
    %v1821 = vld [vmem:[%s1767 + $0x1a8] sm:$0xff]
    %v1822 = vld [vmem:[%s1767 + $0x1b0] sm:$0xff]
    %v1823 = vld [vmem:[%s1767 + $0x1b8] sm:$0xff]
    %v1824 = vld [vmem:[%s1767 + $0x1c0] sm:$0xff]
    %v1825 = vld [vmem:[%s1767 + $0x1c8] sm:$0xff]
    %v1826 = vld [vmem:[%s1767 + $0x1d0] sm:$0xff]
    %v1827 = vld [vmem:[%s1767 + $0x1d8] sm:$0xff]
    %v1828 = vld [vmem:[%s1767 + $0x1e0] sm:$0xff]
    %v1829 = vld [vmem:[%s1767 + $0x1e8] sm:$0xff]
    %v1830 = vld [vmem:[%s1767 + $0x1f0] sm:$0xff]
    %v1831 = vld [vmem:[%s1767 + $0x1f8] sm:$0xff]
    %v1832 = vld [vmem:[%s1767 + $0x200] sm:$0xff]
    %v1833 = vld [vmem:[%s1767 + $0x208] sm:$0xff]
    %v1834 = vld [vmem:[%s1767 + $0x210] sm:$0xff]
    %v1835 = vld [vmem:[%s1767 + $0x218] sm:$0xff]
    %v1836 = vld [vmem:[%s1767 + $0x220] sm:$0xff]
    %v1837 = vld [vmem:[%s1767 + $0x228] sm:$0xff]
    %v1838 = vld [vmem:[%s1767 + $0x230] sm:$0xff]
    %v1839 = vld [vmem:[%s1767 + $0x238] sm:$0xff]
    %v1840 = vld [vmem:[%s1767 + $0x240] sm:$0xff]
    %v1841 = vld [vmem:[%s1767 + $0x248] sm:$0xff]
    %v1842 = vld [vmem:[%s1767 + $0x250] sm:$0xff]
    %v1843 = vld [vmem:[%s1767 + $0x258] sm:$0xff]
    %v1844 = vld [vmem:[%s1767 + $0x260] sm:$0xff]
    %v1845 = vld [vmem:[%s1767 + $0x268] sm:$0xff]
    %v1846 = vld [vmem:[%s1767 + $0x270] sm:$0xff]
    %v1847 = vld [vmem:[%s1767 + $0x278] sm:$0xff]
    %v1848 = vld [vmem:[%s1767 + $0x280] sm:$0xff]
    %v1849 = vld [vmem:[%s1767 + $0x288] sm:$0xff]
    %v1850 = vld [vmem:[%s1767 + $0x290] sm:$0xff]
    %v1851 = vld [vmem:[%s1767 + $0x298] sm:$0xff]
    %v1852 = vld [vmem:[%s1767 + $0x2a0] sm:$0xff]
    %v1853 = vld [vmem:[%s1767 + $0x2a8] sm:$0xff]
    %v1854 = vld [vmem:[%s1767 + $0x2b0] sm:$0xff]
    %v1855 = vld [vmem:[%s1767 + $0x2b8] sm:$0xff]
    %v1856 = vld [vmem:[%s1767 + $0x2c0] sm:$0xff]
    %v1857 = vld [vmem:[%s1767 + $0x2c8] sm:$0xff]
    %v1858 = vld [vmem:[%s1767 + $0x2d0] sm:$0xff]
    %v1859 = vld [vmem:[%s1767 + $0x2d8] sm:$0xff]
    %v1860 = vld [vmem:[%s1767 + $0x2e0] sm:$0xff]
    %v1861 = vld [vmem:[%s1767 + $0x2e8] sm:$0xff]
    %v1862 = vld [vmem:[%s1767 + $0x2f0] sm:$0xff]
    %v1863 = vld [vmem:[%s1767 + $0x2f8] sm:$0xff]
    %v1864 = vld [vmem:[%s1767 + $0x300] sm:$0xff]
    %v1865 = vld [vmem:[%s1767 + $0x308] sm:$0xff]
    %v1866 = vld [vmem:[%s1767 + $0x310] sm:$0xff]
    %v1867 = vld [vmem:[%s1767 + $0x318] sm:$0xff]
    %v1868 = vld [vmem:[%s1767 + $0x320] sm:$0xff]
    %v1869 = vld [vmem:[%s1767 + $0x328] sm:$0xff]
    %v1870 = vld [vmem:[%s1767 + $0x330] sm:$0xff]
    %v1871 = vld [vmem:[%s1767 + $0x338] sm:$0xff]
    %v1872 = vld [vmem:[%s1767 + $0x340] sm:$0xff]
    %v1873 = vld [vmem:[%s1767 + $0x348] sm:$0xff]
    %v1874 = vld [vmem:[%s1767 + $0x350] sm:$0xff]
    %v1875 = vld [vmem:[%s1767 + $0x358] sm:$0xff]
    %v1876 = vld [vmem:[%s1767 + $0x360] sm:$0xff]
    %v1877 = vld [vmem:[%s1767 + $0x368] sm:$0xff]
    %v1878 = vld [vmem:[%s1767 + $0x370] sm:$0xff]
    %v1879 = vld [vmem:[%s1767 + $0x378] sm:$0xf]
    %v1880 = vld [vmem:[%s1767 + $0x380] sm:$0xf]
    %v1881 = vld [vmem:[%s1767 + $0x388] sm:$0xf]
    %v1883 = vsel %vm345, %v1322, 0
    %v1886 = vsel %vm367, %v1879, 0
    %v1889 = vsel %vm367, %v1880, 0
    %v1892 = vsel %vm367, %v1881, 0
    %1894 = vmatprep.subr.mxu0 %v1769
    %1895 = vmatpush1.msra.mxu0 %v1768
    %1896 = vmatprep.subr.mxu0 %v1772
    %1897 = vmatpush1.msra.mxu0 %v1771
    %1898 = vmatprep.subr.mxu0 %v1775
    %1899 = vmatpush1.msra.mxu0 %v1774
    %1900 = vmatprep.subr.mxu0 %v1778
    %1901 = vmatpush1.msra.mxu0 %v1777
    %1902 = vmatprep.subr.mxu0 %v1781
    %1903 = vmatpush1.msra.mxu0 %v1780
    %1904 = vmatprep.subr.mxu0 %v1784
    %1905 = vmatpush1.msra.mxu0 %v1783
    %1906 = vmatprep.subr.mxu0 %v1787
    %1907 = vmatpush1.msra.mxu0 %v1786
    %1908 = vmatprep.subr.mxu0 %v1790
    %1909 = vmatpush1.msra.mxu0 %v1789
    %1910 = vmatprep.subr.mxu0 %v1793
    %1911 = vmatpush1.msra.mxu0 %v1792
    %1912 = vmatprep.subr.mxu0 %v1796
    %1913 = vmatpush1.msra.mxu0 %v1795
    %1914 = vmatprep.subr.mxu0 %v1799
    %1915 = vmatpush1.msra.mxu0 %v1798
    %1916 = vmatprep.subr.mxu0 %v1802
    %1917 = vmatpush1.msra.mxu0 %v1801
    %1918 = vmatprep.subr.mxu0 %v1805
    %1919 = vmatpush1.msra.mxu0 %v1804
    %1920 = vmatprep.subr.mxu0 %v1808
    %1921 = vmatpush1.msra.mxu0 %v1807
    %1922 = vmatprep.subr.mxu0 %v1811
    %1923 = vmatpush1.msra.mxu0 %v1810
    %1924 = vmatprep.subr.mxu0 %v1814
    %1925 = vmatpush1.msra.mxu0 %v1813
    %1926 = vmatprep.subr.mxu0 %v1817
    %1927 = vmatpush1.msra.mxu0 %v1816
    %1928 = vmatprep.subr.mxu0 %v1820
    %1929 = vmatpush1.msra.mxu0 %v1819
    %1930 = vmatprep.subr.mxu0 %v1823
    %1931 = vmatpush1.msra.mxu0 %v1822
    %1932 = vmatprep.subr.mxu0 %v1826
    %1933 = vmatpush1.msra.mxu0 %v1825
    %1934 = vmatprep.subr.mxu0 %v1829
    %1935 = vmatpush1.msra.mxu0 %v1828
    %1936 = vmatprep.subr.mxu0 %v1832
    %1937 = vmatpush1.msra.mxu0 %v1831
    %1938 = vmatprep.subr.mxu0 %v1835
    %1939 = vmatpush1.msra.mxu0 %v1834
    %1940 = vmatprep.subr.mxu0 %v1838
    %1941 = vmatpush1.msra.mxu0 %v1837
    %1942 = vmatprep.subr.mxu0 %v1841
    %1943 = vmatpush1.msra.mxu0 %v1840
    %1944 = vmatprep.subr.mxu0 %v1844
    %1945 = vmatpush1.msra.mxu0 %v1843
    %1946 = vmatprep.subr.mxu0 %v1847
    %1947 = vmatpush1.msra.mxu0 %v1846
    %1948 = vmatprep.subr.mxu0 %v1850
    %1949 = vmatpush1.msra.mxu0 %v1849
    %1950 = vmatprep.subr.mxu0 %v1853
    %1951 = vmatpush1.msra.mxu0 %v1852
    %1952 = vmatprep.subr.mxu0 %v1856
    %1953 = vmatpush1.msra.mxu0 %v1855
    %1954 = vmatprep.subr.mxu0 %v1859
    %1955 = vmatpush1.msra.mxu0 %v1858
    %1956 = vmatprep.subr.mxu0 %v1862
    %1957 = vmatpush1.msra.mxu0 %v1861
    %1958 = vmatprep.mubr.f32.mxu0 %v1321
    %1959 = vmatmul.mubr.f32.gmra.mrb[0].mxu0 %v1320
    %v1960 = vpop.f32.mrb[0].mxu0
    %v1961 = vadd.f32 0.0, %v1960
    %v1962 = vpop.f32.mrb[0].mxu0
    %v1963 = vadd.f32 0.0, %v1962
    %1964 = vdwg.mxu0
    %1965 = vmatprep.subr.mxu0 %v1865
    %1966 = vmatpush1.msra.mxu0 %v1864
    %1967 = vmatprep.subr.mxu0 %v1868
    %1968 = vmatpush1.msra.mxu0 %v1867
    %1969 = vmatprep.subr.mxu0 %v1871
    %1970 = vmatpush1.msra.mxu0 %v1870
    %1971 = vmatprep.subr.mxu0 %v1874
    %1972 = vmatpush1.msra.mxu0 %v1873
    %1973 = vmatprep.subr.mxu0 %v1877
    %1974 = vmatpush1.msra.mxu0 %v1876
    %1975 = vmatprep.subr.mxu0 %v1889
    %1976 = vmatpush1.msra.mxu0 %v1886
    %1977 = vmatprep.subr.mxu0 0.0
    %1978 = vmatpush1.msra.mxu0 0.0
    %1979 = vmatprep.subr.mxu0 0.0
    %1980 = vmatpush1.msra.mxu0 0.0
    %1981 = vmatprep.subr.mxu0 0.0
    %1982 = vmatpush1.msra.mxu0 0.0
    %1983 = vmatprep.subr.mxu0 0.0
    %1984 = vmatpush1.msra.mxu0 0.0
    %1985 = vmatprep.subr.mxu0 0.0
    %1986 = vmatpush1.msra.mxu0 0.0
    %1987 = vmatprep.subr.mxu0 0.0
    %1988 = vmatpush1.msra.mxu0 0.0
    %1989 = vmatprep.subr.mxu0 0.0
    %1990 = vmatpush1.msra.mxu0 0.0
    %1991 = vmatprep.subr.mxu0 0.0
    %1992 = vmatpush1.msra.mxu0 0.0
    %1993 = vmatprep.subr.mxu0 0.0
    %1994 = vmatpush1.msra.mxu0 0.0
    %1995 = vmatprep.subr.mxu0 0.0
    %1996 = vmatpush1.msra.mxu0 0.0
    %1997 = vmatprep.subr.mxu0 0.0
    %1998 = vmatpush1.msra.mxu0 0.0
    %1999 = vmatprep.subr.mxu0 0.0
    %2000 = vmatpush1.msra.mxu0 0.0
    %2001 = vmatprep.subr.mxu0 0.0
    %2002 = vmatpush1.msra.mxu0 0.0
    %2003 = vmatprep.subr.mxu0 0.0
    %2004 = vmatpush1.msra.mxu0 0.0
    %2005 = vmatprep.subr.mxu0 0.0
    %2006 = vmatpush1.msra.mxu0 0.0
    %2007 = vmatprep.subr.mxu0 0.0
    %2008 = vmatpush1.msra.mxu0 0.0
    %2009 = vmatprep.subr.mxu0 0.0
    %2010 = vmatpush1.msra.mxu0 0.0
    %2011 = vmatprep.subr.mxu0 0.0
    %2012 = vmatpush1.msra.mxu0 0.0
    %2013 = vmatprep.subr.mxu0 0.0
    %2014 = vmatpush1.msra.mxu0 0.0
    %2015 = vmatprep.subr.mxu0 0.0
    %2016 = vmatpush1.msra.mxu0 0.0
    %2017 = vmatprep.subr.mxu0 0.0
    %2018 = vmatpush1.msra.mxu0 0.0
    %2019 = vmatprep.subr.mxu0 0.0
    %2020 = vmatpush1.msra.mxu0 0.0
    %2021 = vmatprep.subr.mxu0 0.0
    %2022 = vmatpush1.msra.mxu0 0.0
    %2023 = vmatprep.subr.mxu0 0.0
    %2024 = vmatpush1.msra.mxu0 0.0
    %2025 = vmatprep.subr.mxu0 0.0
    %2026 = vmatpush1.msra.mxu0 0.0
    %2027 = vmatprep.subr.mxu0 0.0
    %2028 = vmatpush1.msra.mxu0 0.0
    %2029 = vmatprep.mubr.f32.mxu0 0.0
    %2030 = vmatmul.mubr.f32.gmra.mrb[0].mxu0 %v1883
    %v2031 = vpop.f32.mrb[0].mxu0
    %v2032 = vadd.f32 %v1961, %v2031
    %v2033 = vpop.f32.mrb[0].mxu0
    %v2034 = vadd.f32 %v1963, %v2033
    %2035 = vdwg.mxu0
    %2036 = vmatprep.subr.mxu0 0.0
    %2037 = vmatpush1.msra.mxu0 %v1770
    %2038 = vmatprep.subr.mxu0 0.0
    %2039 = vmatpush1.msra.mxu0 %v1773
    %2040 = vmatprep.subr.mxu0 0.0
    %2041 = vmatpush1.msra.mxu0 %v1776
    %2042 = vmatprep.subr.mxu0 0.0
    %2043 = vmatpush1.msra.mxu0 %v1779
    %2044 = vmatprep.subr.mxu0 0.0
    %2045 = vmatpush1.msra.mxu0 %v1782
    %2046 = vmatprep.subr.mxu0 0.0
    %2047 = vmatpush1.msra.mxu0 %v1785
    %2048 = vmatprep.subr.mxu0 0.0
    %2049 = vmatpush1.msra.mxu0 %v1788
    %2050 = vmatprep.subr.mxu0 0.0
    %2051 = vmatpush1.msra.mxu0 %v1791
    %2052 = vmatprep.subr.mxu0 0.0
    %2053 = vmatpush1.msra.mxu0 %v1794
    %2054 = vmatprep.subr.mxu0 0.0
    %2055 = vmatpush1.msra.mxu0 %v1797
    %2056 = vmatprep.subr.mxu0 0.0
    %2057 = vmatpush1.msra.mxu0 %v1800
    %2058 = vmatprep.subr.mxu0 0.0
    %2059 = vmatpush1.msra.mxu0 %v1803
    %2060 = vmatprep.subr.mxu0 0.0
    %2061 = vmatpush1.msra.mxu0 %v1806
    %2062 = vmatprep.subr.mxu0 0.0
    %2063 = vmatpush1.msra.mxu0 %v1809
    %2064 = vmatprep.subr.mxu0 0.0
    %2065 = vmatpush1.msra.mxu0 %v1812
    %2066 = vmatprep.subr.mxu0 0.0
    %2067 = vmatpush1.msra.mxu0 %v1815
    %2068 = vmatprep.subr.mxu0 0.0
    %2069 = vmatpush1.msra.mxu0 %v1818
    %2070 = vmatprep.subr.mxu0 0.0
    %2071 = vmatpush1.msra.mxu0 %v1821
    %2072 = vmatprep.subr.mxu0 0.0
    %2073 = vmatpush1.msra.mxu0 %v1824
    %2074 = vmatprep.subr.mxu0 0.0
    %2075 = vmatpush1.msra.mxu0 %v1827
    %2076 = vmatprep.subr.mxu0 0.0
    %2077 = vmatpush1.msra.mxu0 %v1830
    %2078 = vmatprep.subr.mxu0 0.0
    %2079 = vmatpush1.msra.mxu0 %v1833
    %2080 = vmatprep.subr.mxu0 0.0
    %2081 = vmatpush1.msra.mxu0 %v1836
    %2082 = vmatprep.subr.mxu0 0.0
    %2083 = vmatpush1.msra.mxu0 %v1839
    %2084 = vmatprep.subr.mxu0 0.0
    %2085 = vmatpush1.msra.mxu0 %v1842
    %2086 = vmatprep.subr.mxu0 0.0
    %2087 = vmatpush1.msra.mxu0 %v1845
    %2088 = vmatprep.subr.mxu0 0.0
    %2089 = vmatpush1.msra.mxu0 %v1848
    %2090 = vmatprep.subr.mxu0 0.0
    %2091 = vmatpush1.msra.mxu0 %v1851
    %2092 = vmatprep.subr.mxu0 0.0
    %2093 = vmatpush1.msra.mxu0 %v1854
    %2094 = vmatprep.subr.mxu0 0.0
    %2095 = vmatpush1.msra.mxu0 %v1857
    %2096 = vmatprep.subr.mxu0 0.0
    %2097 = vmatpush1.msra.mxu0 %v1860
    %2098 = vmatprep.subr.mxu0 0.0
    %2099 = vmatpush1.msra.mxu0 %v1863
    %2100 = vmatprep.mubr.f32.mxu0 %v1321
    %2101 = vmatmul.mubr.f32.gmra.mrb[0].mxu0 %v1320
    %v2102 = vpop.f32.mrb[0].mxu0
    %v2103 = vadd.f32 0.0, %v2102
    %v2104 = vpop.f32.mrb[0].mxu0
    %2105 = vdwg.mxu0
    %2106 = vmatprep.subr.mxu0 0.0
    %2107 = vmatpush1.msra.mxu0 %v1866
    %2108 = vmatprep.subr.mxu0 0.0
    %2109 = vmatpush1.msra.mxu0 %v1869
    %2110 = vmatprep.subr.mxu0 0.0
    %2111 = vmatpush1.msra.mxu0 %v1872
    %2112 = vmatprep.subr.mxu0 0.0
    %2113 = vmatpush1.msra.mxu0 %v1875
    %2114 = vmatprep.subr.mxu0 0.0
    %2115 = vmatpush1.msra.mxu0 %v1878
    %2116 = vmatprep.subr.mxu0 0.0
    %2117 = vmatpush1.msra.mxu0 %v1892
    %2118 = vmatprep.subr.mxu0 0.0
    %2119 = vmatpush1.msra.mxu0 0.0
    %2120 = vmatprep.subr.mxu0 0.0
    %2121 = vmatpush1.msra.mxu0 0.0
    %2122 = vmatprep.subr.mxu0 0.0
    %2123 = vmatpush1.msra.mxu0 0.0
    %2124 = vmatprep.subr.mxu0 0.0
    %2125 = vmatpush1.msra.mxu0 0.0
    %2126 = vmatprep.subr.mxu0 0.0
    %2127 = vmatpush1.msra.mxu0 0.0
    %2128 = vmatprep.subr.mxu0 0.0
    %2129 = vmatpush1.msra.mxu0 0.0
    %2130 = vmatprep.subr.mxu0 0.0
    %2131 = vmatpush1.msra.mxu0 0.0
    %2132 = vmatprep.subr.mxu0 0.0
    %2133 = vmatpush1.msra.mxu0 0.0
    %2134 = vmatprep.subr.mxu0 0.0
    %2135 = vmatpush1.msra.mxu0 0.0
    %2136 = vmatprep.subr.mxu0 0.0
    %2137 = vmatpush1.msra.mxu0 0.0
    %2138 = vmatprep.subr.mxu0 0.0
    %2139 = vmatpush1.msra.mxu0 0.0
    %2140 = vmatprep.subr.mxu0 0.0
    %2141 = vmatpush1.msra.mxu0 0.0
    %2142 = vmatprep.subr.mxu0 0.0
    %2143 = vmatpush1.msra.mxu0 0.0
    %2144 = vmatprep.subr.mxu0 0.0
    %2145 = vmatpush1.msra.mxu0 0.0
    %2146 = vmatprep.subr.mxu0 0.0
    %2147 = vmatpush1.msra.mxu0 0.0
    %2148 = vmatprep.subr.mxu0 0.0
    %2149 = vmatpush1.msra.mxu0 0.0
    %2150 = vmatprep.subr.mxu0 0.0
    %2151 = vmatpush1.msra.mxu0 0.0
    %2152 = vmatprep.subr.mxu0 0.0
    %2153 = vmatpush1.msra.mxu0 0.0
    %2154 = vmatprep.subr.mxu0 0.0
    %2155 = vmatpush1.msra.mxu0 0.0
    %2156 = vmatprep.subr.mxu0 0.0
    %2157 = vmatpush1.msra.mxu0 0.0
    %2158 = vmatprep.subr.mxu0 0.0
    %2159 = vmatpush1.msra.mxu0 0.0
    %2160 = vmatprep.subr.mxu0 0.0
    %2161 = vmatpush1.msra.mxu0 0.0
    %2162 = vmatprep.subr.mxu0 0.0
    %2163 = vmatpush1.msra.mxu0 0.0
    %2164 = vmatprep.subr.mxu0 0.0
    %2165 = vmatpush1.msra.mxu0 0.0
    %2166 = vmatprep.subr.mxu0 0.0
    %2167 = vmatpush1.msra.mxu0 0.0
    %2168 = vmatprep.subr.mxu0 0.0
    %2169 = vmatpush1.msra.mxu0 0.0
    %2170 = vmatprep.mubr.f32.mxu0 0.0
    %2171 = vmatmul.mubr.f32.gmra.mrb[0].mxu0 %v1883
    %v2172 = vpop.f32.mrb[0].mxu0
    %v2173 = vadd.f32 %v2103, %v2172
    %v2174 = vpop.f32.mrb[0].mxu0
    %2175 = vdwg.mxu0
    %v2176 = vadd.f32 %v1764, %v2032
    %v2177 = vadd.f32 %v1765, %v2034
    %v2178 = vadd.f32 %v1766, %v2173
    %s2179 = scalar_lea.vmem %s3, 1824
    %v2180 = vld [vmem:[%s2179] sm:$0xff]
    %v2181 = vld [vmem:[%s2179 + $0x8] sm:$0xff]
    %v2182 = vld [vmem:[%s2179 + $0x10] sm:$0xff]
    %v2183 = vld [vmem:[%s2179 + $0x18] sm:$0xff]
    %v2184 = vld [vmem:[%s2179 + $0x20] sm:$0xff]
    %v2185 = vld [vmem:[%s2179 + $0x28] sm:$0xff]
    %v2186 = vld [vmem:[%s2179 + $0x30] sm:$0xff]
    %v2187 = vld [vmem:[%s2179 + $0x38] sm:$0xff]
    %v2188 = vld [vmem:[%s2179 + $0x40] sm:$0xff]
    %v2189 = vld [vmem:[%s2179 + $0x48] sm:$0xff]
    %v2190 = vld [vmem:[%s2179 + $0x50] sm:$0xff]
    %v2191 = vld [vmem:[%s2179 + $0x58] sm:$0xff]
    %v2192 = vld [vmem:[%s2179 + $0x60] sm:$0xff]
    %v2193 = vld [vmem:[%s2179 + $0x68] sm:$0xff]
    %v2194 = vld [vmem:[%s2179 + $0x70] sm:$0xff]
    %v2195 = vld [vmem:[%s2179 + $0x78] sm:$0xff]
    %v2196 = vld [vmem:[%s2179 + $0x80] sm:$0xff]
    %v2197 = vld [vmem:[%s2179 + $0x88] sm:$0xff]
    %v2198 = vld [vmem:[%s2179 + $0x90] sm:$0xff]
    %v2199 = vld [vmem:[%s2179 + $0x98] sm:$0xff]
    %v2200 = vld [vmem:[%s2179 + $0xa0] sm:$0xff]
    %v2201 = vld [vmem:[%s2179 + $0xa8] sm:$0xff]
    %v2202 = vld [vmem:[%s2179 + $0xb0] sm:$0xff]
    %v2203 = vld [vmem:[%s2179 + $0xb8] sm:$0xff]
    %v2204 = vld [vmem:[%s2179 + $0xc0] sm:$0xff]
    %v2205 = vld [vmem:[%s2179 + $0xc8] sm:$0xff]
    %v2206 = vld [vmem:[%s2179 + $0xd0] sm:$0xff]
    %v2207 = vld [vmem:[%s2179 + $0xd8] sm:$0xff]
    %v2208 = vld [vmem:[%s2179 + $0xe0] sm:$0xff]
    %v2209 = vld [vmem:[%s2179 + $0xe8] sm:$0xff]
    %v2210 = vld [vmem:[%s2179 + $0xf0] sm:$0xff]
    %v2211 = vld [vmem:[%s2179 + $0xf8] sm:$0xff]
    %v2212 = vld [vmem:[%s2179 + $0x100] sm:$0xff]
    %v2213 = vld [vmem:[%s2179 + $0x108] sm:$0xff]
    %v2214 = vld [vmem:[%s2179 + $0x110] sm:$0xff]
    %v2215 = vld [vmem:[%s2179 + $0x118] sm:$0xff]
    %v2216 = vld [vmem:[%s2179 + $0x120] sm:$0xff]
    %v2217 = vld [vmem:[%s2179 + $0x128] sm:$0xff]
    %v2218 = vld [vmem:[%s2179 + $0x130] sm:$0xff]
    %v2219 = vld [vmem:[%s2179 + $0x138] sm:$0xff]
    %v2220 = vld [vmem:[%s2179 + $0x140] sm:$0xff]
    %v2221 = vld [vmem:[%s2179 + $0x148] sm:$0xff]
    %v2222 = vld [vmem:[%s2179 + $0x150] sm:$0xff]
    %v2223 = vld [vmem:[%s2179 + $0x158] sm:$0xff]
    %v2224 = vld [vmem:[%s2179 + $0x160] sm:$0xff]
    %v2225 = vld [vmem:[%s2179 + $0x168] sm:$0xff]
    %v2226 = vld [vmem:[%s2179 + $0x170] sm:$0xff]
    %v2227 = vld [vmem:[%s2179 + $0x178] sm:$0xff]
    %v2228 = vld [vmem:[%s2179 + $0x180] sm:$0xff]
    %v2229 = vld [vmem:[%s2179 + $0x188] sm:$0xff]
    %v2230 = vld [vmem:[%s2179 + $0x190] sm:$0xff]
    %v2231 = vld [vmem:[%s2179 + $0x198] sm:$0xff]
    %v2232 = vld [vmem:[%s2179 + $0x1a0] sm:$0xff]
    %v2233 = vld [vmem:[%s2179 + $0x1a8] sm:$0xff]
    %v2234 = vld [vmem:[%s2179 + $0x1b0] sm:$0xff]
    %v2235 = vld [vmem:[%s2179 + $0x1b8] sm:$0xff]
    %v2236 = vld [vmem:[%s2179 + $0x1c0] sm:$0xff]
    %v2237 = vld [vmem:[%s2179 + $0x1c8] sm:$0xff]
    %v2238 = vld [vmem:[%s2179 + $0x1d0] sm:$0xff]
    %v2239 = vld [vmem:[%s2179 + $0x1d8] sm:$0xff]
    %v2240 = vld [vmem:[%s2179 + $0x1e0] sm:$0xff]
    %v2241 = vld [vmem:[%s2179 + $0x1e8] sm:$0xff]
    %v2242 = vld [vmem:[%s2179 + $0x1f0] sm:$0xff]
    %v2243 = vld [vmem:[%s2179 + $0x1f8] sm:$0xff]
    %v2244 = vld [vmem:[%s2179 + $0x200] sm:$0xff]
    %v2245 = vld [vmem:[%s2179 + $0x208] sm:$0xff]
    %v2246 = vld [vmem:[%s2179 + $0x210] sm:$0xff]
    %v2247 = vld [vmem:[%s2179 + $0x218] sm:$0xff]
    %v2248 = vld [vmem:[%s2179 + $0x220] sm:$0xff]
    %v2249 = vld [vmem:[%s2179 + $0x228] sm:$0xff]
    %v2250 = vld [vmem:[%s2179 + $0x230] sm:$0xff]
    %v2251 = vld [vmem:[%s2179 + $0x238] sm:$0xff]
    %v2252 = vld [vmem:[%s2179 + $0x240] sm:$0xff]
    %v2253 = vld [vmem:[%s2179 + $0x248] sm:$0xff]
    %v2254 = vld [vmem:[%s2179 + $0x250] sm:$0xff]
    %v2255 = vld [vmem:[%s2179 + $0x258] sm:$0xff]
    %v2256 = vld [vmem:[%s2179 + $0x260] sm:$0xff]
    %v2257 = vld [vmem:[%s2179 + $0x268] sm:$0xff]
    %v2258 = vld [vmem:[%s2179 + $0x270] sm:$0xff]
    %v2259 = vld [vmem:[%s2179 + $0x278] sm:$0xff]
    %v2260 = vld [vmem:[%s2179 + $0x280] sm:$0xff]
    %v2261 = vld [vmem:[%s2179 + $0x288] sm:$0xff]
    %v2262 = vld [vmem:[%s2179 + $0x290] sm:$0xff]
    %v2263 = vld [vmem:[%s2179 + $0x298] sm:$0xff]
    %v2264 = vld [vmem:[%s2179 + $0x2a0] sm:$0xff]
    %v2265 = vld [vmem:[%s2179 + $0x2a8] sm:$0xff]
    %v2266 = vld [vmem:[%s2179 + $0x2b0] sm:$0xff]
    %v2267 = vld [vmem:[%s2179 + $0x2b8] sm:$0xff]
    %v2268 = vld [vmem:[%s2179 + $0x2c0] sm:$0xff]
    %v2269 = vld [vmem:[%s2179 + $0x2c8] sm:$0xff]
    %v2270 = vld [vmem:[%s2179 + $0x2d0] sm:$0xff]
    %v2271 = vld [vmem:[%s2179 + $0x2d8] sm:$0xff]
    %v2272 = vld [vmem:[%s2179 + $0x2e0] sm:$0xff]
    %v2273 = vld [vmem:[%s2179 + $0x2e8] sm:$0xff]
    %v2274 = vld [vmem:[%s2179 + $0x2f0] sm:$0xff]
    %v2275 = vld [vmem:[%s2179 + $0x2f8] sm:$0xff]
    %v2276 = vld [vmem:[%s2179 + $0x300] sm:$0xff]
    %v2277 = vld [vmem:[%s2179 + $0x308] sm:$0xff]
    %v2278 = vld [vmem:[%s2179 + $0x310] sm:$0xff]
    %v2279 = vld [vmem:[%s2179 + $0x318] sm:$0xff]
    %v2280 = vld [vmem:[%s2179 + $0x320] sm:$0xff]
    %v2281 = vld [vmem:[%s2179 + $0x328] sm:$0xff]
    %v2282 = vld [vmem:[%s2179 + $0x330] sm:$0xff]
    %v2283 = vld [vmem:[%s2179 + $0x338] sm:$0xff]
    %v2284 = vld [vmem:[%s2179 + $0x340] sm:$0xff]
    %v2285 = vld [vmem:[%s2179 + $0x348] sm:$0xff]
    %v2286 = vld [vmem:[%s2179 + $0x350] sm:$0xff]
    %v2287 = vld [vmem:[%s2179 + $0x358] sm:$0xff]
    %v2288 = vld [vmem:[%s2179 + $0x360] sm:$0xff]
    %v2289 = vld [vmem:[%s2179 + $0x368] sm:$0xff]
    %v2290 = vld [vmem:[%s2179 + $0x370] sm:$0xff]
    %v2291 = vld [vmem:[%s2179 + $0x378] sm:$0xf]
    %v2292 = vld [vmem:[%s2179 + $0x380] sm:$0xf]
    %v2293 = vld [vmem:[%s2179 + $0x388] sm:$0xf]
    %v2295 = vsel %vm345, %v1325, 0
    %v2298 = vsel %vm367, %v2291, 0
    %v2301 = vsel %vm367, %v2292, 0
    %v2304 = vsel %vm367, %v2293, 0
    %2306 = vmatprep.subr.mxu0 %v2181
    %2307 = vmatpush1.msra.mxu0 %v2180
    %2308 = vmatprep.subr.mxu0 %v2184
    %2309 = vmatpush1.msra.mxu0 %v2183
    %2310 = vmatprep.subr.mxu0 %v2187
    %2311 = vmatpush1.msra.mxu0 %v2186
    %2312 = vmatprep.subr.mxu0 %v2190
    %2313 = vmatpush1.msra.mxu0 %v2189
    %2314 = vmatprep.subr.mxu0 %v2193
    %2315 = vmatpush1.msra.mxu0 %v2192
    %2316 = vmatprep.subr.mxu0 %v2196
    %2317 = vmatpush1.msra.mxu0 %v2195
    %2318 = vmatprep.subr.mxu0 %v2199
    %2319 = vmatpush1.msra.mxu0 %v2198
    %2320 = vmatprep.subr.mxu0 %v2202
    %2321 = vmatpush1.msra.mxu0 %v2201
    %2322 = vmatprep.subr.mxu0 %v2205
    %2323 = vmatpush1.msra.mxu0 %v2204
    %2324 = vmatprep.subr.mxu0 %v2208
    %2325 = vmatpush1.msra.mxu0 %v2207
    %2326 = vmatprep.subr.mxu0 %v2211
    %2327 = vmatpush1.msra.mxu0 %v2210
    %2328 = vmatprep.subr.mxu0 %v2214
    %2329 = vmatpush1.msra.mxu0 %v2213
    %2330 = vmatprep.subr.mxu0 %v2217
    %2331 = vmatpush1.msra.mxu0 %v2216
    %2332 = vmatprep.subr.mxu0 %v2220
    %2333 = vmatpush1.msra.mxu0 %v2219
    %2334 = vmatprep.subr.mxu0 %v2223
    %2335 = vmatpush1.msra.mxu0 %v2222
    %2336 = vmatprep.subr.mxu0 %v2226
    %2337 = vmatpush1.msra.mxu0 %v2225
    %2338 = vmatprep.subr.mxu0 %v2229
    %2339 = vmatpush1.msra.mxu0 %v2228
    %2340 = vmatprep.subr.mxu0 %v2232
    %2341 = vmatpush1.msra.mxu0 %v2231
    %2342 = vmatprep.subr.mxu0 %v2235
    %2343 = vmatpush1.msra.mxu0 %v2234
    %2344 = vmatprep.subr.mxu0 %v2238
    %2345 = vmatpush1.msra.mxu0 %v2237
    %2346 = vmatprep.subr.mxu0 %v2241
    %2347 = vmatpush1.msra.mxu0 %v2240
    %2348 = vmatprep.subr.mxu0 %v2244
    %2349 = vmatpush1.msra.mxu0 %v2243
    %2350 = vmatprep.subr.mxu0 %v2247
    %2351 = vmatpush1.msra.mxu0 %v2246
    %2352 = vmatprep.subr.mxu0 %v2250
    %2353 = vmatpush1.msra.mxu0 %v2249
    %2354 = vmatprep.subr.mxu0 %v2253
    %2355 = vmatpush1.msra.mxu0 %v2252
    %2356 = vmatprep.subr.mxu0 %v2256
    %2357 = vmatpush1.msra.mxu0 %v2255
    %2358 = vmatprep.subr.mxu0 %v2259
    %2359 = vmatpush1.msra.mxu0 %v2258
    %2360 = vmatprep.subr.mxu0 %v2262
    %2361 = vmatpush1.msra.mxu0 %v2261
    %2362 = vmatprep.subr.mxu0 %v2265
    %2363 = vmatpush1.msra.mxu0 %v2264
    %2364 = vmatprep.subr.mxu0 %v2268
    %2365 = vmatpush1.msra.mxu0 %v2267
    %2366 = vmatprep.subr.mxu0 %v2271
    %2367 = vmatpush1.msra.mxu0 %v2270
    %2368 = vmatprep.subr.mxu0 %v2274
    %2369 = vmatpush1.msra.mxu0 %v2273
    %2370 = vmatprep.mubr.f32.mxu0 %v1324
    %2371 = vmatmul.mubr.f32.gmra.mrb[0].mxu0 %v1323
    %v2372 = vpop.f32.mrb[0].mxu0
    %v2373 = vadd.f32 0.0, %v2372
    %v2374 = vpop.f32.mrb[0].mxu0
    %v2375 = vadd.f32 0.0, %v2374
    %2376 = vdwg.mxu0
    %2377 = vmatprep.subr.mxu0 %v2277
    %2378 = vmatpush1.msra.mxu0 %v2276
    %2379 = vmatprep.subr.mxu0 %v2280
    %2380 = vmatpush1.msra.mxu0 %v2279
    %2381 = vmatprep.subr.mxu0 %v2283
    %2382 = vmatpush1.msra.mxu0 %v2282
    %2383 = vmatprep.subr.mxu0 %v2286
    %2384 = vmatpush1.msra.mxu0 %v2285
    %2385 = vmatprep.subr.mxu0 %v2289
    %2386 = vmatpush1.msra.mxu0 %v2288
    %2387 = vmatprep.subr.mxu0 %v2301
    %2388 = vmatpush1.msra.mxu0 %v2298
    %2389 = vmatprep.subr.mxu0 0.0
    %2390 = vmatpush1.msra.mxu0 0.0
    %2391 = vmatprep.subr.mxu0 0.0
    %2392 = vmatpush1.msra.mxu0 0.0
    %2393 = vmatprep.subr.mxu0 0.0
    %2394 = vmatpush1.msra.mxu0 0.0
    %2395 = vmatprep.subr.mxu0 0.0
    %2396 = vmatpush1.msra.mxu0 0.0
    %2397 = vmatprep.subr.mxu0 0.0
    %2398 = vmatpush1.msra.mxu0 0.0
    %2399 = vmatprep.subr.mxu0 0.0
    %2400 = vmatpush1.msra.mxu0 0.0
    %2401 = vmatprep.subr.mxu0 0.0
    %2402 = vmatpush1.msra.mxu0 0.0
    %2403 = vmatprep.subr.mxu0 0.0
    %2404 = vmatpush1.msra.mxu0 0.0
    %2405 = vmatprep.subr.mxu0 0.0
    %2406 = vmatpush1.msra.mxu0 0.0
    %2407 = vmatprep.subr.mxu0 0.0
    %2408 = vmatpush1.msra.mxu0 0.0
    %2409 = vmatprep.subr.mxu0 0.0
    %2410 = vmatpush1.msra.mxu0 0.0
    %2411 = vmatprep.subr.mxu0 0.0
    %2412 = vmatpush1.msra.mxu0 0.0
    %2413 = vmatprep.subr.mxu0 0.0
    %2414 = vmatpush1.msra.mxu0 0.0
    %2415 = vmatprep.subr.mxu0 0.0
    %2416 = vmatpush1.msra.mxu0 0.0
    %2417 = vmatprep.subr.mxu0 0.0
    %2418 = vmatpush1.msra.mxu0 0.0
    %2419 = vmatprep.subr.mxu0 0.0
    %2420 = vmatpush1.msra.mxu0 0.0
    %2421 = vmatprep.subr.mxu0 0.0
    %2422 = vmatpush1.msra.mxu0 0.0
    %2423 = vmatprep.subr.mxu0 0.0
    %2424 = vmatpush1.msra.mxu0 0.0
    %2425 = vmatprep.subr.mxu0 0.0
    %2426 = vmatpush1.msra.mxu0 0.0
    %2427 = vmatprep.subr.mxu0 0.0
    %2428 = vmatpush1.msra.mxu0 0.0
    %2429 = vmatprep.subr.mxu0 0.0
    %2430 = vmatpush1.msra.mxu0 0.0
    %2431 = vmatprep.subr.mxu0 0.0
    %2432 = vmatpush1.msra.mxu0 0.0
    %2433 = vmatprep.subr.mxu0 0.0
    %2434 = vmatpush1.msra.mxu0 0.0
    %2435 = vmatprep.subr.mxu0 0.0
    %2436 = vmatpush1.msra.mxu0 0.0
    %2437 = vmatprep.subr.mxu0 0.0
    %2438 = vmatpush1.msra.mxu0 0.0
    %2439 = vmatprep.subr.mxu0 0.0
    %2440 = vmatpush1.msra.mxu0 0.0
    %2441 = vmatprep.mubr.f32.mxu0 0.0
    %2442 = vmatmul.mubr.f32.gmra.mrb[0].mxu0 %v2295
    %v2443 = vpop.f32.mrb[0].mxu0
    %v2444 = vadd.f32 %v2373, %v2443
    %v2445 = vpop.f32.mrb[0].mxu0
    %v2446 = vadd.f32 %v2375, %v2445
    %2447 = vdwg.mxu0
    %2448 = vmatprep.subr.mxu0 0.0
    %2449 = vmatpush1.msra.mxu0 %v2182
    %2450 = vmatprep.subr.mxu0 0.0
    %2451 = vmatpush1.msra.mxu0 %v2185
    %2452 = vmatprep.subr.mxu0 0.0
    %2453 = vmatpush1.msra.mxu0 %v2188
    %2454 = vmatprep.subr.mxu0 0.0
    %2455 = vmatpush1.msra.mxu0 %v2191
    %2456 = vmatprep.subr.mxu0 0.0
    %2457 = vmatpush1.msra.mxu0 %v2194
    %2458 = vmatprep.subr.mxu0 0.0
    %2459 = vmatpush1.msra.mxu0 %v2197
    %2460 = vmatprep.subr.mxu0 0.0
    %2461 = vmatpush1.msra.mxu0 %v2200
    %2462 = vmatprep.subr.mxu0 0.0
    %2463 = vmatpush1.msra.mxu0 %v2203
    %2464 = vmatprep.subr.mxu0 0.0
    %2465 = vmatpush1.msra.mxu0 %v2206
    %2466 = vmatprep.subr.mxu0 0.0
    %2467 = vmatpush1.msra.mxu0 %v2209
    %2468 = vmatprep.subr.mxu0 0.0
    %2469 = vmatpush1.msra.mxu0 %v2212
    %2470 = vmatprep.subr.mxu0 0.0
    %2471 = vmatpush1.msra.mxu0 %v2215
    %2472 = vmatprep.subr.mxu0 0.0
    %2473 = vmatpush1.msra.mxu0 %v2218
    %2474 = vmatprep.subr.mxu0 0.0
    %2475 = vmatpush1.msra.mxu0 %v2221
    %2476 = vmatprep.subr.mxu0 0.0
    %2477 = vmatpush1.msra.mxu0 %v2224
    %2478 = vmatprep.subr.mxu0 0.0
    %2479 = vmatpush1.msra.mxu0 %v2227
    %2480 = vmatprep.subr.mxu0 0.0
    %2481 = vmatpush1.msra.mxu0 %v2230
    %2482 = vmatprep.subr.mxu0 0.0
    %2483 = vmatpush1.msra.mxu0 %v2233
    %2484 = vmatprep.subr.mxu0 0.0
    %2485 = vmatpush1.msra.mxu0 %v2236
    %2486 = vmatprep.subr.mxu0 0.0
    %2487 = vmatpush1.msra.mxu0 %v2239
    %2488 = vmatprep.subr.mxu0 0.0
    %2489 = vmatpush1.msra.mxu0 %v2242
    %2490 = vmatprep.subr.mxu0 0.0
    %2491 = vmatpush1.msra.mxu0 %v2245
    %2492 = vmatprep.subr.mxu0 0.0
    %2493 = vmatpush1.msra.mxu0 %v2248
    %2494 = vmatprep.subr.mxu0 0.0
    %2495 = vmatpush1.msra.mxu0 %v2251
    %2496 = vmatprep.subr.mxu0 0.0
    %2497 = vmatpush1.msra.mxu0 %v2254
    %2498 = vmatprep.subr.mxu0 0.0
    %2499 = vmatpush1.msra.mxu0 %v2257
    %2500 = vmatprep.subr.mxu0 0.0
    %2501 = vmatpush1.msra.mxu0 %v2260
    %2502 = vmatprep.subr.mxu0 0.0
    %2503 = vmatpush1.msra.mxu0 %v2263
    %2504 = vmatprep.subr.mxu0 0.0
    %2505 = vmatpush1.msra.mxu0 %v2266
    %2506 = vmatprep.subr.mxu0 0.0
    %2507 = vmatpush1.msra.mxu0 %v2269
    %2508 = vmatprep.subr.mxu0 0.0
    %2509 = vmatpush1.msra.mxu0 %v2272
    %2510 = vmatprep.subr.mxu0 0.0
    %2511 = vmatpush1.msra.mxu0 %v2275
    %2512 = vmatprep.mubr.f32.mxu0 %v1324
    %2513 = vmatmul.mubr.f32.gmra.mrb[0].mxu0 %v1323
    %v2514 = vpop.f32.mrb[0].mxu0
    %v2515 = vadd.f32 0.0, %v2514
    %v2516 = vpop.f32.mrb[0].mxu0
    %2517 = vdwg.mxu0
    %2518 = vmatprep.subr.mxu0 0.0
    %2519 = vmatpush1.msra.mxu0 %v2278
    %2520 = vmatprep.subr.mxu0 0.0
    %2521 = vmatpush1.msra.mxu0 %v2281
    %2522 = vmatprep.subr.mxu0 0.0
    %2523 = vmatpush1.msra.mxu0 %v2284
    %2524 = vmatprep.subr.mxu0 0.0
    %2525 = vmatpush1.msra.mxu0 %v2287
    %2526 = vmatprep.subr.mxu0 0.0
    %2527 = vmatpush1.msra.mxu0 %v2290
    %2528 = vmatprep.subr.mxu0 0.0
    %2529 = vmatpush1.msra.mxu0 %v2304
    %2530 = vmatprep.subr.mxu0 0.0
    %2531 = vmatpush1.msra.mxu0 0.0
    %2532 = vmatprep.subr.mxu0 0.0
    %2533 = vmatpush1.msra.mxu0 0.0
    %2534 = vmatprep.subr.mxu0 0.0
    %2535 = vmatpush1.msra.mxu0 0.0
    %2536 = vmatprep.subr.mxu0 0.0
    %2537 = vmatpush1.msra.mxu0 0.0
    %2538 = vmatprep.subr.mxu0 0.0
    %2539 = vmatpush1.msra.mxu0 0.0
    %2540 = vmatprep.subr.mxu0 0.0
    %2541 = vmatpush1.msra.mxu0 0.0
    %2542 = vmatprep.subr.mxu0 0.0
    %2543 = vmatpush1.msra.mxu0 0.0
    %2544 = vmatprep.subr.mxu0 0.0
    %2545 = vmatpush1.msra.mxu0 0.0
    %2546 = vmatprep.subr.mxu0 0.0
    %2547 = vmatpush1.msra.mxu0 0.0
    %2548 = vmatprep.subr.mxu0 0.0
    %2549 = vmatpush1.msra.mxu0 0.0
    %2550 = vmatprep.subr.mxu0 0.0
    %2551 = vmatpush1.msra.mxu0 0.0
    %2552 = vmatprep.subr.mxu0 0.0
    %2553 = vmatpush1.msra.mxu0 0.0
    %2554 = vmatprep.subr.mxu0 0.0
    %2555 = vmatpush1.msra.mxu0 0.0
    %2556 = vmatprep.subr.mxu0 0.0
    %2557 = vmatpush1.msra.mxu0 0.0
    %2558 = vmatprep.subr.mxu0 0.0
    %2559 = vmatpush1.msra.mxu0 0.0
    %2560 = vmatprep.subr.mxu0 0.0
    %2561 = vmatpush1.msra.mxu0 0.0
    %2562 = vmatprep.subr.mxu0 0.0
    %2563 = vmatpush1.msra.mxu0 0.0
    %2564 = vmatprep.subr.mxu0 0.0
    %2565 = vmatpush1.msra.mxu0 0.0
    %2566 = vmatprep.subr.mxu0 0.0
    %2567 = vmatpush1.msra.mxu0 0.0
    %2568 = vmatprep.subr.mxu0 0.0
    %2569 = vmatpush1.msra.mxu0 0.0
    %2570 = vmatprep.subr.mxu0 0.0
    %2571 = vmatpush1.msra.mxu0 0.0
    %2572 = vmatprep.subr.mxu0 0.0
    %2573 = vmatpush1.msra.mxu0 0.0
    %2574 = vmatprep.subr.mxu0 0.0
    %2575 = vmatpush1.msra.mxu0 0.0
    %2576 = vmatprep.subr.mxu0 0.0
    %2577 = vmatpush1.msra.mxu0 0.0
    %2578 = vmatprep.subr.mxu0 0.0
    %2579 = vmatpush1.msra.mxu0 0.0
    %2580 = vmatprep.subr.mxu0 0.0
    %2581 = vmatpush1.msra.mxu0 0.0
    %2582 = vmatprep.mubr.f32.mxu0 0.0
    %2583 = vmatmul.mubr.f32.gmra.mrb[0].mxu0 %v2295
    %v2584 = vpop.f32.mrb[0].mxu0
    %v2585 = vadd.f32 %v2515, %v2584
    %v2586 = vpop.f32.mrb[0].mxu0
    %2587 = vdwg.mxu0
    %v2588 = vadd.f32 %v2176, %v2444
    %v2589 = vadd.f32 %v2177, %v2446
    %v2590 = vadd.f32 %v2178, %v2585
    %s2591 = sld [smem:[#allocation5 + $0x1]]
    %vm2592 = vcmp.ge.f32.partialorder %v2588, 0.0
    %vm2593 = vcmp.ge.f32.partialorder %v2589, 0.0
    %vm2594 = vcmp.ge.f32.partialorder %v2590, 0.0
    %v2595 = vstv %s2591
    %v2596 = vmul.f32 %v2595, %v2588
    %v2597 = vmul.f32 %v2595, %v2589
    %v2598 = vmul.f32 %v2595, %v2590
    %v2599 = vsel %vm2592, %v2588, %v2596
    %v2600 = vsel %vm2593, %v2589, %v2597
    %v2601 = vsel %vm2594, %v2590, %v2598
    %v2602 = vld [vmem:[#allocation2] sm:$0xff]
    %v2603 = vld [vmem:[#allocation2 + $0x8] sm:$0xff]
    %v2604 = vld [vmem:[#allocation2 + $0x10] sm:$0xff]
    %v2605 = vld [vmem:[#allocation2 + $0x18] sm:$0xff]
    %v2606 = vld [vmem:[#allocation2 + $0x20] sm:$0xff]
    %v2607 = vld [vmem:[#allocation2 + $0x28] sm:$0xff]
    %v2608 = vld [vmem:[#allocation2 + $0x30] sm:$0xff]
    %v2609 = vld [vmem:[#allocation2 + $0x38] sm:$0xff]
    %v2610 = vld [vmem:[#allocation2 + $0x40] sm:$0xff]
    %v2611 = vld [vmem:[#allocation2 + $0x48] sm:$0xff]
    %v2612 = vld [vmem:[#allocation2 + $0x50] sm:$0xff]
    %v2613 = vld [vmem:[#allocation2 + $0x58] sm:$0xff]
    %v2614 = vld [vmem:[#allocation2 + $0x60] sm:$0xff]
    %v2615 = vld [vmem:[#allocation2 + $0x68] sm:$0xff]
    %v2616 = vld [vmem:[#allocation2 + $0x70] sm:$0xff]
    %v2617 = vld [vmem:[#allocation2 + $0x78] sm:$0xff]
    %v2618 = vld [vmem:[#allocation2 + $0x80] sm:$0xff]
    %v2619 = vld [vmem:[#allocation2 + $0x88] sm:$0xff]
    %v2620 = vld [vmem:[#allocation2 + $0x90] sm:$0xff]
    %v2621 = vld [vmem:[#allocation2 + $0x98] sm:$0xff]
    %v2622 = vld [vmem:[#allocation2 + $0xa0] sm:$0xff]
    %v2623 = vld [vmem:[#allocation2 + $0xa8] sm:$0xff]
    %v2624 = vld [vmem:[#allocation2 + $0xb0] sm:$0xff]
    %v2625 = vld [vmem:[#allocation2 + $0xb8] sm:$0xff]
    %v2626 = vld [vmem:[#allocation2 + $0xc0] sm:$0xff]
    %v2627 = vld [vmem:[#allocation2 + $0xc8] sm:$0xff]
    %v2628 = vld [vmem:[#allocation2 + $0xd0] sm:$0xff]
    %v2629 = vld [vmem:[#allocation2 + $0xd8] sm:$0xff]
    %v2630 = vld [vmem:[#allocation2 + $0xe0] sm:$0xff]
    %v2631 = vld [vmem:[#allocation2 + $0xe8] sm:$0xff]
    %v2632 = vld [vmem:[#allocation2 + $0xf0] sm:$0xff]
    %v2633 = vld [vmem:[#allocation2 + $0xf8] sm:$0xff]
    %v2634 = vld [vmem:[#allocation2 + $0x100] sm:$0xff]
    %v2635 = vld [vmem:[#allocation2 + $0x108] sm:$0xff]
    %v2636 = vld [vmem:[#allocation2 + $0x110] sm:$0xff]
    %v2637 = vld [vmem:[#allocation2 + $0x118] sm:$0xff]
    %v2638 = vld [vmem:[#allocation2 + $0x120] sm:$0xff]
    %v2639 = vld [vmem:[#allocation2 + $0x128] sm:$0xff]
    %v2640 = vld [vmem:[#allocation2 + $0x130] sm:$0xff]
    %v2641 = vld [vmem:[#allocation2 + $0x138] sm:$0xff]
    %v2642 = vld [vmem:[#allocation2 + $0x140] sm:$0xff]
    %v2643 = vld [vmem:[#allocation2 + $0x148] sm:$0xff]
    %v2644 = vld [vmem:[#allocation2 + $0x150] sm:$0xff]
    %v2645 = vld [vmem:[#allocation2 + $0x158] sm:$0xff]
    %v2646 = vld [vmem:[#allocation2 + $0x160] sm:$0xff]
    %v2647 = vld [vmem:[#allocation2 + $0x168] sm:$0xff]
    %v2648 = vld [vmem:[#allocation2 + $0x170] sm:$0xff]
    %v2649 = vld [vmem:[#allocation2 + $0x178] sm:$0xff]
    %v2650 = vld [vmem:[#allocation2 + $0x180] sm:$0xff]
    %v2651 = vld [vmem:[#allocation2 + $0x188] sm:$0xff]
    %v2652 = vld [vmem:[#allocation2 + $0x190] sm:$0xff]
    %v2653 = vld [vmem:[#allocation2 + $0x198] sm:$0xff]
    %v2654 = vld [vmem:[#allocation2 + $0x1a0] sm:$0xff]
    %v2655 = vld [vmem:[#allocation2 + $0x1a8] sm:$0xff]
    %v2656 = vld [vmem:[#allocation2 + $0x1b0] sm:$0xff]
    %v2657 = vld [vmem:[#allocation2 + $0x1b8] sm:$0xff]
    %v2658 = vld [vmem:[#allocation2 + $0x1c0] sm:$0xff]
    %v2659 = vld [vmem:[#allocation2 + $0x1c8] sm:$0xff]
    %v2660 = vld [vmem:[#allocation2 + $0x1d0] sm:$0xff]
    %v2661 = vld [vmem:[#allocation2 + $0x1d8] sm:$0xff]
    %v2662 = vld [vmem:[#allocation2 + $0x1e0] sm:$0xff]
    %v2663 = vld [vmem:[#allocation2 + $0x1e8] sm:$0xff]
    %v2664 = vld [vmem:[#allocation2 + $0x1f0] sm:$0xff]
    %v2665 = vld [vmem:[#allocation2 + $0x1f8] sm:$0xff]
    %v2666 = vld [vmem:[#allocation2 + $0x200] sm:$0xff]
    %v2667 = vld [vmem:[#allocation2 + $0x208] sm:$0xff]
    %v2668 = vld [vmem:[#allocation2 + $0x210] sm:$0xff]
    %v2669 = vld [vmem:[#allocation2 + $0x218] sm:$0xff]
    %v2670 = vld [vmem:[#allocation2 + $0x220] sm:$0xff]
    %v2671 = vld [vmem:[#allocation2 + $0x228] sm:$0xff]
    %v2672 = vld [vmem:[#allocation2 + $0x230] sm:$0xff]
    %v2673 = vld [vmem:[#allocation2 + $0x238] sm:$0xff]
    %v2674 = vld [vmem:[#allocation2 + $0x240] sm:$0xff]
    %v2675 = vld [vmem:[#allocation2 + $0x248] sm:$0xff]
    %v2676 = vld [vmem:[#allocation2 + $0x250] sm:$0xff]
    %v2677 = vld [vmem:[#allocation2 + $0x258] sm:$0xff]
    %v2678 = vld [vmem:[#allocation2 + $0x260] sm:$0xff]
    %v2679 = vld [vmem:[#allocation2 + $0x268] sm:$0xff]
    %v2680 = vld [vmem:[#allocation2 + $0x270] sm:$0xff]
    %v2681 = vld [vmem:[#allocation2 + $0x278] sm:$0xff]
    %v2682 = vld [vmem:[#allocation2 + $0x280] sm:$0xff]
    %v2683 = vld [vmem:[#allocation2 + $0x288] sm:$0xff]
    %v2684 = vld [vmem:[#allocation2 + $0x290] sm:$0xff]
    %v2685 = vld [vmem:[#allocation2 + $0x298] sm:$0xff]
    %v2686 = vld [vmem:[#allocation2 + $0x2a0] sm:$0xff]
    %v2687 = vld [vmem:[#allocation2 + $0x2a8] sm:$0xff]
    %v2688 = vld [vmem:[#allocation2 + $0x2b0] sm:$0xff]
    %v2689 = vld [vmem:[#allocation2 + $0x2b8] sm:$0xff]
    %v2690 = vld [vmem:[#allocation2 + $0x2c0] sm:$0xff]
    %v2691 = vld [vmem:[#allocation2 + $0x2c8] sm:$0xff]
    %v2692 = vld [vmem:[#allocation2 + $0x2d0] sm:$0xff]
    %v2693 = vld [vmem:[#allocation2 + $0x2d8] sm:$0xff]
    %v2694 = vld [vmem:[#allocation2 + $0x2e0] sm:$0xff]
    %v2695 = vld [vmem:[#allocation2 + $0x2e8] sm:$0xff]
    %v2696 = vld [vmem:[#allocation2 + $0x2f0] sm:$0xff]
    %v2697 = vld [vmem:[#allocation2 + $0x2f8] sm:$0xff]
    %v2698 = vld [vmem:[#allocation2 + $0x300] sm:$0xff]
    %v2699 = vld [vmem:[#allocation2 + $0x308] sm:$0xff]
    %v2700 = vld [vmem:[#allocation2 + $0x310] sm:$0xff]
    %v2701 = vld [vmem:[#allocation2 + $0x318] sm:$0xff]
    %v2702 = vld [vmem:[#allocation2 + $0x320] sm:$0xff]
    %v2703 = vld [vmem:[#allocation2 + $0x328] sm:$0xff]
    %v2704 = vld [vmem:[#allocation2 + $0x330] sm:$0xff]
    %v2705 = vld [vmem:[#allocation2 + $0x338] sm:$0xff]
    %v2706 = vld [vmem:[#allocation2 + $0x340] sm:$0xff]
    %v2707 = vld [vmem:[#allocation2 + $0x348] sm:$0xff]
    %v2708 = vld [vmem:[#allocation2 + $0x350] sm:$0xff]
    %v2709 = vld [vmem:[#allocation2 + $0x358] sm:$0xff]
    %v2710 = vld [vmem:[#allocation2 + $0x360] sm:$0xff]
    %v2711 = vld [vmem:[#allocation2 + $0x368] sm:$0xff]
    %v2712 = vld [vmem:[#allocation2 + $0x370] sm:$0xff]
    %v2713 = vld [vmem:[#allocation2 + $0x378] sm:$0xf]
    %v2714 = vld [vmem:[#allocation2 + $0x380] sm:$0xf]
    %v2715 = vld [vmem:[#allocation2 + $0x388] sm:$0xf]
    %v2717 = vsel %vm345, %v2601, 0
    %v2720 = vsel %vm367, %v2713, 0
    %v2723 = vsel %vm367, %v2714, 0
    %v2726 = vsel %vm367, %v2715, 0
    %2728 = vmatprep.subr.mxu0 %v2603
    %2729 = vmatpush1.msra.mxu0 %v2602
    %2730 = vmatprep.subr.mxu0 %v2606
    %2731 = vmatpush1.msra.mxu0 %v2605
    %2732 = vmatprep.subr.mxu0 %v2609
    %2733 = vmatpush1.msra.mxu0 %v2608
    %2734 = vmatprep.subr.mxu0 %v2612
    %2735 = vmatpush1.msra.mxu0 %v2611
    %2736 = vmatprep.subr.mxu0 %v2615
    %2737 = vmatpush1.msra.mxu0 %v2614
    %2738 = vmatprep.subr.mxu0 %v2618
    %2739 = vmatpush1.msra.mxu0 %v2617
    %2740 = vmatprep.subr.mxu0 %v2621
    %2741 = vmatpush1.msra.mxu0 %v2620
    %2742 = vmatprep.subr.mxu0 %v2624
    %2743 = vmatpush1.msra.mxu0 %v2623
    %2744 = vmatprep.subr.mxu0 %v2627
    %2745 = vmatpush1.msra.mxu0 %v2626
    %2746 = vmatprep.subr.mxu0 %v2630
    %2747 = vmatpush1.msra.mxu0 %v2629
    %2748 = vmatprep.subr.mxu0 %v2633
    %2749 = vmatpush1.msra.mxu0 %v2632
    %2750 = vmatprep.subr.mxu0 %v2636
    %2751 = vmatpush1.msra.mxu0 %v2635
    %2752 = vmatprep.subr.mxu0 %v2639
    %2753 = vmatpush1.msra.mxu0 %v2638
    %2754 = vmatprep.subr.mxu0 %v2642
    %2755 = vmatpush1.msra.mxu0 %v2641
    %2756 = vmatprep.subr.mxu0 %v2645
    %2757 = vmatpush1.msra.mxu0 %v2644
    %2758 = vmatprep.subr.mxu0 %v2648
    %2759 = vmatpush1.msra.mxu0 %v2647
    %2760 = vmatprep.subr.mxu0 %v2651
    %2761 = vmatpush1.msra.mxu0 %v2650
    %2762 = vmatprep.subr.mxu0 %v2654
    %2763 = vmatpush1.msra.mxu0 %v2653
    %2764 = vmatprep.subr.mxu0 %v2657
    %2765 = vmatpush1.msra.mxu0 %v2656
    %2766 = vmatprep.subr.mxu0 %v2660
    %2767 = vmatpush1.msra.mxu0 %v2659
    %2768 = vmatprep.subr.mxu0 %v2663
    %2769 = vmatpush1.msra.mxu0 %v2662
    %2770 = vmatprep.subr.mxu0 %v2666
    %2771 = vmatpush1.msra.mxu0 %v2665
    %2772 = vmatprep.subr.mxu0 %v2669
    %2773 = vmatpush1.msra.mxu0 %v2668
    %2774 = vmatprep.subr.mxu0 %v2672
    %2775 = vmatpush1.msra.mxu0 %v2671
    %2776 = vmatprep.subr.mxu0 %v2675
    %2777 = vmatpush1.msra.mxu0 %v2674
    %2778 = vmatprep.subr.mxu0 %v2678
    %2779 = vmatpush1.msra.mxu0 %v2677
    %2780 = vmatprep.subr.mxu0 %v2681
    %2781 = vmatpush1.msra.mxu0 %v2680
    %2782 = vmatprep.subr.mxu0 %v2684
    %2783 = vmatpush1.msra.mxu0 %v2683
    %2784 = vmatprep.subr.mxu0 %v2687
    %2785 = vmatpush1.msra.mxu0 %v2686
    %2786 = vmatprep.subr.mxu0 %v2690
    %2787 = vmatpush1.msra.mxu0 %v2689
    %2788 = vmatprep.subr.mxu0 %v2693
    %2789 = vmatpush1.msra.mxu0 %v2692
    %2790 = vmatprep.subr.mxu0 %v2696
    %2791 = vmatpush1.msra.mxu0 %v2695
    %2792 = vmatprep.mubr.f32.mxu0 %v2600
    %2793 = vmatmul.mubr.f32.gmra.mrb[0].mxu0 %v2599
    %v2794 = vpop.f32.mrb[0].mxu0
    %v2795 = vadd.f32 0.0, %v2794
    %v2796 = vpop.f32.mrb[0].mxu0
    %v2797 = vadd.f32 0.0, %v2796
    %2798 = vdwg.mxu0
    %2799 = vmatprep.subr.mxu0 %v2699
    %2800 = vmatpush1.msra.mxu0 %v2698
    %2801 = vmatprep.subr.mxu0 %v2702
    %2802 = vmatpush1.msra.mxu0 %v2701
    %2803 = vmatprep.subr.mxu0 %v2705
    %2804 = vmatpush1.msra.mxu0 %v2704
    %2805 = vmatprep.subr.mxu0 %v2708
    %2806 = vmatpush1.msra.mxu0 %v2707
    %2807 = vmatprep.subr.mxu0 %v2711
    %2808 = vmatpush1.msra.mxu0 %v2710
    %2809 = vmatprep.subr.mxu0 %v2723
    %2810 = vmatpush1.msra.mxu0 %v2720
    %2811 = vmatprep.subr.mxu0 0.0
    %2812 = vmatpush1.msra.mxu0 0.0
    %2813 = vmatprep.subr.mxu0 0.0
    %2814 = vmatpush1.msra.mxu0 0.0
    %2815 = vmatprep.subr.mxu0 0.0
    %2816 = vmatpush1.msra.mxu0 0.0
    %2817 = vmatprep.subr.mxu0 0.0
    %2818 = vmatpush1.msra.mxu0 0.0
    %2819 = vmatprep.subr.mxu0 0.0
    %2820 = vmatpush1.msra.mxu0 0.0
    %2821 = vmatprep.subr.mxu0 0.0
    %2822 = vmatpush1.msra.mxu0 0.0
    %2823 = vmatprep.subr.mxu0 0.0
    %2824 = vmatpush1.msra.mxu0 0.0
    %2825 = vmatprep.subr.mxu0 0.0
    %2826 = vmatpush1.msra.mxu0 0.0
    %2827 = vmatprep.subr.mxu0 0.0
    %2828 = vmatpush1.msra.mxu0 0.0
    %2829 = vmatprep.subr.mxu0 0.0
    %2830 = vmatpush1.msra.mxu0 0.0
    %2831 = vmatprep.subr.mxu0 0.0
    %2832 = vmatpush1.msra.mxu0 0.0
    %2833 = vmatprep.subr.mxu0 0.0
    %2834 = vmatpush1.msra.mxu0 0.0
    %2835 = vmatprep.subr.mxu0 0.0
    %2836 = vmatpush1.msra.mxu0 0.0
    %2837 = vmatprep.subr.mxu0 0.0
    %2838 = vmatpush1.msra.mxu0 0.0
    %2839 = vmatprep.subr.mxu0 0.0
    %2840 = vmatpush1.msra.mxu0 0.0
    %2841 = vmatprep.subr.mxu0 0.0
    %2842 = vmatpush1.msra.mxu0 0.0
    %2843 = vmatprep.subr.mxu0 0.0
    %2844 = vmatpush1.msra.mxu0 0.0
    %2845 = vmatprep.subr.mxu0 0.0
    %2846 = vmatpush1.msra.mxu0 0.0
    %2847 = vmatprep.subr.mxu0 0.0
    %2848 = vmatpush1.msra.mxu0 0.0
    %2849 = vmatprep.subr.mxu0 0.0
    %2850 = vmatpush1.msra.mxu0 0.0
    %2851 = vmatprep.subr.mxu0 0.0
    %2852 = vmatpush1.msra.mxu0 0.0
    %2853 = vmatprep.subr.mxu0 0.0
    %2854 = vmatpush1.msra.mxu0 0.0
    %2855 = vmatprep.subr.mxu0 0.0
    %2856 = vmatpush1.msra.mxu0 0.0
    %2857 = vmatprep.subr.mxu0 0.0
    %2858 = vmatpush1.msra.mxu0 0.0
    %2859 = vmatprep.subr.mxu0 0.0
    %2860 = vmatpush1.msra.mxu0 0.0
    %2861 = vmatprep.subr.mxu0 0.0
    %2862 = vmatpush1.msra.mxu0 0.0
    %2863 = vmatprep.mubr.f32.mxu0 0.0
    %2864 = vmatmul.mubr.f32.gmra.mrb[0].mxu0 %v2717
    %v2865 = vpop.f32.mrb[0].mxu0
    %v2866 = vadd.f32 %v2795, %v2865
    %v2867 = vpop.f32.mrb[0].mxu0
    %v2868 = vadd.f32 %v2797, %v2867
    %2869 = vdwg.mxu0
    %2870 = vmatprep.subr.mxu0 0.0
    %2871 = vmatpush1.msra.mxu0 %v2604
    %2872 = vmatprep.subr.mxu0 0.0
    %2873 = vmatpush1.msra.mxu0 %v2607
    %2874 = vmatprep.subr.mxu0 0.0
    %2875 = vmatpush1.msra.mxu0 %v2610
    %2876 = vmatprep.subr.mxu0 0.0
    %2877 = vmatpush1.msra.mxu0 %v2613
    %2878 = vmatprep.subr.mxu0 0.0
    %2879 = vmatpush1.msra.mxu0 %v2616
    %2880 = vmatprep.subr.mxu0 0.0
    %2881 = vmatpush1.msra.mxu0 %v2619
    %2882 = vmatprep.subr.mxu0 0.0
    %2883 = vmatpush1.msra.mxu0 %v2622
    %2884 = vmatprep.subr.mxu0 0.0
    %2885 = vmatpush1.msra.mxu0 %v2625
    %2886 = vmatprep.subr.mxu0 0.0
    %2887 = vmatpush1.msra.mxu0 %v2628
    %2888 = vmatprep.subr.mxu0 0.0
    %2889 = vmatpush1.msra.mxu0 %v2631
    %2890 = vmatprep.subr.mxu0 0.0
    %2891 = vmatpush1.msra.mxu0 %v2634
    %2892 = vmatprep.subr.mxu0 0.0
    %2893 = vmatpush1.msra.mxu0 %v2637
    %2894 = vmatprep.subr.mxu0 0.0
    %2895 = vmatpush1.msra.mxu0 %v2640
    %2896 = vmatprep.subr.mxu0 0.0
    %2897 = vmatpush1.msra.mxu0 %v2643
    %2898 = vmatprep.subr.mxu0 0.0
    %2899 = vmatpush1.msra.mxu0 %v2646
    %2900 = vmatprep.subr.mxu0 0.0
    %2901 = vmatpush1.msra.mxu0 %v2649
    %2902 = vmatprep.subr.mxu0 0.0
    %2903 = vmatpush1.msra.mxu0 %v2652
    %2904 = vmatprep.subr.mxu0 0.0
    %2905 = vmatpush1.msra.mxu0 %v2655
    %2906 = vmatprep.subr.mxu0 0.0
    %2907 = vmatpush1.msra.mxu0 %v2658
    %2908 = vmatprep.subr.mxu0 0.0
    %2909 = vmatpush1.msra.mxu0 %v2661
    %2910 = vmatprep.subr.mxu0 0.0
    %2911 = vmatpush1.msra.mxu0 %v2664
    %2912 = vmatprep.subr.mxu0 0.0
    %2913 = vmatpush1.msra.mxu0 %v2667
    %2914 = vmatprep.subr.mxu0 0.0
    %2915 = vmatpush1.msra.mxu0 %v2670
    %2916 = vmatprep.subr.mxu0 0.0
    %2917 = vmatpush1.msra.mxu0 %v2673
    %2918 = vmatprep.subr.mxu0 0.0
    %2919 = vmatpush1.msra.mxu0 %v2676
    %2920 = vmatprep.subr.mxu0 0.0
    %2921 = vmatpush1.msra.mxu0 %v2679
    %2922 = vmatprep.subr.mxu0 0.0
    %2923 = vmatpush1.msra.mxu0 %v2682
    %2924 = vmatprep.subr.mxu0 0.0
    %2925 = vmatpush1.msra.mxu0 %v2685
    %2926 = vmatprep.subr.mxu0 0.0
    %2927 = vmatpush1.msra.mxu0 %v2688
    %2928 = vmatprep.subr.mxu0 0.0
    %2929 = vmatpush1.msra.mxu0 %v2691
    %2930 = vmatprep.subr.mxu0 0.0
    %2931 = vmatpush1.msra.mxu0 %v2694
    %2932 = vmatprep.subr.mxu0 0.0
    %2933 = vmatpush1.msra.mxu0 %v2697
    %2934 = vmatprep.mubr.f32.mxu0 %v2600
    %2935 = vmatmul.mubr.f32.gmra.mrb[0].mxu0 %v2599
    %v2936 = vpop.f32.mrb[0].mxu0
    %v2937 = vadd.f32 0.0, %v2936
    %v2938 = vpop.f32.mrb[0].mxu0
    %2939 = vdwg.mxu0
    %2940 = vmatprep.subr.mxu0 0.0
    %2941 = vmatpush1.msra.mxu0 %v2700
    %2942 = vmatprep.subr.mxu0 0.0
    %2943 = vmatpush1.msra.mxu0 %v2703
    %2944 = vmatprep.subr.mxu0 0.0
    %2945 = vmatpush1.msra.mxu0 %v2706
    %2946 = vmatprep.subr.mxu0 0.0
    %2947 = vmatpush1.msra.mxu0 %v2709
    %2948 = vmatprep.subr.mxu0 0.0
    %2949 = vmatpush1.msra.mxu0 %v2712
    %2950 = vmatprep.subr.mxu0 0.0
    %2951 = vmatpush1.msra.mxu0 %v2726
    %2952 = vmatprep.subr.mxu0 0.0
    %2953 = vmatpush1.msra.mxu0 0.0
    %2954 = vmatprep.subr.mxu0 0.0
    %2955 = vmatpush1.msra.mxu0 0.0
    %2956 = vmatprep.subr.mxu0 0.0
    %2957 = vmatpush1.msra.mxu0 0.0
    %2958 = vmatprep.subr.mxu0 0.0
    %2959 = vmatpush1.msra.mxu0 0.0
    %2960 = vmatprep.subr.mxu0 0.0
    %2961 = vmatpush1.msra.mxu0 0.0
    %2962 = vmatprep.subr.mxu0 0.0
    %2963 = vmatpush1.msra.mxu0 0.0
    %2964 = vmatprep.subr.mxu0 0.0
    %2965 = vmatpush1.msra.mxu0 0.0
    %2966 = vmatprep.subr.mxu0 0.0
    %2967 = vmatpush1.msra.mxu0 0.0
    %2968 = vmatprep.subr.mxu0 0.0
    %2969 = vmatpush1.msra.mxu0 0.0
    %2970 = vmatprep.subr.mxu0 0.0
    %2971 = vmatpush1.msra.mxu0 0.0
    %2972 = vmatprep.subr.mxu0 0.0
    %2973 = vmatpush1.msra.mxu0 0.0
    %2974 = vmatprep.subr.mxu0 0.0
    %2975 = vmatpush1.msra.mxu0 0.0
    %2976 = vmatprep.subr.mxu0 0.0
    %2977 = vmatpush1.msra.mxu0 0.0
    %2978 = vmatprep.subr.mxu0 0.0
    %2979 = vmatpush1.msra.mxu0 0.0
    %2980 = vmatprep.subr.mxu0 0.0
    %2981 = vmatpush1.msra.mxu0 0.0
    %2982 = vmatprep.subr.mxu0 0.0
    %2983 = vmatpush1.msra.mxu0 0.0
    %2984 = vmatprep.subr.mxu0 0.0
    %2985 = vmatpush1.msra.mxu0 0.0
    %2986 = vmatprep.subr.mxu0 0.0
    %2987 = vmatpush1.msra.mxu0 0.0
    %2988 = vmatprep.subr.mxu0 0.0
    %2989 = vmatpush1.msra.mxu0 0.0
    %2990 = vmatprep.subr.mxu0 0.0
    %2991 = vmatpush1.msra.mxu0 0.0
    %2992 = vmatprep.subr.mxu0 0.0
    %2993 = vmatpush1.msra.mxu0 0.0
    %2994 = vmatprep.subr.mxu0 0.0
    %2995 = vmatpush1.msra.mxu0 0.0
    %2996 = vmatprep.subr.mxu0 0.0
    %2997 = vmatpush1.msra.mxu0 0.0
    %2998 = vmatprep.subr.mxu0 0.0
    %2999 = vmatpush1.msra.mxu0 0.0
    %3000 = vmatprep.subr.mxu0 0.0
    %3001 = vmatpush1.msra.mxu0 0.0
    %3002 = vmatprep.subr.mxu0 0.0
    %3003 = vmatpush1.msra.mxu0 0.0
    %3004 = vmatprep.mubr.f32.mxu0 0.0
    %3005 = vmatmul.mubr.f32.gmra.mrb[0].mxu0 %v2717
    %v3006 = vpop.f32.mrb[0].mxu0
    %v3007 = vadd.f32 %v2937, %v3006
    %v3008 = vpop.f32.mrb[0].mxu0
    %3009 = vdwg.mxu0
    %v3011 = vlaneseq
    %v3012 = vshrl.u32 %v3011, 7
    %v3013 = vsub.s32 0, %v3012
    %v3014 = vrot.slane %v1338, %v3013
    %v3015 = vlaneseq
    %v3016 = vshrl.u32 %v3015, 7
    %v3017 = vsub.s32 1, %v3016
    %v3018 = vrot.slane %v1338, %v3017
    %v3019 = vlaneseq
    %v3020 = vshrl.u32 %v3019, 7
    %v3021 = vsub.s32 2, %v3020
    %v3022 = vrot.slane %v1338, %v3021
    %v3026 = vadd.f32 %v3014, %v2866
    %v3027 = vadd.f32 %v3018, %v2868
    %v3028 = vadd.f32 %v3022, %v3007
    %3029 = vmatprep.subr.mxu0 %v1341
    %3030 = vmatpush1.msra.mxu0 %v1340
    %3031 = vmatprep.subr.mxu0 %v1344
    %3032 = vmatpush1.msra.mxu0 %v1343
    %3033 = vmatprep.subr.mxu0 %v1347
    %3034 = vmatpush1.msra.mxu0 %v1346
    %3035 = vmatprep.subr.mxu0 %v1350
    %3036 = vmatpush1.msra.mxu0 %v1349
    %3037 = vmatprep.subr.mxu0 %v1353
    %3038 = vmatpush1.msra.mxu0 %v1352
    %3039 = vmatprep.subr.mxu0 %v1356
    %3040 = vmatpush1.msra.mxu0 %v1355
    %3041 = vmatprep.subr.mxu0 %v1359
    %3042 = vmatpush1.msra.mxu0 %v1358
    %3043 = vmatprep.subr.mxu0 %v1362
    %3044 = vmatpush1.msra.mxu0 %v1361
    %3045 = vmatprep.subr.mxu0 %v1365
    %3046 = vmatpush1.msra.mxu0 %v1364
    %3047 = vmatprep.subr.mxu0 %v1368
    %3048 = vmatpush1.msra.mxu0 %v1367
    %3049 = vmatprep.subr.mxu0 %v1371
    %3050 = vmatpush1.msra.mxu0 %v1370
    %3051 = vmatprep.subr.mxu0 %v1374
    %3052 = vmatpush1.msra.mxu0 %v1373
    %3053 = vmatprep.subr.mxu0 %v1377
    %3054 = vmatpush1.msra.mxu0 %v1376
    %3055 = vmatprep.subr.mxu0 %v1380
    %3056 = vmatpush1.msra.mxu0 %v1379
    %3057 = vmatprep.subr.mxu0 %v1383
    %3058 = vmatpush1.msra.mxu0 %v1382
    %3059 = vmatprep.subr.mxu0 %v1386
    %3060 = vmatpush1.msra.mxu0 %v1385
    %3061 = vmatprep.subr.mxu0 %v1389
    %3062 = vmatpush1.msra.mxu0 %v1388
    %3063 = vmatprep.subr.mxu0 %v1392
    %3064 = vmatpush1.msra.mxu0 %v1391
    %3065 = vmatprep.subr.mxu0 %v1395
    %3066 = vmatpush1.msra.mxu0 %v1394
    %3067 = vmatprep.subr.mxu0 %v1398
    %3068 = vmatpush1.msra.mxu0 %v1397
    %3069 = vmatprep.subr.mxu0 %v1401
    %3070 = vmatpush1.msra.mxu0 %v1400
    %3071 = vmatprep.subr.mxu0 %v1404
    %3072 = vmatpush1.msra.mxu0 %v1403
    %3073 = vmatprep.subr.mxu0 %v1407
    %3074 = vmatpush1.msra.mxu0 %v1406
    %3075 = vmatprep.subr.mxu0 %v1410
    %3076 = vmatpush1.msra.mxu0 %v1409
    %3077 = vmatprep.subr.mxu0 %v1413
    %3078 = vmatpush1.msra.mxu0 %v1412
    %3079 = vmatprep.subr.mxu0 %v1416
    %3080 = vmatpush1.msra.mxu0 %v1415
    %3081 = vmatprep.subr.mxu0 %v1419
    %3082 = vmatpush1.msra.mxu0 %v1418
    %3083 = vmatprep.subr.mxu0 %v1422
    %3084 = vmatpush1.msra.mxu0 %v1421
    %3085 = vmatprep.subr.mxu0 %v1425
    %3086 = vmatpush1.msra.mxu0 %v1424
    %3087 = vmatprep.subr.mxu0 %v1428
    %3088 = vmatpush1.msra.mxu0 %v1427
    %3089 = vmatprep.subr.mxu0 %v1431
    %3090 = vmatpush1.msra.mxu0 %v1430
    %3091 = vmatprep.subr.mxu0 %v1434
    %3092 = vmatpush1.msra.mxu0 %v1433
    %3093 = vmatprep.mubr.f32.mxu0 %v1324
    %3094 = vmatmul.mubr.f32.gmra.mrb[0].mxu0 %v1323
    %v3095 = vpop.f32.mrb[0].mxu0
    %v3096 = vadd.f32 0.0, %v3095
    %v3097 = vpop.f32.mrb[0].mxu0
    %v3098 = vadd.f32 0.0, %v3097
    %3099 = vdwg.mxu0
    %3100 = vmatprep.subr.mxu0 %v1437
    %3101 = vmatpush1.msra.mxu0 %v1436
    %3102 = vmatprep.subr.mxu0 %v1440
    %3103 = vmatpush1.msra.mxu0 %v1439
    %3104 = vmatprep.subr.mxu0 %v1443
    %3105 = vmatpush1.msra.mxu0 %v1442
    %3106 = vmatprep.subr.mxu0 %v1446
    %3107 = vmatpush1.msra.mxu0 %v1445
    %3108 = vmatprep.subr.mxu0 %v1449
    %3109 = vmatpush1.msra.mxu0 %v1448
    %3110 = vmatprep.subr.mxu0 %v1461
    %3111 = vmatpush1.msra.mxu0 %v1458
    %3112 = vmatprep.subr.mxu0 0.0
    %3113 = vmatpush1.msra.mxu0 0.0
    %3114 = vmatprep.subr.mxu0 0.0
    %3115 = vmatpush1.msra.mxu0 0.0
    %3116 = vmatprep.subr.mxu0 0.0
    %3117 = vmatpush1.msra.mxu0 0.0
    %3118 = vmatprep.subr.mxu0 0.0
    %3119 = vmatpush1.msra.mxu0 0.0
    %3120 = vmatprep.subr.mxu0 0.0
    %3121 = vmatpush1.msra.mxu0 0.0
    %3122 = vmatprep.subr.mxu0 0.0
    %3123 = vmatpush1.msra.mxu0 0.0
    %3124 = vmatprep.subr.mxu0 0.0
    %3125 = vmatpush1.msra.mxu0 0.0
    %3126 = vmatprep.subr.mxu0 0.0
    %3127 = vmatpush1.msra.mxu0 0.0
    %3128 = vmatprep.subr.mxu0 0.0
    %3129 = vmatpush1.msra.mxu0 0.0
    %3130 = vmatprep.subr.mxu0 0.0
    %3131 = vmatpush1.msra.mxu0 0.0
    %3132 = vmatprep.subr.mxu0 0.0
    %3133 = vmatpush1.msra.mxu0 0.0
    %3134 = vmatprep.subr.mxu0 0.0
    %3135 = vmatpush1.msra.mxu0 0.0
    %3136 = vmatprep.subr.mxu0 0.0
    %3137 = vmatpush1.msra.mxu0 0.0
    %3138 = vmatprep.subr.mxu0 0.0
    %3139 = vmatpush1.msra.mxu0 0.0
    %3140 = vmatprep.subr.mxu0 0.0
    %3141 = vmatpush1.msra.mxu0 0.0
    %3142 = vmatprep.subr.mxu0 0.0
    %3143 = vmatpush1.msra.mxu0 0.0
    %3144 = vmatprep.subr.mxu0 0.0
    %3145 = vmatpush1.msra.mxu0 0.0
    %3146 = vmatprep.subr.mxu0 0.0
    %3147 = vmatpush1.msra.mxu0 0.0
    %3148 = vmatprep.subr.mxu0 0.0
    %3149 = vmatpush1.msra.mxu0 0.0
    %3150 = vmatprep.subr.mxu0 0.0
    %3151 = vmatpush1.msra.mxu0 0.0
    %3152 = vmatprep.subr.mxu0 0.0
    %3153 = vmatpush1.msra.mxu0 0.0
    %3154 = vmatprep.subr.mxu0 0.0
    %3155 = vmatpush1.msra.mxu0 0.0
    %3156 = vmatprep.subr.mxu0 0.0
    %3157 = vmatpush1.msra.mxu0 0.0
    %3158 = vmatprep.subr.mxu0 0.0
    %3159 = vmatpush1.msra.mxu0 0.0
    %3160 = vmatprep.subr.mxu0 0.0
    %3161 = vmatpush1.msra.mxu0 0.0
    %3162 = vmatprep.subr.mxu0 0.0
    %3163 = vmatpush1.msra.mxu0 0.0
    %3164 = vmatprep.mubr.f32.mxu0 0.0
    %3165 = vmatmul.mubr.f32.gmra.mrb[0].mxu0 %v2295
    %v3166 = vpop.f32.mrb[0].mxu0
    %v3167 = vadd.f32 %v3096, %v3166
    %v3168 = vpop.f32.mrb[0].mxu0
    %v3169 = vadd.f32 %v3098, %v3168
    %3170 = vdwg.mxu0
    %3171 = vmatprep.subr.mxu0 0.0
    %3172 = vmatpush1.msra.mxu0 %v1342
    %3173 = vmatprep.subr.mxu0 0.0
    %3174 = vmatpush1.msra.mxu0 %v1345
    %3175 = vmatprep.subr.mxu0 0.0
    %3176 = vmatpush1.msra.mxu0 %v1348
    %3177 = vmatprep.subr.mxu0 0.0
    %3178 = vmatpush1.msra.mxu0 %v1351
    %3179 = vmatprep.subr.mxu0 0.0
    %3180 = vmatpush1.msra.mxu0 %v1354
    %3181 = vmatprep.subr.mxu0 0.0
    %3182 = vmatpush1.msra.mxu0 %v1357
    %3183 = vmatprep.subr.mxu0 0.0
    %3184 = vmatpush1.msra.mxu0 %v1360
    %3185 = vmatprep.subr.mxu0 0.0
    %3186 = vmatpush1.msra.mxu0 %v1363
    %3187 = vmatprep.subr.mxu0 0.0
    %3188 = vmatpush1.msra.mxu0 %v1366
    %3189 = vmatprep.subr.mxu0 0.0
    %3190 = vmatpush1.msra.mxu0 %v1369
    %3191 = vmatprep.subr.mxu0 0.0
    %3192 = vmatpush1.msra.mxu0 %v1372
    %3193 = vmatprep.subr.mxu0 0.0
    %3194 = vmatpush1.msra.mxu0 %v1375
    %3195 = vmatprep.subr.mxu0 0.0
    %3196 = vmatpush1.msra.mxu0 %v1378
    %3197 = vmatprep.subr.mxu0 0.0
    %3198 = vmatpush1.msra.mxu0 %v1381
    %3199 = vmatprep.subr.mxu0 0.0
    %3200 = vmatpush1.msra.mxu0 %v1384
    %3201 = vmatprep.subr.mxu0 0.0
    %3202 = vmatpush1.msra.mxu0 %v1387
    %3203 = vmatprep.subr.mxu0 0.0
    %3204 = vmatpush1.msra.mxu0 %v1390
    %3205 = vmatprep.subr.mxu0 0.0
    %3206 = vmatpush1.msra.mxu0 %v1393
    %3207 = vmatprep.subr.mxu0 0.0
    %3208 = vmatpush1.msra.mxu0 %v1396
    %3209 = vmatprep.subr.mxu0 0.0
    %3210 = vmatpush1.msra.mxu0 %v1399
    %3211 = vmatprep.subr.mxu0 0.0
    %3212 = vmatpush1.msra.mxu0 %v1402
    %3213 = vmatprep.subr.mxu0 0.0
    %3214 = vmatpush1.msra.mxu0 %v1405
    %3215 = vmatprep.subr.mxu0 0.0
    %3216 = vmatpush1.msra.mxu0 %v1408
    %3217 = vmatprep.subr.mxu0 0.0
    %3218 = vmatpush1.msra.mxu0 %v1411
    %3219 = vmatprep.subr.mxu0 0.0
    %3220 = vmatpush1.msra.mxu0 %v1414
    %3221 = vmatprep.subr.mxu0 0.0
    %3222 = vmatpush1.msra.mxu0 %v1417
    %3223 = vmatprep.subr.mxu0 0.0
    %3224 = vmatpush1.msra.mxu0 %v1420
    %3225 = vmatprep.subr.mxu0 0.0
    %3226 = vmatpush1.msra.mxu0 %v1423
    %3227 = vmatprep.subr.mxu0 0.0
    %3228 = vmatpush1.msra.mxu0 %v1426
    %3229 = vmatprep.subr.mxu0 0.0
    %3230 = vmatpush1.msra.mxu0 %v1429
    %3231 = vmatprep.subr.mxu0 0.0
    %3232 = vmatpush1.msra.mxu0 %v1432
    %3233 = vmatprep.subr.mxu0 0.0
    %3234 = vmatpush1.msra.mxu0 %v1435
    %3235 = vmatprep.mubr.f32.mxu0 %v1324
    %3236 = vmatmul.mubr.f32.gmra.mrb[0].mxu0 %v1323
    %v3237 = vpop.f32.mrb[0].mxu0
    %v3238 = vadd.f32 0.0, %v3237
    %v3239 = vpop.f32.mrb[0].mxu0
    %3240 = vdwg.mxu0
    %3241 = vmatprep.subr.mxu0 0.0
    %3242 = vmatpush1.msra.mxu0 %v1438
    %3243 = vmatprep.subr.mxu0 0.0
    %3244 = vmatpush1.msra.mxu0 %v1441
    %3245 = vmatprep.subr.mxu0 0.0
    %3246 = vmatpush1.msra.mxu0 %v1444
    %3247 = vmatprep.subr.mxu0 0.0
    %3248 = vmatpush1.msra.mxu0 %v1447
    %3249 = vmatprep.subr.mxu0 0.0
    %3250 = vmatpush1.msra.mxu0 %v1450
    %3251 = vmatprep.subr.mxu0 0.0
    %3252 = vmatpush1.msra.mxu0 %v1464
    %3253 = vmatprep.subr.mxu0 0.0
    %3254 = vmatpush1.msra.mxu0 0.0
    %3255 = vmatprep.subr.mxu0 0.0
    %3256 = vmatpush1.msra.mxu0 0.0
    %3257 = vmatprep.subr.mxu0 0.0
    %3258 = vmatpush1.msra.mxu0 0.0
    %3259 = vmatprep.subr.mxu0 0.0
    %3260 = vmatpush1.msra.mxu0 0.0
    %3261 = vmatprep.subr.mxu0 0.0
    %3262 = vmatpush1.msra.mxu0 0.0
    %3263 = vmatprep.subr.mxu0 0.0
    %3264 = vmatpush1.msra.mxu0 0.0
    %3265 = vmatprep.subr.mxu0 0.0
    %3266 = vmatpush1.msra.mxu0 0.0
    %3267 = vmatprep.subr.mxu0 0.0
    %3268 = vmatpush1.msra.mxu0 0.0
    %3269 = vmatprep.subr.mxu0 0.0
    %3270 = vmatpush1.msra.mxu0 0.0
    %3271 = vmatprep.subr.mxu0 0.0
    %3272 = vmatpush1.msra.mxu0 0.0
    %3273 = vmatprep.subr.mxu0 0.0
    %3274 = vmatpush1.msra.mxu0 0.0
    %3275 = vmatprep.subr.mxu0 0.0
    %3276 = vmatpush1.msra.mxu0 0.0
    %3277 = vmatprep.subr.mxu0 0.0
    %3278 = vmatpush1.msra.mxu0 0.0
    %3279 = vmatprep.subr.mxu0 0.0
    %3280 = vmatpush1.msra.mxu0 0.0
    %3281 = vmatprep.subr.mxu0 0.0
    %3282 = vmatpush1.msra.mxu0 0.0
    %3283 = vmatprep.subr.mxu0 0.0
    %3284 = vmatpush1.msra.mxu0 0.0
    %3285 = vmatprep.subr.mxu0 0.0
    %3286 = vmatpush1.msra.mxu0 0.0
    %3287 = vmatprep.subr.mxu0 0.0
    %3288 = vmatpush1.msra.mxu0 0.0
    %3289 = vmatprep.subr.mxu0 0.0
    %3290 = vmatpush1.msra.mxu0 0.0
    %3291 = vmatprep.subr.mxu0 0.0
    %3292 = vmatpush1.msra.mxu0 0.0
    %3293 = vmatprep.subr.mxu0 0.0
    %3294 = vmatpush1.msra.mxu0 0.0
    %3295 = vmatprep.subr.mxu0 0.0
    %3296 = vmatpush1.msra.mxu0 0.0
    %3297 = vmatprep.subr.mxu0 0.0
    %3298 = vmatpush1.msra.mxu0 0.0
    %3299 = vmatprep.subr.mxu0 0.0
    %3300 = vmatpush1.msra.mxu0 0.0
    %3301 = vmatprep.subr.mxu0 0.0
    %3302 = vmatpush1.msra.mxu0 0.0
    %3303 = vmatprep.subr.mxu0 0.0
    %3304 = vmatpush1.msra.mxu0 0.0
    %3305 = vmatprep.mubr.f32.mxu0 0.0
    %3306 = vmatmul.mubr.f32.gmra.mrb[0].mxu0 %v2295
    %v3307 = vpop.f32.mrb[0].mxu0
    %v3308 = vadd.f32 %v3238, %v3307
    %v3309 = vpop.f32.mrb[0].mxu0
    %3310 = vdwg.mxu0
    %v3311 = vadd.f32 %v1752, %v3167
    %v3312 = vadd.f32 %v1756, %v3169
    %v3313 = vadd.f32 %v1760, %v3308
    %v3315 = vsel %vm345, %v1328, 0
    %3317 = vmatprep.subr.mxu0 %v1769
    %3318 = vmatpush1.msra.mxu0 %v1768
    %3319 = vmatprep.subr.mxu0 %v1772
    %3320 = vmatpush1.msra.mxu0 %v1771
    %3321 = vmatprep.subr.mxu0 %v1775
    %3322 = vmatpush1.msra.mxu0 %v1774
    %3323 = vmatprep.subr.mxu0 %v1778
    %3324 = vmatpush1.msra.mxu0 %v1777
    %3325 = vmatprep.subr.mxu0 %v1781
    %3326 = vmatpush1.msra.mxu0 %v1780
    %3327 = vmatprep.subr.mxu0 %v1784
    %3328 = vmatpush1.msra.mxu0 %v1783
    %3329 = vmatprep.subr.mxu0 %v1787
    %3330 = vmatpush1.msra.mxu0 %v1786
    %3331 = vmatprep.subr.mxu0 %v1790
    %3332 = vmatpush1.msra.mxu0 %v1789
    %3333 = vmatprep.subr.mxu0 %v1793
    %3334 = vmatpush1.msra.mxu0 %v1792
    %3335 = vmatprep.subr.mxu0 %v1796
    %3336 = vmatpush1.msra.mxu0 %v1795
    %3337 = vmatprep.subr.mxu0 %v1799
    %3338 = vmatpush1.msra.mxu0 %v1798
    %3339 = vmatprep.subr.mxu0 %v1802
    %3340 = vmatpush1.msra.mxu0 %v1801
    %3341 = vmatprep.subr.mxu0 %v1805
    %3342 = vmatpush1.msra.mxu0 %v1804
    %3343 = vmatprep.subr.mxu0 %v1808
    %3344 = vmatpush1.msra.mxu0 %v1807
    %3345 = vmatprep.subr.mxu0 %v1811
    %3346 = vmatpush1.msra.mxu0 %v1810
    %3347 = vmatprep.subr.mxu0 %v1814
    %3348 = vmatpush1.msra.mxu0 %v1813
    %3349 = vmatprep.subr.mxu0 %v1817
    %3350 = vmatpush1.msra.mxu0 %v1816
    %3351 = vmatprep.subr.mxu0 %v1820
    %3352 = vmatpush1.msra.mxu0 %v1819
    %3353 = vmatprep.subr.mxu0 %v1823
    %3354 = vmatpush1.msra.mxu0 %v1822
    %3355 = vmatprep.subr.mxu0 %v1826
    %3356 = vmatpush1.msra.mxu0 %v1825
    %3357 = vmatprep.subr.mxu0 %v1829
    %3358 = vmatpush1.msra.mxu0 %v1828
    %3359 = vmatprep.subr.mxu0 %v1832
    %3360 = vmatpush1.msra.mxu0 %v1831
    %3361 = vmatprep.subr.mxu0 %v1835
    %3362 = vmatpush1.msra.mxu0 %v1834
    %3363 = vmatprep.subr.mxu0 %v1838
    %3364 = vmatpush1.msra.mxu0 %v1837
    %3365 = vmatprep.subr.mxu0 %v1841
    %3366 = vmatpush1.msra.mxu0 %v1840
    %3367 = vmatprep.subr.mxu0 %v1844
    %3368 = vmatpush1.msra.mxu0 %v1843
    %3369 = vmatprep.subr.mxu0 %v1847
    %3370 = vmatpush1.msra.mxu0 %v1846
    %3371 = vmatprep.subr.mxu0 %v1850
    %3372 = vmatpush1.msra.mxu0 %v1849
    %3373 = vmatprep.subr.mxu0 %v1853
    %3374 = vmatpush1.msra.mxu0 %v1852
    %3375 = vmatprep.subr.mxu0 %v1856
    %3376 = vmatpush1.msra.mxu0 %v1855
    %3377 = vmatprep.subr.mxu0 %v1859
    %3378 = vmatpush1.msra.mxu0 %v1858
    %3379 = vmatprep.subr.mxu0 %v1862
    %3380 = vmatpush1.msra.mxu0 %v1861
    %3381 = vmatprep.mubr.f32.mxu0 %v1327
    %3382 = vmatmul.mubr.f32.gmra.mrb[0].mxu0 %v1326
    %v3383 = vpop.f32.mrb[0].mxu0
    %v3384 = vadd.f32 0.0, %v3383
    %v3385 = vpop.f32.mrb[0].mxu0
    %v3386 = vadd.f32 0.0, %v3385
    %3387 = vdwg.mxu0
    %3388 = vmatprep.subr.mxu0 %v1865
    %3389 = vmatpush1.msra.mxu0 %v1864
    %3390 = vmatprep.subr.mxu0 %v1868
    %3391 = vmatpush1.msra.mxu0 %v1867
    %3392 = vmatprep.subr.mxu0 %v1871
    %3393 = vmatpush1.msra.mxu0 %v1870
    %3394 = vmatprep.subr.mxu0 %v1874
    %3395 = vmatpush1.msra.mxu0 %v1873
    %3396 = vmatprep.subr.mxu0 %v1877
    %3397 = vmatpush1.msra.mxu0 %v1876
    %3398 = vmatprep.subr.mxu0 %v1889
    %3399 = vmatpush1.msra.mxu0 %v1886
    %3400 = vmatprep.subr.mxu0 0.0
    %3401 = vmatpush1.msra.mxu0 0.0
    %3402 = vmatprep.subr.mxu0 0.0
    %3403 = vmatpush1.msra.mxu0 0.0
    %3404 = vmatprep.subr.mxu0 0.0
    %3405 = vmatpush1.msra.mxu0 0.0
    %3406 = vmatprep.subr.mxu0 0.0
    %3407 = vmatpush1.msra.mxu0 0.0
    %3408 = vmatprep.subr.mxu0 0.0
    %3409 = vmatpush1.msra.mxu0 0.0
    %3410 = vmatprep.subr.mxu0 0.0
    %3411 = vmatpush1.msra.mxu0 0.0
    %3412 = vmatprep.subr.mxu0 0.0
    %3413 = vmatpush1.msra.mxu0 0.0
    %3414 = vmatprep.subr.mxu0 0.0
    %3415 = vmatpush1.msra.mxu0 0.0
    %3416 = vmatprep.subr.mxu0 0.0
    %3417 = vmatpush1.msra.mxu0 0.0
    %3418 = vmatprep.subr.mxu0 0.0
    %3419 = vmatpush1.msra.mxu0 0.0
    %3420 = vmatprep.subr.mxu0 0.0
    %3421 = vmatpush1.msra.mxu0 0.0
    %3422 = vmatprep.subr.mxu0 0.0
    %3423 = vmatpush1.msra.mxu0 0.0
    %3424 = vmatprep.subr.mxu0 0.0
    %3425 = vmatpush1.msra.mxu0 0.0
    %3426 = vmatprep.subr.mxu0 0.0
    %3427 = vmatpush1.msra.mxu0 0.0
    %3428 = vmatprep.subr.mxu0 0.0
    %3429 = vmatpush1.msra.mxu0 0.0
    %3430 = vmatprep.subr.mxu0 0.0
    %3431 = vmatpush1.msra.mxu0 0.0
    %3432 = vmatprep.subr.mxu0 0.0
    %3433 = vmatpush1.msra.mxu0 0.0
    %3434 = vmatprep.subr.mxu0 0.0
    %3435 = vmatpush1.msra.mxu0 0.0
    %3436 = vmatprep.subr.mxu0 0.0
    %3437 = vmatpush1.msra.mxu0 0.0
    %3438 = vmatprep.subr.mxu0 0.0
    %3439 = vmatpush1.msra.mxu0 0.0
    %3440 = vmatprep.subr.mxu0 0.0
    %3441 = vmatpush1.msra.mxu0 0.0
    %3442 = vmatprep.subr.mxu0 0.0
    %3443 = vmatpush1.msra.mxu0 0.0
    %3444 = vmatprep.subr.mxu0 0.0
    %3445 = vmatpush1.msra.mxu0 0.0
    %3446 = vmatprep.subr.mxu0 0.0
    %3447 = vmatpush1.msra.mxu0 0.0
    %3448 = vmatprep.subr.mxu0 0.0
    %3449 = vmatpush1.msra.mxu0 0.0
    %3450 = vmatprep.subr.mxu0 0.0
    %3451 = vmatpush1.msra.mxu0 0.0
    %3452 = vmatprep.mubr.f32.mxu0 0.0
    %3453 = vmatmul.mubr.f32.gmra.mrb[0].mxu0 %v3315
    %v3454 = vpop.f32.mrb[0].mxu0
    %v3455 = vadd.f32 %v3384, %v3454
    %v3456 = vpop.f32.mrb[0].mxu0
    %v3457 = vadd.f32 %v3386, %v3456
    %3458 = vdwg.mxu0
    %3459 = vmatprep.subr.mxu0 0.0
    %3460 = vmatpush1.msra.mxu0 %v1770
    %3461 = vmatprep.subr.mxu0 0.0
    %3462 = vmatpush1.msra.mxu0 %v1773
    %3463 = vmatprep.subr.mxu0 0.0
    %3464 = vmatpush1.msra.mxu0 %v1776
    %3465 = vmatprep.subr.mxu0 0.0
    %3466 = vmatpush1.msra.mxu0 %v1779
    %3467 = vmatprep.subr.mxu0 0.0
    %3468 = vmatpush1.msra.mxu0 %v1782
    %3469 = vmatprep.subr.mxu0 0.0
    %3470 = vmatpush1.msra.mxu0 %v1785
    %3471 = vmatprep.subr.mxu0 0.0
    %3472 = vmatpush1.msra.mxu0 %v1788
    %3473 = vmatprep.subr.mxu0 0.0
    %3474 = vmatpush1.msra.mxu0 %v1791
    %3475 = vmatprep.subr.mxu0 0.0
    %3476 = vmatpush1.msra.mxu0 %v1794
    %3477 = vmatprep.subr.mxu0 0.0
    %3478 = vmatpush1.msra.mxu0 %v1797
    %3479 = vmatprep.subr.mxu0 0.0
    %3480 = vmatpush1.msra.mxu0 %v1800
    %3481 = vmatprep.subr.mxu0 0.0
    %3482 = vmatpush1.msra.mxu0 %v1803
    %3483 = vmatprep.subr.mxu0 0.0
    %3484 = vmatpush1.msra.mxu0 %v1806
    %3485 = vmatprep.subr.mxu0 0.0
    %3486 = vmatpush1.msra.mxu0 %v1809
    %3487 = vmatprep.subr.mxu0 0.0
    %3488 = vmatpush1.msra.mxu0 %v1812
    %3489 = vmatprep.subr.mxu0 0.0
    %3490 = vmatpush1.msra.mxu0 %v1815
    %3491 = vmatprep.subr.mxu0 0.0
    %3492 = vmatpush1.msra.mxu0 %v1818
    %3493 = vmatprep.subr.mxu0 0.0
    %3494 = vmatpush1.msra.mxu0 %v1821
    %3495 = vmatprep.subr.mxu0 0.0
    %3496 = vmatpush1.msra.mxu0 %v1824
    %3497 = vmatprep.subr.mxu0 0.0
    %3498 = vmatpush1.msra.mxu0 %v1827
    %3499 = vmatprep.subr.mxu0 0.0
    %3500 = vmatpush1.msra.mxu0 %v1830
    %3501 = vmatprep.subr.mxu0 0.0
    %3502 = vmatpush1.msra.mxu0 %v1833
    %3503 = vmatprep.subr.mxu0 0.0
    %3504 = vmatpush1.msra.mxu0 %v1836
    %3505 = vmatprep.subr.mxu0 0.0
    %3506 = vmatpush1.msra.mxu0 %v1839
    %3507 = vmatprep.subr.mxu0 0.0
    %3508 = vmatpush1.msra.mxu0 %v1842
    %3509 = vmatprep.subr.mxu0 0.0
    %3510 = vmatpush1.msra.mxu0 %v1845
    %3511 = vmatprep.subr.mxu0 0.0
    %3512 = vmatpush1.msra.mxu0 %v1848
    %3513 = vmatprep.subr.mxu0 0.0
    %3514 = vmatpush1.msra.mxu0 %v1851
    %3515 = vmatprep.subr.mxu0 0.0
    %3516 = vmatpush1.msra.mxu0 %v1854
    %3517 = vmatprep.subr.mxu0 0.0
    %3518 = vmatpush1.msra.mxu0 %v1857
    %3519 = vmatprep.subr.mxu0 0.0
    %3520 = vmatpush1.msra.mxu0 %v1860
    %3521 = vmatprep.subr.mxu0 0.0
    %3522 = vmatpush1.msra.mxu0 %v1863
    %3523 = vmatprep.mubr.f32.mxu0 %v1327
    %3524 = vmatmul.mubr.f32.gmra.mrb[0].mxu0 %v1326
    %v3525 = vpop.f32.mrb[0].mxu0
    %v3526 = vadd.f32 0.0, %v3525
    %v3527 = vpop.f32.mrb[0].mxu0
    %3528 = vdwg.mxu0
    %3529 = vmatprep.subr.mxu0 0.0
    %3530 = vmatpush1.msra.mxu0 %v1866
    %3531 = vmatprep.subr.mxu0 0.0
    %3532 = vmatpush1.msra.mxu0 %v1869
    %3533 = vmatprep.subr.mxu0 0.0
    %3534 = vmatpush1.msra.mxu0 %v1872
    %3535 = vmatprep.subr.mxu0 0.0
    %3536 = vmatpush1.msra.mxu0 %v1875
    %3537 = vmatprep.subr.mxu0 0.0
    %3538 = vmatpush1.msra.mxu0 %v1878
    %3539 = vmatprep.subr.mxu0 0.0
    %3540 = vmatpush1.msra.mxu0 %v1892
    %3541 = vmatprep.subr.mxu0 0.0
    %3542 = vmatpush1.msra.mxu0 0.0
    %3543 = vmatprep.subr.mxu0 0.0
    %3544 = vmatpush1.msra.mxu0 0.0
    %3545 = vmatprep.subr.mxu0 0.0
    %3546 = vmatpush1.msra.mxu0 0.0
    %3547 = vmatprep.subr.mxu0 0.0
    %3548 = vmatpush1.msra.mxu0 0.0
    %3549 = vmatprep.subr.mxu0 0.0
    %3550 = vmatpush1.msra.mxu0 0.0
    %3551 = vmatprep.subr.mxu0 0.0
    %3552 = vmatpush1.msra.mxu0 0.0
    %3553 = vmatprep.subr.mxu0 0.0
    %3554 = vmatpush1.msra.mxu0 0.0
    %3555 = vmatprep.subr.mxu0 0.0
    %3556 = vmatpush1.msra.mxu0 0.0
    %3557 = vmatprep.subr.mxu0 0.0
    %3558 = vmatpush1.msra.mxu0 0.0
    %3559 = vmatprep.subr.mxu0 0.0
    %3560 = vmatpush1.msra.mxu0 0.0
    %3561 = vmatprep.subr.mxu0 0.0
    %3562 = vmatpush1.msra.mxu0 0.0
    %3563 = vmatprep.subr.mxu0 0.0
    %3564 = vmatpush1.msra.mxu0 0.0
    %3565 = vmatprep.subr.mxu0 0.0
    %3566 = vmatpush1.msra.mxu0 0.0
    %3567 = vmatprep.subr.mxu0 0.0
    %3568 = vmatpush1.msra.mxu0 0.0
    %3569 = vmatprep.subr.mxu0 0.0
    %3570 = vmatpush1.msra.mxu0 0.0
    %3571 = vmatprep.subr.mxu0 0.0
    %3572 = vmatpush1.msra.mxu0 0.0
    %3573 = vmatprep.subr.mxu0 0.0
    %3574 = vmatpush1.msra.mxu0 0.0
    %3575 = vmatprep.subr.mxu0 0.0
    %3576 = vmatpush1.msra.mxu0 0.0
    %3577 = vmatprep.subr.mxu0 0.0
    %3578 = vmatpush1.msra.mxu0 0.0
    %3579 = vmatprep.subr.mxu0 0.0
    %3580 = vmatpush1.msra.mxu0 0.0
    %3581 = vmatprep.subr.mxu0 0.0
    %3582 = vmatpush1.msra.mxu0 0.0
    %3583 = vmatprep.subr.mxu0 0.0
    %3584 = vmatpush1.msra.mxu0 0.0
    %3585 = vmatprep.subr.mxu0 0.0
    %3586 = vmatpush1.msra.mxu0 0.0
    %3587 = vmatprep.subr.mxu0 0.0
    %3588 = vmatpush1.msra.mxu0 0.0
    %3589 = vmatprep.subr.mxu0 0.0
    %3590 = vmatpush1.msra.mxu0 0.0
    %3591 = vmatprep.subr.mxu0 0.0
    %3592 = vmatpush1.msra.mxu0 0.0
    %3593 = vmatprep.mubr.f32.mxu0 0.0
    %3594 = vmatmul.mubr.f32.gmra.mrb[0].mxu0 %v3315
    %v3595 = vpop.f32.mrb[0].mxu0
    %v3596 = vadd.f32 %v3526, %v3595
    %v3597 = vpop.f32.mrb[0].mxu0
    %3598 = vdwg.mxu0
    %v3599 = vadd.f32 %v3311, %v3455
    %v3600 = vadd.f32 %v3312, %v3457
    %v3601 = vadd.f32 %v3313, %v3596
    %v3603 = vsel %vm345, %v1331, 0
    %3605 = vmatprep.subr.mxu0 %v2181
    %3606 = vmatpush1.msra.mxu0 %v2180
    %3607 = vmatprep.subr.mxu0 %v2184
    %3608 = vmatpush1.msra.mxu0 %v2183
    %3609 = vmatprep.subr.mxu0 %v2187
    %3610 = vmatpush1.msra.mxu0 %v2186
    %3611 = vmatprep.subr.mxu0 %v2190
    %3612 = vmatpush1.msra.mxu0 %v2189
    %3613 = vmatprep.subr.mxu0 %v2193
    %3614 = vmatpush1.msra.mxu0 %v2192
    %3615 = vmatprep.subr.mxu0 %v2196
    %3616 = vmatpush1.msra.mxu0 %v2195
    %3617 = vmatprep.subr.mxu0 %v2199
    %3618 = vmatpush1.msra.mxu0 %v2198
    %3619 = vmatprep.subr.mxu0 %v2202
    %3620 = vmatpush1.msra.mxu0 %v2201
    %3621 = vmatprep.subr.mxu0 %v2205
    %3622 = vmatpush1.msra.mxu0 %v2204
    %3623 = vmatprep.subr.mxu0 %v2208
    %3624 = vmatpush1.msra.mxu0 %v2207
    %3625 = vmatprep.subr.mxu0 %v2211
    %3626 = vmatpush1.msra.mxu0 %v2210
    %3627 = vmatprep.subr.mxu0 %v2214
    %3628 = vmatpush1.msra.mxu0 %v2213
    %3629 = vmatprep.subr.mxu0 %v2217
    %3630 = vmatpush1.msra.mxu0 %v2216
    %3631 = vmatprep.subr.mxu0 %v2220
    %3632 = vmatpush1.msra.mxu0 %v2219
    %3633 = vmatprep.subr.mxu0 %v2223
    %3634 = vmatpush1.msra.mxu0 %v2222
    %3635 = vmatprep.subr.mxu0 %v2226
    %3636 = vmatpush1.msra.mxu0 %v2225
    %3637 = vmatprep.subr.mxu0 %v2229
    %3638 = vmatpush1.msra.mxu0 %v2228
    %3639 = vmatprep.subr.mxu0 %v2232
    %3640 = vmatpush1.msra.mxu0 %v2231
    %3641 = vmatprep.subr.mxu0 %v2235
    %3642 = vmatpush1.msra.mxu0 %v2234
    %3643 = vmatprep.subr.mxu0 %v2238
    %3644 = vmatpush1.msra.mxu0 %v2237
    %3645 = vmatprep.subr.mxu0 %v2241
    %3646 = vmatpush1.msra.mxu0 %v2240
    %3647 = vmatprep.subr.mxu0 %v2244
    %3648 = vmatpush1.msra.mxu0 %v2243
    %3649 = vmatprep.subr.mxu0 %v2247
    %3650 = vmatpush1.msra.mxu0 %v2246
    %3651 = vmatprep.subr.mxu0 %v2250
    %3652 = vmatpush1.msra.mxu0 %v2249
    %3653 = vmatprep.subr.mxu0 %v2253
    %3654 = vmatpush1.msra.mxu0 %v2252
    %3655 = vmatprep.subr.mxu0 %v2256
    %3656 = vmatpush1.msra.mxu0 %v2255
    %3657 = vmatprep.subr.mxu0 %v2259
    %3658 = vmatpush1.msra.mxu0 %v2258
    %3659 = vmatprep.subr.mxu0 %v2262
    %3660 = vmatpush1.msra.mxu0 %v2261
    %3661 = vmatprep.subr.mxu0 %v2265
    %3662 = vmatpush1.msra.mxu0 %v2264
    %3663 = vmatprep.subr.mxu0 %v2268
    %3664 = vmatpush1.msra.mxu0 %v2267
    %3665 = vmatprep.subr.mxu0 %v2271
    %3666 = vmatpush1.msra.mxu0 %v2270
    %3667 = vmatprep.subr.mxu0 %v2274
    %3668 = vmatpush1.msra.mxu0 %v2273
    %3669 = vmatprep.mubr.f32.mxu0 %v1330
    %3670 = vmatmul.mubr.f32.gmra.mrb[0].mxu0 %v1329
    %v3671 = vpop.f32.mrb[0].mxu0
    %v3672 = vadd.f32 0.0, %v3671
    %v3673 = vpop.f32.mrb[0].mxu0
    %v3674 = vadd.f32 0.0, %v3673
    %3675 = vdwg.mxu0
    %3676 = vmatprep.subr.mxu0 %v2277
    %3677 = vmatpush1.msra.mxu0 %v2276
    %3678 = vmatprep.subr.mxu0 %v2280
    %3679 = vmatpush1.msra.mxu0 %v2279
    %3680 = vmatprep.subr.mxu0 %v2283
    %3681 = vmatpush1.msra.mxu0 %v2282
    %3682 = vmatprep.subr.mxu0 %v2286
    %3683 = vmatpush1.msra.mxu0 %v2285
    %3684 = vmatprep.subr.mxu0 %v2289
    %3685 = vmatpush1.msra.mxu0 %v2288
    %3686 = vmatprep.subr.mxu0 %v2301
    %3687 = vmatpush1.msra.mxu0 %v2298
    %3688 = vmatprep.subr.mxu0 0.0
    %3689 = vmatpush1.msra.mxu0 0.0
    %3690 = vmatprep.subr.mxu0 0.0
    %3691 = vmatpush1.msra.mxu0 0.0
    %3692 = vmatprep.subr.mxu0 0.0
    %3693 = vmatpush1.msra.mxu0 0.0
    %3694 = vmatprep.subr.mxu0 0.0
    %3695 = vmatpush1.msra.mxu0 0.0
    %3696 = vmatprep.subr.mxu0 0.0
    %3697 = vmatpush1.msra.mxu0 0.0
    %3698 = vmatprep.subr.mxu0 0.0
    %3699 = vmatpush1.msra.mxu0 0.0
    %3700 = vmatprep.subr.mxu0 0.0
    %3701 = vmatpush1.msra.mxu0 0.0
    %3702 = vmatprep.subr.mxu0 0.0
    %3703 = vmatpush1.msra.mxu0 0.0
    %3704 = vmatprep.subr.mxu0 0.0
    %3705 = vmatpush1.msra.mxu0 0.0
    %3706 = vmatprep.subr.mxu0 0.0
    %3707 = vmatpush1.msra.mxu0 0.0
    %3708 = vmatprep.subr.mxu0 0.0
    %3709 = vmatpush1.msra.mxu0 0.0
    %3710 = vmatprep.subr.mxu0 0.0
    %3711 = vmatpush1.msra.mxu0 0.0
    %3712 = vmatprep.subr.mxu0 0.0
    %3713 = vmatpush1.msra.mxu0 0.0
    %3714 = vmatprep.subr.mxu0 0.0
    %3715 = vmatpush1.msra.mxu0 0.0
    %3716 = vmatprep.subr.mxu0 0.0
    %3717 = vmatpush1.msra.mxu0 0.0
    %3718 = vmatprep.subr.mxu0 0.0
    %3719 = vmatpush1.msra.mxu0 0.0
    %3720 = vmatprep.subr.mxu0 0.0
    %3721 = vmatpush1.msra.mxu0 0.0
    %3722 = vmatprep.subr.mxu0 0.0
    %3723 = vmatpush1.msra.mxu0 0.0
    %3724 = vmatprep.subr.mxu0 0.0
    %3725 = vmatpush1.msra.mxu0 0.0
    %3726 = vmatprep.subr.mxu0 0.0
    %3727 = vmatpush1.msra.mxu0 0.0
    %3728 = vmatprep.subr.mxu0 0.0
    %3729 = vmatpush1.msra.mxu0 0.0
    %3730 = vmatprep.subr.mxu0 0.0
    %3731 = vmatpush1.msra.mxu0 0.0
    %3732 = vmatprep.subr.mxu0 0.0
    %3733 = vmatpush1.msra.mxu0 0.0
    %3734 = vmatprep.subr.mxu0 0.0
    %3735 = vmatpush1.msra.mxu0 0.0
    %3736 = vmatprep.subr.mxu0 0.0
    %3737 = vmatpush1.msra.mxu0 0.0
    %3738 = vmatprep.subr.mxu0 0.0
    %3739 = vmatpush1.msra.mxu0 0.0
    %3740 = vmatprep.mubr.f32.mxu0 0.0
    %3741 = vmatmul.mubr.f32.gmra.mrb[0].mxu0 %v3603
    %v3742 = vpop.f32.mrb[0].mxu0
    %v3743 = vadd.f32 %v3672, %v3742
    %v3744 = vpop.f32.mrb[0].mxu0
    %v3745 = vadd.f32 %v3674, %v3744
    %3746 = vdwg.mxu0
    %3747 = vmatprep.subr.mxu0 0.0
    %3748 = vmatpush1.msra.mxu0 %v2182
    %3749 = vmatprep.subr.mxu0 0.0
    %3750 = vmatpush1.msra.mxu0 %v2185
    %3751 = vmatprep.subr.mxu0 0.0
    %3752 = vmatpush1.msra.mxu0 %v2188
    %3753 = vmatprep.subr.mxu0 0.0
    %3754 = vmatpush1.msra.mxu0 %v2191
    %3755 = vmatprep.subr.mxu0 0.0
    %3756 = vmatpush1.msra.mxu0 %v2194
    %3757 = vmatprep.subr.mxu0 0.0
    %3758 = vmatpush1.msra.mxu0 %v2197
    %3759 = vmatprep.subr.mxu0 0.0
    %3760 = vmatpush1.msra.mxu0 %v2200
    %3761 = vmatprep.subr.mxu0 0.0
    %3762 = vmatpush1.msra.mxu0 %v2203
    %3763 = vmatprep.subr.mxu0 0.0
    %3764 = vmatpush1.msra.mxu0 %v2206
    %3765 = vmatprep.subr.mxu0 0.0
    %3766 = vmatpush1.msra.mxu0 %v2209
    %3767 = vmatprep.subr.mxu0 0.0
    %3768 = vmatpush1.msra.mxu0 %v2212
    %3769 = vmatprep.subr.mxu0 0.0
    %3770 = vmatpush1.msra.mxu0 %v2215
    %3771 = vmatprep.subr.mxu0 0.0
    %3772 = vmatpush1.msra.mxu0 %v2218
    %3773 = vmatprep.subr.mxu0 0.0
    %3774 = vmatpush1.msra.mxu0 %v2221
    %3775 = vmatprep.subr.mxu0 0.0
    %3776 = vmatpush1.msra.mxu0 %v2224
    %3777 = vmatprep.subr.mxu0 0.0
    %3778 = vmatpush1.msra.mxu0 %v2227
    %3779 = vmatprep.subr.mxu0 0.0
    %3780 = vmatpush1.msra.mxu0 %v2230
    %3781 = vmatprep.subr.mxu0 0.0
    %3782 = vmatpush1.msra.mxu0 %v2233
    %3783 = vmatprep.subr.mxu0 0.0
    %3784 = vmatpush1.msra.mxu0 %v2236
    %3785 = vmatprep.subr.mxu0 0.0
    %3786 = vmatpush1.msra.mxu0 %v2239
    %3787 = vmatprep.subr.mxu0 0.0
    %3788 = vmatpush1.msra.mxu0 %v2242
    %3789 = vmatprep.subr.mxu0 0.0
    %3790 = vmatpush1.msra.mxu0 %v2245
    %3791 = vmatprep.subr.mxu0 0.0
    %3792 = vmatpush1.msra.mxu0 %v2248
    %3793 = vmatprep.subr.mxu0 0.0
    %3794 = vmatpush1.msra.mxu0 %v2251
    %3795 = vmatprep.subr.mxu0 0.0
    %3796 = vmatpush1.msra.mxu0 %v2254
    %3797 = vmatprep.subr.mxu0 0.0
    %3798 = vmatpush1.msra.mxu0 %v2257
    %3799 = vmatprep.subr.mxu0 0.0
    %3800 = vmatpush1.msra.mxu0 %v2260
    %3801 = vmatprep.subr.mxu0 0.0
    %3802 = vmatpush1.msra.mxu0 %v2263
    %3803 = vmatprep.subr.mxu0 0.0
    %3804 = vmatpush1.msra.mxu0 %v2266
    %3805 = vmatprep.subr.mxu0 0.0
    %3806 = vmatpush1.msra.mxu0 %v2269
    %3807 = vmatprep.subr.mxu0 0.0
    %3808 = vmatpush1.msra.mxu0 %v2272
    %3809 = vmatprep.subr.mxu0 0.0
    %3810 = vmatpush1.msra.mxu0 %v2275
    %3811 = vmatprep.mubr.f32.mxu0 %v1330
    %3812 = vmatmul.mubr.f32.gmra.mrb[0].mxu0 %v1329
    %v3813 = vpop.f32.mrb[0].mxu0
    %v3814 = vadd.f32 0.0, %v3813
    %v3815 = vpop.f32.mrb[0].mxu0
    %3816 = vdwg.mxu0
    %3817 = vmatprep.subr.mxu0 0.0
    %3818 = vmatpush1.msra.mxu0 %v2278
    %3819 = vmatprep.subr.mxu0 0.0
    %3820 = vmatpush1.msra.mxu0 %v2281
    %3821 = vmatprep.subr.mxu0 0.0
    %3822 = vmatpush1.msra.mxu0 %v2284
    %3823 = vmatprep.subr.mxu0 0.0
    %3824 = vmatpush1.msra.mxu0 %v2287
    %3825 = vmatprep.subr.mxu0 0.0
    %3826 = vmatpush1.msra.mxu0 %v2290
    %3827 = vmatprep.subr.mxu0 0.0
    %3828 = vmatpush1.msra.mxu0 %v2304
    %3829 = vmatprep.subr.mxu0 0.0
    %3830 = vmatpush1.msra.mxu0 0.0
    %3831 = vmatprep.subr.mxu0 0.0
    %3832 = vmatpush1.msra.mxu0 0.0
    %3833 = vmatprep.subr.mxu0 0.0
    %3834 = vmatpush1.msra.mxu0 0.0
    %3835 = vmatprep.subr.mxu0 0.0
    %3836 = vmatpush1.msra.mxu0 0.0
    %3837 = vmatprep.subr.mxu0 0.0
    %3838 = vmatpush1.msra.mxu0 0.0
    %3839 = vmatprep.subr.mxu0 0.0
    %3840 = vmatpush1.msra.mxu0 0.0
    %3841 = vmatprep.subr.mxu0 0.0
    %3842 = vmatpush1.msra.mxu0 0.0
    %3843 = vmatprep.subr.mxu0 0.0
    %3844 = vmatpush1.msra.mxu0 0.0
    %3845 = vmatprep.subr.mxu0 0.0
    %3846 = vmatpush1.msra.mxu0 0.0
    %3847 = vmatprep.subr.mxu0 0.0
    %3848 = vmatpush1.msra.mxu0 0.0
    %3849 = vmatprep.subr.mxu0 0.0
    %3850 = vmatpush1.msra.mxu0 0.0
    %3851 = vmatprep.subr.mxu0 0.0
    %3852 = vmatpush1.msra.mxu0 0.0
    %3853 = vmatprep.subr.mxu0 0.0
    %3854 = vmatpush1.msra.mxu0 0.0
    %3855 = vmatprep.subr.mxu0 0.0
    %3856 = vmatpush1.msra.mxu0 0.0
    %3857 = vmatprep.subr.mxu0 0.0
    %3858 = vmatpush1.msra.mxu0 0.0
    %3859 = vmatprep.subr.mxu0 0.0
    %3860 = vmatpush1.msra.mxu0 0.0
    %3861 = vmatprep.subr.mxu0 0.0
    %3862 = vmatpush1.msra.mxu0 0.0
    %3863 = vmatprep.subr.mxu0 0.0
    %3864 = vmatpush1.msra.mxu0 0.0
    %3865 = vmatprep.subr.mxu0 0.0
    %3866 = vmatpush1.msra.mxu0 0.0
    %3867 = vmatprep.subr.mxu0 0.0
    %3868 = vmatpush1.msra.mxu0 0.0
    %3869 = vmatprep.subr.mxu0 0.0
    %3870 = vmatpush1.msra.mxu0 0.0
    %3871 = vmatprep.subr.mxu0 0.0
    %3872 = vmatpush1.msra.mxu0 0.0
    %3873 = vmatprep.subr.mxu0 0.0
    %3874 = vmatpush1.msra.mxu0 0.0
    %3875 = vmatprep.subr.mxu0 0.0
    %3876 = vmatpush1.msra.mxu0 0.0
    %3877 = vmatprep.subr.mxu0 0.0
    %3878 = vmatpush1.msra.mxu0 0.0
    %3879 = vmatprep.subr.mxu0 0.0
    %3880 = vmatpush1.msra.mxu0 0.0
    %3881 = vmatprep.mubr.f32.mxu0 0.0
    %3882 = vmatmul.mubr.f32.gmra.mrb[0].mxu0 %v3603
    %v3883 = vpop.f32.mrb[0].mxu0
    %v3884 = vadd.f32 %v3814, %v3883
    %v3885 = vpop.f32.mrb[0].mxu0
    %3886 = vdwg.mxu0
    %v3887 = vadd.f32 %v3599, %v3743
    %v3888 = vadd.f32 %v3600, %v3745
    %v3889 = vadd.f32 %v3601, %v3884
    %vm3890 = vcmp.ge.f32.partialorder %v3887, 0.0
    %vm3891 = vcmp.ge.f32.partialorder %v3888, 0.0
    %vm3892 = vcmp.ge.f32.partialorder %v3889, 0.0
    %v3893 = vmul.f32 %v2595, %v3887
    %v3894 = vmul.f32 %v2595, %v3888
    %v3895 = vmul.f32 %v2595, %v3889
    %v3896 = vsel %vm3890, %v3887, %v3893
    %v3897 = vsel %vm3891, %v3888, %v3894
    %v3898 = vsel %vm3892, %v3889, %v3895
    %s3899 = scalar_lea.vmem [#allocation2], 912
    %v3900 = vld [vmem:[%s3899] sm:$0xff]
    %v3901 = vld [vmem:[%s3899 + $0x8] sm:$0xff]
    %v3902 = vld [vmem:[%s3899 + $0x10] sm:$0xff]
    %v3903 = vld [vmem:[%s3899 + $0x18] sm:$0xff]
    %v3904 = vld [vmem:[%s3899 + $0x20] sm:$0xff]
    %v3905 = vld [vmem:[%s3899 + $0x28] sm:$0xff]
    %v3906 = vld [vmem:[%s3899 + $0x30] sm:$0xff]
    %v3907 = vld [vmem:[%s3899 + $0x38] sm:$0xff]
    %v3908 = vld [vmem:[%s3899 + $0x40] sm:$0xff]
    %v3909 = vld [vmem:[%s3899 + $0x48] sm:$0xff]
    %v3910 = vld [vmem:[%s3899 + $0x50] sm:$0xff]
    %v3911 = vld [vmem:[%s3899 + $0x58] sm:$0xff]
    %v3912 = vld [vmem:[%s3899 + $0x60] sm:$0xff]
    %v3913 = vld [vmem:[%s3899 + $0x68] sm:$0xff]
    %v3914 = vld [vmem:[%s3899 + $0x70] sm:$0xff]
    %v3915 = vld [vmem:[%s3899 + $0x78] sm:$0xff]
    %v3916 = vld [vmem:[%s3899 + $0x80] sm:$0xff]
    %v3917 = vld [vmem:[%s3899 + $0x88] sm:$0xff]
    %v3918 = vld [vmem:[%s3899 + $0x90] sm:$0xff]
    %v3919 = vld [vmem:[%s3899 + $0x98] sm:$0xff]
    %v3920 = vld [vmem:[%s3899 + $0xa0] sm:$0xff]
    %v3921 = vld [vmem:[%s3899 + $0xa8] sm:$0xff]
    %v3922 = vld [vmem:[%s3899 + $0xb0] sm:$0xff]
    %v3923 = vld [vmem:[%s3899 + $0xb8] sm:$0xff]
    %v3924 = vld [vmem:[%s3899 + $0xc0] sm:$0xff]
    %v3925 = vld [vmem:[%s3899 + $0xc8] sm:$0xff]
    %v3926 = vld [vmem:[%s3899 + $0xd0] sm:$0xff]
    %v3927 = vld [vmem:[%s3899 + $0xd8] sm:$0xff]
    %v3928 = vld [vmem:[%s3899 + $0xe0] sm:$0xff]
    %v3929 = vld [vmem:[%s3899 + $0xe8] sm:$0xff]
    %v3930 = vld [vmem:[%s3899 + $0xf0] sm:$0xff]
    %v3931 = vld [vmem:[%s3899 + $0xf8] sm:$0xff]
    %v3932 = vld [vmem:[%s3899 + $0x100] sm:$0xff]
    %v3933 = vld [vmem:[%s3899 + $0x108] sm:$0xff]
    %v3934 = vld [vmem:[%s3899 + $0x110] sm:$0xff]
    %v3935 = vld [vmem:[%s3899 + $0x118] sm:$0xff]
    %v3936 = vld [vmem:[%s3899 + $0x120] sm:$0xff]
    %v3937 = vld [vmem:[%s3899 + $0x128] sm:$0xff]
    %v3938 = vld [vmem:[%s3899 + $0x130] sm:$0xff]
    %v3939 = vld [vmem:[%s3899 + $0x138] sm:$0xff]
    %v3940 = vld [vmem:[%s3899 + $0x140] sm:$0xff]
    %v3941 = vld [vmem:[%s3899 + $0x148] sm:$0xff]
    %v3942 = vld [vmem:[%s3899 + $0x150] sm:$0xff]
    %v3943 = vld [vmem:[%s3899 + $0x158] sm:$0xff]
    %v3944 = vld [vmem:[%s3899 + $0x160] sm:$0xff]
    %v3945 = vld [vmem:[%s3899 + $0x168] sm:$0xff]
    %v3946 = vld [vmem:[%s3899 + $0x170] sm:$0xff]
    %v3947 = vld [vmem:[%s3899 + $0x178] sm:$0xff]
    %v3948 = vld [vmem:[%s3899 + $0x180] sm:$0xff]
    %v3949 = vld [vmem:[%s3899 + $0x188] sm:$0xff]
    %v3950 = vld [vmem:[%s3899 + $0x190] sm:$0xff]
    %v3951 = vld [vmem:[%s3899 + $0x198] sm:$0xff]
    %v3952 = vld [vmem:[%s3899 + $0x1a0] sm:$0xff]
    %v3953 = vld [vmem:[%s3899 + $0x1a8] sm:$0xff]
    %v3954 = vld [vmem:[%s3899 + $0x1b0] sm:$0xff]
    %v3955 = vld [vmem:[%s3899 + $0x1b8] sm:$0xff]
    %v3956 = vld [vmem:[%s3899 + $0x1c0] sm:$0xff]
    %v3957 = vld [vmem:[%s3899 + $0x1c8] sm:$0xff]
    %v3958 = vld [vmem:[%s3899 + $0x1d0] sm:$0xff]
    %v3959 = vld [vmem:[%s3899 + $0x1d8] sm:$0xff]
    %v3960 = vld [vmem:[%s3899 + $0x1e0] sm:$0xff]
    %v3961 = vld [vmem:[%s3899 + $0x1e8] sm:$0xff]
    %v3962 = vld [vmem:[%s3899 + $0x1f0] sm:$0xff]
    %v3963 = vld [vmem:[%s3899 + $0x1f8] sm:$0xff]
    %v3964 = vld [vmem:[%s3899 + $0x200] sm:$0xff]
    %v3965 = vld [vmem:[%s3899 + $0x208] sm:$0xff]
    %v3966 = vld [vmem:[%s3899 + $0x210] sm:$0xff]
    %v3967 = vld [vmem:[%s3899 + $0x218] sm:$0xff]
    %v3968 = vld [vmem:[%s3899 + $0x220] sm:$0xff]
    %v3969 = vld [vmem:[%s3899 + $0x228] sm:$0xff]
    %v3970 = vld [vmem:[%s3899 + $0x230] sm:$0xff]
    %v3971 = vld [vmem:[%s3899 + $0x238] sm:$0xff]
    %v3972 = vld [vmem:[%s3899 + $0x240] sm:$0xff]
    %v3973 = vld [vmem:[%s3899 + $0x248] sm:$0xff]
    %v3974 = vld [vmem:[%s3899 + $0x250] sm:$0xff]
    %v3975 = vld [vmem:[%s3899 + $0x258] sm:$0xff]
    %v3976 = vld [vmem:[%s3899 + $0x260] sm:$0xff]
    %v3977 = vld [vmem:[%s3899 + $0x268] sm:$0xff]
    %v3978 = vld [vmem:[%s3899 + $0x270] sm:$0xff]
    %v3979 = vld [vmem:[%s3899 + $0x278] sm:$0xff]
    %v3980 = vld [vmem:[%s3899 + $0x280] sm:$0xff]
    %v3981 = vld [vmem:[%s3899 + $0x288] sm:$0xff]
    %v3982 = vld [vmem:[%s3899 + $0x290] sm:$0xff]
    %v3983 = vld [vmem:[%s3899 + $0x298] sm:$0xff]
    %v3984 = vld [vmem:[%s3899 + $0x2a0] sm:$0xff]
    %v3985 = vld [vmem:[%s3899 + $0x2a8] sm:$0xff]
    %v3986 = vld [vmem:[%s3899 + $0x2b0] sm:$0xff]
    %v3987 = vld [vmem:[%s3899 + $0x2b8] sm:$0xff]
    %v3988 = vld [vmem:[%s3899 + $0x2c0] sm:$0xff]
    %v3989 = vld [vmem:[%s3899 + $0x2c8] sm:$0xff]
    %v3990 = vld [vmem:[%s3899 + $0x2d0] sm:$0xff]
    %v3991 = vld [vmem:[%s3899 + $0x2d8] sm:$0xff]
    %v3992 = vld [vmem:[%s3899 + $0x2e0] sm:$0xff]
    %v3993 = vld [vmem:[%s3899 + $0x2e8] sm:$0xff]
    %v3994 = vld [vmem:[%s3899 + $0x2f0] sm:$0xff]
    %v3995 = vld [vmem:[%s3899 + $0x2f8] sm:$0xff]
    %v3996 = vld [vmem:[%s3899 + $0x300] sm:$0xff]
    %v3997 = vld [vmem:[%s3899 + $0x308] sm:$0xff]
    %v3998 = vld [vmem:[%s3899 + $0x310] sm:$0xff]
    %v3999 = vld [vmem:[%s3899 + $0x318] sm:$0xff]
    %v4000 = vld [vmem:[%s3899 + $0x320] sm:$0xff]
    %v4001 = vld [vmem:[%s3899 + $0x328] sm:$0xff]
    %v4002 = vld [vmem:[%s3899 + $0x330] sm:$0xff]
    %v4003 = vld [vmem:[%s3899 + $0x338] sm:$0xff]
    %v4004 = vld [vmem:[%s3899 + $0x340] sm:$0xff]
    %v4005 = vld [vmem:[%s3899 + $0x348] sm:$0xff]
    %v4006 = vld [vmem:[%s3899 + $0x350] sm:$0xff]
    %v4007 = vld [vmem:[%s3899 + $0x358] sm:$0xff]
    %v4008 = vld [vmem:[%s3899 + $0x360] sm:$0xff]
    %v4009 = vld [vmem:[%s3899 + $0x368] sm:$0xff]
    %v4010 = vld [vmem:[%s3899 + $0x370] sm:$0xff]
    %v4011 = vld [vmem:[%s3899 + $0x378] sm:$0xf]
    %v4012 = vld [vmem:[%s3899 + $0x380] sm:$0xf]
    %v4013 = vld [vmem:[%s3899 + $0x388] sm:$0xf]
    %v4015 = vsel %vm345, %v3898, 0
    %v4018 = vsel %vm367, %v4011, 0
    %v4021 = vsel %vm367, %v4012, 0
    %v4024 = vsel %vm367, %v4013, 0
    %4026 = vmatprep.subr.mxu0 %v3901
    %4027 = vmatpush1.msra.mxu0 %v3900
    %4028 = vmatprep.subr.mxu0 %v3904
    %4029 = vmatpush1.msra.mxu0 %v3903
    %4030 = vmatprep.subr.mxu0 %v3907
    %4031 = vmatpush1.msra.mxu0 %v3906
    %4032 = vmatprep.subr.mxu0 %v3910
    %4033 = vmatpush1.msra.mxu0 %v3909
    %4034 = vmatprep.subr.mxu0 %v3913
    %4035 = vmatpush1.msra.mxu0 %v3912
    %4036 = vmatprep.subr.mxu0 %v3916
    %4037 = vmatpush1.msra.mxu0 %v3915
    %4038 = vmatprep.subr.mxu0 %v3919
    %4039 = vmatpush1.msra.mxu0 %v3918
    %4040 = vmatprep.subr.mxu0 %v3922
    %4041 = vmatpush1.msra.mxu0 %v3921
    %4042 = vmatprep.subr.mxu0 %v3925
    %4043 = vmatpush1.msra.mxu0 %v3924
    %4044 = vmatprep.subr.mxu0 %v3928
    %4045 = vmatpush1.msra.mxu0 %v3927
    %4046 = vmatprep.subr.mxu0 %v3931
    %4047 = vmatpush1.msra.mxu0 %v3930
    %4048 = vmatprep.subr.mxu0 %v3934
    %4049 = vmatpush1.msra.mxu0 %v3933
    %4050 = vmatprep.subr.mxu0 %v3937
    %4051 = vmatpush1.msra.mxu0 %v3936
    %4052 = vmatprep.subr.mxu0 %v3940
    %4053 = vmatpush1.msra.mxu0 %v3939
    %4054 = vmatprep.subr.mxu0 %v3943
    %4055 = vmatpush1.msra.mxu0 %v3942
    %4056 = vmatprep.subr.mxu0 %v3946
    %4057 = vmatpush1.msra.mxu0 %v3945
    %4058 = vmatprep.subr.mxu0 %v3949
    %4059 = vmatpush1.msra.mxu0 %v3948
    %4060 = vmatprep.subr.mxu0 %v3952
    %4061 = vmatpush1.msra.mxu0 %v3951
    %4062 = vmatprep.subr.mxu0 %v3955
    %4063 = vmatpush1.msra.mxu0 %v3954
    %4064 = vmatprep.subr.mxu0 %v3958
    %4065 = vmatpush1.msra.mxu0 %v3957
    %4066 = vmatprep.subr.mxu0 %v3961
    %4067 = vmatpush1.msra.mxu0 %v3960
    %4068 = vmatprep.subr.mxu0 %v3964
    %4069 = vmatpush1.msra.mxu0 %v3963
    %4070 = vmatprep.subr.mxu0 %v3967
    %4071 = vmatpush1.msra.mxu0 %v3966
    %4072 = vmatprep.subr.mxu0 %v3970
    %4073 = vmatpush1.msra.mxu0 %v3969
    %4074 = vmatprep.subr.mxu0 %v3973
    %4075 = vmatpush1.msra.mxu0 %v3972
    %4076 = vmatprep.subr.mxu0 %v3976
    %4077 = vmatpush1.msra.mxu0 %v3975
    %4078 = vmatprep.subr.mxu0 %v3979
    %4079 = vmatpush1.msra.mxu0 %v3978
    %4080 = vmatprep.subr.mxu0 %v3982
    %4081 = vmatpush1.msra.mxu0 %v3981
    %4082 = vmatprep.subr.mxu0 %v3985
    %4083 = vmatpush1.msra.mxu0 %v3984
    %4084 = vmatprep.subr.mxu0 %v3988
    %4085 = vmatpush1.msra.mxu0 %v3987
    %4086 = vmatprep.subr.mxu0 %v3991
    %4087 = vmatpush1.msra.mxu0 %v3990
    %4088 = vmatprep.subr.mxu0 %v3994
    %4089 = vmatpush1.msra.mxu0 %v3993
    %4090 = vmatprep.mubr.f32.mxu0 %v3897
    %4091 = vmatmul.mubr.f32.gmra.mrb[0].mxu0 %v3896
    %v4092 = vpop.f32.mrb[0].mxu0
    %v4093 = vadd.f32 0.0, %v4092
    %v4094 = vpop.f32.mrb[0].mxu0
    %v4095 = vadd.f32 0.0, %v4094
    %4096 = vdwg.mxu0
    %4097 = vmatprep.subr.mxu0 %v3997
    %4098 = vmatpush1.msra.mxu0 %v3996
    %4099 = vmatprep.subr.mxu0 %v4000
    %4100 = vmatpush1.msra.mxu0 %v3999
    %4101 = vmatprep.subr.mxu0 %v4003
    %4102 = vmatpush1.msra.mxu0 %v4002
    %4103 = vmatprep.subr.mxu0 %v4006
    %4104 = vmatpush1.msra.mxu0 %v4005
    %4105 = vmatprep.subr.mxu0 %v4009
    %4106 = vmatpush1.msra.mxu0 %v4008
    %4107 = vmatprep.subr.mxu0 %v4021
    %4108 = vmatpush1.msra.mxu0 %v4018
    %4109 = vmatprep.subr.mxu0 0.0
    %4110 = vmatpush1.msra.mxu0 0.0
    %4111 = vmatprep.subr.mxu0 0.0
    %4112 = vmatpush1.msra.mxu0 0.0
    %4113 = vmatprep.subr.mxu0 0.0
    %4114 = vmatpush1.msra.mxu0 0.0
    %4115 = vmatprep.subr.mxu0 0.0
    %4116 = vmatpush1.msra.mxu0 0.0
    %4117 = vmatprep.subr.mxu0 0.0
    %4118 = vmatpush1.msra.mxu0 0.0
    %4119 = vmatprep.subr.mxu0 0.0
    %4120 = vmatpush1.msra.mxu0 0.0
    %4121 = vmatprep.subr.mxu0 0.0
    %4122 = vmatpush1.msra.mxu0 0.0
    %4123 = vmatprep.subr.mxu0 0.0
    %4124 = vmatpush1.msra.mxu0 0.0
    %4125 = vmatprep.subr.mxu0 0.0
    %4126 = vmatpush1.msra.mxu0 0.0
    %4127 = vmatprep.subr.mxu0 0.0
    %4128 = vmatpush1.msra.mxu0 0.0
    %4129 = vmatprep.subr.mxu0 0.0
    %4130 = vmatpush1.msra.mxu0 0.0
    %4131 = vmatprep.subr.mxu0 0.0
    %4132 = vmatpush1.msra.mxu0 0.0
    %4133 = vmatprep.subr.mxu0 0.0
    %4134 = vmatpush1.msra.mxu0 0.0
    %4135 = vmatprep.subr.mxu0 0.0
    %4136 = vmatpush1.msra.mxu0 0.0
    %4137 = vmatprep.subr.mxu0 0.0
    %4138 = vmatpush1.msra.mxu0 0.0
    %4139 = vmatprep.subr.mxu0 0.0
    %4140 = vmatpush1.msra.mxu0 0.0
    %4141 = vmatprep.subr.mxu0 0.0
    %4142 = vmatpush1.msra.mxu0 0.0
    %4143 = vmatprep.subr.mxu0 0.0
    %4144 = vmatpush1.msra.mxu0 0.0
    %4145 = vmatprep.subr.mxu0 0.0
    %4146 = vmatpush1.msra.mxu0 0.0
    %4147 = vmatprep.subr.mxu0 0.0
    %4148 = vmatpush1.msra.mxu0 0.0
    %4149 = vmatprep.subr.mxu0 0.0
    %4150 = vmatpush1.msra.mxu0 0.0
    %4151 = vmatprep.subr.mxu0 0.0
    %4152 = vmatpush1.msra.mxu0 0.0
    %4153 = vmatprep.subr.mxu0 0.0
    %4154 = vmatpush1.msra.mxu0 0.0
    %4155 = vmatprep.subr.mxu0 0.0
    %4156 = vmatpush1.msra.mxu0 0.0
    %4157 = vmatprep.subr.mxu0 0.0
    %4158 = vmatpush1.msra.mxu0 0.0
    %4159 = vmatprep.subr.mxu0 0.0
    %4160 = vmatpush1.msra.mxu0 0.0
    %4161 = vmatprep.mubr.f32.mxu0 0.0
    %4162 = vmatmul.mubr.f32.gmra.mrb[0].mxu0 %v4015
    %v4163 = vpop.f32.mrb[0].mxu0
    %v4164 = vadd.f32 %v4093, %v4163
    %v4165 = vpop.f32.mrb[0].mxu0
    %v4166 = vadd.f32 %v4095, %v4165
    %4167 = vdwg.mxu0
    %4168 = vmatprep.subr.mxu0 0.0
    %4169 = vmatpush1.msra.mxu0 %v3902
    %4170 = vmatprep.subr.mxu0 0.0
    %4171 = vmatpush1.msra.mxu0 %v3905
    %4172 = vmatprep.subr.mxu0 0.0
    %4173 = vmatpush1.msra.mxu0 %v3908
    %4174 = vmatprep.subr.mxu0 0.0
    %4175 = vmatpush1.msra.mxu0 %v3911
    %4176 = vmatprep.subr.mxu0 0.0
    %4177 = vmatpush1.msra.mxu0 %v3914
    %4178 = vmatprep.subr.mxu0 0.0
    %4179 = vmatpush1.msra.mxu0 %v3917
    %4180 = vmatprep.subr.mxu0 0.0
    %4181 = vmatpush1.msra.mxu0 %v3920
    %4182 = vmatprep.subr.mxu0 0.0
    %4183 = vmatpush1.msra.mxu0 %v3923
    %4184 = vmatprep.subr.mxu0 0.0
    %4185 = vmatpush1.msra.mxu0 %v3926
    %4186 = vmatprep.subr.mxu0 0.0
    %4187 = vmatpush1.msra.mxu0 %v3929
    %4188 = vmatprep.subr.mxu0 0.0
    %4189 = vmatpush1.msra.mxu0 %v3932
    %4190 = vmatprep.subr.mxu0 0.0
    %4191 = vmatpush1.msra.mxu0 %v3935
    %4192 = vmatprep.subr.mxu0 0.0
    %4193 = vmatpush1.msra.mxu0 %v3938
    %4194 = vmatprep.subr.mxu0 0.0
    %4195 = vmatpush1.msra.mxu0 %v3941
    %4196 = vmatprep.subr.mxu0 0.0
    %4197 = vmatpush1.msra.mxu0 %v3944
    %4198 = vmatprep.subr.mxu0 0.0
    %4199 = vmatpush1.msra.mxu0 %v3947
    %4200 = vmatprep.subr.mxu0 0.0
    %4201 = vmatpush1.msra.mxu0 %v3950
    %4202 = vmatprep.subr.mxu0 0.0
    %4203 = vmatpush1.msra.mxu0 %v3953
    %4204 = vmatprep.subr.mxu0 0.0
    %4205 = vmatpush1.msra.mxu0 %v3956
    %4206 = vmatprep.subr.mxu0 0.0
    %4207 = vmatpush1.msra.mxu0 %v3959
    %4208 = vmatprep.subr.mxu0 0.0
    %4209 = vmatpush1.msra.mxu0 %v3962
    %4210 = vmatprep.subr.mxu0 0.0
    %4211 = vmatpush1.msra.mxu0 %v3965
    %4212 = vmatprep.subr.mxu0 0.0
    %4213 = vmatpush1.msra.mxu0 %v3968
    %4214 = vmatprep.subr.mxu0 0.0
    %4215 = vmatpush1.msra.mxu0 %v3971
    %4216 = vmatprep.subr.mxu0 0.0
    %4217 = vmatpush1.msra.mxu0 %v3974
    %4218 = vmatprep.subr.mxu0 0.0
    %4219 = vmatpush1.msra.mxu0 %v3977
    %4220 = vmatprep.subr.mxu0 0.0
    %4221 = vmatpush1.msra.mxu0 %v3980
    %4222 = vmatprep.subr.mxu0 0.0
    %4223 = vmatpush1.msra.mxu0 %v3983
    %4224 = vmatprep.subr.mxu0 0.0
    %4225 = vmatpush1.msra.mxu0 %v3986
    %4226 = vmatprep.subr.mxu0 0.0
    %4227 = vmatpush1.msra.mxu0 %v3989
    %4228 = vmatprep.subr.mxu0 0.0
    %4229 = vmatpush1.msra.mxu0 %v3992
    %4230 = vmatprep.subr.mxu0 0.0
    %4231 = vmatpush1.msra.mxu0 %v3995
    %4232 = vmatprep.mubr.f32.mxu0 %v3897
    %4233 = vmatmul.mubr.f32.gmra.mrb[0].mxu0 %v3896
    %v4234 = vpop.f32.mrb[0].mxu0
    %v4235 = vadd.f32 0.0, %v4234
    %v4236 = vpop.f32.mrb[0].mxu0
    %4237 = vdwg.mxu0
    %4238 = vmatprep.subr.mxu0 0.0
    %4239 = vmatpush1.msra.mxu0 %v3998
    %4240 = vmatprep.subr.mxu0 0.0
    %4241 = vmatpush1.msra.mxu0 %v4001
    %4242 = vmatprep.subr.mxu0 0.0
    %4243 = vmatpush1.msra.mxu0 %v4004
    %4244 = vmatprep.subr.mxu0 0.0
    %4245 = vmatpush1.msra.mxu0 %v4007
    %4246 = vmatprep.subr.mxu0 0.0
    %4247 = vmatpush1.msra.mxu0 %v4010
    %4248 = vmatprep.subr.mxu0 0.0
    %4249 = vmatpush1.msra.mxu0 %v4024
    %4250 = vmatprep.subr.mxu0 0.0
    %4251 = vmatpush1.msra.mxu0 0.0
    %4252 = vmatprep.subr.mxu0 0.0
    %4253 = vmatpush1.msra.mxu0 0.0
    %4254 = vmatprep.subr.mxu0 0.0
    %4255 = vmatpush1.msra.mxu0 0.0
    %4256 = vmatprep.subr.mxu0 0.0
    %4257 = vmatpush1.msra.mxu0 0.0
    %4258 = vmatprep.subr.mxu0 0.0
    %4259 = vmatpush1.msra.mxu0 0.0
    %4260 = vmatprep.subr.mxu0 0.0
    %4261 = vmatpush1.msra.mxu0 0.0
    %4262 = vmatprep.subr.mxu0 0.0
    %4263 = vmatpush1.msra.mxu0 0.0
    %4264 = vmatprep.subr.mxu0 0.0
    %4265 = vmatpush1.msra.mxu0 0.0
    %4266 = vmatprep.subr.mxu0 0.0
    %4267 = vmatpush1.msra.mxu0 0.0
    %4268 = vmatprep.subr.mxu0 0.0
    %4269 = vmatpush1.msra.mxu0 0.0
    %4270 = vmatprep.subr.mxu0 0.0
    %4271 = vmatpush1.msra.mxu0 0.0
    %4272 = vmatprep.subr.mxu0 0.0
    %4273 = vmatpush1.msra.mxu0 0.0
    %4274 = vmatprep.subr.mxu0 0.0
    %4275 = vmatpush1.msra.mxu0 0.0
    %4276 = vmatprep.subr.mxu0 0.0
    %4277 = vmatpush1.msra.mxu0 0.0
    %4278 = vmatprep.subr.mxu0 0.0
    %4279 = vmatpush1.msra.mxu0 0.0
    %4280 = vmatprep.subr.mxu0 0.0
    %4281 = vmatpush1.msra.mxu0 0.0
    %4282 = vmatprep.subr.mxu0 0.0
    %4283 = vmatpush1.msra.mxu0 0.0
    %4284 = vmatprep.subr.mxu0 0.0
    %4285 = vmatpush1.msra.mxu0 0.0
    %4286 = vmatprep.subr.mxu0 0.0
    %4287 = vmatpush1.msra.mxu0 0.0
    %4288 = vmatprep.subr.mxu0 0.0
    %4289 = vmatpush1.msra.mxu0 0.0
    %4290 = vmatprep.subr.mxu0 0.0
    %4291 = vmatpush1.msra.mxu0 0.0
    %4292 = vmatprep.subr.mxu0 0.0
    %4293 = vmatpush1.msra.mxu0 0.0
    %4294 = vmatprep.subr.mxu0 0.0
    %4295 = vmatpush1.msra.mxu0 0.0
    %4296 = vmatprep.subr.mxu0 0.0
    %4297 = vmatpush1.msra.mxu0 0.0
    %4298 = vmatprep.subr.mxu0 0.0
    %4299 = vmatpush1.msra.mxu0 0.0
    %4300 = vmatprep.subr.mxu0 0.0
    %4301 = vmatpush1.msra.mxu0 0.0
    %4302 = vmatprep.mubr.f32.mxu0 0.0
    %4303 = vmatmul.mubr.f32.gmra.mrb[0].mxu0 %v4015
    %v4304 = vpop.f32.mrb[0].mxu0
    %v4305 = vadd.f32 %v4235, %v4304
    %v4306 = vpop.f32.mrb[0].mxu0
    %4307 = vdwg.mxu0
    %v4308 = vadd.f32 %v3026, %v4164
    %v4309 = vadd.f32 %v3027, %v4166
    %v4310 = vadd.f32 %v3028, %v4305
    %4311 = vmatprep.subr.mxu0 %v1341
    %4312 = vmatpush1.msra.mxu0 %v1340
    %4313 = vmatprep.subr.mxu0 %v1344
    %4314 = vmatpush1.msra.mxu0 %v1343
    %4315 = vmatprep.subr.mxu0 %v1347
    %4316 = vmatpush1.msra.mxu0 %v1346
    %4317 = vmatprep.subr.mxu0 %v1350
    %4318 = vmatpush1.msra.mxu0 %v1349
    %4319 = vmatprep.subr.mxu0 %v1353
    %4320 = vmatpush1.msra.mxu0 %v1352
    %4321 = vmatprep.subr.mxu0 %v1356
    %4322 = vmatpush1.msra.mxu0 %v1355
    %4323 = vmatprep.subr.mxu0 %v1359
    %4324 = vmatpush1.msra.mxu0 %v1358
    %4325 = vmatprep.subr.mxu0 %v1362
    %4326 = vmatpush1.msra.mxu0 %v1361
    %4327 = vmatprep.subr.mxu0 %v1365
    %4328 = vmatpush1.msra.mxu0 %v1364
    %4329 = vmatprep.subr.mxu0 %v1368
    %4330 = vmatpush1.msra.mxu0 %v1367
    %4331 = vmatprep.subr.mxu0 %v1371
    %4332 = vmatpush1.msra.mxu0 %v1370
    %4333 = vmatprep.subr.mxu0 %v1374
    %4334 = vmatpush1.msra.mxu0 %v1373
    %4335 = vmatprep.subr.mxu0 %v1377
    %4336 = vmatpush1.msra.mxu0 %v1376
    %4337 = vmatprep.subr.mxu0 %v1380
    %4338 = vmatpush1.msra.mxu0 %v1379
    %4339 = vmatprep.subr.mxu0 %v1383
    %4340 = vmatpush1.msra.mxu0 %v1382
    %4341 = vmatprep.subr.mxu0 %v1386
    %4342 = vmatpush1.msra.mxu0 %v1385
    %4343 = vmatprep.subr.mxu0 %v1389
    %4344 = vmatpush1.msra.mxu0 %v1388
    %4345 = vmatprep.subr.mxu0 %v1392
    %4346 = vmatpush1.msra.mxu0 %v1391
    %4347 = vmatprep.subr.mxu0 %v1395
    %4348 = vmatpush1.msra.mxu0 %v1394
    %4349 = vmatprep.subr.mxu0 %v1398
    %4350 = vmatpush1.msra.mxu0 %v1397
    %4351 = vmatprep.subr.mxu0 %v1401
    %4352 = vmatpush1.msra.mxu0 %v1400
    %4353 = vmatprep.subr.mxu0 %v1404
    %4354 = vmatpush1.msra.mxu0 %v1403
    %4355 = vmatprep.subr.mxu0 %v1407
    %4356 = vmatpush1.msra.mxu0 %v1406
    %4357 = vmatprep.subr.mxu0 %v1410
    %4358 = vmatpush1.msra.mxu0 %v1409
    %4359 = vmatprep.subr.mxu0 %v1413
    %4360 = vmatpush1.msra.mxu0 %v1412
    %4361 = vmatprep.subr.mxu0 %v1416
    %4362 = vmatpush1.msra.mxu0 %v1415
    %4363 = vmatprep.subr.mxu0 %v1419
    %4364 = vmatpush1.msra.mxu0 %v1418
    %4365 = vmatprep.subr.mxu0 %v1422
    %4366 = vmatpush1.msra.mxu0 %v1421
    %4367 = vmatprep.subr.mxu0 %v1425
    %4368 = vmatpush1.msra.mxu0 %v1424
    %4369 = vmatprep.subr.mxu0 %v1428
    %4370 = vmatpush1.msra.mxu0 %v1427
    %4371 = vmatprep.subr.mxu0 %v1431
    %4372 = vmatpush1.msra.mxu0 %v1430
    %4373 = vmatprep.subr.mxu0 %v1434
    %4374 = vmatpush1.msra.mxu0 %v1433
    %4375 = vmatprep.mubr.f32.mxu0 %v1330
    %4376 = vmatmul.mubr.f32.gmra.mrb[0].mxu0 %v1329
    %v4377 = vpop.f32.mrb[0].mxu0
    %v4378 = vadd.f32 0.0, %v4377
    %v4379 = vpop.f32.mrb[0].mxu0
    %v4380 = vadd.f32 0.0, %v4379
    %4381 = vdwg.mxu0
    %4382 = vmatprep.subr.mxu0 %v1437
    %4383 = vmatpush1.msra.mxu0 %v1436
    %4384 = vmatprep.subr.mxu0 %v1440
    %4385 = vmatpush1.msra.mxu0 %v1439
    %4386 = vmatprep.subr.mxu0 %v1443
    %4387 = vmatpush1.msra.mxu0 %v1442
    %4388 = vmatprep.subr.mxu0 %v1446
    %4389 = vmatpush1.msra.mxu0 %v1445
    %4390 = vmatprep.subr.mxu0 %v1449
    %4391 = vmatpush1.msra.mxu0 %v1448
    %4392 = vmatprep.subr.mxu0 %v1461
    %4393 = vmatpush1.msra.mxu0 %v1458
    %4394 = vmatprep.subr.mxu0 0.0
    %4395 = vmatpush1.msra.mxu0 0.0
    %4396 = vmatprep.subr.mxu0 0.0
    %4397 = vmatpush1.msra.mxu0 0.0
    %4398 = vmatprep.subr.mxu0 0.0
    %4399 = vmatpush1.msra.mxu0 0.0
    %4400 = vmatprep.subr.mxu0 0.0
    %4401 = vmatpush1.msra.mxu0 0.0
    %4402 = vmatprep.subr.mxu0 0.0
    %4403 = vmatpush1.msra.mxu0 0.0
    %4404 = vmatprep.subr.mxu0 0.0
    %4405 = vmatpush1.msra.mxu0 0.0
    %4406 = vmatprep.subr.mxu0 0.0
    %4407 = vmatpush1.msra.mxu0 0.0
    %4408 = vmatprep.subr.mxu0 0.0
    %4409 = vmatpush1.msra.mxu0 0.0
    %4410 = vmatprep.subr.mxu0 0.0
    %4411 = vmatpush1.msra.mxu0 0.0
    %4412 = vmatprep.subr.mxu0 0.0
    %4413 = vmatpush1.msra.mxu0 0.0
    %4414 = vmatprep.subr.mxu0 0.0
    %4415 = vmatpush1.msra.mxu0 0.0
    %4416 = vmatprep.subr.mxu0 0.0
    %4417 = vmatpush1.msra.mxu0 0.0
    %4418 = vmatprep.subr.mxu0 0.0
    %4419 = vmatpush1.msra.mxu0 0.0
    %4420 = vmatprep.subr.mxu0 0.0
    %4421 = vmatpush1.msra.mxu0 0.0
    %4422 = vmatprep.subr.mxu0 0.0
    %4423 = vmatpush1.msra.mxu0 0.0
    %4424 = vmatprep.subr.mxu0 0.0
    %4425 = vmatpush1.msra.mxu0 0.0
    %4426 = vmatprep.subr.mxu0 0.0
    %4427 = vmatpush1.msra.mxu0 0.0
    %4428 = vmatprep.subr.mxu0 0.0
    %4429 = vmatpush1.msra.mxu0 0.0
    %4430 = vmatprep.subr.mxu0 0.0
    %4431 = vmatpush1.msra.mxu0 0.0
    %4432 = vmatprep.subr.mxu0 0.0
    %4433 = vmatpush1.msra.mxu0 0.0
    %4434 = vmatprep.subr.mxu0 0.0
    %4435 = vmatpush1.msra.mxu0 0.0
    %4436 = vmatprep.subr.mxu0 0.0
    %4437 = vmatpush1.msra.mxu0 0.0
    %4438 = vmatprep.subr.mxu0 0.0
    %4439 = vmatpush1.msra.mxu0 0.0
    %4440 = vmatprep.subr.mxu0 0.0
    %4441 = vmatpush1.msra.mxu0 0.0
    %4442 = vmatprep.subr.mxu0 0.0
    %4443 = vmatpush1.msra.mxu0 0.0
    %4444 = vmatprep.subr.mxu0 0.0
    %4445 = vmatpush1.msra.mxu0 0.0
    %4446 = vmatprep.mubr.f32.mxu0 0.0
    %4447 = vmatmul.mubr.f32.gmra.mrb[0].mxu0 %v3603
    %v4448 = vpop.f32.mrb[0].mxu0
    %v4449 = vadd.f32 %v4378, %v4448
    %v4450 = vpop.f32.mrb[0].mxu0
    %v4451 = vadd.f32 %v4380, %v4450
    %4452 = vdwg.mxu0
    %4453 = vmatprep.subr.mxu0 0.0
    %4454 = vmatpush1.msra.mxu0 %v1342
    %4455 = vmatprep.subr.mxu0 0.0
    %4456 = vmatpush1.msra.mxu0 %v1345
    %4457 = vmatprep.subr.mxu0 0.0
    %4458 = vmatpush1.msra.mxu0 %v1348
    %4459 = vmatprep.subr.mxu0 0.0
    %4460 = vmatpush1.msra.mxu0 %v1351
    %4461 = vmatprep.subr.mxu0 0.0
    %4462 = vmatpush1.msra.mxu0 %v1354
    %4463 = vmatprep.subr.mxu0 0.0
    %4464 = vmatpush1.msra.mxu0 %v1357
    %4465 = vmatprep.subr.mxu0 0.0
    %4466 = vmatpush1.msra.mxu0 %v1360
    %4467 = vmatprep.subr.mxu0 0.0
    %4468 = vmatpush1.msra.mxu0 %v1363
    %4469 = vmatprep.subr.mxu0 0.0
    %4470 = vmatpush1.msra.mxu0 %v1366
    %4471 = vmatprep.subr.mxu0 0.0
    %4472 = vmatpush1.msra.mxu0 %v1369
    %4473 = vmatprep.subr.mxu0 0.0
    %4474 = vmatpush1.msra.mxu0 %v1372
    %4475 = vmatprep.subr.mxu0 0.0
    %4476 = vmatpush1.msra.mxu0 %v1375
    %4477 = vmatprep.subr.mxu0 0.0
    %4478 = vmatpush1.msra.mxu0 %v1378
    %4479 = vmatprep.subr.mxu0 0.0
    %4480 = vmatpush1.msra.mxu0 %v1381
    %4481 = vmatprep.subr.mxu0 0.0
    %4482 = vmatpush1.msra.mxu0 %v1384
    %4483 = vmatprep.subr.mxu0 0.0
    %4484 = vmatpush1.msra.mxu0 %v1387
    %4485 = vmatprep.subr.mxu0 0.0
    %4486 = vmatpush1.msra.mxu0 %v1390
    %4487 = vmatprep.subr.mxu0 0.0
    %4488 = vmatpush1.msra.mxu0 %v1393
    %4489 = vmatprep.subr.mxu0 0.0
    %4490 = vmatpush1.msra.mxu0 %v1396
    %4491 = vmatprep.subr.mxu0 0.0
    %4492 = vmatpush1.msra.mxu0 %v1399
    %4493 = vmatprep.subr.mxu0 0.0
    %4494 = vmatpush1.msra.mxu0 %v1402
    %4495 = vmatprep.subr.mxu0 0.0
    %4496 = vmatpush1.msra.mxu0 %v1405
    %4497 = vmatprep.subr.mxu0 0.0
    %4498 = vmatpush1.msra.mxu0 %v1408
    %4499 = vmatprep.subr.mxu0 0.0
    %4500 = vmatpush1.msra.mxu0 %v1411
    %4501 = vmatprep.subr.mxu0 0.0
    %4502 = vmatpush1.msra.mxu0 %v1414
    %4503 = vmatprep.subr.mxu0 0.0
    %4504 = vmatpush1.msra.mxu0 %v1417
    %4505 = vmatprep.subr.mxu0 0.0
    %4506 = vmatpush1.msra.mxu0 %v1420
    %4507 = vmatprep.subr.mxu0 0.0
    %4508 = vmatpush1.msra.mxu0 %v1423
    %4509 = vmatprep.subr.mxu0 0.0
    %4510 = vmatpush1.msra.mxu0 %v1426
    %4511 = vmatprep.subr.mxu0 0.0
    %4512 = vmatpush1.msra.mxu0 %v1429
    %4513 = vmatprep.subr.mxu0 0.0
    %4514 = vmatpush1.msra.mxu0 %v1432
    %4515 = vmatprep.subr.mxu0 0.0
    %4516 = vmatpush1.msra.mxu0 %v1435
    %4517 = vmatprep.mubr.f32.mxu0 %v1330
    %4518 = vmatmul.mubr.f32.gmra.mrb[0].mxu0 %v1329
    %v4519 = vpop.f32.mrb[0].mxu0
    %v4520 = vadd.f32 0.0, %v4519
    %v4521 = vpop.f32.mrb[0].mxu0
    %4522 = vdwg.mxu0
    %4523 = vmatprep.subr.mxu0 0.0
    %4524 = vmatpush1.msra.mxu0 %v1438
    %4525 = vmatprep.subr.mxu0 0.0
    %4526 = vmatpush1.msra.mxu0 %v1441
    %4527 = vmatprep.subr.mxu0 0.0
    %4528 = vmatpush1.msra.mxu0 %v1444
    %4529 = vmatprep.subr.mxu0 0.0
    %4530 = vmatpush1.msra.mxu0 %v1447
    %4531 = vmatprep.subr.mxu0 0.0
    %4532 = vmatpush1.msra.mxu0 %v1450
    %4533 = vmatprep.subr.mxu0 0.0
    %4534 = vmatpush1.msra.mxu0 %v1464
    %4535 = vmatprep.subr.mxu0 0.0
    %4536 = vmatpush1.msra.mxu0 0.0
    %4537 = vmatprep.subr.mxu0 0.0
    %4538 = vmatpush1.msra.mxu0 0.0
    %4539 = vmatprep.subr.mxu0 0.0
    %4540 = vmatpush1.msra.mxu0 0.0
    %4541 = vmatprep.subr.mxu0 0.0
    %4542 = vmatpush1.msra.mxu0 0.0
    %4543 = vmatprep.subr.mxu0 0.0
    %4544 = vmatpush1.msra.mxu0 0.0
    %4545 = vmatprep.subr.mxu0 0.0
    %4546 = vmatpush1.msra.mxu0 0.0
    %4547 = vmatprep.subr.mxu0 0.0
    %4548 = vmatpush1.msra.mxu0 0.0
    %4549 = vmatprep.subr.mxu0 0.0
    %4550 = vmatpush1.msra.mxu0 0.0
    %4551 = vmatprep.subr.mxu0 0.0
    %4552 = vmatpush1.msra.mxu0 0.0
    %4553 = vmatprep.subr.mxu0 0.0
    %4554 = vmatpush1.msra.mxu0 0.0
    %4555 = vmatprep.subr.mxu0 0.0
    %4556 = vmatpush1.msra.mxu0 0.0
    %4557 = vmatprep.subr.mxu0 0.0
    %4558 = vmatpush1.msra.mxu0 0.0
    %4559 = vmatprep.subr.mxu0 0.0
    %4560 = vmatpush1.msra.mxu0 0.0
    %4561 = vmatprep.subr.mxu0 0.0
    %4562 = vmatpush1.msra.mxu0 0.0
    %4563 = vmatprep.subr.mxu0 0.0
    %4564 = vmatpush1.msra.mxu0 0.0
    %4565 = vmatprep.subr.mxu0 0.0
    %4566 = vmatpush1.msra.mxu0 0.0
    %4567 = vmatprep.subr.mxu0 0.0
    %4568 = vmatpush1.msra.mxu0 0.0
    %4569 = vmatprep.subr.mxu0 0.0
    %4570 = vmatpush1.msra.mxu0 0.0
    %4571 = vmatprep.subr.mxu0 0.0
    %4572 = vmatpush1.msra.mxu0 0.0
    %4573 = vmatprep.subr.mxu0 0.0
    %4574 = vmatpush1.msra.mxu0 0.0
    %4575 = vmatprep.subr.mxu0 0.0
    %4576 = vmatpush1.msra.mxu0 0.0
    %4577 = vmatprep.subr.mxu0 0.0
    %4578 = vmatpush1.msra.mxu0 0.0
    %4579 = vmatprep.subr.mxu0 0.0
    %4580 = vmatpush1.msra.mxu0 0.0
    %4581 = vmatprep.subr.mxu0 0.0
    %4582 = vmatpush1.msra.mxu0 0.0
    %4583 = vmatprep.subr.mxu0 0.0
    %4584 = vmatpush1.msra.mxu0 0.0
    %4585 = vmatprep.subr.mxu0 0.0
    %4586 = vmatpush1.msra.mxu0 0.0
    %4587 = vmatprep.mubr.f32.mxu0 0.0
    %4588 = vmatmul.mubr.f32.gmra.mrb[0].mxu0 %v3603
    %v4589 = vpop.f32.mrb[0].mxu0
    %v4590 = vadd.f32 %v4520, %v4589
    %v4591 = vpop.f32.mrb[0].mxu0
    %4592 = vdwg.mxu0
    %v4593 = vadd.f32 %v1752, %v4449
    %v4594 = vadd.f32 %v1756, %v4451
    %v4595 = vadd.f32 %v1760, %v4590
    %v4597 = vsel %vm345, %v1334, 0
    %4599 = vmatprep.subr.mxu0 %v1769
    %4600 = vmatpush1.msra.mxu0 %v1768
    %4601 = vmatprep.subr.mxu0 %v1772
    %4602 = vmatpush1.msra.mxu0 %v1771
    %4603 = vmatprep.subr.mxu0 %v1775
    %4604 = vmatpush1.msra.mxu0 %v1774
    %4605 = vmatprep.subr.mxu0 %v1778
    %4606 = vmatpush1.msra.mxu0 %v1777
    %4607 = vmatprep.subr.mxu0 %v1781
    %4608 = vmatpush1.msra.mxu0 %v1780
    %4609 = vmatprep.subr.mxu0 %v1784
    %4610 = vmatpush1.msra.mxu0 %v1783
    %4611 = vmatprep.subr.mxu0 %v1787
    %4612 = vmatpush1.msra.mxu0 %v1786
    %4613 = vmatprep.subr.mxu0 %v1790
    %4614 = vmatpush1.msra.mxu0 %v1789
    %4615 = vmatprep.subr.mxu0 %v1793
    %4616 = vmatpush1.msra.mxu0 %v1792
    %4617 = vmatprep.subr.mxu0 %v1796
    %4618 = vmatpush1.msra.mxu0 %v1795
    %4619 = vmatprep.subr.mxu0 %v1799
    %4620 = vmatpush1.msra.mxu0 %v1798
    %4621 = vmatprep.subr.mxu0 %v1802
    %4622 = vmatpush1.msra.mxu0 %v1801
    %4623 = vmatprep.subr.mxu0 %v1805
    %4624 = vmatpush1.msra.mxu0 %v1804
    %4625 = vmatprep.subr.mxu0 %v1808
    %4626 = vmatpush1.msra.mxu0 %v1807
    %4627 = vmatprep.subr.mxu0 %v1811
    %4628 = vmatpush1.msra.mxu0 %v1810
    %4629 = vmatprep.subr.mxu0 %v1814
    %4630 = vmatpush1.msra.mxu0 %v1813
    %4631 = vmatprep.subr.mxu0 %v1817
    %4632 = vmatpush1.msra.mxu0 %v1816
    %4633 = vmatprep.subr.mxu0 %v1820
    %4634 = vmatpush1.msra.mxu0 %v1819
    %4635 = vmatprep.subr.mxu0 %v1823
    %4636 = vmatpush1.msra.mxu0 %v1822
    %4637 = vmatprep.subr.mxu0 %v1826
    %4638 = vmatpush1.msra.mxu0 %v1825
    %4639 = vmatprep.subr.mxu0 %v1829
    %4640 = vmatpush1.msra.mxu0 %v1828
    %4641 = vmatprep.subr.mxu0 %v1832
    %4642 = vmatpush1.msra.mxu0 %v1831
    %4643 = vmatprep.subr.mxu0 %v1835
    %4644 = vmatpush1.msra.mxu0 %v1834
    %4645 = vmatprep.subr.mxu0 %v1838
    %4646 = vmatpush1.msra.mxu0 %v1837
    %4647 = vmatprep.subr.mxu0 %v1841
    %4648 = vmatpush1.msra.mxu0 %v1840
    %4649 = vmatprep.subr.mxu0 %v1844
    %4650 = vmatpush1.msra.mxu0 %v1843
    %4651 = vmatprep.subr.mxu0 %v1847
    %4652 = vmatpush1.msra.mxu0 %v1846
    %4653 = vmatprep.subr.mxu0 %v1850
    %4654 = vmatpush1.msra.mxu0 %v1849
    %4655 = vmatprep.subr.mxu0 %v1853
    %4656 = vmatpush1.msra.mxu0 %v1852
    %4657 = vmatprep.subr.mxu0 %v1856
    %4658 = vmatpush1.msra.mxu0 %v1855
    %4659 = vmatprep.subr.mxu0 %v1859
    %4660 = vmatpush1.msra.mxu0 %v1858
    %4661 = vmatprep.subr.mxu0 %v1862
    %4662 = vmatpush1.msra.mxu0 %v1861
    %4663 = vmatprep.mubr.f32.mxu0 %v1333
    %4664 = vmatmul.mubr.f32.gmra.mrb[0].mxu0 %v1332
    %v4665 = vpop.f32.mrb[0].mxu0
    %v4666 = vadd.f32 0.0, %v4665
    %v4667 = vpop.f32.mrb[0].mxu0
    %v4668 = vadd.f32 0.0, %v4667
    %4669 = vdwg.mxu0
    %4670 = vmatprep.subr.mxu0 %v1865
    %4671 = vmatpush1.msra.mxu0 %v1864
    %4672 = vmatprep.subr.mxu0 %v1868
    %4673 = vmatpush1.msra.mxu0 %v1867
    %4674 = vmatprep.subr.mxu0 %v1871
    %4675 = vmatpush1.msra.mxu0 %v1870
    %4676 = vmatprep.subr.mxu0 %v1874
    %4677 = vmatpush1.msra.mxu0 %v1873
    %4678 = vmatprep.subr.mxu0 %v1877
    %4679 = vmatpush1.msra.mxu0 %v1876
    %4680 = vmatprep.subr.mxu0 %v1889
    %4681 = vmatpush1.msra.mxu0 %v1886
    %4682 = vmatprep.subr.mxu0 0.0
    %4683 = vmatpush1.msra.mxu0 0.0
    %4684 = vmatprep.subr.mxu0 0.0
    %4685 = vmatpush1.msra.mxu0 0.0
    %4686 = vmatprep.subr.mxu0 0.0
    %4687 = vmatpush1.msra.mxu0 0.0
    %4688 = vmatprep.subr.mxu0 0.0
    %4689 = vmatpush1.msra.mxu0 0.0
    %4690 = vmatprep.subr.mxu0 0.0
    %4691 = vmatpush1.msra.mxu0 0.0
    %4692 = vmatprep.subr.mxu0 0.0
    %4693 = vmatpush1.msra.mxu0 0.0
    %4694 = vmatprep.subr.mxu0 0.0
    %4695 = vmatpush1.msra.mxu0 0.0
    %4696 = vmatprep.subr.mxu0 0.0
    %4697 = vmatpush1.msra.mxu0 0.0
    %4698 = vmatprep.subr.mxu0 0.0
    %4699 = vmatpush1.msra.mxu0 0.0
    %4700 = vmatprep.subr.mxu0 0.0
    %4701 = vmatpush1.msra.mxu0 0.0
    %4702 = vmatprep.subr.mxu0 0.0
    %4703 = vmatpush1.msra.mxu0 0.0
    %4704 = vmatprep.subr.mxu0 0.0
    %4705 = vmatpush1.msra.mxu0 0.0
    %4706 = vmatprep.subr.mxu0 0.0
    %4707 = vmatpush1.msra.mxu0 0.0
    %4708 = vmatprep.subr.mxu0 0.0
    %4709 = vmatpush1.msra.mxu0 0.0
    %4710 = vmatprep.subr.mxu0 0.0
    %4711 = vmatpush1.msra.mxu0 0.0
    %4712 = vmatprep.subr.mxu0 0.0
    %4713 = vmatpush1.msra.mxu0 0.0
    %4714 = vmatprep.subr.mxu0 0.0
    %4715 = vmatpush1.msra.mxu0 0.0
    %4716 = vmatprep.subr.mxu0 0.0
    %4717 = vmatpush1.msra.mxu0 0.0
    %4718 = vmatprep.subr.mxu0 0.0
    %4719 = vmatpush1.msra.mxu0 0.0
    %4720 = vmatprep.subr.mxu0 0.0
    %4721 = vmatpush1.msra.mxu0 0.0
    %4722 = vmatprep.subr.mxu0 0.0
    %4723 = vmatpush1.msra.mxu0 0.0
    %4724 = vmatprep.subr.mxu0 0.0
    %4725 = vmatpush1.msra.mxu0 0.0
    %4726 = vmatprep.subr.mxu0 0.0
    %4727 = vmatpush1.msra.mxu0 0.0
    %4728 = vmatprep.subr.mxu0 0.0
    %4729 = vmatpush1.msra.mxu0 0.0
    %4730 = vmatprep.subr.mxu0 0.0
    %4731 = vmatpush1.msra.mxu0 0.0
    %4732 = vmatprep.subr.mxu0 0.0
    %4733 = vmatpush1.msra.mxu0 0.0
    %4734 = vmatprep.mubr.f32.mxu0 0.0
    %4735 = vmatmul.mubr.f32.gmra.mrb[0].mxu0 %v4597
    %v4736 = vpop.f32.mrb[0].mxu0
    %v4737 = vadd.f32 %v4666, %v4736
    %v4738 = vpop.f32.mrb[0].mxu0
    %v4739 = vadd.f32 %v4668, %v4738
    %4740 = vdwg.mxu0
    %4741 = vmatprep.subr.mxu0 0.0
    %4742 = vmatpush1.msra.mxu0 %v1770
    %4743 = vmatprep.subr.mxu0 0.0
    %4744 = vmatpush1.msra.mxu0 %v1773
    %4745 = vmatprep.subr.mxu0 0.0
    %4746 = vmatpush1.msra.mxu0 %v1776
    %4747 = vmatprep.subr.mxu0 0.0
    %4748 = vmatpush1.msra.mxu0 %v1779
    %4749 = vmatprep.subr.mxu0 0.0
    %4750 = vmatpush1.msra.mxu0 %v1782
    %4751 = vmatprep.subr.mxu0 0.0
    %4752 = vmatpush1.msra.mxu0 %v1785
    %4753 = vmatprep.subr.mxu0 0.0
    %4754 = vmatpush1.msra.mxu0 %v1788
    %4755 = vmatprep.subr.mxu0 0.0
    %4756 = vmatpush1.msra.mxu0 %v1791
    %4757 = vmatprep.subr.mxu0 0.0
    %4758 = vmatpush1.msra.mxu0 %v1794
    %4759 = vmatprep.subr.mxu0 0.0
    %4760 = vmatpush1.msra.mxu0 %v1797
    %4761 = vmatprep.subr.mxu0 0.0
    %4762 = vmatpush1.msra.mxu0 %v1800
    %4763 = vmatprep.subr.mxu0 0.0
    %4764 = vmatpush1.msra.mxu0 %v1803
    %4765 = vmatprep.subr.mxu0 0.0
    %4766 = vmatpush1.msra.mxu0 %v1806
    %4767 = vmatprep.subr.mxu0 0.0
    %4768 = vmatpush1.msra.mxu0 %v1809
    %4769 = vmatprep.subr.mxu0 0.0
    %4770 = vmatpush1.msra.mxu0 %v1812
    %4771 = vmatprep.subr.mxu0 0.0
    %4772 = vmatpush1.msra.mxu0 %v1815
    %4773 = vmatprep.subr.mxu0 0.0
    %4774 = vmatpush1.msra.mxu0 %v1818
    %4775 = vmatprep.subr.mxu0 0.0
    %4776 = vmatpush1.msra.mxu0 %v1821
    %4777 = vmatprep.subr.mxu0 0.0
    %4778 = vmatpush1.msra.mxu0 %v1824
    %4779 = vmatprep.subr.mxu0 0.0
    %4780 = vmatpush1.msra.mxu0 %v1827
    %4781 = vmatprep.subr.mxu0 0.0
    %4782 = vmatpush1.msra.mxu0 %v1830
    %4783 = vmatprep.subr.mxu0 0.0
    %4784 = vmatpush1.msra.mxu0 %v1833
    %4785 = vmatprep.subr.mxu0 0.0
    %4786 = vmatpush1.msra.mxu0 %v1836
    %4787 = vmatprep.subr.mxu0 0.0
    %4788 = vmatpush1.msra.mxu0 %v1839
    %4789 = vmatprep.subr.mxu0 0.0
    %4790 = vmatpush1.msra.mxu0 %v1842
    %4791 = vmatprep.subr.mxu0 0.0
    %4792 = vmatpush1.msra.mxu0 %v1845
    %4793 = vmatprep.subr.mxu0 0.0
    %4794 = vmatpush1.msra.mxu0 %v1848
    %4795 = vmatprep.subr.mxu0 0.0
    %4796 = vmatpush1.msra.mxu0 %v1851
    %4797 = vmatprep.subr.mxu0 0.0
    %4798 = vmatpush1.msra.mxu0 %v1854
    %4799 = vmatprep.subr.mxu0 0.0
    %4800 = vmatpush1.msra.mxu0 %v1857
    %4801 = vmatprep.subr.mxu0 0.0
    %4802 = vmatpush1.msra.mxu0 %v1860
    %4803 = vmatprep.subr.mxu0 0.0
    %4804 = vmatpush1.msra.mxu0 %v1863
    %4805 = vmatprep.mubr.f32.mxu0 %v1333
    %4806 = vmatmul.mubr.f32.gmra.mrb[0].mxu0 %v1332
    %v4807 = vpop.f32.mrb[0].mxu0
    %v4808 = vadd.f32 0.0, %v4807
    %v4809 = vpop.f32.mrb[0].mxu0
    %4810 = vdwg.mxu0
    %4811 = vmatprep.subr.mxu0 0.0
    %4812 = vmatpush1.msra.mxu0 %v1866
    %4813 = vmatprep.subr.mxu0 0.0
    %4814 = vmatpush1.msra.mxu0 %v1869
    %4815 = vmatprep.subr.mxu0 0.0
    %4816 = vmatpush1.msra.mxu0 %v1872
    %4817 = vmatprep.subr.mxu0 0.0
    %4818 = vmatpush1.msra.mxu0 %v1875
    %4819 = vmatprep.subr.mxu0 0.0
    %4820 = vmatpush1.msra.mxu0 %v1878
    %4821 = vmatprep.subr.mxu0 0.0
    %4822 = vmatpush1.msra.mxu0 %v1892
    %4823 = vmatprep.subr.mxu0 0.0
    %4824 = vmatpush1.msra.mxu0 0.0
    %4825 = vmatprep.subr.mxu0 0.0
    %4826 = vmatpush1.msra.mxu0 0.0
    %4827 = vmatprep.subr.mxu0 0.0
    %4828 = vmatpush1.msra.mxu0 0.0
    %4829 = vmatprep.subr.mxu0 0.0
    %4830 = vmatpush1.msra.mxu0 0.0
    %4831 = vmatprep.subr.mxu0 0.0
    %4832 = vmatpush1.msra.mxu0 0.0
    %4833 = vmatprep.subr.mxu0 0.0
    %4834 = vmatpush1.msra.mxu0 0.0
    %4835 = vmatprep.subr.mxu0 0.0
    %4836 = vmatpush1.msra.mxu0 0.0
    %4837 = vmatprep.subr.mxu0 0.0
    %4838 = vmatpush1.msra.mxu0 0.0
    %4839 = vmatprep.subr.mxu0 0.0
    %4840 = vmatpush1.msra.mxu0 0.0
    %4841 = vmatprep.subr.mxu0 0.0
    %4842 = vmatpush1.msra.mxu0 0.0
    %4843 = vmatprep.subr.mxu0 0.0
    %4844 = vmatpush1.msra.mxu0 0.0
    %4845 = vmatprep.subr.mxu0 0.0
    %4846 = vmatpush1.msra.mxu0 0.0
    %4847 = vmatprep.subr.mxu0 0.0
    %4848 = vmatpush1.msra.mxu0 0.0
    %4849 = vmatprep.subr.mxu0 0.0
    %4850 = vmatpush1.msra.mxu0 0.0
    %4851 = vmatprep.subr.mxu0 0.0
    %4852 = vmatpush1.msra.mxu0 0.0
    %4853 = vmatprep.subr.mxu0 0.0
    %4854 = vmatpush1.msra.mxu0 0.0
    %4855 = vmatprep.subr.mxu0 0.0
    %4856 = vmatpush1.msra.mxu0 0.0
    %4857 = vmatprep.subr.mxu0 0.0
    %4858 = vmatpush1.msra.mxu0 0.0
    %4859 = vmatprep.subr.mxu0 0.0
    %4860 = vmatpush1.msra.mxu0 0.0
    %4861 = vmatprep.subr.mxu0 0.0
    %4862 = vmatpush1.msra.mxu0 0.0
    %4863 = vmatprep.subr.mxu0 0.0
    %4864 = vmatpush1.msra.mxu0 0.0
    %4865 = vmatprep.subr.mxu0 0.0
    %4866 = vmatpush1.msra.mxu0 0.0
    %4867 = vmatprep.subr.mxu0 0.0
    %4868 = vmatpush1.msra.mxu0 0.0
    %4869 = vmatprep.subr.mxu0 0.0
    %4870 = vmatpush1.msra.mxu0 0.0
    %4871 = vmatprep.subr.mxu0 0.0
    %4872 = vmatpush1.msra.mxu0 0.0
    %4873 = vmatprep.subr.mxu0 0.0
    %4874 = vmatpush1.msra.mxu0 0.0
    %4875 = vmatprep.mubr.f32.mxu0 0.0
    %4876 = vmatmul.mubr.f32.gmra.mrb[0].mxu0 %v4597
    %v4877 = vpop.f32.mrb[0].mxu0
    %v4878 = vadd.f32 %v4808, %v4877
    %v4879 = vpop.f32.mrb[0].mxu0
    %4880 = vdwg.mxu0
    %v4881 = vadd.f32 %v4593, %v4737
    %v4882 = vadd.f32 %v4594, %v4739
    %v4883 = vadd.f32 %v4595, %v4878
    %v4885 = vsel %vm345, %v1337, 0
    %4887 = vmatprep.subr.mxu0 %v2181
    %4888 = vmatpush1.msra.mxu0 %v2180
    %4889 = vmatprep.subr.mxu0 %v2184
    %4890 = vmatpush1.msra.mxu0 %v2183
    %4891 = vmatprep.subr.mxu0 %v2187
    %4892 = vmatpush1.msra.mxu0 %v2186
    %4893 = vmatprep.subr.mxu0 %v2190
    %4894 = vmatpush1.msra.mxu0 %v2189
    %4895 = vmatprep.subr.mxu0 %v2193
    %4896 = vmatpush1.msra.mxu0 %v2192
    %4897 = vmatprep.subr.mxu0 %v2196
    %4898 = vmatpush1.msra.mxu0 %v2195
    %4899 = vmatprep.subr.mxu0 %v2199
    %4900 = vmatpush1.msra.mxu0 %v2198
    %4901 = vmatprep.subr.mxu0 %v2202
    %4902 = vmatpush1.msra.mxu0 %v2201
    %4903 = vmatprep.subr.mxu0 %v2205
    %4904 = vmatpush1.msra.mxu0 %v2204
    %4905 = vmatprep.subr.mxu0 %v2208
    %4906 = vmatpush1.msra.mxu0 %v2207
    %4907 = vmatprep.subr.mxu0 %v2211
    %4908 = vmatpush1.msra.mxu0 %v2210
    %4909 = vmatprep.subr.mxu0 %v2214
    %4910 = vmatpush1.msra.mxu0 %v2213
    %4911 = vmatprep.subr.mxu0 %v2217
    %4912 = vmatpush1.msra.mxu0 %v2216
    %4913 = vmatprep.subr.mxu0 %v2220
    %4914 = vmatpush1.msra.mxu0 %v2219
    %4915 = vmatprep.subr.mxu0 %v2223
    %4916 = vmatpush1.msra.mxu0 %v2222
    %4917 = vmatprep.subr.mxu0 %v2226
    %4918 = vmatpush1.msra.mxu0 %v2225
    %4919 = vmatprep.subr.mxu0 %v2229
    %4920 = vmatpush1.msra.mxu0 %v2228
    %4921 = vmatprep.subr.mxu0 %v2232
    %4922 = vmatpush1.msra.mxu0 %v2231
    %4923 = vmatprep.subr.mxu0 %v2235
    %4924 = vmatpush1.msra.mxu0 %v2234
    %4925 = vmatprep.subr.mxu0 %v2238
    %4926 = vmatpush1.msra.mxu0 %v2237
    %4927 = vmatprep.subr.mxu0 %v2241
    %4928 = vmatpush1.msra.mxu0 %v2240
    %4929 = vmatprep.subr.mxu0 %v2244
    %4930 = vmatpush1.msra.mxu0 %v2243
    %4931 = vmatprep.subr.mxu0 %v2247
    %4932 = vmatpush1.msra.mxu0 %v2246
    %4933 = vmatprep.subr.mxu0 %v2250
    %4934 = vmatpush1.msra.mxu0 %v2249
    %4935 = vmatprep.subr.mxu0 %v2253
    %4936 = vmatpush1.msra.mxu0 %v2252
    %4937 = vmatprep.subr.mxu0 %v2256
    %4938 = vmatpush1.msra.mxu0 %v2255
    %4939 = vmatprep.subr.mxu0 %v2259
    %4940 = vmatpush1.msra.mxu0 %v2258
    %4941 = vmatprep.subr.mxu0 %v2262
    %4942 = vmatpush1.msra.mxu0 %v2261
    %4943 = vmatprep.subr.mxu0 %v2265
    %4944 = vmatpush1.msra.mxu0 %v2264
    %4945 = vmatprep.subr.mxu0 %v2268
    %4946 = vmatpush1.msra.mxu0 %v2267
    %4947 = vmatprep.subr.mxu0 %v2271
    %4948 = vmatpush1.msra.mxu0 %v2270
    %4949 = vmatprep.subr.mxu0 %v2274
    %4950 = vmatpush1.msra.mxu0 %v2273
    %4951 = vmatprep.mubr.f32.mxu0 %v1336
    %4952 = vmatmul.mubr.f32.gmra.mrb[0].mxu0 %v1335
    %v4953 = vpop.f32.mrb[0].mxu0
    %v4954 = vadd.f32 0.0, %v4953
    %v4955 = vpop.f32.mrb[0].mxu0
    %v4956 = vadd.f32 0.0, %v4955
    %4957 = vdwg.mxu0
    %4958 = vmatprep.subr.mxu0 %v2277
    %4959 = vmatpush1.msra.mxu0 %v2276
    %4960 = vmatprep.subr.mxu0 %v2280
    %4961 = vmatpush1.msra.mxu0 %v2279
    %4962 = vmatprep.subr.mxu0 %v2283
    %4963 = vmatpush1.msra.mxu0 %v2282
    %4964 = vmatprep.subr.mxu0 %v2286
    %4965 = vmatpush1.msra.mxu0 %v2285
    %4966 = vmatprep.subr.mxu0 %v2289
    %4967 = vmatpush1.msra.mxu0 %v2288
    %4968 = vmatprep.subr.mxu0 %v2301
    %4969 = vmatpush1.msra.mxu0 %v2298
    %4970 = vmatprep.subr.mxu0 0.0
    %4971 = vmatpush1.msra.mxu0 0.0
    %4972 = vmatprep.subr.mxu0 0.0
    %4973 = vmatpush1.msra.mxu0 0.0
    %4974 = vmatprep.subr.mxu0 0.0
    %4975 = vmatpush1.msra.mxu0 0.0
    %4976 = vmatprep.subr.mxu0 0.0
    %4977 = vmatpush1.msra.mxu0 0.0
    %4978 = vmatprep.subr.mxu0 0.0
    %4979 = vmatpush1.msra.mxu0 0.0
    %4980 = vmatprep.subr.mxu0 0.0
    %4981 = vmatpush1.msra.mxu0 0.0
    %4982 = vmatprep.subr.mxu0 0.0
    %4983 = vmatpush1.msra.mxu0 0.0
    %4984 = vmatprep.subr.mxu0 0.0
    %4985 = vmatpush1.msra.mxu0 0.0
    %4986 = vmatprep.subr.mxu0 0.0
    %4987 = vmatpush1.msra.mxu0 0.0
    %4988 = vmatprep.subr.mxu0 0.0
    %4989 = vmatpush1.msra.mxu0 0.0
    %4990 = vmatprep.subr.mxu0 0.0
    %4991 = vmatpush1.msra.mxu0 0.0
    %4992 = vmatprep.subr.mxu0 0.0
    %4993 = vmatpush1.msra.mxu0 0.0
    %4994 = vmatprep.subr.mxu0 0.0
    %4995 = vmatpush1.msra.mxu0 0.0
    %4996 = vmatprep.subr.mxu0 0.0
    %4997 = vmatpush1.msra.mxu0 0.0
    %4998 = vmatprep.subr.mxu0 0.0
    %4999 = vmatpush1.msra.mxu0 0.0
    %5000 = vmatprep.subr.mxu0 0.0
    %5001 = vmatpush1.msra.mxu0 0.0
    %5002 = vmatprep.subr.mxu0 0.0
    %5003 = vmatpush1.msra.mxu0 0.0
    %5004 = vmatprep.subr.mxu0 0.0
    %5005 = vmatpush1.msra.mxu0 0.0
    %5006 = vmatprep.subr.mxu0 0.0
    %5007 = vmatpush1.msra.mxu0 0.0
    %5008 = vmatprep.subr.mxu0 0.0
    %5009 = vmatpush1.msra.mxu0 0.0
    %5010 = vmatprep.subr.mxu0 0.0
    %5011 = vmatpush1.msra.mxu0 0.0
    %5012 = vmatprep.subr.mxu0 0.0
    %5013 = vmatpush1.msra.mxu0 0.0
    %5014 = vmatprep.subr.mxu0 0.0
    %5015 = vmatpush1.msra.mxu0 0.0
    %5016 = vmatprep.subr.mxu0 0.0
    %5017 = vmatpush1.msra.mxu0 0.0
    %5018 = vmatprep.subr.mxu0 0.0
    %5019 = vmatpush1.msra.mxu0 0.0
    %5020 = vmatprep.subr.mxu0 0.0
    %5021 = vmatpush1.msra.mxu0 0.0
    %5022 = vmatprep.mubr.f32.mxu0 0.0
    %5023 = vmatmul.mubr.f32.gmra.mrb[0].mxu0 %v4885
    %v5024 = vpop.f32.mrb[0].mxu0
    %v5025 = vadd.f32 %v4954, %v5024
    %v5026 = vpop.f32.mrb[0].mxu0
    %v5027 = vadd.f32 %v4956, %v5026
    %5028 = vdwg.mxu0
    %5029 = vmatprep.subr.mxu0 0.0
    %5030 = vmatpush1.msra.mxu0 %v2182
    %5031 = vmatprep.subr.mxu0 0.0
    %5032 = vmatpush1.msra.mxu0 %v2185
    %5033 = vmatprep.subr.mxu0 0.0
    %5034 = vmatpush1.msra.mxu0 %v2188
    %5035 = vmatprep.subr.mxu0 0.0
    %5036 = vmatpush1.msra.mxu0 %v2191
    %5037 = vmatprep.subr.mxu0 0.0
    %5038 = vmatpush1.msra.mxu0 %v2194
    %5039 = vmatprep.subr.mxu0 0.0
    %5040 = vmatpush1.msra.mxu0 %v2197
    %5041 = vmatprep.subr.mxu0 0.0
    %5042 = vmatpush1.msra.mxu0 %v2200
    %5043 = vmatprep.subr.mxu0 0.0
    %5044 = vmatpush1.msra.mxu0 %v2203
    %5045 = vmatprep.subr.mxu0 0.0
    %5046 = vmatpush1.msra.mxu0 %v2206
    %5047 = vmatprep.subr.mxu0 0.0
    %5048 = vmatpush1.msra.mxu0 %v2209
    %5049 = vmatprep.subr.mxu0 0.0
    %5050 = vmatpush1.msra.mxu0 %v2212
    %5051 = vmatprep.subr.mxu0 0.0
    %5052 = vmatpush1.msra.mxu0 %v2215
    %5053 = vmatprep.subr.mxu0 0.0
    %5054 = vmatpush1.msra.mxu0 %v2218
    %5055 = vmatprep.subr.mxu0 0.0
    %5056 = vmatpush1.msra.mxu0 %v2221
    %5057 = vmatprep.subr.mxu0 0.0
    %5058 = vmatpush1.msra.mxu0 %v2224
    %5059 = vmatprep.subr.mxu0 0.0
    %5060 = vmatpush1.msra.mxu0 %v2227
    %5061 = vmatprep.subr.mxu0 0.0
    %5062 = vmatpush1.msra.mxu0 %v2230
    %5063 = vmatprep.subr.mxu0 0.0
    %5064 = vmatpush1.msra.mxu0 %v2233
    %5065 = vmatprep.subr.mxu0 0.0
    %5066 = vmatpush1.msra.mxu0 %v2236
    %5067 = vmatprep.subr.mxu0 0.0
    %5068 = vmatpush1.msra.mxu0 %v2239
    %5069 = vmatprep.subr.mxu0 0.0
    %5070 = vmatpush1.msra.mxu0 %v2242
    %5071 = vmatprep.subr.mxu0 0.0
    %5072 = vmatpush1.msra.mxu0 %v2245
    %5073 = vmatprep.subr.mxu0 0.0
    %5074 = vmatpush1.msra.mxu0 %v2248
    %5075 = vmatprep.subr.mxu0 0.0
    %5076 = vmatpush1.msra.mxu0 %v2251
    %5077 = vmatprep.subr.mxu0 0.0
    %5078 = vmatpush1.msra.mxu0 %v2254
    %5079 = vmatprep.subr.mxu0 0.0
    %5080 = vmatpush1.msra.mxu0 %v2257
    %5081 = vmatprep.subr.mxu0 0.0
    %5082 = vmatpush1.msra.mxu0 %v2260
    %5083 = vmatprep.subr.mxu0 0.0
    %5084 = vmatpush1.msra.mxu0 %v2263
    %5085 = vmatprep.subr.mxu0 0.0
    %5086 = vmatpush1.msra.mxu0 %v2266
    %5087 = vmatprep.subr.mxu0 0.0
    %5088 = vmatpush1.msra.mxu0 %v2269
    %5089 = vmatprep.subr.mxu0 0.0
    %5090 = vmatpush1.msra.mxu0 %v2272
    %5091 = vmatprep.subr.mxu0 0.0
    %5092 = vmatpush1.msra.mxu0 %v2275
    %5093 = vmatprep.mubr.f32.mxu0 %v1336
    %5094 = vmatmul.mubr.f32.gmra.mrb[0].mxu0 %v1335
    %v5095 = vpop.f32.mrb[0].mxu0
    %v5096 = vadd.f32 0.0, %v5095
    %v5097 = vpop.f32.mrb[0].mxu0
    %5098 = vdwg.mxu0
    %5099 = vmatprep.subr.mxu0 0.0
    %5100 = vmatpush1.msra.mxu0 %v2278
    %5101 = vmatprep.subr.mxu0 0.0
    %5102 = vmatpush1.msra.mxu0 %v2281
    %5103 = vmatprep.subr.mxu0 0.0
    %5104 = vmatpush1.msra.mxu0 %v2284
    %5105 = vmatprep.subr.mxu0 0.0
    %5106 = vmatpush1.msra.mxu0 %v2287
    %5107 = vmatprep.subr.mxu0 0.0
    %5108 = vmatpush1.msra.mxu0 %v2290
    %5109 = vmatprep.subr.mxu0 0.0
    %5110 = vmatpush1.msra.mxu0 %v2304
    %5111 = vmatprep.subr.mxu0 0.0
    %5112 = vmatpush1.msra.mxu0 0.0
    %5113 = vmatprep.subr.mxu0 0.0
    %5114 = vmatpush1.msra.mxu0 0.0
    %5115 = vmatprep.subr.mxu0 0.0
    %5116 = vmatpush1.msra.mxu0 0.0
    %5117 = vmatprep.subr.mxu0 0.0
    %5118 = vmatpush1.msra.mxu0 0.0
    %5119 = vmatprep.subr.mxu0 0.0
    %5120 = vmatpush1.msra.mxu0 0.0
    %5121 = vmatprep.subr.mxu0 0.0
    %5122 = vmatpush1.msra.mxu0 0.0
    %5123 = vmatprep.subr.mxu0 0.0
    %5124 = vmatpush1.msra.mxu0 0.0
    %5125 = vmatprep.subr.mxu0 0.0
    %5126 = vmatpush1.msra.mxu0 0.0
    %5127 = vmatprep.subr.mxu0 0.0
    %5128 = vmatpush1.msra.mxu0 0.0
    %5129 = vmatprep.subr.mxu0 0.0
    %5130 = vmatpush1.msra.mxu0 0.0
    %5131 = vmatprep.subr.mxu0 0.0
    %5132 = vmatpush1.msra.mxu0 0.0
    %5133 = vmatprep.subr.mxu0 0.0
    %5134 = vmatpush1.msra.mxu0 0.0
    %5135 = vmatprep.subr.mxu0 0.0
    %5136 = vmatpush1.msra.mxu0 0.0
    %5137 = vmatprep.subr.mxu0 0.0
    %5138 = vmatpush1.msra.mxu0 0.0
    %5139 = vmatprep.subr.mxu0 0.0
    %5140 = vmatpush1.msra.mxu0 0.0
    %5141 = vmatprep.subr.mxu0 0.0
    %5142 = vmatpush1.msra.mxu0 0.0
    %5143 = vmatprep.subr.mxu0 0.0
    %5144 = vmatpush1.msra.mxu0 0.0
    %5145 = vmatprep.subr.mxu0 0.0
    %5146 = vmatpush1.msra.mxu0 0.0
    %5147 = vmatprep.subr.mxu0 0.0
    %5148 = vmatpush1.msra.mxu0 0.0
    %5149 = vmatprep.subr.mxu0 0.0
    %5150 = vmatpush1.msra.mxu0 0.0
    %5151 = vmatprep.subr.mxu0 0.0
    %5152 = vmatpush1.msra.mxu0 0.0
    %5153 = vmatprep.subr.mxu0 0.0
    %5154 = vmatpush1.msra.mxu0 0.0
    %5155 = vmatprep.subr.mxu0 0.0
    %5156 = vmatpush1.msra.mxu0 0.0
    %5157 = vmatprep.subr.mxu0 0.0
    %5158 = vmatpush1.msra.mxu0 0.0
    %5159 = vmatprep.subr.mxu0 0.0
    %5160 = vmatpush1.msra.mxu0 0.0
    %5161 = vmatprep.subr.mxu0 0.0
    %5162 = vmatpush1.msra.mxu0 0.0
    %5163 = vmatprep.mubr.f32.mxu0 0.0
    %5164 = vmatmul.mubr.f32.gmra.mrb[0].mxu0 %v4885
    %v5165 = vpop.f32.mrb[0].mxu0
    %v5166 = vadd.f32 %v5096, %v5165
    %v5167 = vpop.f32.mrb[0].mxu0
    %5168 = vdwg.mxu0
    %v5169 = vadd.f32 %v4881, %v5025
    %v5170 = vadd.f32 %v4882, %v5027
    %v5171 = vadd.f32 %v4883, %v5166
    %vm5172 = vcmp.ge.f32.partialorder %v5169, 0.0
    %vm5173 = vcmp.ge.f32.partialorder %v5170, 0.0
    %vm5174 = vcmp.ge.f32.partialorder %v5171, 0.0
    %v5175 = vmul.f32 %v2595, %v5169
    %v5176 = vmul.f32 %v2595, %v5170
    %v5177 = vmul.f32 %v2595, %v5171
    %v5178 = vsel %vm5172, %v5169, %v5175
    %v5179 = vsel %vm5173, %v5170, %v5176
    %v5180 = vsel %vm5174, %v5171, %v5177
    %s5181 = scalar_lea.vmem [#allocation2], 1824
    %v5182 = vld [vmem:[%s5181] sm:$0xff]
    %v5183 = vld [vmem:[%s5181 + $0x8] sm:$0xff]
    %v5184 = vld [vmem:[%s5181 + $0x10] sm:$0xff]
    %v5185 = vld [vmem:[%s5181 + $0x18] sm:$0xff]
    %v5186 = vld [vmem:[%s5181 + $0x20] sm:$0xff]
    %v5187 = vld [vmem:[%s5181 + $0x28] sm:$0xff]
    %v5188 = vld [vmem:[%s5181 + $0x30] sm:$0xff]
    %v5189 = vld [vmem:[%s5181 + $0x38] sm:$0xff]
    %v5190 = vld [vmem:[%s5181 + $0x40] sm:$0xff]
    %v5191 = vld [vmem:[%s5181 + $0x48] sm:$0xff]
    %v5192 = vld [vmem:[%s5181 + $0x50] sm:$0xff]
    %v5193 = vld [vmem:[%s5181 + $0x58] sm:$0xff]
    %v5194 = vld [vmem:[%s5181 + $0x60] sm:$0xff]
    %v5195 = vld [vmem:[%s5181 + $0x68] sm:$0xff]
    %v5196 = vld [vmem:[%s5181 + $0x70] sm:$0xff]
    %v5197 = vld [vmem:[%s5181 + $0x78] sm:$0xff]
    %v5198 = vld [vmem:[%s5181 + $0x80] sm:$0xff]
    %v5199 = vld [vmem:[%s5181 + $0x88] sm:$0xff]
    %v5200 = vld [vmem:[%s5181 + $0x90] sm:$0xff]
    %v5201 = vld [vmem:[%s5181 + $0x98] sm:$0xff]
    %v5202 = vld [vmem:[%s5181 + $0xa0] sm:$0xff]
    %v5203 = vld [vmem:[%s5181 + $0xa8] sm:$0xff]
    %v5204 = vld [vmem:[%s5181 + $0xb0] sm:$0xff]
    %v5205 = vld [vmem:[%s5181 + $0xb8] sm:$0xff]
    %v5206 = vld [vmem:[%s5181 + $0xc0] sm:$0xff]
    %v5207 = vld [vmem:[%s5181 + $0xc8] sm:$0xff]
    %v5208 = vld [vmem:[%s5181 + $0xd0] sm:$0xff]
    %v5209 = vld [vmem:[%s5181 + $0xd8] sm:$0xff]
    %v5210 = vld [vmem:[%s5181 + $0xe0] sm:$0xff]
    %v5211 = vld [vmem:[%s5181 + $0xe8] sm:$0xff]
    %v5212 = vld [vmem:[%s5181 + $0xf0] sm:$0xff]
    %v5213 = vld [vmem:[%s5181 + $0xf8] sm:$0xff]
    %v5214 = vld [vmem:[%s5181 + $0x100] sm:$0xff]
    %v5215 = vld [vmem:[%s5181 + $0x108] sm:$0xff]
    %v5216 = vld [vmem:[%s5181 + $0x110] sm:$0xff]
    %v5217 = vld [vmem:[%s5181 + $0x118] sm:$0xff]
    %v5218 = vld [vmem:[%s5181 + $0x120] sm:$0xff]
    %v5219 = vld [vmem:[%s5181 + $0x128] sm:$0xff]
    %v5220 = vld [vmem:[%s5181 + $0x130] sm:$0xff]
    %v5221 = vld [vmem:[%s5181 + $0x138] sm:$0xff]
    %v5222 = vld [vmem:[%s5181 + $0x140] sm:$0xff]
    %v5223 = vld [vmem:[%s5181 + $0x148] sm:$0xff]
    %v5224 = vld [vmem:[%s5181 + $0x150] sm:$0xff]
    %v5225 = vld [vmem:[%s5181 + $0x158] sm:$0xff]
    %v5226 = vld [vmem:[%s5181 + $0x160] sm:$0xff]
    %v5227 = vld [vmem:[%s5181 + $0x168] sm:$0xff]
    %v5228 = vld [vmem:[%s5181 + $0x170] sm:$0xff]
    %v5229 = vld [vmem:[%s5181 + $0x178] sm:$0xff]
    %v5230 = vld [vmem:[%s5181 + $0x180] sm:$0xff]
    %v5231 = vld [vmem:[%s5181 + $0x188] sm:$0xff]
    %v5232 = vld [vmem:[%s5181 + $0x190] sm:$0xff]
    %v5233 = vld [vmem:[%s5181 + $0x198] sm:$0xff]
    %v5234 = vld [vmem:[%s5181 + $0x1a0] sm:$0xff]
    %v5235 = vld [vmem:[%s5181 + $0x1a8] sm:$0xff]
    %v5236 = vld [vmem:[%s5181 + $0x1b0] sm:$0xff]
    %v5237 = vld [vmem:[%s5181 + $0x1b8] sm:$0xff]
    %v5238 = vld [vmem:[%s5181 + $0x1c0] sm:$0xff]
    %v5239 = vld [vmem:[%s5181 + $0x1c8] sm:$0xff]
    %v5240 = vld [vmem:[%s5181 + $0x1d0] sm:$0xff]
    %v5241 = vld [vmem:[%s5181 + $0x1d8] sm:$0xff]
    %v5242 = vld [vmem:[%s5181 + $0x1e0] sm:$0xff]
    %v5243 = vld [vmem:[%s5181 + $0x1e8] sm:$0xff]
    %v5244 = vld [vmem:[%s5181 + $0x1f0] sm:$0xff]
    %v5245 = vld [vmem:[%s5181 + $0x1f8] sm:$0xff]
    %v5246 = vld [vmem:[%s5181 + $0x200] sm:$0xff]
    %v5247 = vld [vmem:[%s5181 + $0x208] sm:$0xff]
    %v5248 = vld [vmem:[%s5181 + $0x210] sm:$0xff]
    %v5249 = vld [vmem:[%s5181 + $0x218] sm:$0xff]
    %v5250 = vld [vmem:[%s5181 + $0x220] sm:$0xff]
    %v5251 = vld [vmem:[%s5181 + $0x228] sm:$0xff]
    %v5252 = vld [vmem:[%s5181 + $0x230] sm:$0xff]
    %v5253 = vld [vmem:[%s5181 + $0x238] sm:$0xff]
    %v5254 = vld [vmem:[%s5181 + $0x240] sm:$0xff]
    %v5255 = vld [vmem:[%s5181 + $0x248] sm:$0xff]
    %v5256 = vld [vmem:[%s5181 + $0x250] sm:$0xff]
    %v5257 = vld [vmem:[%s5181 + $0x258] sm:$0xff]
    %v5258 = vld [vmem:[%s5181 + $0x260] sm:$0xff]
    %v5259 = vld [vmem:[%s5181 + $0x268] sm:$0xff]
    %v5260 = vld [vmem:[%s5181 + $0x270] sm:$0xff]
    %v5261 = vld [vmem:[%s5181 + $0x278] sm:$0xff]
    %v5262 = vld [vmem:[%s5181 + $0x280] sm:$0xff]
    %v5263 = vld [vmem:[%s5181 + $0x288] sm:$0xff]
    %v5264 = vld [vmem:[%s5181 + $0x290] sm:$0xff]
    %v5265 = vld [vmem:[%s5181 + $0x298] sm:$0xff]
    %v5266 = vld [vmem:[%s5181 + $0x2a0] sm:$0xff]
    %v5267 = vld [vmem:[%s5181 + $0x2a8] sm:$0xff]
    %v5268 = vld [vmem:[%s5181 + $0x2b0] sm:$0xff]
    %v5269 = vld [vmem:[%s5181 + $0x2b8] sm:$0xff]
    %v5270 = vld [vmem:[%s5181 + $0x2c0] sm:$0xff]
    %v5271 = vld [vmem:[%s5181 + $0x2c8] sm:$0xff]
    %v5272 = vld [vmem:[%s5181 + $0x2d0] sm:$0xff]
    %v5273 = vld [vmem:[%s5181 + $0x2d8] sm:$0xff]
    %v5274 = vld [vmem:[%s5181 + $0x2e0] sm:$0xff]
    %v5275 = vld [vmem:[%s5181 + $0x2e8] sm:$0xff]
    %v5276 = vld [vmem:[%s5181 + $0x2f0] sm:$0xff]
    %v5277 = vld [vmem:[%s5181 + $0x2f8] sm:$0xff]
    %v5278 = vld [vmem:[%s5181 + $0x300] sm:$0xff]
    %v5279 = vld [vmem:[%s5181 + $0x308] sm:$0xff]
    %v5280 = vld [vmem:[%s5181 + $0x310] sm:$0xff]
    %v5281 = vld [vmem:[%s5181 + $0x318] sm:$0xff]
    %v5282 = vld [vmem:[%s5181 + $0x320] sm:$0xff]
    %v5283 = vld [vmem:[%s5181 + $0x328] sm:$0xff]
    %v5284 = vld [vmem:[%s5181 + $0x330] sm:$0xff]
    %v5285 = vld [vmem:[%s5181 + $0x338] sm:$0xff]
    %v5286 = vld [vmem:[%s5181 + $0x340] sm:$0xff]
    %v5287 = vld [vmem:[%s5181 + $0x348] sm:$0xff]
    %v5288 = vld [vmem:[%s5181 + $0x350] sm:$0xff]
    %v5289 = vld [vmem:[%s5181 + $0x358] sm:$0xff]
    %v5290 = vld [vmem:[%s5181 + $0x360] sm:$0xff]
    %v5291 = vld [vmem:[%s5181 + $0x368] sm:$0xff]
    %v5292 = vld [vmem:[%s5181 + $0x370] sm:$0xff]
    %v5293 = vld [vmem:[%s5181 + $0x378] sm:$0xf]
    %v5294 = vld [vmem:[%s5181 + $0x380] sm:$0xf]
    %v5295 = vld [vmem:[%s5181 + $0x388] sm:$0xf]
    %v5297 = vsel %vm345, %v5180, 0
    %v5300 = vsel %vm367, %v5293, 0
    %v5303 = vsel %vm367, %v5294, 0
    %v5306 = vsel %vm367, %v5295, 0
    %5308 = vmatprep.subr.mxu0 %v5183
    %5309 = vmatpush1.msra.mxu0 %v5182
    %5310 = vmatprep.subr.mxu0 %v5186
    %5311 = vmatpush1.msra.mxu0 %v5185
    %5312 = vmatprep.subr.mxu0 %v5189
    %5313 = vmatpush1.msra.mxu0 %v5188
    %5314 = vmatprep.subr.mxu0 %v5192
    %5315 = vmatpush1.msra.mxu0 %v5191
    %5316 = vmatprep.subr.mxu0 %v5195
    %5317 = vmatpush1.msra.mxu0 %v5194
    %5318 = vmatprep.subr.mxu0 %v5198
    %5319 = vmatpush1.msra.mxu0 %v5197
    %5320 = vmatprep.subr.mxu0 %v5201
    %5321 = vmatpush1.msra.mxu0 %v5200
    %5322 = vmatprep.subr.mxu0 %v5204
    %5323 = vmatpush1.msra.mxu0 %v5203
    %5324 = vmatprep.subr.mxu0 %v5207
    %5325 = vmatpush1.msra.mxu0 %v5206
    %5326 = vmatprep.subr.mxu0 %v5210
    %5327 = vmatpush1.msra.mxu0 %v5209
    %5328 = vmatprep.subr.mxu0 %v5213
    %5329 = vmatpush1.msra.mxu0 %v5212
    %5330 = vmatprep.subr.mxu0 %v5216
    %5331 = vmatpush1.msra.mxu0 %v5215
    %5332 = vmatprep.subr.mxu0 %v5219
    %5333 = vmatpush1.msra.mxu0 %v5218
    %5334 = vmatprep.subr.mxu0 %v5222
    %5335 = vmatpush1.msra.mxu0 %v5221
    %5336 = vmatprep.subr.mxu0 %v5225
    %5337 = vmatpush1.msra.mxu0 %v5224
    %5338 = vmatprep.subr.mxu0 %v5228
    %5339 = vmatpush1.msra.mxu0 %v5227
    %5340 = vmatprep.subr.mxu0 %v5231
    %5341 = vmatpush1.msra.mxu0 %v5230
    %5342 = vmatprep.subr.mxu0 %v5234
    %5343 = vmatpush1.msra.mxu0 %v5233
    %5344 = vmatprep.subr.mxu0 %v5237
    %5345 = vmatpush1.msra.mxu0 %v5236
    %5346 = vmatprep.subr.mxu0 %v5240
    %5347 = vmatpush1.msra.mxu0 %v5239
    %5348 = vmatprep.subr.mxu0 %v5243
    %5349 = vmatpush1.msra.mxu0 %v5242
    %5350 = vmatprep.subr.mxu0 %v5246
    %5351 = vmatpush1.msra.mxu0 %v5245
    %5352 = vmatprep.subr.mxu0 %v5249
    %5353 = vmatpush1.msra.mxu0 %v5248
    %5354 = vmatprep.subr.mxu0 %v5252
    %5355 = vmatpush1.msra.mxu0 %v5251
    %5356 = vmatprep.subr.mxu0 %v5255
    %5357 = vmatpush1.msra.mxu0 %v5254
    %5358 = vmatprep.subr.mxu0 %v5258
    %5359 = vmatpush1.msra.mxu0 %v5257
    %5360 = vmatprep.subr.mxu0 %v5261
    %5361 = vmatpush1.msra.mxu0 %v5260
    %5362 = vmatprep.subr.mxu0 %v5264
    %5363 = vmatpush1.msra.mxu0 %v5263
    %5364 = vmatprep.subr.mxu0 %v5267
    %5365 = vmatpush1.msra.mxu0 %v5266
    %5366 = vmatprep.subr.mxu0 %v5270
    %5367 = vmatpush1.msra.mxu0 %v5269
    %5368 = vmatprep.subr.mxu0 %v5273
    %5369 = vmatpush1.msra.mxu0 %v5272
    %5370 = vmatprep.subr.mxu0 %v5276
    %5371 = vmatpush1.msra.mxu0 %v5275
    %5372 = vmatprep.mubr.f32.mxu0 %v5179
    %5373 = vmatmul.mubr.f32.gmra.mrb[0].mxu0 %v5178
    %v5374 = vpop.f32.mrb[0].mxu0
    %v5375 = vadd.f32 0.0, %v5374
    %v5376 = vpop.f32.mrb[0].mxu0
    %v5377 = vadd.f32 0.0, %v5376
    %5378 = vdwg.mxu0
    %5379 = vmatprep.subr.mxu0 %v5279
    %5380 = vmatpush1.msra.mxu0 %v5278
    %5381 = vmatprep.subr.mxu0 %v5282
    %5382 = vmatpush1.msra.mxu0 %v5281
    %5383 = vmatprep.subr.mxu0 %v5285
    %5384 = vmatpush1.msra.mxu0 %v5284
    %5385 = vmatprep.subr.mxu0 %v5288
    %5386 = vmatpush1.msra.mxu0 %v5287
    %5387 = vmatprep.subr.mxu0 %v5291
    %5388 = vmatpush1.msra.mxu0 %v5290
    %5389 = vmatprep.subr.mxu0 %v5303
    %5390 = vmatpush1.msra.mxu0 %v5300
    %5391 = vmatprep.subr.mxu0 0.0
    %5392 = vmatpush1.msra.mxu0 0.0
    %5393 = vmatprep.subr.mxu0 0.0
    %5394 = vmatpush1.msra.mxu0 0.0
    %5395 = vmatprep.subr.mxu0 0.0
    %5396 = vmatpush1.msra.mxu0 0.0
    %5397 = vmatprep.subr.mxu0 0.0
    %5398 = vmatpush1.msra.mxu0 0.0
    %5399 = vmatprep.subr.mxu0 0.0
    %5400 = vmatpush1.msra.mxu0 0.0
    %5401 = vmatprep.subr.mxu0 0.0
    %5402 = vmatpush1.msra.mxu0 0.0
    %5403 = vmatprep.subr.mxu0 0.0
    %5404 = vmatpush1.msra.mxu0 0.0
    %5405 = vmatprep.subr.mxu0 0.0
    %5406 = vmatpush1.msra.mxu0 0.0
    %5407 = vmatprep.subr.mxu0 0.0
    %5408 = vmatpush1.msra.mxu0 0.0
    %5409 = vmatprep.subr.mxu0 0.0
    %5410 = vmatpush1.msra.mxu0 0.0
    %5411 = vmatprep.subr.mxu0 0.0
    %5412 = vmatpush1.msra.mxu0 0.0
    %5413 = vmatprep.subr.mxu0 0.0
    %5414 = vmatpush1.msra.mxu0 0.0
    %5415 = vmatprep.subr.mxu0 0.0
    %5416 = vmatpush1.msra.mxu0 0.0
    %5417 = vmatprep.subr.mxu0 0.0
    %5418 = vmatpush1.msra.mxu0 0.0
    %5419 = vmatprep.subr.mxu0 0.0
    %5420 = vmatpush1.msra.mxu0 0.0
    %5421 = vmatprep.subr.mxu0 0.0
    %5422 = vmatpush1.msra.mxu0 0.0
    %5423 = vmatprep.subr.mxu0 0.0
    %5424 = vmatpush1.msra.mxu0 0.0
    %5425 = vmatprep.subr.mxu0 0.0
    %5426 = vmatpush1.msra.mxu0 0.0
    %5427 = vmatprep.subr.mxu0 0.0
    %5428 = vmatpush1.msra.mxu0 0.0
    %5429 = vmatprep.subr.mxu0 0.0
    %5430 = vmatpush1.msra.mxu0 0.0
    %5431 = vmatprep.subr.mxu0 0.0
    %5432 = vmatpush1.msra.mxu0 0.0
    %5433 = vmatprep.subr.mxu0 0.0
    %5434 = vmatpush1.msra.mxu0 0.0
    %5435 = vmatprep.subr.mxu0 0.0
    %5436 = vmatpush1.msra.mxu0 0.0
    %5437 = vmatprep.subr.mxu0 0.0
    %5438 = vmatpush1.msra.mxu0 0.0
    %5439 = vmatprep.subr.mxu0 0.0
    %5440 = vmatpush1.msra.mxu0 0.0
    %5441 = vmatprep.subr.mxu0 0.0
    %5442 = vmatpush1.msra.mxu0 0.0
    %5443 = vmatprep.mubr.f32.mxu0 0.0
    %5444 = vmatmul.mubr.f32.gmra.mrb[0].mxu0 %v5297
    %v5445 = vpop.f32.mrb[0].mxu0
    %v5446 = vadd.f32 %v5375, %v5445
    %v5447 = vpop.f32.mrb[0].mxu0
    %v5448 = vadd.f32 %v5377, %v5447
    %5449 = vdwg.mxu0
    %5450 = vmatprep.subr.mxu0 0.0
    %5451 = vmatpush1.msra.mxu0 %v5184
    %5452 = vmatprep.subr.mxu0 0.0
    %5453 = vmatpush1.msra.mxu0 %v5187
    %5454 = vmatprep.subr.mxu0 0.0
    %5455 = vmatpush1.msra.mxu0 %v5190
    %5456 = vmatprep.subr.mxu0 0.0
    %5457 = vmatpush1.msra.mxu0 %v5193
    %5458 = vmatprep.subr.mxu0 0.0
    %5459 = vmatpush1.msra.mxu0 %v5196
    %5460 = vmatprep.subr.mxu0 0.0
    %5461 = vmatpush1.msra.mxu0 %v5199
    %5462 = vmatprep.subr.mxu0 0.0
    %5463 = vmatpush1.msra.mxu0 %v5202
    %5464 = vmatprep.subr.mxu0 0.0
    %5465 = vmatpush1.msra.mxu0 %v5205
    %5466 = vmatprep.subr.mxu0 0.0
    %5467 = vmatpush1.msra.mxu0 %v5208
    %5468 = vmatprep.subr.mxu0 0.0
    %5469 = vmatpush1.msra.mxu0 %v5211
    %5470 = vmatprep.subr.mxu0 0.0
    %5471 = vmatpush1.msra.mxu0 %v5214
    %5472 = vmatprep.subr.mxu0 0.0
    %5473 = vmatpush1.msra.mxu0 %v5217
    %5474 = vmatprep.subr.mxu0 0.0
    %5475 = vmatpush1.msra.mxu0 %v5220
    %5476 = vmatprep.subr.mxu0 0.0
    %5477 = vmatpush1.msra.mxu0 %v5223
    %5478 = vmatprep.subr.mxu0 0.0
    %5479 = vmatpush1.msra.mxu0 %v5226
    %5480 = vmatprep.subr.mxu0 0.0
    %5481 = vmatpush1.msra.mxu0 %v5229
    %5482 = vmatprep.subr.mxu0 0.0
    %5483 = vmatpush1.msra.mxu0 %v5232
    %5484 = vmatprep.subr.mxu0 0.0
    %5485 = vmatpush1.msra.mxu0 %v5235
    %5486 = vmatprep.subr.mxu0 0.0
    %5487 = vmatpush1.msra.mxu0 %v5238
    %5488 = vmatprep.subr.mxu0 0.0
    %5489 = vmatpush1.msra.mxu0 %v5241
    %5490 = vmatprep.subr.mxu0 0.0
    %5491 = vmatpush1.msra.mxu0 %v5244
    %5492 = vmatprep.subr.mxu0 0.0
    %5493 = vmatpush1.msra.mxu0 %v5247
    %5494 = vmatprep.subr.mxu0 0.0
    %5495 = vmatpush1.msra.mxu0 %v5250
    %5496 = vmatprep.subr.mxu0 0.0
    %5497 = vmatpush1.msra.mxu0 %v5253
    %5498 = vmatprep.subr.mxu0 0.0
    %5499 = vmatpush1.msra.mxu0 %v5256
    %5500 = vmatprep.subr.mxu0 0.0
    %5501 = vmatpush1.msra.mxu0 %v5259
    %5502 = vmatprep.subr.mxu0 0.0
    %5503 = vmatpush1.msra.mxu0 %v5262
    %5504 = vmatprep.subr.mxu0 0.0
    %5505 = vmatpush1.msra.mxu0 %v5265
    %5506 = vmatprep.subr.mxu0 0.0
    %5507 = vmatpush1.msra.mxu0 %v5268
    %5508 = vmatprep.subr.mxu0 0.0
    %5509 = vmatpush1.msra.mxu0 %v5271
    %5510 = vmatprep.subr.mxu0 0.0
    %5511 = vmatpush1.msra.mxu0 %v5274
    %5512 = vmatprep.subr.mxu0 0.0
    %5513 = vmatpush1.msra.mxu0 %v5277
    %5514 = vmatprep.mubr.f32.mxu0 %v5179
    %5515 = vmatmul.mubr.f32.gmra.mrb[0].mxu0 %v5178
    %v5516 = vpop.f32.mrb[0].mxu0
    %v5517 = vadd.f32 0.0, %v5516
    %v5518 = vpop.f32.mrb[0].mxu0
    %5519 = vdwg.mxu0
    %5520 = vmatprep.subr.mxu0 0.0
    %5521 = vmatpush1.msra.mxu0 %v5280
    %5522 = vmatprep.subr.mxu0 0.0
    %5523 = vmatpush1.msra.mxu0 %v5283
    %5524 = vmatprep.subr.mxu0 0.0
    %5525 = vmatpush1.msra.mxu0 %v5286
    %5526 = vmatprep.subr.mxu0 0.0
    %5527 = vmatpush1.msra.mxu0 %v5289
    %5528 = vmatprep.subr.mxu0 0.0
    %5529 = vmatpush1.msra.mxu0 %v5292
    %5530 = vmatprep.subr.mxu0 0.0
    %5531 = vmatpush1.msra.mxu0 %v5306
    %5532 = vmatprep.subr.mxu0 0.0
    %5533 = vmatpush1.msra.mxu0 0.0
    %5534 = vmatprep.subr.mxu0 0.0
    %5535 = vmatpush1.msra.mxu0 0.0
    %5536 = vmatprep.subr.mxu0 0.0
    %5537 = vmatpush1.msra.mxu0 0.0
    %5538 = vmatprep.subr.mxu0 0.0
    %5539 = vmatpush1.msra.mxu0 0.0
    %5540 = vmatprep.subr.mxu0 0.0
    %5541 = vmatpush1.msra.mxu0 0.0
    %5542 = vmatprep.subr.mxu0 0.0
    %5543 = vmatpush1.msra.mxu0 0.0
    %5544 = vmatprep.subr.mxu0 0.0
    %5545 = vmatpush1.msra.mxu0 0.0
    %5546 = vmatprep.subr.mxu0 0.0
    %5547 = vmatpush1.msra.mxu0 0.0
    %5548 = vmatprep.subr.mxu0 0.0
    %5549 = vmatpush1.msra.mxu0 0.0
    %5550 = vmatprep.subr.mxu0 0.0
    %5551 = vmatpush1.msra.mxu0 0.0
    %5552 = vmatprep.subr.mxu0 0.0
    %5553 = vmatpush1.msra.mxu0 0.0
    %5554 = vmatprep.subr.mxu0 0.0
    %5555 = vmatpush1.msra.mxu0 0.0
    %5556 = vmatprep.subr.mxu0 0.0
    %5557 = vmatpush1.msra.mxu0 0.0
    %5558 = vmatprep.subr.mxu0 0.0
    %5559 = vmatpush1.msra.mxu0 0.0
    %5560 = vmatprep.subr.mxu0 0.0
    %5561 = vmatpush1.msra.mxu0 0.0
    %5562 = vmatprep.subr.mxu0 0.0
    %5563 = vmatpush1.msra.mxu0 0.0
    %5564 = vmatprep.subr.mxu0 0.0
    %5565 = vmatpush1.msra.mxu0 0.0
    %5566 = vmatprep.subr.mxu0 0.0
    %5567 = vmatpush1.msra.mxu0 0.0
    %5568 = vmatprep.subr.mxu0 0.0
    %5569 = vmatpush1.msra.mxu0 0.0
    %5570 = vmatprep.subr.mxu0 0.0
    %5571 = vmatpush1.msra.mxu0 0.0
    %5572 = vmatprep.subr.mxu0 0.0
    %5573 = vmatpush1.msra.mxu0 0.0
    %5574 = vmatprep.subr.mxu0 0.0
    %5575 = vmatpush1.msra.mxu0 0.0
    %5576 = vmatprep.subr.mxu0 0.0
    %5577 = vmatpush1.msra.mxu0 0.0
    %5578 = vmatprep.subr.mxu0 0.0
    %5579 = vmatpush1.msra.mxu0 0.0
    %5580 = vmatprep.subr.mxu0 0.0
    %5581 = vmatpush1.msra.mxu0 0.0
    %5582 = vmatprep.subr.mxu0 0.0
    %5583 = vmatpush1.msra.mxu0 0.0
    %5584 = vmatprep.mubr.f32.mxu0 0.0
    %5585 = vmatmul.mubr.f32.gmra.mrb[0].mxu0 %v5297
    %v5586 = vpop.f32.mrb[0].mxu0
    %v5587 = vadd.f32 %v5517, %v5586
    %v5588 = vpop.f32.mrb[0].mxu0
    %5589 = vdwg.mxu0
    %v5590 = vadd.f32 %v4308, %v5446
    %v5591 = vadd.f32 %v4309, %v5448
    %v5592 = vadd.f32 %v4310, %v5587
    %s5593 = sld [smem:[#allocation5 + $0x2]]
    %vm5594 = vcmp.ge.f32.partialorder %v5590, 0.0
    %vm5595 = vcmp.ge.f32.partialorder %v5591, 0.0
    %vm5596 = vcmp.ge.f32.partialorder %v5592, 0.0
    %v5597 = vstv %s5593
    %v5598 = vmul.f32 %v5597, %v5590
    %v5599 = vmul.f32 %v5597, %v5591
    %v5600 = vmul.f32 %v5597, %v5592
    %v5601 = vsel %vm5594, %v5590, %v5598
    %v5602 = vsel %vm5595, %v5591, %v5599
    %v5603 = vsel %vm5596, %v5592, %v5600
    %v5604 = vld [vmem:[%s7] sm:$0xff]
    %v5605 = vld [vmem:[%s7 + $0x8] sm:$0xff]
    %v5606 = vld [vmem:[%s7 + $0x10] sm:$0xff]
    %v5607 = vld [vmem:[%s7 + $0x18] sm:$0xff]
    %v5608 = vld [vmem:[%s7 + $0x20] sm:$0xff]
    %v5609 = vld [vmem:[%s7 + $0x28] sm:$0xff]
    %v5610 = vld [vmem:[%s7 + $0x30] sm:$0xff]
    %v5611 = vld [vmem:[%s7 + $0x38] sm:$0xff]
    %v5612 = vld [vmem:[%s7 + $0x40] sm:$0xff]
    %v5613 = vld [vmem:[%s7 + $0x48] sm:$0xff]
    %v5614 = vld [vmem:[%s7 + $0x50] sm:$0xff]
    %v5615 = vld [vmem:[%s7 + $0x58] sm:$0xff]
    %v5616 = vld [vmem:[%s7 + $0x60] sm:$0xff]
    %v5617 = vld [vmem:[%s7 + $0x68] sm:$0xff]
    %v5618 = vld [vmem:[%s7 + $0x70] sm:$0xff]
    %v5619 = vld [vmem:[%s7 + $0x78] sm:$0xff]
    %v5620 = vld [vmem:[%s7 + $0x80] sm:$0xff]
    %v5621 = vld [vmem:[%s7 + $0x88] sm:$0xff]
    %v5622 = vld [vmem:[%s7 + $0x90] sm:$0xff]
    %v5623 = vld [vmem:[%s7 + $0x98] sm:$0xff]
    %v5624 = vld [vmem:[%s7 + $0xa0] sm:$0xff]
    %v5625 = vld [vmem:[%s7 + $0xa8] sm:$0xff]
    %v5626 = vld [vmem:[%s7 + $0xb0] sm:$0xff]
    %v5627 = vld [vmem:[%s7 + $0xb8] sm:$0xff]
    %v5628 = vld [vmem:[%s7 + $0xc0] sm:$0xff]
    %v5629 = vld [vmem:[%s7 + $0xc8] sm:$0xff]
    %v5630 = vld [vmem:[%s7 + $0xd0] sm:$0xff]
    %v5631 = vld [vmem:[%s7 + $0xd8] sm:$0xff]
    %v5632 = vld [vmem:[%s7 + $0xe0] sm:$0xff]
    %v5633 = vld [vmem:[%s7 + $0xe8] sm:$0xff]
    %v5634 = vld [vmem:[%s7 + $0xf0] sm:$0xff]
    %v5635 = vld [vmem:[%s7 + $0xf8] sm:$0xff]
    %v5636 = vld [vmem:[%s7 + $0x100] sm:$0xff]
    %v5637 = vld [vmem:[%s7 + $0x108] sm:$0xff]
    %v5638 = vld [vmem:[%s7 + $0x110] sm:$0xff]
    %v5639 = vld [vmem:[%s7 + $0x118] sm:$0xff]
    %v5640 = vld [vmem:[%s7 + $0x120] sm:$0xff]
    %v5641 = vld [vmem:[%s7 + $0x128] sm:$0xf]
    %v5642 = vld [vmem:[%s8] sm:$0x1]
    %v5644 = vlaneseq
    %v5645 = vshrl.u32 %v5644, 7
    %v5646 = vsub.s32 0, %v5645
    %v5647 = vrot.slane %v5642, %v5646
    %v5650 = vsel %vm345, %v5603, 0
    %v5653 = vsel %vm367, %v5641, 0
    %5655 = vmatprep.subr.mxu0 0.0
    %5656 = vmatpush1.msra.mxu0 %v5604
    %5657 = vmatprep.subr.mxu0 0.0
    %5658 = vmatpush1.msra.mxu0 %v5605
    %5659 = vmatprep.subr.mxu0 0.0
    %5660 = vmatpush1.msra.mxu0 %v5606
    %5661 = vmatprep.subr.mxu0 0.0
    %5662 = vmatpush1.msra.mxu0 %v5607
    %5663 = vmatprep.subr.mxu0 0.0
    %5664 = vmatpush1.msra.mxu0 %v5608
    %5665 = vmatprep.subr.mxu0 0.0
    %5666 = vmatpush1.msra.mxu0 %v5609
    %5667 = vmatprep.subr.mxu0 0.0
    %5668 = vmatpush1.msra.mxu0 %v5610
    %5669 = vmatprep.subr.mxu0 0.0
    %5670 = vmatpush1.msra.mxu0 %v5611
    %5671 = vmatprep.subr.mxu0 0.0
    %5672 = vmatpush1.msra.mxu0 %v5612
    %5673 = vmatprep.subr.mxu0 0.0
    %5674 = vmatpush1.msra.mxu0 %v5613
    %5675 = vmatprep.subr.mxu0 0.0
    %5676 = vmatpush1.msra.mxu0 %v5614
    %5677 = vmatprep.subr.mxu0 0.0
    %5678 = vmatpush1.msra.mxu0 %v5615
    %5679 = vmatprep.subr.mxu0 0.0
    %5680 = vmatpush1.msra.mxu0 %v5616
    %5681 = vmatprep.subr.mxu0 0.0
    %5682 = vmatpush1.msra.mxu0 %v5617
    %5683 = vmatprep.subr.mxu0 0.0
    %5684 = vmatpush1.msra.mxu0 %v5618
    %5685 = vmatprep.subr.mxu0 0.0
    %5686 = vmatpush1.msra.mxu0 %v5619
    %5687 = vmatprep.subr.mxu0 0.0
    %5688 = vmatpush1.msra.mxu0 %v5620
    %5689 = vmatprep.subr.mxu0 0.0
    %5690 = vmatpush1.msra.mxu0 %v5621
    %5691 = vmatprep.subr.mxu0 0.0
    %5692 = vmatpush1.msra.mxu0 %v5622
    %5693 = vmatprep.subr.mxu0 0.0
    %5694 = vmatpush1.msra.mxu0 %v5623
    %5695 = vmatprep.subr.mxu0 0.0
    %5696 = vmatpush1.msra.mxu0 %v5624
    %5697 = vmatprep.subr.mxu0 0.0
    %5698 = vmatpush1.msra.mxu0 %v5625
    %5699 = vmatprep.subr.mxu0 0.0
    %5700 = vmatpush1.msra.mxu0 %v5626
    %5701 = vmatprep.subr.mxu0 0.0
    %5702 = vmatpush1.msra.mxu0 %v5627
    %5703 = vmatprep.subr.mxu0 0.0
    %5704 = vmatpush1.msra.mxu0 %v5628
    %5705 = vmatprep.subr.mxu0 0.0
    %5706 = vmatpush1.msra.mxu0 %v5629
    %5707 = vmatprep.subr.mxu0 0.0
    %5708 = vmatpush1.msra.mxu0 %v5630
    %5709 = vmatprep.subr.mxu0 0.0
    %5710 = vmatpush1.msra.mxu0 %v5631
    %5711 = vmatprep.subr.mxu0 0.0
    %5712 = vmatpush1.msra.mxu0 %v5632
    %5713 = vmatprep.subr.mxu0 0.0
    %5714 = vmatpush1.msra.mxu0 %v5633
    %5715 = vmatprep.subr.mxu0 0.0
    %5716 = vmatpush1.msra.mxu0 %v5634
    %5717 = vmatprep.subr.mxu0 0.0
    %5718 = vmatpush1.msra.mxu0 %v5635
    %5719 = vmatprep.mubr.f32.mxu0 %v5602
    %5720 = vmatmul.mubr.f32.gmra.mrb[0].mxu0 %v5601
    %v5721 = vpop.f32.mrb[0].mxu0
    %v5722 = vadd.f32 %v5647, %v5721
    %v5723 = vpop.f32.mrb[0].mxu0
    %5724 = vdwg.mxu0
    %5725 = vmatprep.subr.mxu0 0.0
    %5726 = vmatpush1.msra.mxu0 %v5636
    %5727 = vmatprep.subr.mxu0 0.0
    %5728 = vmatpush1.msra.mxu0 %v5637
    %5729 = vmatprep.subr.mxu0 0.0
    %5730 = vmatpush1.msra.mxu0 %v5638
    %5731 = vmatprep.subr.mxu0 0.0
    %5732 = vmatpush1.msra.mxu0 %v5639
    %5733 = vmatprep.subr.mxu0 0.0
    %5734 = vmatpush1.msra.mxu0 %v5640
    %5735 = vmatprep.subr.mxu0 0.0
    %5736 = vmatpush1.msra.mxu0 %v5653
    %5737 = vmatprep.subr.mxu0 0.0
    %5738 = vmatpush1.msra.mxu0 0.0
    %5739 = vmatprep.subr.mxu0 0.0
    %5740 = vmatpush1.msra.mxu0 0.0
    %5741 = vmatprep.subr.mxu0 0.0
    %5742 = vmatpush1.msra.mxu0 0.0
    %5743 = vmatprep.subr.mxu0 0.0
    %5744 = vmatpush1.msra.mxu0 0.0
    %5745 = vmatprep.subr.mxu0 0.0
    %5746 = vmatpush1.msra.mxu0 0.0
    %5747 = vmatprep.subr.mxu0 0.0
    %5748 = vmatpush1.msra.mxu0 0.0
    %5749 = vmatprep.subr.mxu0 0.0
    %5750 = vmatpush1.msra.mxu0 0.0
    %5751 = vmatprep.subr.mxu0 0.0
    %5752 = vmatpush1.msra.mxu0 0.0
    %5753 = vmatprep.subr.mxu0 0.0
    %5754 = vmatpush1.msra.mxu0 0.0
    %5755 = vmatprep.subr.mxu0 0.0
    %5756 = vmatpush1.msra.mxu0 0.0
    %5757 = vmatprep.subr.mxu0 0.0
    %5758 = vmatpush1.msra.mxu0 0.0
    %5759 = vmatprep.subr.mxu0 0.0
    %5760 = vmatpush1.msra.mxu0 0.0
    %5761 = vmatprep.subr.mxu0 0.0
    %5762 = vmatpush1.msra.mxu0 0.0
    %5763 = vmatprep.subr.mxu0 0.0
    %5764 = vmatpush1.msra.mxu0 0.0
    %5765 = vmatprep.subr.mxu0 0.0
    %5766 = vmatpush1.msra.mxu0 0.0
    %5767 = vmatprep.subr.mxu0 0.0
    %5768 = vmatpush1.msra.mxu0 0.0
    %5769 = vmatprep.subr.mxu0 0.0
    %5770 = vmatpush1.msra.mxu0 0.0
    %5771 = vmatprep.subr.mxu0 0.0
    %5772 = vmatpush1.msra.mxu0 0.0
    %5773 = vmatprep.subr.mxu0 0.0
    %5774 = vmatpush1.msra.mxu0 0.0
    %5775 = vmatprep.subr.mxu0 0.0
    %5776 = vmatpush1.msra.mxu0 0.0
    %5777 = vmatprep.subr.mxu0 0.0
    %5778 = vmatpush1.msra.mxu0 0.0
    %5779 = vmatprep.subr.mxu0 0.0
    %5780 = vmatpush1.msra.mxu0 0.0
    %5781 = vmatprep.subr.mxu0 0.0
    %5782 = vmatpush1.msra.mxu0 0.0
    %5783 = vmatprep.subr.mxu0 0.0
    %5784 = vmatpush1.msra.mxu0 0.0
    %5785 = vmatprep.subr.mxu0 0.0
    %5786 = vmatpush1.msra.mxu0 0.0
    %5787 = vmatprep.subr.mxu0 0.0
    %5788 = vmatpush1.msra.mxu0 0.0
    %5789 = vmatprep.mubr.f32.mxu0 0.0
    %5790 = vmatmul.mubr.f32.gmra.mrb[0].mxu0 %v5650
    %v5791 = vpop.f32.mrb[0].mxu0
    %v5792 = vadd.f32 %v5722, %v5791
    %v5793 = vpop.f32.mrb[0].mxu0
    %5794 = vdwg.mxu0
    %s5795 = sld [smem:[#allocation5 + $0x3]]
    %vm5796 = vcmp.ge.f32.partialorder %v5792, 0.0
    %v5797 = vstv %s5795
    %v5798 = vmul.f32 %v5797, %v5792
    %v5799 = vsel %vm5796, %v5792, %v5798
    %v5800 = vld [vmem:[%s10] sm:$0xff]
    %v5801 = vld [vmem:[%s10 + $0x8] sm:$0xff]
    %v5802 = vld [vmem:[%s10 + $0x10] sm:$0xff]
    %v5803 = vld [vmem:[%s10 + $0x18] sm:$0xff]
    %v5804 = vld [vmem:[%s10 + $0x20] sm:$0xff]
    %v5805 = vld [vmem:[%s10 + $0x28] sm:$0xff]
    %v5806 = vld [vmem:[%s10 + $0x30] sm:$0xff]
    %v5807 = vld [vmem:[%s10 + $0x38] sm:$0xff]
    %v5808 = vld [vmem:[%s10 + $0x40] sm:$0xff]
    %v5809 = vld [vmem:[%s10 + $0x48] sm:$0xff]
    %v5810 = vld [vmem:[%s10 + $0x50] sm:$0xff]
    %v5811 = vld [vmem:[%s10 + $0x58] sm:$0xff]
    %v5812 = vld [vmem:[%s10 + $0x60] sm:$0xff]
    %v5813 = vld [vmem:[%s10 + $0x68] sm:$0xff]
    %v5814 = vld [vmem:[%s10 + $0x70] sm:$0xff]
    %v5815 = vld [vmem:[%s10 + $0x78] sm:$0xff]
    %v5816 = vld [vmem:[%s10 + $0x80] sm:$0xff]
    %v5817 = vld [vmem:[%s10 + $0x88] sm:$0xff]
    %v5818 = vld [vmem:[%s10 + $0x90] sm:$0xff]
    %v5819 = vld [vmem:[%s10 + $0x98] sm:$0xff]
    %v5820 = vld [vmem:[%s10 + $0xa0] sm:$0xff]
    %v5821 = vld [vmem:[%s10 + $0xa8] sm:$0xff]
    %v5822 = vld [vmem:[%s10 + $0xb0] sm:$0xff]
    %v5823 = vld [vmem:[%s10 + $0xb8] sm:$0xff]
    %v5824 = vld [vmem:[%s10 + $0xc0] sm:$0xff]
    %v5825 = vld [vmem:[%s10 + $0xc8] sm:$0xff]
    %v5826 = vld [vmem:[%s10 + $0xd0] sm:$0xff]
    %v5827 = vld [vmem:[%s10 + $0xd8] sm:$0xff]
    %v5828 = vld [vmem:[%s10 + $0xe0] sm:$0xff]
    %v5829 = vld [vmem:[%s10 + $0xe8] sm:$0xff]
    %v5830 = vld [vmem:[%s10 + $0xf0] sm:$0xff]
    %v5831 = vld [vmem:[%s10 + $0xf8] sm:$0xff]
    %v5832 = vld [vmem:[%s10 + $0x100] sm:$0xff]
    %v5833 = vld [vmem:[%s10 + $0x108] sm:$0xff]
    %v5834 = vld [vmem:[%s10 + $0x110] sm:$0xff]
    %v5835 = vld [vmem:[%s10 + $0x118] sm:$0xff]
    %v5836 = vld [vmem:[%s10 + $0x120] sm:$0xff]
    %v5837 = vld [vmem:[%s10 + $0x128] sm:$0xff]
    %v5838 = vld [vmem:[%s10 + $0x130] sm:$0xff]
    %v5839 = vld [vmem:[%s10 + $0x138] sm:$0xff]
    %v5840 = vld [vmem:[%s10 + $0x140] sm:$0xff]
    %v5841 = vld [vmem:[%s10 + $0x148] sm:$0xff]
    %v5842 = vld [vmem:[%s10 + $0x150] sm:$0xff]
    %v5843 = vld [vmem:[%s10 + $0x158] sm:$0xff]
    %v5844 = vld [vmem:[%s10 + $0x160] sm:$0xff]
    %v5845 = vld [vmem:[%s10 + $0x168] sm:$0xff]
    %v5846 = vld [vmem:[%s10 + $0x170] sm:$0xff]
    %v5847 = vld [vmem:[%s10 + $0x178] sm:$0xff]
    %v5848 = vld [vmem:[%s10 + $0x180] sm:$0xff]
    %v5849 = vld [vmem:[%s10 + $0x188] sm:$0xff]
    %v5850 = vld [vmem:[%s10 + $0x190] sm:$0xff]
    %v5851 = vld [vmem:[%s10 + $0x198] sm:$0xff]
    %v5852 = vld [vmem:[%s10 + $0x1a0] sm:$0xff]
    %v5853 = vld [vmem:[%s10 + $0x1a8] sm:$0xff]
    %v5854 = vld [vmem:[%s10 + $0x1b0] sm:$0xff]
    %v5855 = vld [vmem:[%s10 + $0x1b8] sm:$0xff]
    %v5856 = vld [vmem:[%s10 + $0x1c0] sm:$0xff]
    %v5857 = vld [vmem:[%s10 + $0x1c8] sm:$0xff]
    %v5858 = vld [vmem:[%s10 + $0x1d0] sm:$0xff]
    %v5859 = vld [vmem:[%s10 + $0x1d8] sm:$0xff]
    %v5860 = vld [vmem:[%s10 + $0x1e0] sm:$0xff]
    %v5861 = vld [vmem:[%s10 + $0x1e8] sm:$0xff]
    %v5862 = vld [vmem:[%s10 + $0x1f0] sm:$0xff]
    %v5863 = vld [vmem:[%s10 + $0x1f8] sm:$0xff]
    %v5864 = vld [vmem:[%s10 + $0x200] sm:$0xff]
    %v5865 = vld [vmem:[%s10 + $0x208] sm:$0xff]
    %v5866 = vld [vmem:[%s10 + $0x210] sm:$0xff]
    %v5867 = vld [vmem:[%s10 + $0x218] sm:$0xff]
    %v5868 = vld [vmem:[%s10 + $0x220] sm:$0xff]
    %v5869 = vld [vmem:[%s10 + $0x228] sm:$0xff]
    %v5870 = vld [vmem:[%s10 + $0x230] sm:$0xff]
    %v5871 = vld [vmem:[%s10 + $0x238] sm:$0xff]
    %v5872 = vld [vmem:[%s10 + $0x240] sm:$0xff]
    %v5873 = vld [vmem:[%s10 + $0x248] sm:$0xff]
    %v5874 = vld [vmem:[%s10 + $0x250] sm:$0xff]
    %v5875 = vld [vmem:[%s10 + $0x258] sm:$0xff]
    %v5876 = vld [vmem:[%s10 + $0x260] sm:$0xff]
    %v5877 = vld [vmem:[%s10 + $0x268] sm:$0xff]
    %v5878 = vld [vmem:[%s10 + $0x270] sm:$0xff]
    %v5879 = vld [vmem:[%s10 + $0x278] sm:$0xff]
    %v5880 = vld [vmem:[%s10 + $0x280] sm:$0xff]
    %v5881 = vld [vmem:[%s10 + $0x288] sm:$0xff]
    %v5882 = vld [vmem:[%s10 + $0x290] sm:$0xff]
    %v5883 = vld [vmem:[%s10 + $0x298] sm:$0xff]
    %v5884 = vld [vmem:[%s10 + $0x2a0] sm:$0xff]
    %v5885 = vld [vmem:[%s10 + $0x2a8] sm:$0xff]
    %v5886 = vld [vmem:[%s10 + $0x2b0] sm:$0xff]
    %v5887 = vld [vmem:[%s10 + $0x2b8] sm:$0xff]
    %v5888 = vld [vmem:[%s10 + $0x2c0] sm:$0xff]
    %v5889 = vld [vmem:[%s10 + $0x2c8] sm:$0xff]
    %v5890 = vld [vmem:[%s10 + $0x2d0] sm:$0xff]
    %v5891 = vld [vmem:[%s10 + $0x2d8] sm:$0xff]
    %v5892 = vld [vmem:[%s10 + $0x2e0] sm:$0xff]
    %v5893 = vld [vmem:[%s10 + $0x2e8] sm:$0xff]
    %v5894 = vld [vmem:[%s10 + $0x2f0] sm:$0xff]
    %v5895 = vld [vmem:[%s10 + $0x2f8] sm:$0xff]
    %v5896 = vld [vmem:[%s10 + $0x300] sm:$0xff]
    %v5897 = vld [vmem:[%s10 + $0x308] sm:$0xff]
    %v5898 = vld [vmem:[%s10 + $0x310] sm:$0xff]
    %v5899 = vld [vmem:[%s10 + $0x318] sm:$0xff]
    %v5900 = vld [vmem:[%s10 + $0x320] sm:$0xff]
    %v5901 = vld [vmem:[%s10 + $0x328] sm:$0xff]
    %v5902 = vld [vmem:[%s10 + $0x330] sm:$0xff]
    %v5903 = vld [vmem:[%s10 + $0x338] sm:$0xff]
    %v5904 = vld [vmem:[%s10 + $0x340] sm:$0xff]
    %v5905 = vld [vmem:[%s10 + $0x348] sm:$0xff]
    %v5906 = vld [vmem:[%s10 + $0x350] sm:$0xff]
    %v5907 = vld [vmem:[%s10 + $0x358] sm:$0xff]
    %v5908 = vld [vmem:[%s10 + $0x360] sm:$0xff]
    %v5909 = vld [vmem:[%s10 + $0x368] sm:$0xff]
    %v5910 = vld [vmem:[%s10 + $0x370] sm:$0xff]
    %v5911 = vld [vmem:[%s10 + $0x378] sm:$0xf]
    %v5912 = vld [vmem:[%s10 + $0x380] sm:$0xf]
    %v5913 = vld [vmem:[%s10 + $0x388] sm:$0xf]
    %v5914 = vld [vmem:[%s11] sm:$0x7]
    %v5916 = vlaneseq
    %v5917 = vshrl.u32 %v5916, 7
    %v5918 = vsub.s32 0, %v5917
    %v5919 = vrot.slane %v5914, %v5918
    %v5920 = vlaneseq
    %v5921 = vshrl.u32 %v5920, 7
    %v5922 = vsub.s32 1, %v5921
    %v5923 = vrot.slane %v5914, %v5922
    %v5924 = vlaneseq
    %v5925 = vshrl.u32 %v5924, 7
    %v5926 = vsub.s32 2, %v5925
    %v5927 = vrot.slane %v5914, %v5926
    %v5932 = vsel %vm367, %v5911, 0
    %v5935 = vsel %vm367, %v5912, 0
    %v5938 = vsel %vm367, %v5913, 0
    %5940 = vmatprep.subr.mxu0 %v5801
    %5941 = vmatpush1.msra.mxu0 %v5800
    %5942 = vmatprep.subr.mxu0 %v5804
    %5943 = vmatpush1.msra.mxu0 %v5803
    %5944 = vmatprep.subr.mxu0 %v5807
    %5945 = vmatpush1.msra.mxu0 %v5806
    %5946 = vmatprep.subr.mxu0 %v5810
    %5947 = vmatpush1.msra.mxu0 %v5809
    %5948 = vmatprep.subr.mxu0 %v5813
    %5949 = vmatpush1.msra.mxu0 %v5812
    %5950 = vmatprep.subr.mxu0 %v5816
    %5951 = vmatpush1.msra.mxu0 %v5815
    %5952 = vmatprep.subr.mxu0 %v5819
    %5953 = vmatpush1.msra.mxu0 %v5818
    %5954 = vmatprep.subr.mxu0 %v5822
    %5955 = vmatpush1.msra.mxu0 %v5821
    %5956 = vmatprep.subr.mxu0 %v5825
    %5957 = vmatpush1.msra.mxu0 %v5824
    %5958 = vmatprep.subr.mxu0 %v5828
    %5959 = vmatpush1.msra.mxu0 %v5827
    %5960 = vmatprep.subr.mxu0 %v5831
    %5961 = vmatpush1.msra.mxu0 %v5830
    %5962 = vmatprep.subr.mxu0 %v5834
    %5963 = vmatpush1.msra.mxu0 %v5833
    %5964 = vmatprep.subr.mxu0 %v5837
    %5965 = vmatpush1.msra.mxu0 %v5836
    %5966 = vmatprep.subr.mxu0 %v5840
    %5967 = vmatpush1.msra.mxu0 %v5839
    %5968 = vmatprep.subr.mxu0 %v5843
    %5969 = vmatpush1.msra.mxu0 %v5842
    %5970 = vmatprep.subr.mxu0 %v5846
    %5971 = vmatpush1.msra.mxu0 %v5845
    %5972 = vmatprep.subr.mxu0 %v5849
    %5973 = vmatpush1.msra.mxu0 %v5848
    %5974 = vmatprep.subr.mxu0 %v5852
    %5975 = vmatpush1.msra.mxu0 %v5851
    %5976 = vmatprep.subr.mxu0 %v5855
    %5977 = vmatpush1.msra.mxu0 %v5854
    %5978 = vmatprep.subr.mxu0 %v5858
    %5979 = vmatpush1.msra.mxu0 %v5857
    %5980 = vmatprep.subr.mxu0 %v5861
    %5981 = vmatpush1.msra.mxu0 %v5860
    %5982 = vmatprep.subr.mxu0 %v5864
    %5983 = vmatpush1.msra.mxu0 %v5863
    %5984 = vmatprep.subr.mxu0 %v5867
    %5985 = vmatpush1.msra.mxu0 %v5866
    %5986 = vmatprep.subr.mxu0 %v5870
    %5987 = vmatpush1.msra.mxu0 %v5869
    %5988 = vmatprep.subr.mxu0 %v5873
    %5989 = vmatpush1.msra.mxu0 %v5872
    %5990 = vmatprep.subr.mxu0 %v5876
    %5991 = vmatpush1.msra.mxu0 %v5875
    %5992 = vmatprep.subr.mxu0 %v5879
    %5993 = vmatpush1.msra.mxu0 %v5878
    %5994 = vmatprep.subr.mxu0 %v5882
    %5995 = vmatpush1.msra.mxu0 %v5881
    %5996 = vmatprep.subr.mxu0 %v5885
    %5997 = vmatpush1.msra.mxu0 %v5884
    %5998 = vmatprep.subr.mxu0 %v5888
    %5999 = vmatpush1.msra.mxu0 %v5887
    %6000 = vmatprep.subr.mxu0 %v5891
    %6001 = vmatpush1.msra.mxu0 %v5890
    %6002 = vmatprep.subr.mxu0 %v5894
    %6003 = vmatpush1.msra.mxu0 %v5893
    %6004 = vmatprep.mubr.f32.mxu0 %v75
    %6005 = vmatmul.mubr.f32.gmra.mrb[0].mxu0 %v74
    %v6006 = vpop.f32.mrb[0].mxu0
    %v6007 = vadd.f32 %v5919, %v6006
    %v6008 = vpop.f32.mrb[0].mxu0
    %v6009 = vadd.f32 %v5923, %v6008
    %6010 = vmatprep.mubr.f32.mxu0 %v78
    %6011 = vmatmul.mubr.f32.gmra.mrb[0].mxu0 %v77
    %v6012 = vpop.f32.mrb[0].mxu0
    %v6013 = vadd.f32 %v5919, %v6012
    %v6014 = vpop.f32.mrb[0].mxu0
    %v6015 = vadd.f32 %v5923, %v6014
    %6016 = vmatprep.mubr.f32.mxu0 %v81
    %6017 = vmatmul.mubr.f32.gmra.mrb[0].mxu0 %v80
    %v6018 = vpop.f32.mrb[0].mxu0
    %v6019 = vadd.f32 %v5919, %v6018
    %v6020 = vpop.f32.mrb[0].mxu0
    %v6021 = vadd.f32 %v5923, %v6020
    %6022 = vmatprep.mubr.f32.mxu0 %v84
    %6023 = vmatmul.mubr.f32.gmra.mrb[0].mxu0 %v83
    %v6024 = vpop.f32.mrb[0].mxu0
    %v6025 = vadd.f32 %v5919, %v6024
    %v6026 = vpop.f32.mrb[0].mxu0
    %v6027 = vadd.f32 %v5923, %v6026
    %6028 = vmatprep.mubr.f32.mxu0 %v87
    %6029 = vmatmul.mubr.f32.gmra.mrb[0].mxu0 %v86
    %v6030 = vpop.f32.mrb[0].mxu0
    %v6031 = vadd.f32 %v5919, %v6030
    %v6032 = vpop.f32.mrb[0].mxu0
    %v6033 = vadd.f32 %v5923, %v6032
    %6034 = vmatprep.mubr.f32.mxu0 %v90
    %6035 = vmatmul.mubr.f32.gmra.mrb[0].mxu0 %v89
    %v6036 = vpop.f32.mrb[0].mxu0
    %v6037 = vadd.f32 %v5919, %v6036
    %v6038 = vpop.f32.mrb[0].mxu0
    %v6039 = vadd.f32 %v5923, %v6038
    %6040 = vmatprep.mubr.f32.mxu0 %v93
    %6041 = vmatmul.mubr.f32.gmra.mrb[0].mxu0 %v92
    %v6042 = vpop.f32.mrb[0].mxu0
    %v6043 = vadd.f32 %v5919, %v6042
    %v6044 = vpop.f32.mrb[0].mxu0
    %v6045 = vadd.f32 %v5923, %v6044
    %6046 = vmatprep.mubr.f32.mxu0 %v96
    %6047 = vmatmul.mubr.f32.gmra.mrb[0].mxu0 %v95
    %v6048 = vpop.f32.mrb[0].mxu0
    %v6049 = vadd.f32 %v5919, %v6048
    %v6050 = vpop.f32.mrb[0].mxu0
    %v6051 = vadd.f32 %v5923, %v6050
    %6052 = vmatprep.mubr.f32.mxu0 %v99
    %6053 = vmatmul.mubr.f32.gmra.mrb[0].mxu0 %v98
    %v6054 = vpop.f32.mrb[0].mxu0
    %v6055 = vadd.f32 %v5919, %v6054
    %v6056 = vpop.f32.mrb[0].mxu0
    %v6057 = vadd.f32 %v5923, %v6056
    %6058 = vmatprep.mubr.f32.mxu0 %v102
    %6059 = vmatmul.mubr.f32.gmra.mrb[0].mxu0 %v101
    %v6060 = vpop.f32.mrb[0].mxu0
    %v6061 = vadd.f32 %v5919, %v6060
    %v6062 = vpop.f32.mrb[0].mxu0
    %v6063 = vadd.f32 %v5923, %v6062
    %6064 = vmatprep.mubr.f32.mxu0 %v105
    %6065 = vmatmul.mubr.f32.gmra.mrb[0].mxu0 %v104
    %v6066 = vpop.f32.mrb[0].mxu0
    %v6067 = vadd.f32 %v5919, %v6066
    %v6068 = vpop.f32.mrb[0].mxu0
    %v6069 = vadd.f32 %v5923, %v6068
    %6070 = vmatprep.mubr.f32.mxu0 %v108
    %6071 = vmatmul.mubr.f32.gmra.mrb[0].mxu0 %v107
    %v6072 = vpop.f32.mrb[0].mxu0
    %v6073 = vadd.f32 %v5919, %v6072
    %v6074 = vpop.f32.mrb[0].mxu0
    %v6075 = vadd.f32 %v5923, %v6074
    %6076 = vmatprep.mubr.f32.mxu0 %v111
    %6077 = vmatmul.mubr.f32.gmra.mrb[0].mxu0 %v110
    %v6078 = vpop.f32.mrb[0].mxu0
    %v6079 = vadd.f32 %v5919, %v6078
    %v6080 = vpop.f32.mrb[0].mxu0
    %v6081 = vadd.f32 %v5923, %v6080
    %6082 = vmatprep.mubr.f32.mxu0 %v114
    %6083 = vmatmul.mubr.f32.gmra.mrb[0].mxu0 %v113
    %v6084 = vpop.f32.mrb[0].mxu0
    %v6085 = vadd.f32 %v5919, %v6084
    %v6086 = vpop.f32.mrb[0].mxu0
    %v6087 = vadd.f32 %v5923, %v6086
    %6088 = vdwg.mxu0
    %6089 = vmatprep.subr.mxu0 %v5897
    %6090 = vmatpush1.msra.mxu0 %v5896
    %6091 = vmatprep.subr.mxu0 %v5900
    %6092 = vmatpush1.msra.mxu0 %v5899
    %6093 = vmatprep.subr.mxu0 %v5903
    %6094 = vmatpush1.msra.mxu0 %v5902
    %6095 = vmatprep.subr.mxu0 %v5906
    %6096 = vmatpush1.msra.mxu0 %v5905
    %6097 = vmatprep.subr.mxu0 %v5909
    %6098 = vmatpush1.msra.mxu0 %v5908
    %6099 = vmatprep.subr.mxu0 %v5935
    %6100 = vmatpush1.msra.mxu0 %v5932
    %6101 = vmatprep.subr.mxu0 0.0
    %6102 = vmatpush1.msra.mxu0 0.0
    %6103 = vmatprep.subr.mxu0 0.0
    %6104 = vmatpush1.msra.mxu0 0.0
    %6105 = vmatprep.subr.mxu0 0.0
    %6106 = vmatpush1.msra.mxu0 0.0
    %6107 = vmatprep.subr.mxu0 0.0
    %6108 = vmatpush1.msra.mxu0 0.0
    %6109 = vmatprep.subr.mxu0 0.0
    %6110 = vmatpush1.msra.mxu0 0.0
    %6111 = vmatprep.subr.mxu0 0.0
    %6112 = vmatpush1.msra.mxu0 0.0
    %6113 = vmatprep.subr.mxu0 0.0
    %6114 = vmatpush1.msra.mxu0 0.0
    %6115 = vmatprep.subr.mxu0 0.0
    %6116 = vmatpush1.msra.mxu0 0.0
    %6117 = vmatprep.subr.mxu0 0.0
    %6118 = vmatpush1.msra.mxu0 0.0
    %6119 = vmatprep.subr.mxu0 0.0
    %6120 = vmatpush1.msra.mxu0 0.0
    %6121 = vmatprep.subr.mxu0 0.0
    %6122 = vmatpush1.msra.mxu0 0.0
    %6123 = vmatprep.subr.mxu0 0.0
    %6124 = vmatpush1.msra.mxu0 0.0
    %6125 = vmatprep.subr.mxu0 0.0
    %6126 = vmatpush1.msra.mxu0 0.0
    %6127 = vmatprep.subr.mxu0 0.0
    %6128 = vmatpush1.msra.mxu0 0.0
    %6129 = vmatprep.subr.mxu0 0.0
    %6130 = vmatpush1.msra.mxu0 0.0
    %6131 = vmatprep.subr.mxu0 0.0
    %6132 = vmatpush1.msra.mxu0 0.0
    %6133 = vmatprep.subr.mxu0 0.0
    %6134 = vmatpush1.msra.mxu0 0.0
    %6135 = vmatprep.subr.mxu0 0.0
    %6136 = vmatpush1.msra.mxu0 0.0
    %6137 = vmatprep.subr.mxu0 0.0
    %6138 = vmatpush1.msra.mxu0 0.0
    %6139 = vmatprep.subr.mxu0 0.0
    %6140 = vmatpush1.msra.mxu0 0.0
    %6141 = vmatprep.subr.mxu0 0.0
    %6142 = vmatpush1.msra.mxu0 0.0
    %6143 = vmatprep.subr.mxu0 0.0
    %6144 = vmatpush1.msra.mxu0 0.0
    %6145 = vmatprep.subr.mxu0 0.0
    %6146 = vmatpush1.msra.mxu0 0.0
    %6147 = vmatprep.subr.mxu0 0.0
    %6148 = vmatpush1.msra.mxu0 0.0
    %6149 = vmatprep.subr.mxu0 0.0
    %6150 = vmatpush1.msra.mxu0 0.0
    %6151 = vmatprep.subr.mxu0 0.0
    %6152 = vmatpush1.msra.mxu0 0.0
    %6153 = vmatprep.mubr.f32.mxu0 0.0
    %6154 = vmatmul.mubr.f32.gmra.mrb[0].mxu0 %v792
    %v6155 = vpop.f32.mrb[0].mxu0
    %v6156 = vadd.f32 %v6007, %v6155
    %v6157 = vpop.f32.mrb[0].mxu0
    %v6158 = vadd.f32 %v6009, %v6157
    %6159 = vmatprep.mubr.f32.mxu0 0.0
    %6160 = vmatmul.mubr.f32.gmra.mrb[0].mxu0 %v795
    %v6161 = vpop.f32.mrb[0].mxu0
    %v6162 = vadd.f32 %v6013, %v6161
    %v6163 = vpop.f32.mrb[0].mxu0
    %v6164 = vadd.f32 %v6015, %v6163
    %6165 = vmatprep.mubr.f32.mxu0 0.0
    %6166 = vmatmul.mubr.f32.gmra.mrb[0].mxu0 %v798
    %v6167 = vpop.f32.mrb[0].mxu0
    %v6168 = vadd.f32 %v6019, %v6167
    %v6169 = vpop.f32.mrb[0].mxu0
    %v6170 = vadd.f32 %v6021, %v6169
    %6171 = vmatprep.mubr.f32.mxu0 0.0
    %6172 = vmatmul.mubr.f32.gmra.mrb[0].mxu0 %v801
    %v6173 = vpop.f32.mrb[0].mxu0
    %v6174 = vadd.f32 %v6025, %v6173
    %v6175 = vpop.f32.mrb[0].mxu0
    %v6176 = vadd.f32 %v6027, %v6175
    %6177 = vmatprep.mubr.f32.mxu0 0.0
    %6178 = vmatmul.mubr.f32.gmra.mrb[0].mxu0 %v804
    %v6179 = vpop.f32.mrb[0].mxu0
    %v6180 = vadd.f32 %v6031, %v6179
    %v6181 = vpop.f32.mrb[0].mxu0
    %v6182 = vadd.f32 %v6033, %v6181
    %6183 = vmatprep.mubr.f32.mxu0 0.0
    %6184 = vmatmul.mubr.f32.gmra.mrb[0].mxu0 %v807
    %v6185 = vpop.f32.mrb[0].mxu0
    %v6186 = vadd.f32 %v6037, %v6185
    %v6187 = vpop.f32.mrb[0].mxu0
    %v6188 = vadd.f32 %v6039, %v6187
    %6189 = vmatprep.mubr.f32.mxu0 0.0
    %6190 = vmatmul.mubr.f32.gmra.mrb[0].mxu0 %v810
    %v6191 = vpop.f32.mrb[0].mxu0
    %v6192 = vadd.f32 %v6043, %v6191
    %v6193 = vpop.f32.mrb[0].mxu0
    %v6194 = vadd.f32 %v6045, %v6193
    %6195 = vmatprep.mubr.f32.mxu0 0.0
    %6196 = vmatmul.mubr.f32.gmra.mrb[0].mxu0 %v347
    %v6197 = vpop.f32.mrb[0].mxu0
    %v6198 = vadd.f32 %v6049, %v6197
    %v6199 = vpop.f32.mrb[0].mxu0
    %v6200 = vadd.f32 %v6051, %v6199
    %6201 = vmatprep.mubr.f32.mxu0 0.0
    %6202 = vmatmul.mubr.f32.gmra.mrb[0].mxu0 %v350
    %v6203 = vpop.f32.mrb[0].mxu0
    %v6204 = vadd.f32 %v6055, %v6203
    %v6205 = vpop.f32.mrb[0].mxu0
    %v6206 = vadd.f32 %v6057, %v6205
    %6207 = vmatprep.mubr.f32.mxu0 0.0
    %6208 = vmatmul.mubr.f32.gmra.mrb[0].mxu0 %v353
    %v6209 = vpop.f32.mrb[0].mxu0
    %v6210 = vadd.f32 %v6061, %v6209
    %v6211 = vpop.f32.mrb[0].mxu0
    %v6212 = vadd.f32 %v6063, %v6211
    %6213 = vmatprep.mubr.f32.mxu0 0.0
    %6214 = vmatmul.mubr.f32.gmra.mrb[0].mxu0 %v356
    %v6215 = vpop.f32.mrb[0].mxu0
    %v6216 = vadd.f32 %v6067, %v6215
    %v6217 = vpop.f32.mrb[0].mxu0
    %v6218 = vadd.f32 %v6069, %v6217
    %6219 = vmatprep.mubr.f32.mxu0 0.0
    %6220 = vmatmul.mubr.f32.gmra.mrb[0].mxu0 %v359
    %v6221 = vpop.f32.mrb[0].mxu0
    %v6222 = vadd.f32 %v6073, %v6221
    %v6223 = vpop.f32.mrb[0].mxu0
    %v6224 = vadd.f32 %v6075, %v6223
    %6225 = vmatprep.mubr.f32.mxu0 0.0
    %6226 = vmatmul.mubr.f32.gmra.mrb[0].mxu0 %v362
    %v6227 = vpop.f32.mrb[0].mxu0
    %v6228 = vadd.f32 %v6079, %v6227
    %v6229 = vpop.f32.mrb[0].mxu0
    %v6230 = vadd.f32 %v6081, %v6229
    %6231 = vmatprep.mubr.f32.mxu0 0.0
    %6232 = vmatmul.mubr.f32.gmra.mrb[0].mxu0 %v365
    %v6233 = vpop.f32.mrb[0].mxu0
    %v6234 = vadd.f32 %v6085, %v6233
    %v6235 = vpop.f32.mrb[0].mxu0
    %v6236 = vadd.f32 %v6087, %v6235
    %6237 = vdwg.mxu0
    %6238 = vmatprep.subr.mxu0 0.0
    %6239 = vmatpush1.msra.mxu0 %v5802
    %6240 = vmatprep.subr.mxu0 0.0
    %6241 = vmatpush1.msra.mxu0 %v5805
    %6242 = vmatprep.subr.mxu0 0.0
    %6243 = vmatpush1.msra.mxu0 %v5808
    %6244 = vmatprep.subr.mxu0 0.0
    %6245 = vmatpush1.msra.mxu0 %v5811
    %6246 = vmatprep.subr.mxu0 0.0
    %6247 = vmatpush1.msra.mxu0 %v5814
    %6248 = vmatprep.subr.mxu0 0.0
    %6249 = vmatpush1.msra.mxu0 %v5817
    %6250 = vmatprep.subr.mxu0 0.0
    %6251 = vmatpush1.msra.mxu0 %v5820
    %6252 = vmatprep.subr.mxu0 0.0
    %6253 = vmatpush1.msra.mxu0 %v5823
    %6254 = vmatprep.subr.mxu0 0.0
    %6255 = vmatpush1.msra.mxu0 %v5826
    %6256 = vmatprep.subr.mxu0 0.0
    %6257 = vmatpush1.msra.mxu0 %v5829
    %6258 = vmatprep.subr.mxu0 0.0
    %6259 = vmatpush1.msra.mxu0 %v5832
    %6260 = vmatprep.subr.mxu0 0.0
    %6261 = vmatpush1.msra.mxu0 %v5835
    %6262 = vmatprep.subr.mxu0 0.0
    %6263 = vmatpush1.msra.mxu0 %v5838
    %6264 = vmatprep.subr.mxu0 0.0
    %6265 = vmatpush1.msra.mxu0 %v5841
    %6266 = vmatprep.subr.mxu0 0.0
    %6267 = vmatpush1.msra.mxu0 %v5844
    %6268 = vmatprep.subr.mxu0 0.0
    %6269 = vmatpush1.msra.mxu0 %v5847
    %6270 = vmatprep.subr.mxu0 0.0
    %6271 = vmatpush1.msra.mxu0 %v5850
    %6272 = vmatprep.subr.mxu0 0.0
    %6273 = vmatpush1.msra.mxu0 %v5853
    %6274 = vmatprep.subr.mxu0 0.0
    %6275 = vmatpush1.msra.mxu0 %v5856
    %6276 = vmatprep.subr.mxu0 0.0
    %6277 = vmatpush1.msra.mxu0 %v5859
    %6278 = vmatprep.subr.mxu0 0.0
    %6279 = vmatpush1.msra.mxu0 %v5862
    %6280 = vmatprep.subr.mxu0 0.0
    %6281 = vmatpush1.msra.mxu0 %v5865
    %6282 = vmatprep.subr.mxu0 0.0
    %6283 = vmatpush1.msra.mxu0 %v5868
    %6284 = vmatprep.subr.mxu0 0.0
    %6285 = vmatpush1.msra.mxu0 %v5871
    %6286 = vmatprep.subr.mxu0 0.0
    %6287 = vmatpush1.msra.mxu0 %v5874
    %6288 = vmatprep.subr.mxu0 0.0
    %6289 = vmatpush1.msra.mxu0 %v5877
    %6290 = vmatprep.subr.mxu0 0.0
    %6291 = vmatpush1.msra.mxu0 %v5880
    %6292 = vmatprep.subr.mxu0 0.0
    %6293 = vmatpush1.msra.mxu0 %v5883
    %6294 = vmatprep.subr.mxu0 0.0
    %6295 = vmatpush1.msra.mxu0 %v5886
    %6296 = vmatprep.subr.mxu0 0.0
    %6297 = vmatpush1.msra.mxu0 %v5889
    %6298 = vmatprep.subr.mxu0 0.0
    %6299 = vmatpush1.msra.mxu0 %v5892
    %6300 = vmatprep.subr.mxu0 0.0
    %6301 = vmatpush1.msra.mxu0 %v5895
    %6302 = vmatprep.mubr.f32.mxu0 %v75
    %6303 = vmatmul.mubr.f32.gmra.mrb[0].mxu0 %v74
    %v6304 = vpop.f32.mrb[0].mxu0
    %v6305 = vadd.f32 %v5927, %v6304
    %v6306 = vpop.f32.mrb[0].mxu0
    %6307 = vmatprep.mubr.f32.mxu0 %v78
    %6308 = vmatmul.mubr.f32.gmra.mrb[0].mxu0 %v77
    %v6309 = vpop.f32.mrb[0].mxu0
    %v6310 = vadd.f32 %v5927, %v6309
    %v6311 = vpop.f32.mrb[0].mxu0
    %6312 = vmatprep.mubr.f32.mxu0 %v81
    %6313 = vmatmul.mubr.f32.gmra.mrb[0].mxu0 %v80
    %v6314 = vpop.f32.mrb[0].mxu0
    %v6315 = vadd.f32 %v5927, %v6314
    %v6316 = vpop.f32.mrb[0].mxu0
    %6317 = vmatprep.mubr.f32.mxu0 %v84
    %6318 = vmatmul.mubr.f32.gmra.mrb[0].mxu0 %v83
    %v6319 = vpop.f32.mrb[0].mxu0
    %v6320 = vadd.f32 %v5927, %v6319
    %v6321 = vpop.f32.mrb[0].mxu0
    %6322 = vmatprep.mubr.f32.mxu0 %v87
    %6323 = vmatmul.mubr.f32.gmra.mrb[0].mxu0 %v86
    %v6324 = vpop.f32.mrb[0].mxu0
    %v6325 = vadd.f32 %v5927, %v6324
    %v6326 = vpop.f32.mrb[0].mxu0
    %6327 = vmatprep.mubr.f32.mxu0 %v90
    %6328 = vmatmul.mubr.f32.gmra.mrb[0].mxu0 %v89
    %v6329 = vpop.f32.mrb[0].mxu0
    %v6330 = vadd.f32 %v5927, %v6329
    %v6331 = vpop.f32.mrb[0].mxu0
    %6332 = vmatprep.mubr.f32.mxu0 %v93
    %6333 = vmatmul.mubr.f32.gmra.mrb[0].mxu0 %v92
    %v6334 = vpop.f32.mrb[0].mxu0
    %v6335 = vadd.f32 %v5927, %v6334
    %v6336 = vpop.f32.mrb[0].mxu0
    %6337 = vmatprep.mubr.f32.mxu0 %v96
    %6338 = vmatmul.mubr.f32.gmra.mrb[0].mxu0 %v95
    %v6339 = vpop.f32.mrb[0].mxu0
    %v6340 = vadd.f32 %v5927, %v6339
    %v6341 = vpop.f32.mrb[0].mxu0
    %6342 = vmatprep.mubr.f32.mxu0 %v99
    %6343 = vmatmul.mubr.f32.gmra.mrb[0].mxu0 %v98
    %v6344 = vpop.f32.mrb[0].mxu0
    %v6345 = vadd.f32 %v5927, %v6344
    %v6346 = vpop.f32.mrb[0].mxu0
    %6347 = vmatprep.mubr.f32.mxu0 %v102
    %6348 = vmatmul.mubr.f32.gmra.mrb[0].mxu0 %v101
    %v6349 = vpop.f32.mrb[0].mxu0
    %v6350 = vadd.f32 %v5927, %v6349
    %v6351 = vpop.f32.mrb[0].mxu0
    %6352 = vmatprep.mubr.f32.mxu0 %v105
    %6353 = vmatmul.mubr.f32.gmra.mrb[0].mxu0 %v104
    %v6354 = vpop.f32.mrb[0].mxu0
    %v6355 = vadd.f32 %v5927, %v6354
    %v6356 = vpop.f32.mrb[0].mxu0
    %6357 = vmatprep.mubr.f32.mxu0 %v108
    %6358 = vmatmul.mubr.f32.gmra.mrb[0].mxu0 %v107
    %v6359 = vpop.f32.mrb[0].mxu0
    %v6360 = vadd.f32 %v5927, %v6359
    %v6361 = vpop.f32.mrb[0].mxu0
    %6362 = vmatprep.mubr.f32.mxu0 %v111
    %6363 = vmatmul.mubr.f32.gmra.mrb[0].mxu0 %v110
    %v6364 = vpop.f32.mrb[0].mxu0
    %v6365 = vadd.f32 %v5927, %v6364
    %v6366 = vpop.f32.mrb[0].mxu0
    %6367 = vmatprep.mubr.f32.mxu0 %v114
    %6368 = vmatmul.mubr.f32.gmra.mrb[0].mxu0 %v113
    %v6369 = vpop.f32.mrb[0].mxu0
    %v6370 = vadd.f32 %v5927, %v6369
    %v6371 = vpop.f32.mrb[0].mxu0
    %6372 = vdwg.mxu0
    %6373 = vmatprep.subr.mxu0 0.0
    %6374 = vmatpush1.msra.mxu0 %v5898
    %6375 = vmatprep.subr.mxu0 0.0
    %6376 = vmatpush1.msra.mxu0 %v5901
    %6377 = vmatprep.subr.mxu0 0.0
    %6378 = vmatpush1.msra.mxu0 %v5904
    %6379 = vmatprep.subr.mxu0 0.0
    %6380 = vmatpush1.msra.mxu0 %v5907
    %6381 = vmatprep.subr.mxu0 0.0
    %6382 = vmatpush1.msra.mxu0 %v5910
    %6383 = vmatprep.subr.mxu0 0.0
    %6384 = vmatpush1.msra.mxu0 %v5938
    %6385 = vmatprep.subr.mxu0 0.0
    %6386 = vmatpush1.msra.mxu0 0.0
    %6387 = vmatprep.subr.mxu0 0.0
    %6388 = vmatpush1.msra.mxu0 0.0
    %6389 = vmatprep.subr.mxu0 0.0
    %6390 = vmatpush1.msra.mxu0 0.0
    %6391 = vmatprep.subr.mxu0 0.0
    %6392 = vmatpush1.msra.mxu0 0.0
    %6393 = vmatprep.subr.mxu0 0.0
    %6394 = vmatpush1.msra.mxu0 0.0
    %6395 = vmatprep.subr.mxu0 0.0
    %6396 = vmatpush1.msra.mxu0 0.0
    %6397 = vmatprep.subr.mxu0 0.0
    %6398 = vmatpush1.msra.mxu0 0.0
    %6399 = vmatprep.subr.mxu0 0.0
    %6400 = vmatpush1.msra.mxu0 0.0
    %6401 = vmatprep.subr.mxu0 0.0
    %6402 = vmatpush1.msra.mxu0 0.0
    %6403 = vmatprep.subr.mxu0 0.0
    %6404 = vmatpush1.msra.mxu0 0.0
    %6405 = vmatprep.subr.mxu0 0.0
    %6406 = vmatpush1.msra.mxu0 0.0
    %6407 = vmatprep.subr.mxu0 0.0
    %6408 = vmatpush1.msra.mxu0 0.0
    %6409 = vmatprep.subr.mxu0 0.0
    %6410 = vmatpush1.msra.mxu0 0.0
    %6411 = vmatprep.subr.mxu0 0.0
    %6412 = vmatpush1.msra.mxu0 0.0
    %6413 = vmatprep.subr.mxu0 0.0
    %6414 = vmatpush1.msra.mxu0 0.0
    %6415 = vmatprep.subr.mxu0 0.0
    %6416 = vmatpush1.msra.mxu0 0.0
    %6417 = vmatprep.subr.mxu0 0.0
    %6418 = vmatpush1.msra.mxu0 0.0
    %6419 = vmatprep.subr.mxu0 0.0
    %6420 = vmatpush1.msra.mxu0 0.0
    %6421 = vmatprep.subr.mxu0 0.0
    %6422 = vmatpush1.msra.mxu0 0.0
    %6423 = vmatprep.subr.mxu0 0.0
    %6424 = vmatpush1.msra.mxu0 0.0
    %6425 = vmatprep.subr.mxu0 0.0
    %6426 = vmatpush1.msra.mxu0 0.0
    %6427 = vmatprep.subr.mxu0 0.0
    %6428 = vmatpush1.msra.mxu0 0.0
    %6429 = vmatprep.subr.mxu0 0.0
    %6430 = vmatpush1.msra.mxu0 0.0
    %6431 = vmatprep.subr.mxu0 0.0
    %6432 = vmatpush1.msra.mxu0 0.0
    %6433 = vmatprep.subr.mxu0 0.0
    %6434 = vmatpush1.msra.mxu0 0.0
    %6435 = vmatprep.subr.mxu0 0.0
    %6436 = vmatpush1.msra.mxu0 0.0
    %6437 = vmatprep.mubr.f32.mxu0 0.0
    %6438 = vmatmul.mubr.f32.gmra.mrb[0].mxu0 %v792
    %v6439 = vpop.f32.mrb[0].mxu0
    %v6440 = vadd.f32 %v6305, %v6439
    %v6441 = vpop.f32.mrb[0].mxu0
    %6442 = vmatprep.mubr.f32.mxu0 0.0
    %6443 = vmatmul.mubr.f32.gmra.mrb[0].mxu0 %v795
    %v6444 = vpop.f32.mrb[0].mxu0
    %v6445 = vadd.f32 %v6310, %v6444
    %v6446 = vpop.f32.mrb[0].mxu0
    %6447 = vmatprep.mubr.f32.mxu0 0.0
    %6448 = vmatmul.mubr.f32.gmra.mrb[0].mxu0 %v798
    %v6449 = vpop.f32.mrb[0].mxu0
    %v6450 = vadd.f32 %v6315, %v6449
    %v6451 = vpop.f32.mrb[0].mxu0
    %6452 = vmatprep.mubr.f32.mxu0 0.0
    %6453 = vmatmul.mubr.f32.gmra.mrb[0].mxu0 %v801
    %v6454 = vpop.f32.mrb[0].mxu0
    %v6455 = vadd.f32 %v6320, %v6454
    %v6456 = vpop.f32.mrb[0].mxu0
    %6457 = vmatprep.mubr.f32.mxu0 0.0
    %6458 = vmatmul.mubr.f32.gmra.mrb[0].mxu0 %v804
    %v6459 = vpop.f32.mrb[0].mxu0
    %v6460 = vadd.f32 %v6325, %v6459
    %v6461 = vpop.f32.mrb[0].mxu0
    %6462 = vmatprep.mubr.f32.mxu0 0.0
    %6463 = vmatmul.mubr.f32.gmra.mrb[0].mxu0 %v807
    %v6464 = vpop.f32.mrb[0].mxu0
    %v6465 = vadd.f32 %v6330, %v6464
    %v6466 = vpop.f32.mrb[0].mxu0
    %6467 = vmatprep.mubr.f32.mxu0 0.0
    %6468 = vmatmul.mubr.f32.gmra.mrb[0].mxu0 %v810
    %v6469 = vpop.f32.mrb[0].mxu0
    %v6470 = vadd.f32 %v6335, %v6469
    %v6471 = vpop.f32.mrb[0].mxu0
    %6472 = vmatprep.mubr.f32.mxu0 0.0
    %6473 = vmatmul.mubr.f32.gmra.mrb[0].mxu0 %v347
    %v6474 = vpop.f32.mrb[0].mxu0
    %v6475 = vadd.f32 %v6340, %v6474
    %v6476 = vpop.f32.mrb[0].mxu0
    %6477 = vmatprep.mubr.f32.mxu0 0.0
    %6478 = vmatmul.mubr.f32.gmra.mrb[0].mxu0 %v350
    %v6479 = vpop.f32.mrb[0].mxu0
    %v6480 = vadd.f32 %v6345, %v6479
    %v6481 = vpop.f32.mrb[0].mxu0
    %6482 = vmatprep.mubr.f32.mxu0 0.0
    %6483 = vmatmul.mubr.f32.gmra.mrb[0].mxu0 %v353
    %v6484 = vpop.f32.mrb[0].mxu0
    %v6485 = vadd.f32 %v6350, %v6484
    %v6486 = vpop.f32.mrb[0].mxu0
    %6487 = vmatprep.mubr.f32.mxu0 0.0
    %6488 = vmatmul.mubr.f32.gmra.mrb[0].mxu0 %v356
    %v6489 = vpop.f32.mrb[0].mxu0
    %v6490 = vadd.f32 %v6355, %v6489
    %v6491 = vpop.f32.mrb[0].mxu0
    %6492 = vmatprep.mubr.f32.mxu0 0.0
    %6493 = vmatmul.mubr.f32.gmra.mrb[0].mxu0 %v359
    %v6494 = vpop.f32.mrb[0].mxu0
    %v6495 = vadd.f32 %v6360, %v6494
    %v6496 = vpop.f32.mrb[0].mxu0
    %6497 = vmatprep.mubr.f32.mxu0 0.0
    %6498 = vmatmul.mubr.f32.gmra.mrb[0].mxu0 %v362
    %v6499 = vpop.f32.mrb[0].mxu0
    %v6500 = vadd.f32 %v6365, %v6499
    %v6501 = vpop.f32.mrb[0].mxu0
    %6502 = vmatprep.mubr.f32.mxu0 0.0
    %6503 = vmatmul.mubr.f32.gmra.mrb[0].mxu0 %v365
    %v6504 = vpop.f32.mrb[0].mxu0
    %v6505 = vadd.f32 %v6370, %v6504
    %v6506 = vpop.f32.mrb[0].mxu0
    %6507 = vdwg.mxu0
    %v6508 = vld [vmem:[%s12] sm:$0xff]
    %v6509 = vld [vmem:[%s12 + $0x8] sm:$0xff]
    %v6510 = vld [vmem:[%s12 + $0x10] sm:$0xff]
    %v6511 = vld [vmem:[%s12 + $0x18] sm:$0xff]
    %v6512 = vld [vmem:[%s12 + $0x20] sm:$0xff]
    %v6513 = vld [vmem:[%s12 + $0x28] sm:$0xff]
    %v6514 = vld [vmem:[%s12 + $0x30] sm:$0xff]
    %v6515 = vld [vmem:[%s12 + $0x38] sm:$0xff]
    %v6516 = vld [vmem:[%s12 + $0x40] sm:$0xff]
    %v6517 = vld [vmem:[%s12 + $0x48] sm:$0xff]
    %v6518 = vld [vmem:[%s12 + $0x50] sm:$0xff]
    %v6519 = vld [vmem:[%s12 + $0x58] sm:$0xff]
    %v6520 = vld [vmem:[%s12 + $0x60] sm:$0xff]
    %v6521 = vld [vmem:[%s12 + $0x68] sm:$0xff]
    %v6522 = vld [vmem:[%s12 + $0x70] sm:$0xff]
    %v6523 = vld [vmem:[%s12 + $0x78] sm:$0xff]
    %v6524 = vld [vmem:[%s12 + $0x80] sm:$0xff]
    %v6525 = vld [vmem:[%s12 + $0x88] sm:$0xff]
    %v6526 = vld [vmem:[%s12 + $0x90] sm:$0xff]
    %v6527 = vld [vmem:[%s12 + $0x98] sm:$0xff]
    %v6528 = vld [vmem:[%s12 + $0xa0] sm:$0xff]
    %v6529 = vld [vmem:[%s12 + $0xa8] sm:$0xff]
    %v6530 = vld [vmem:[%s12 + $0xb0] sm:$0xff]
    %v6531 = vld [vmem:[%s12 + $0xb8] sm:$0xff]
    %v6532 = vld [vmem:[%s12 + $0xc0] sm:$0xff]
    %v6533 = vld [vmem:[%s12 + $0xc8] sm:$0xff]
    %v6534 = vld [vmem:[%s12 + $0xd0] sm:$0xff]
    %v6535 = vld [vmem:[%s12 + $0xd8] sm:$0xff]
    %v6536 = vld [vmem:[%s12 + $0xe0] sm:$0xff]
    %v6537 = vld [vmem:[%s12 + $0xe8] sm:$0xff]
    %v6538 = vld [vmem:[%s12 + $0xf0] sm:$0xff]
    %v6539 = vld [vmem:[%s12 + $0xf8] sm:$0xff]
    %v6540 = vld [vmem:[%s12 + $0x100] sm:$0xff]
    %v6541 = vld [vmem:[%s12 + $0x108] sm:$0xff]
    %v6542 = vld [vmem:[%s12 + $0x110] sm:$0xff]
    %v6543 = vld [vmem:[%s12 + $0x118] sm:$0xff]
    %v6544 = vld [vmem:[%s12 + $0x120] sm:$0xff]
    %v6545 = vld [vmem:[%s12 + $0x128] sm:$0xff]
    %v6546 = vld [vmem:[%s12 + $0x130] sm:$0xff]
    %v6547 = vld [vmem:[%s12 + $0x138] sm:$0xff]
    %v6548 = vld [vmem:[%s12 + $0x140] sm:$0xff]
    %v6549 = vld [vmem:[%s12 + $0x148] sm:$0xff]
    %v6550 = vld [vmem:[%s12 + $0x150] sm:$0xff]
    %v6551 = vld [vmem:[%s12 + $0x158] sm:$0xff]
    %v6552 = vld [vmem:[%s12 + $0x160] sm:$0xff]
    %v6553 = vld [vmem:[%s12 + $0x168] sm:$0xff]
    %v6554 = vld [vmem:[%s12 + $0x170] sm:$0xff]
    %v6555 = vld [vmem:[%s12 + $0x178] sm:$0xff]
    %v6556 = vld [vmem:[%s13] sm:$0x1]
    %6557 = vmatprep.subr.mxu0 %v6509
    %6558 = vmatpush1.msra.mxu0 %v6508
    %6559 = vmatprep.subr.mxu0 %v6512
    %6560 = vmatpush1.msra.mxu0 %v6511
    %6561 = vmatprep.subr.mxu0 %v6515
    %6562 = vmatpush1.msra.mxu0 %v6514
    %6563 = vmatprep.subr.mxu0 %v6518
    %6564 = vmatpush1.msra.mxu0 %v6517
    %6565 = vmatprep.subr.mxu0 %v6521
    %6566 = vmatpush1.msra.mxu0 %v6520
    %6567 = vmatprep.subr.mxu0 %v6524
    %6568 = vmatpush1.msra.mxu0 %v6523
    %6569 = vmatprep.subr.mxu0 %v6527
    %6570 = vmatpush1.msra.mxu0 %v6526
    %6571 = vmatprep.subr.mxu0 %v6530
    %6572 = vmatpush1.msra.mxu0 %v6529
    %6573 = vmatprep.subr.mxu0 %v6533
    %6574 = vmatpush1.msra.mxu0 %v6532
    %6575 = vmatprep.subr.mxu0 %v6536
    %6576 = vmatpush1.msra.mxu0 %v6535
    %6577 = vmatprep.subr.mxu0 %v6539
    %6578 = vmatpush1.msra.mxu0 %v6538
    %6579 = vmatprep.subr.mxu0 %v6542
    %6580 = vmatpush1.msra.mxu0 %v6541
    %6581 = vmatprep.subr.mxu0 %v6545
    %6582 = vmatpush1.msra.mxu0 %v6544
    %6583 = vmatprep.subr.mxu0 %v6548
    %6584 = vmatpush1.msra.mxu0 %v6547
    %6585 = vmatprep.subr.mxu0 %v6551
    %6586 = vmatpush1.msra.mxu0 %v6550
    %6587 = vmatprep.subr.mxu0 %v6554
    %6588 = vmatpush1.msra.mxu0 %v6553
    %6589 = vmatprep.subr.mxu0 0.0
    %6590 = vmatpush1.msra.mxu0 0.0
    %6591 = vmatprep.subr.mxu0 0.0
    %6592 = vmatpush1.msra.mxu0 0.0
    %6593 = vmatprep.subr.mxu0 0.0
    %6594 = vmatpush1.msra.mxu0 0.0
    %6595 = vmatprep.subr.mxu0 0.0
    %6596 = vmatpush1.msra.mxu0 0.0
    %6597 = vmatprep.subr.mxu0 0.0
    %6598 = vmatpush1.msra.mxu0 0.0
    %6599 = vmatprep.subr.mxu0 0.0
    %6600 = vmatpush1.msra.mxu0 0.0
    %6601 = vmatprep.subr.mxu0 0.0
    %6602 = vmatpush1.msra.mxu0 0.0
    %6603 = vmatprep.subr.mxu0 0.0
    %6604 = vmatpush1.msra.mxu0 0.0
    %6605 = vmatprep.subr.mxu0 0.0
    %6606 = vmatpush1.msra.mxu0 0.0
    %6607 = vmatprep.subr.mxu0 0.0
    %6608 = vmatpush1.msra.mxu0 0.0
    %6609 = vmatprep.subr.mxu0 0.0
    %6610 = vmatpush1.msra.mxu0 0.0
    %6611 = vmatprep.subr.mxu0 0.0
    %6612 = vmatpush1.msra.mxu0 0.0
    %6613 = vmatprep.subr.mxu0 0.0
    %6614 = vmatpush1.msra.mxu0 0.0
    %6615 = vmatprep.subr.mxu0 0.0
    %6616 = vmatpush1.msra.mxu0 0.0
    %6617 = vmatprep.subr.mxu0 0.0
    %6618 = vmatpush1.msra.mxu0 0.0
    %6619 = vmatprep.subr.mxu0 0.0
    %6620 = vmatpush1.msra.mxu0 0.0
    %6621 = vmatprep.mubr.f32.mxu0 0.0
    %6622 = vmatmul.mubr.f32.gmra.mrb[0].mxu0 %v5799
    %v6623 = vpop.f32.mrb[0].mxu0
    %v6624 = vadd.f32 0.0, %v6623
    %v6625 = vpop.f32.mrb[0].mxu0
    %v6626 = vadd.f32 0.0, %v6625
    %6627 = vdwg.mxu0
    %6628 = vmatprep.subr.mxu0 0.0
    %6629 = vmatpush1.msra.mxu0 %v6510
    %6630 = vmatprep.subr.mxu0 0.0
    %6631 = vmatpush1.msra.mxu0 %v6513
    %6632 = vmatprep.subr.mxu0 0.0
    %6633 = vmatpush1.msra.mxu0 %v6516
    %6634 = vmatprep.subr.mxu0 0.0
    %6635 = vmatpush1.msra.mxu0 %v6519
    %6636 = vmatprep.subr.mxu0 0.0
    %6637 = vmatpush1.msra.mxu0 %v6522
    %6638 = vmatprep.subr.mxu0 0.0
    %6639 = vmatpush1.msra.mxu0 %v6525
    %6640 = vmatprep.subr.mxu0 0.0
    %6641 = vmatpush1.msra.mxu0 %v6528
    %6642 = vmatprep.subr.mxu0 0.0
    %6643 = vmatpush1.msra.mxu0 %v6531
    %6644 = vmatprep.subr.mxu0 0.0
    %6645 = vmatpush1.msra.mxu0 %v6534
    %6646 = vmatprep.subr.mxu0 0.0
    %6647 = vmatpush1.msra.mxu0 %v6537
    %6648 = vmatprep.subr.mxu0 0.0
    %6649 = vmatpush1.msra.mxu0 %v6540
    %6650 = vmatprep.subr.mxu0 0.0
    %6651 = vmatpush1.msra.mxu0 %v6543
    %6652 = vmatprep.subr.mxu0 0.0
    %6653 = vmatpush1.msra.mxu0 %v6546
    %6654 = vmatprep.subr.mxu0 0.0
    %6655 = vmatpush1.msra.mxu0 %v6549
    %6656 = vmatprep.subr.mxu0 0.0
    %6657 = vmatpush1.msra.mxu0 %v6552
    %6658 = vmatprep.subr.mxu0 0.0
    %6659 = vmatpush1.msra.mxu0 %v6555
    %6660 = vmatprep.subr.mxu0 0.0
    %6661 = vmatpush1.msra.mxu0 0.0
    %6662 = vmatprep.subr.mxu0 0.0
    %6663 = vmatpush1.msra.mxu0 0.0
    %6664 = vmatprep.subr.mxu0 0.0
    %6665 = vmatpush1.msra.mxu0 0.0
    %6666 = vmatprep.subr.mxu0 0.0
    %6667 = vmatpush1.msra.mxu0 0.0
    %6668 = vmatprep.subr.mxu0 0.0
    %6669 = vmatpush1.msra.mxu0 0.0
    %6670 = vmatprep.subr.mxu0 0.0
    %6671 = vmatpush1.msra.mxu0 0.0
    %6672 = vmatprep.subr.mxu0 0.0
    %6673 = vmatpush1.msra.mxu0 0.0
    %6674 = vmatprep.subr.mxu0 0.0
    %6675 = vmatpush1.msra.mxu0 0.0
    %6676 = vmatprep.subr.mxu0 0.0
    %6677 = vmatpush1.msra.mxu0 0.0
    %6678 = vmatprep.subr.mxu0 0.0
    %6679 = vmatpush1.msra.mxu0 0.0
    %6680 = vmatprep.subr.mxu0 0.0
    %6681 = vmatpush1.msra.mxu0 0.0
    %6682 = vmatprep.subr.mxu0 0.0
    %6683 = vmatpush1.msra.mxu0 0.0
    %6684 = vmatprep.subr.mxu0 0.0
    %6685 = vmatpush1.msra.mxu0 0.0
    %6686 = vmatprep.subr.mxu0 0.0
    %6687 = vmatpush1.msra.mxu0 0.0
    %6688 = vmatprep.subr.mxu0 0.0
    %6689 = vmatpush1.msra.mxu0 0.0
    %6690 = vmatprep.subr.mxu0 0.0
    %6691 = vmatpush1.msra.mxu0 0.0
    %6692 = vmatprep.mubr.f32.mxu0 0.0
    %6693 = vmatmul.mubr.f32.gmra.mrb[0].mxu0 %v5799
    %v6694 = vpop.f32.mrb[0].mxu0
    %v6695 = vadd.f32 0.0, %v6694
    %v6696 = vpop.f32.mrb[0].mxu0
    %6697 = vdwg.mxu0
    %v6698 = vadd.f32 %v6156, %v6624
    %v6699 = vxor.u32 %v6698, 2147483648
    %v6700 = vmul.f32 %v6699, 1.442695
    %v6701 = vpow.pop %v6700
    %v6702 = vadd.f32 %v6701, 1.0
    %v6703 = vrcp.pop %v6702
    %v6704 = vmul.f32 1.0, %v6703
    %v6705 = vadd.f32 %v6158, %v6626
    %v6706 = vxor.u32 %v6705, 2147483648
    %v6707 = vmul.f32 %v6706, 1.442695
    %v6708 = vpow.pop %v6707
    %v6709 = vadd.f32 %v6708, 1.0
    %v6710 = vrcp.pop %v6709
    %v6711 = vmul.f32 1.0, %v6710
    %v6713 = vlaneseq
    %v6714 = vshrl.u32 %v6713, 7
    %v6715 = vsub.s32 0, %v6714
    %v6716 = vrot.slane %v6556, %v6715
    %v6718 = vadd.f32 %v6695, %v6716
    %v6719 = vmul.f32 %v6704, %v6718
    %v6720 = vadd.f32 %v6440, %v6719
    %v6721 = vtanh.pop %v6720
    %v6722 = vsub.f32 1.0, %v6711
    %v6723 = vmul.f32 %v6722, %v6721
    %v6724 = vmul.f32 %v6711, %v5799
    %v6725 = vadd.f32 %v6723, %v6724
    %6726 = vmatprep.subr.mxu0 %v6509
    %6727 = vmatpush1.msra.mxu0 %v6508
    %6728 = vmatprep.subr.mxu0 %v6512
    %6729 = vmatpush1.msra.mxu0 %v6511
    %6730 = vmatprep.subr.mxu0 %v6515
    %6731 = vmatpush1.msra.mxu0 %v6514
    %6732 = vmatprep.subr.mxu0 %v6518
    %6733 = vmatpush1.msra.mxu0 %v6517
    %6734 = vmatprep.subr.mxu0 %v6521
    %6735 = vmatpush1.msra.mxu0 %v6520
    %6736 = vmatprep.subr.mxu0 %v6524
    %6737 = vmatpush1.msra.mxu0 %v6523
    %6738 = vmatprep.subr.mxu0 %v6527
    %6739 = vmatpush1.msra.mxu0 %v6526
    %6740 = vmatprep.subr.mxu0 %v6530
    %6741 = vmatpush1.msra.mxu0 %v6529
    %6742 = vmatprep.subr.mxu0 %v6533
    %6743 = vmatpush1.msra.mxu0 %v6532
    %6744 = vmatprep.subr.mxu0 %v6536
    %6745 = vmatpush1.msra.mxu0 %v6535
    %6746 = vmatprep.subr.mxu0 %v6539
    %6747 = vmatpush1.msra.mxu0 %v6538
    %6748 = vmatprep.subr.mxu0 %v6542
    %6749 = vmatpush1.msra.mxu0 %v6541
    %6750 = vmatprep.subr.mxu0 %v6545
    %6751 = vmatpush1.msra.mxu0 %v6544
    %6752 = vmatprep.subr.mxu0 %v6548
    %6753 = vmatpush1.msra.mxu0 %v6547
    %6754 = vmatprep.subr.mxu0 %v6551
    %6755 = vmatpush1.msra.mxu0 %v6550
    %6756 = vmatprep.subr.mxu0 %v6554
    %6757 = vmatpush1.msra.mxu0 %v6553
    %6758 = vmatprep.subr.mxu0 0.0
    %6759 = vmatpush1.msra.mxu0 0.0
    %6760 = vmatprep.subr.mxu0 0.0
    %6761 = vmatpush1.msra.mxu0 0.0
    %6762 = vmatprep.subr.mxu0 0.0
    %6763 = vmatpush1.msra.mxu0 0.0
    %6764 = vmatprep.subr.mxu0 0.0
    %6765 = vmatpush1.msra.mxu0 0.0
    %6766 = vmatprep.subr.mxu0 0.0
    %6767 = vmatpush1.msra.mxu0 0.0
    %6768 = vmatprep.subr.mxu0 0.0
    %6769 = vmatpush1.msra.mxu0 0.0
    %6770 = vmatprep.subr.mxu0 0.0
    %6771 = vmatpush1.msra.mxu0 0.0
    %6772 = vmatprep.subr.mxu0 0.0
    %6773 = vmatpush1.msra.mxu0 0.0
    %6774 = vmatprep.subr.mxu0 0.0
    %6775 = vmatpush1.msra.mxu0 0.0
    %6776 = vmatprep.subr.mxu0 0.0
    %6777 = vmatpush1.msra.mxu0 0.0
    %6778 = vmatprep.subr.mxu0 0.0
    %6779 = vmatpush1.msra.mxu0 0.0
    %6780 = vmatprep.subr.mxu0 0.0
    %6781 = vmatpush1.msra.mxu0 0.0
    %6782 = vmatprep.subr.mxu0 0.0
    %6783 = vmatpush1.msra.mxu0 0.0
    %6784 = vmatprep.subr.mxu0 0.0
    %6785 = vmatpush1.msra.mxu0 0.0
    %6786 = vmatprep.subr.mxu0 0.0
    %6787 = vmatpush1.msra.mxu0 0.0
    %6788 = vmatprep.subr.mxu0 0.0
    %6789 = vmatpush1.msra.mxu0 0.0
    %6790 = vmatprep.mubr.f32.mxu0 0.0
    %6791 = vmatmul.mubr.f32.gmra.mrb[0].mxu0 %v6725
    %v6792 = vpop.f32.mrb[0].mxu0
    %v6793 = vadd.f32 0.0, %v6792
    %v6794 = vpop.f32.mrb[0].mxu0
    %v6795 = vadd.f32 0.0, %v6794
    %6796 = vdwg.mxu0
    %6797 = vmatprep.subr.mxu0 0.0
    %6798 = vmatpush1.msra.mxu0 %v6510
    %6799 = vmatprep.subr.mxu0 0.0
    %6800 = vmatpush1.msra.mxu0 %v6513
    %6801 = vmatprep.subr.mxu0 0.0
    %6802 = vmatpush1.msra.mxu0 %v6516
    %6803 = vmatprep.subr.mxu0 0.0
    %6804 = vmatpush1.msra.mxu0 %v6519
    %6805 = vmatprep.subr.mxu0 0.0
    %6806 = vmatpush1.msra.mxu0 %v6522
    %6807 = vmatprep.subr.mxu0 0.0
    %6808 = vmatpush1.msra.mxu0 %v6525
    %6809 = vmatprep.subr.mxu0 0.0
    %6810 = vmatpush1.msra.mxu0 %v6528
    %6811 = vmatprep.subr.mxu0 0.0
    %6812 = vmatpush1.msra.mxu0 %v6531
    %6813 = vmatprep.subr.mxu0 0.0
    %6814 = vmatpush1.msra.mxu0 %v6534
    %6815 = vmatprep.subr.mxu0 0.0
    %6816 = vmatpush1.msra.mxu0 %v6537
    %6817 = vmatprep.subr.mxu0 0.0
    %6818 = vmatpush1.msra.mxu0 %v6540
    %6819 = vmatprep.subr.mxu0 0.0
    %6820 = vmatpush1.msra.mxu0 %v6543
    %6821 = vmatprep.subr.mxu0 0.0
    %6822 = vmatpush1.msra.mxu0 %v6546
    %6823 = vmatprep.subr.mxu0 0.0
    %6824 = vmatpush1.msra.mxu0 %v6549
    %6825 = vmatprep.subr.mxu0 0.0
    %6826 = vmatpush1.msra.mxu0 %v6552
    %6827 = vmatprep.subr.mxu0 0.0
    %6828 = vmatpush1.msra.mxu0 %v6555
    %6829 = vmatprep.subr.mxu0 0.0
    %6830 = vmatpush1.msra.mxu0 0.0
    %6831 = vmatprep.subr.mxu0 0.0
    %6832 = vmatpush1.msra.mxu0 0.0
    %6833 = vmatprep.subr.mxu0 0.0
    %6834 = vmatpush1.msra.mxu0 0.0
    %6835 = vmatprep.subr.mxu0 0.0
    %6836 = vmatpush1.msra.mxu0 0.0
    %6837 = vmatprep.subr.mxu0 0.0
    %6838 = vmatpush1.msra.mxu0 0.0
    %6839 = vmatprep.subr.mxu0 0.0
    %6840 = vmatpush1.msra.mxu0 0.0
    %6841 = vmatprep.subr.mxu0 0.0
    %6842 = vmatpush1.msra.mxu0 0.0
    %6843 = vmatprep.subr.mxu0 0.0
    %6844 = vmatpush1.msra.mxu0 0.0
    %6845 = vmatprep.subr.mxu0 0.0
    %6846 = vmatpush1.msra.mxu0 0.0
    %6847 = vmatprep.subr.mxu0 0.0
    %6848 = vmatpush1.msra.mxu0 0.0
    %6849 = vmatprep.subr.mxu0 0.0
    %6850 = vmatpush1.msra.mxu0 0.0
    %6851 = vmatprep.subr.mxu0 0.0
    %6852 = vmatpush1.msra.mxu0 0.0
    %6853 = vmatprep.subr.mxu0 0.0
    %6854 = vmatpush1.msra.mxu0 0.0
    %6855 = vmatprep.subr.mxu0 0.0
    %6856 = vmatpush1.msra.mxu0 0.0
    %6857 = vmatprep.subr.mxu0 0.0
    %6858 = vmatpush1.msra.mxu0 0.0
    %6859 = vmatprep.subr.mxu0 0.0
    %6860 = vmatpush1.msra.mxu0 0.0
    %6861 = vmatprep.mubr.f32.mxu0 0.0
    %6862 = vmatmul.mubr.f32.gmra.mrb[0].mxu0 %v6725
    %v6863 = vpop.f32.mrb[0].mxu0
    %v6864 = vadd.f32 0.0, %v6863
    %v6865 = vpop.f32.mrb[0].mxu0
    %6866 = vdwg.mxu0
    %v6867 = vadd.f32 %v6198, %v6793
    %v6868 = vxor.u32 %v6867, 2147483648
    %v6869 = vmul.f32 %v6868, 1.442695
    %v6870 = vpow.pop %v6869
    %v6871 = vadd.f32 %v6870, 1.0
    %v6872 = vrcp.pop %v6871
    %v6873 = vmul.f32 1.0, %v6872
    %v6874 = vadd.f32 %v6200, %v6795
    %v6875 = vxor.u32 %v6874, 2147483648
    %v6876 = vmul.f32 %v6875, 1.442695
    %v6877 = vpow.pop %v6876
    %v6878 = vadd.f32 %v6877, 1.0
    %v6879 = vrcp.pop %v6878
    %v6880 = vmul.f32 1.0, %v6879
    %v6881 = vadd.f32 %v6864, %v6716
    %v6882 = vmul.f32 %v6873, %v6881
    %v6883 = vadd.f32 %v6475, %v6882
    %v6884 = vtanh.pop %v6883
    %v6885 = vsub.f32 1.0, %v6880
    %v6886 = vmul.f32 %v6885, %v6884
    %v6887 = vmul.f32 %v6880, %v6725
    %v6888 = vadd.f32 %v6886, %v6887
    %6889 = vmatprep.subr.mxu0 %v6509
    %6890 = vmatpush1.msra.mxu0 %v6508
    %6891 = vmatprep.subr.mxu0 %v6512
    %6892 = vmatpush1.msra.mxu0 %v6511
    %6893 = vmatprep.subr.mxu0 %v6515
    %6894 = vmatpush1.msra.mxu0 %v6514
    %6895 = vmatprep.subr.mxu0 %v6518
    %6896 = vmatpush1.msra.mxu0 %v6517
    %6897 = vmatprep.subr.mxu0 %v6521
    %6898 = vmatpush1.msra.mxu0 %v6520
    %6899 = vmatprep.subr.mxu0 %v6524
    %6900 = vmatpush1.msra.mxu0 %v6523
    %6901 = vmatprep.subr.mxu0 %v6527
    %6902 = vmatpush1.msra.mxu0 %v6526
    %6903 = vmatprep.subr.mxu0 %v6530
    %6904 = vmatpush1.msra.mxu0 %v6529
    %6905 = vmatprep.subr.mxu0 %v6533
    %6906 = vmatpush1.msra.mxu0 %v6532
    %6907 = vmatprep.subr.mxu0 %v6536
    %6908 = vmatpush1.msra.mxu0 %v6535
    %6909 = vmatprep.subr.mxu0 %v6539
    %6910 = vmatpush1.msra.mxu0 %v6538
    %6911 = vmatprep.subr.mxu0 %v6542
    %6912 = vmatpush1.msra.mxu0 %v6541
    %6913 = vmatprep.subr.mxu0 %v6545
    %6914 = vmatpush1.msra.mxu0 %v6544
    %6915 = vmatprep.subr.mxu0 %v6548
    %6916 = vmatpush1.msra.mxu0 %v6547
    %6917 = vmatprep.subr.mxu0 %v6551
    %6918 = vmatpush1.msra.mxu0 %v6550
    %6919 = vmatprep.subr.mxu0 %v6554
    %6920 = vmatpush1.msra.mxu0 %v6553
    %6921 = vmatprep.subr.mxu0 0.0
    %6922 = vmatpush1.msra.mxu0 0.0
    %6923 = vmatprep.subr.mxu0 0.0
    %6924 = vmatpush1.msra.mxu0 0.0
    %6925 = vmatprep.subr.mxu0 0.0
    %6926 = vmatpush1.msra.mxu0 0.0
    %6927 = vmatprep.subr.mxu0 0.0
    %6928 = vmatpush1.msra.mxu0 0.0
    %6929 = vmatprep.subr.mxu0 0.0
    %6930 = vmatpush1.msra.mxu0 0.0
    %6931 = vmatprep.subr.mxu0 0.0
    %6932 = vmatpush1.msra.mxu0 0.0
    %6933 = vmatprep.subr.mxu0 0.0
    %6934 = vmatpush1.msra.mxu0 0.0
    %6935 = vmatprep.subr.mxu0 0.0
    %6936 = vmatpush1.msra.mxu0 0.0
    %6937 = vmatprep.subr.mxu0 0.0
    %6938 = vmatpush1.msra.mxu0 0.0
    %6939 = vmatprep.subr.mxu0 0.0
    %6940 = vmatpush1.msra.mxu0 0.0
    %6941 = vmatprep.subr.mxu0 0.0
    %6942 = vmatpush1.msra.mxu0 0.0
    %6943 = vmatprep.subr.mxu0 0.0
    %6944 = vmatpush1.msra.mxu0 0.0
    %6945 = vmatprep.subr.mxu0 0.0
    %6946 = vmatpush1.msra.mxu0 0.0
    %6947 = vmatprep.subr.mxu0 0.0
    %6948 = vmatpush1.msra.mxu0 0.0
    %6949 = vmatprep.subr.mxu0 0.0
    %6950 = vmatpush1.msra.mxu0 0.0
    %6951 = vmatprep.subr.mxu0 0.0
    %6952 = vmatpush1.msra.mxu0 0.0
    %6953 = vmatprep.mubr.f32.mxu0 0.0
    %6954 = vmatmul.mubr.f32.gmra.mrb[0].mxu0 %v6888
    %v6955 = vpop.f32.mrb[0].mxu0
    %v6956 = vadd.f32 0.0, %v6955
    %v6957 = vpop.f32.mrb[0].mxu0
    %v6958 = vadd.f32 0.0, %v6957
    %6959 = vdwg.mxu0
    %6960 = vmatprep.subr.mxu0 0.0
    %6961 = vmatpush1.msra.mxu0 %v6510
    %6962 = vmatprep.subr.mxu0 0.0
    %6963 = vmatpush1.msra.mxu0 %v6513
    %6964 = vmatprep.subr.mxu0 0.0
    %6965 = vmatpush1.msra.mxu0 %v6516
    %6966 = vmatprep.subr.mxu0 0.0
    %6967 = vmatpush1.msra.mxu0 %v6519
    %6968 = vmatprep.subr.mxu0 0.0
    %6969 = vmatpush1.msra.mxu0 %v6522
    %6970 = vmatprep.subr.mxu0 0.0
    %6971 = vmatpush1.msra.mxu0 %v6525
    %6972 = vmatprep.subr.mxu0 0.0
    %6973 = vmatpush1.msra.mxu0 %v6528
    %6974 = vmatprep.subr.mxu0 0.0
    %6975 = vmatpush1.msra.mxu0 %v6531
    %6976 = vmatprep.subr.mxu0 0.0
    %6977 = vmatpush1.msra.mxu0 %v6534
    %6978 = vmatprep.subr.mxu0 0.0
    %6979 = vmatpush1.msra.mxu0 %v6537
    %6980 = vmatprep.subr.mxu0 0.0
    %6981 = vmatpush1.msra.mxu0 %v6540
    %6982 = vmatprep.subr.mxu0 0.0
    %6983 = vmatpush1.msra.mxu0 %v6543
    %6984 = vmatprep.subr.mxu0 0.0
    %6985 = vmatpush1.msra.mxu0 %v6546
    %6986 = vmatprep.subr.mxu0 0.0
    %6987 = vmatpush1.msra.mxu0 %v6549
    %6988 = vmatprep.subr.mxu0 0.0
    %6989 = vmatpush1.msra.mxu0 %v6552
    %6990 = vmatprep.subr.mxu0 0.0
    %6991 = vmatpush1.msra.mxu0 %v6555
    %6992 = vmatprep.subr.mxu0 0.0
    %6993 = vmatpush1.msra.mxu0 0.0
    %6994 = vmatprep.subr.mxu0 0.0
    %6995 = vmatpush1.msra.mxu0 0.0
    %6996 = vmatprep.subr.mxu0 0.0
    %6997 = vmatpush1.msra.mxu0 0.0
    %6998 = vmatprep.subr.mxu0 0.0
    %6999 = vmatpush1.msra.mxu0 0.0
    %7000 = vmatprep.subr.mxu0 0.0
    %7001 = vmatpush1.msra.mxu0 0.0
    %7002 = vmatprep.subr.mxu0 0.0
    %7003 = vmatpush1.msra.mxu0 0.0
    %7004 = vmatprep.subr.mxu0 0.0
    %7005 = vmatpush1.msra.mxu0 0.0
    %7006 = vmatprep.subr.mxu0 0.0
    %7007 = vmatpush1.msra.mxu0 0.0
    %7008 = vmatprep.subr.mxu0 0.0
    %7009 = vmatpush1.msra.mxu0 0.0
    %7010 = vmatprep.subr.mxu0 0.0
    %7011 = vmatpush1.msra.mxu0 0.0
    %7012 = vmatprep.subr.mxu0 0.0
    %7013 = vmatpush1.msra.mxu0 0.0
    %7014 = vmatprep.subr.mxu0 0.0
    %7015 = vmatpush1.msra.mxu0 0.0
    %7016 = vmatprep.subr.mxu0 0.0
    %7017 = vmatpush1.msra.mxu0 0.0
    %7018 = vmatprep.subr.mxu0 0.0
    %7019 = vmatpush1.msra.mxu0 0.0
    %7020 = vmatprep.subr.mxu0 0.0
    %7021 = vmatpush1.msra.mxu0 0.0
    %7022 = vmatprep.subr.mxu0 0.0
    %7023 = vmatpush1.msra.mxu0 0.0
    %7024 = vmatprep.mubr.f32.mxu0 0.0
    %7025 = vmatmul.mubr.f32.gmra.mrb[0].mxu0 %v6888
    %v7026 = vpop.f32.mrb[0].mxu0
    %v7027 = vadd.f32 0.0, %v7026
    %v7028 = vpop.f32.mrb[0].mxu0
    %7029 = vdwg.mxu0
    %v7030 = vadd.f32 %v6162, %v6956
    %v7031 = vxor.u32 %v7030, 2147483648
    %v7032 = vmul.f32 %v7031, 1.442695
    %v7033 = vpow.pop %v7032
    %v7034 = vadd.f32 %v7033, 1.0
    %v7035 = vrcp.pop %v7034
    %v7036 = vmul.f32 1.0, %v7035
    %v7037 = vadd.f32 %v6164, %v6958
    %v7038 = vxor.u32 %v7037, 2147483648
    %v7039 = vmul.f32 %v7038, 1.442695
    %v7040 = vpow.pop %v7039
    %v7041 = vadd.f32 %v7040, 1.0
    %v7042 = vrcp.pop %v7041
    %v7043 = vmul.f32 1.0, %v7042
    %v7044 = vadd.f32 %v7027, %v6716
    %v7045 = vmul.f32 %v7036, %v7044
    %v7046 = vadd.f32 %v6445, %v7045
    %v7047 = vtanh.pop %v7046
    %v7048 = vsub.f32 1.0, %v7043
    %v7049 = vmul.f32 %v7048, %v7047
    %v7050 = vmul.f32 %v7043, %v6888
    %v7051 = vadd.f32 %v7049, %v7050
    %7052 = vmatprep.subr.mxu0 %v6509
    %7053 = vmatpush1.msra.mxu0 %v6508
    %7054 = vmatprep.subr.mxu0 %v6512
    %7055 = vmatpush1.msra.mxu0 %v6511
    %7056 = vmatprep.subr.mxu0 %v6515
    %7057 = vmatpush1.msra.mxu0 %v6514
    %7058 = vmatprep.subr.mxu0 %v6518
    %7059 = vmatpush1.msra.mxu0 %v6517
    %7060 = vmatprep.subr.mxu0 %v6521
    %7061 = vmatpush1.msra.mxu0 %v6520
    %7062 = vmatprep.subr.mxu0 %v6524
    %7063 = vmatpush1.msra.mxu0 %v6523
    %7064 = vmatprep.subr.mxu0 %v6527
    %7065 = vmatpush1.msra.mxu0 %v6526
    %7066 = vmatprep.subr.mxu0 %v6530
    %7067 = vmatpush1.msra.mxu0 %v6529
    %7068 = vmatprep.subr.mxu0 %v6533
    %7069 = vmatpush1.msra.mxu0 %v6532
    %7070 = vmatprep.subr.mxu0 %v6536
    %7071 = vmatpush1.msra.mxu0 %v6535
    %7072 = vmatprep.subr.mxu0 %v6539
    %7073 = vmatpush1.msra.mxu0 %v6538
    %7074 = vmatprep.subr.mxu0 %v6542
    %7075 = vmatpush1.msra.mxu0 %v6541
    %7076 = vmatprep.subr.mxu0 %v6545
    %7077 = vmatpush1.msra.mxu0 %v6544
    %7078 = vmatprep.subr.mxu0 %v6548
    %7079 = vmatpush1.msra.mxu0 %v6547
    %7080 = vmatprep.subr.mxu0 %v6551
    %7081 = vmatpush1.msra.mxu0 %v6550
    %7082 = vmatprep.subr.mxu0 %v6554
    %7083 = vmatpush1.msra.mxu0 %v6553
    %7084 = vmatprep.subr.mxu0 0.0
    %7085 = vmatpush1.msra.mxu0 0.0
    %7086 = vmatprep.subr.mxu0 0.0
    %7087 = vmatpush1.msra.mxu0 0.0
    %7088 = vmatprep.subr.mxu0 0.0
    %7089 = vmatpush1.msra.mxu0 0.0
    %7090 = vmatprep.subr.mxu0 0.0
    %7091 = vmatpush1.msra.mxu0 0.0
    %7092 = vmatprep.subr.mxu0 0.0
    %7093 = vmatpush1.msra.mxu0 0.0
    %7094 = vmatprep.subr.mxu0 0.0
    %7095 = vmatpush1.msra.mxu0 0.0
    %7096 = vmatprep.subr.mxu0 0.0
    %7097 = vmatpush1.msra.mxu0 0.0
    %7098 = vmatprep.subr.mxu0 0.0
    %7099 = vmatpush1.msra.mxu0 0.0
    %7100 = vmatprep.subr.mxu0 0.0
    %7101 = vmatpush1.msra.mxu0 0.0
    %7102 = vmatprep.subr.mxu0 0.0
    %7103 = vmatpush1.msra.mxu0 0.0
    %7104 = vmatprep.subr.mxu0 0.0
    %7105 = vmatpush1.msra.mxu0 0.0
    %7106 = vmatprep.subr.mxu0 0.0
    %7107 = vmatpush1.msra.mxu0 0.0
    %7108 = vmatprep.subr.mxu0 0.0
    %7109 = vmatpush1.msra.mxu0 0.0
    %7110 = vmatprep.subr.mxu0 0.0
    %7111 = vmatpush1.msra.mxu0 0.0
    %7112 = vmatprep.subr.mxu0 0.0
    %7113 = vmatpush1.msra.mxu0 0.0
    %7114 = vmatprep.subr.mxu0 0.0
    %7115 = vmatpush1.msra.mxu0 0.0
    %7116 = vmatprep.mubr.f32.mxu0 0.0
    %7117 = vmatmul.mubr.f32.gmra.mrb[0].mxu0 %v7051
    %v7118 = vpop.f32.mrb[0].mxu0
    %v7119 = vadd.f32 0.0, %v7118
    %v7120 = vpop.f32.mrb[0].mxu0
    %v7121 = vadd.f32 0.0, %v7120
    %7122 = vdwg.mxu0
    %7123 = vmatprep.subr.mxu0 0.0
    %7124 = vmatpush1.msra.mxu0 %v6510
    %7125 = vmatprep.subr.mxu0 0.0
    %7126 = vmatpush1.msra.mxu0 %v6513
    %7127 = vmatprep.subr.mxu0 0.0
    %7128 = vmatpush1.msra.mxu0 %v6516
    %7129 = vmatprep.subr.mxu0 0.0
    %7130 = vmatpush1.msra.mxu0 %v6519
    %7131 = vmatprep.subr.mxu0 0.0
    %7132 = vmatpush1.msra.mxu0 %v6522
    %7133 = vmatprep.subr.mxu0 0.0
    %7134 = vmatpush1.msra.mxu0 %v6525
    %7135 = vmatprep.subr.mxu0 0.0
    %7136 = vmatpush1.msra.mxu0 %v6528
    %7137 = vmatprep.subr.mxu0 0.0
    %7138 = vmatpush1.msra.mxu0 %v6531
    %7139 = vmatprep.subr.mxu0 0.0
    %7140 = vmatpush1.msra.mxu0 %v6534
    %7141 = vmatprep.subr.mxu0 0.0
    %7142 = vmatpush1.msra.mxu0 %v6537
    %7143 = vmatprep.subr.mxu0 0.0
    %7144 = vmatpush1.msra.mxu0 %v6540
    %7145 = vmatprep.subr.mxu0 0.0
    %7146 = vmatpush1.msra.mxu0 %v6543
    %7147 = vmatprep.subr.mxu0 0.0
    %7148 = vmatpush1.msra.mxu0 %v6546
    %7149 = vmatprep.subr.mxu0 0.0
    %7150 = vmatpush1.msra.mxu0 %v6549
    %7151 = vmatprep.subr.mxu0 0.0
    %7152 = vmatpush1.msra.mxu0 %v6552
    %7153 = vmatprep.subr.mxu0 0.0
    %7154 = vmatpush1.msra.mxu0 %v6555
    %7155 = vmatprep.subr.mxu0 0.0
    %7156 = vmatpush1.msra.mxu0 0.0
    %7157 = vmatprep.subr.mxu0 0.0
    %7158 = vmatpush1.msra.mxu0 0.0
    %7159 = vmatprep.subr.mxu0 0.0
    %7160 = vmatpush1.msra.mxu0 0.0
    %7161 = vmatprep.subr.mxu0 0.0
    %7162 = vmatpush1.msra.mxu0 0.0
    %7163 = vmatprep.subr.mxu0 0.0
    %7164 = vmatpush1.msra.mxu0 0.0
    %7165 = vmatprep.subr.mxu0 0.0
    %7166 = vmatpush1.msra.mxu0 0.0
    %7167 = vmatprep.subr.mxu0 0.0
    %7168 = vmatpush1.msra.mxu0 0.0
    %7169 = vmatprep.subr.mxu0 0.0
    %7170 = vmatpush1.msra.mxu0 0.0
    %7171 = vmatprep.subr.mxu0 0.0
    %7172 = vmatpush1.msra.mxu0 0.0
    %7173 = vmatprep.subr.mxu0 0.0
    %7174 = vmatpush1.msra.mxu0 0.0
    %7175 = vmatprep.subr.mxu0 0.0
    %7176 = vmatpush1.msra.mxu0 0.0
    %7177 = vmatprep.subr.mxu0 0.0
    %7178 = vmatpush1.msra.mxu0 0.0
    %7179 = vmatprep.subr.mxu0 0.0
    %7180 = vmatpush1.msra.mxu0 0.0
    %7181 = vmatprep.subr.mxu0 0.0
    %7182 = vmatpush1.msra.mxu0 0.0
    %7183 = vmatprep.subr.mxu0 0.0
    %7184 = vmatpush1.msra.mxu0 0.0
    %7185 = vmatprep.subr.mxu0 0.0
    %7186 = vmatpush1.msra.mxu0 0.0
    %7187 = vmatprep.mubr.f32.mxu0 0.0
    %7188 = vmatmul.mubr.f32.gmra.mrb[0].mxu0 %v7051
    %v7189 = vpop.f32.mrb[0].mxu0
    %v7190 = vadd.f32 0.0, %v7189
    %v7191 = vpop.f32.mrb[0].mxu0
    %7192 = vdwg.mxu0
    %v7193 = vadd.f32 %v6204, %v7119
    %v7194 = vxor.u32 %v7193, 2147483648
    %v7195 = vmul.f32 %v7194, 1.442695
    %v7196 = vpow.pop %v7195
    %v7197 = vadd.f32 %v7196, 1.0
    %v7198 = vrcp.pop %v7197
    %v7199 = vmul.f32 1.0, %v7198
    %v7200 = vadd.f32 %v6206, %v7121
    %v7201 = vxor.u32 %v7200, 2147483648
    %v7202 = vmul.f32 %v7201, 1.442695
    %v7203 = vpow.pop %v7202
    %v7204 = vadd.f32 %v7203, 1.0
    %v7205 = vrcp.pop %v7204
    %v7206 = vmul.f32 1.0, %v7205
    %v7207 = vadd.f32 %v7190, %v6716
    %v7208 = vmul.f32 %v7199, %v7207
    %v7209 = vadd.f32 %v6480, %v7208
    %v7210 = vtanh.pop %v7209
    %v7211 = vsub.f32 1.0, %v7206
    %v7212 = vmul.f32 %v7211, %v7210
    %v7213 = vmul.f32 %v7206, %v7051
    %v7214 = vadd.f32 %v7212, %v7213
    %7215 = vmatprep.subr.mxu0 %v6509
    %7216 = vmatpush1.msra.mxu0 %v6508
    %7217 = vmatprep.subr.mxu0 %v6512
    %7218 = vmatpush1.msra.mxu0 %v6511
    %7219 = vmatprep.subr.mxu0 %v6515
    %7220 = vmatpush1.msra.mxu0 %v6514
    %7221 = vmatprep.subr.mxu0 %v6518
    %7222 = vmatpush1.msra.mxu0 %v6517
    %7223 = vmatprep.subr.mxu0 %v6521
    %7224 = vmatpush1.msra.mxu0 %v6520
    %7225 = vmatprep.subr.mxu0 %v6524
    %7226 = vmatpush1.msra.mxu0 %v6523
    %7227 = vmatprep.subr.mxu0 %v6527
    %7228 = vmatpush1.msra.mxu0 %v6526
    %7229 = vmatprep.subr.mxu0 %v6530
    %7230 = vmatpush1.msra.mxu0 %v6529
    %7231 = vmatprep.subr.mxu0 %v6533
    %7232 = vmatpush1.msra.mxu0 %v6532
    %7233 = vmatprep.subr.mxu0 %v6536
    %7234 = vmatpush1.msra.mxu0 %v6535
    %7235 = vmatprep.subr.mxu0 %v6539
    %7236 = vmatpush1.msra.mxu0 %v6538
    %7237 = vmatprep.subr.mxu0 %v6542
    %7238 = vmatpush1.msra.mxu0 %v6541
    %7239 = vmatprep.subr.mxu0 %v6545
    %7240 = vmatpush1.msra.mxu0 %v6544
    %7241 = vmatprep.subr.mxu0 %v6548
    %7242 = vmatpush1.msra.mxu0 %v6547
    %7243 = vmatprep.subr.mxu0 %v6551
    %7244 = vmatpush1.msra.mxu0 %v6550
    %7245 = vmatprep.subr.mxu0 %v6554
    %7246 = vmatpush1.msra.mxu0 %v6553
    %7247 = vmatprep.subr.mxu0 0.0
    %7248 = vmatpush1.msra.mxu0 0.0
    %7249 = vmatprep.subr.mxu0 0.0
    %7250 = vmatpush1.msra.mxu0 0.0
    %7251 = vmatprep.subr.mxu0 0.0
    %7252 = vmatpush1.msra.mxu0 0.0
    %7253 = vmatprep.subr.mxu0 0.0
    %7254 = vmatpush1.msra.mxu0 0.0
    %7255 = vmatprep.subr.mxu0 0.0
    %7256 = vmatpush1.msra.mxu0 0.0
    %7257 = vmatprep.subr.mxu0 0.0
    %7258 = vmatpush1.msra.mxu0 0.0
    %7259 = vmatprep.subr.mxu0 0.0
    %7260 = vmatpush1.msra.mxu0 0.0
    %7261 = vmatprep.subr.mxu0 0.0
    %7262 = vmatpush1.msra.mxu0 0.0
    %7263 = vmatprep.subr.mxu0 0.0
    %7264 = vmatpush1.msra.mxu0 0.0
    %7265 = vmatprep.subr.mxu0 0.0
    %7266 = vmatpush1.msra.mxu0 0.0
    %7267 = vmatprep.subr.mxu0 0.0
    %7268 = vmatpush1.msra.mxu0 0.0
    %7269 = vmatprep.subr.mxu0 0.0
    %7270 = vmatpush1.msra.mxu0 0.0
    %7271 = vmatprep.subr.mxu0 0.0
    %7272 = vmatpush1.msra.mxu0 0.0
    %7273 = vmatprep.subr.mxu0 0.0
    %7274 = vmatpush1.msra.mxu0 0.0
    %7275 = vmatprep.subr.mxu0 0.0
    %7276 = vmatpush1.msra.mxu0 0.0
    %7277 = vmatprep.subr.mxu0 0.0
    %7278 = vmatpush1.msra.mxu0 0.0
    %7279 = vmatprep.mubr.f32.mxu0 0.0
    %7280 = vmatmul.mubr.f32.gmra.mrb[0].mxu0 %v7214
    %v7281 = vpop.f32.mrb[0].mxu0
    %v7282 = vadd.f32 0.0, %v7281
    %v7283 = vpop.f32.mrb[0].mxu0
    %v7284 = vadd.f32 0.0, %v7283
    %7285 = vdwg.mxu0
    %7286 = vmatprep.subr.mxu0 0.0
    %7287 = vmatpush1.msra.mxu0 %v6510
    %7288 = vmatprep.subr.mxu0 0.0
    %7289 = vmatpush1.msra.mxu0 %v6513
    %7290 = vmatprep.subr.mxu0 0.0
    %7291 = vmatpush1.msra.mxu0 %v6516
    %7292 = vmatprep.subr.mxu0 0.0
    %7293 = vmatpush1.msra.mxu0 %v6519
    %7294 = vmatprep.subr.mxu0 0.0
    %7295 = vmatpush1.msra.mxu0 %v6522
    %7296 = vmatprep.subr.mxu0 0.0
    %7297 = vmatpush1.msra.mxu0 %v6525
    %7298 = vmatprep.subr.mxu0 0.0
    %7299 = vmatpush1.msra.mxu0 %v6528
    %7300 = vmatprep.subr.mxu0 0.0
    %7301 = vmatpush1.msra.mxu0 %v6531
    %7302 = vmatprep.subr.mxu0 0.0
    %7303 = vmatpush1.msra.mxu0 %v6534
    %7304 = vmatprep.subr.mxu0 0.0
    %7305 = vmatpush1.msra.mxu0 %v6537
    %7306 = vmatprep.subr.mxu0 0.0
    %7307 = vmatpush1.msra.mxu0 %v6540
    %7308 = vmatprep.subr.mxu0 0.0
    %7309 = vmatpush1.msra.mxu0 %v6543
    %7310 = vmatprep.subr.mxu0 0.0
    %7311 = vmatpush1.msra.mxu0 %v6546
    %7312 = vmatprep.subr.mxu0 0.0
    %7313 = vmatpush1.msra.mxu0 %v6549
    %7314 = vmatprep.subr.mxu0 0.0
    %7315 = vmatpush1.msra.mxu0 %v6552
    %7316 = vmatprep.subr.mxu0 0.0
    %7317 = vmatpush1.msra.mxu0 %v6555
    %7318 = vmatprep.subr.mxu0 0.0
    %7319 = vmatpush1.msra.mxu0 0.0
    %7320 = vmatprep.subr.mxu0 0.0
    %7321 = vmatpush1.msra.mxu0 0.0
    %7322 = vmatprep.subr.mxu0 0.0
    %7323 = vmatpush1.msra.mxu0 0.0
    %7324 = vmatprep.subr.mxu0 0.0
    %7325 = vmatpush1.msra.mxu0 0.0
    %7326 = vmatprep.subr.mxu0 0.0
    %7327 = vmatpush1.msra.mxu0 0.0
    %7328 = vmatprep.subr.mxu0 0.0
    %7329 = vmatpush1.msra.mxu0 0.0
    %7330 = vmatprep.subr.mxu0 0.0
    %7331 = vmatpush1.msra.mxu0 0.0
    %7332 = vmatprep.subr.mxu0 0.0
    %7333 = vmatpush1.msra.mxu0 0.0
    %7334 = vmatprep.subr.mxu0 0.0
    %7335 = vmatpush1.msra.mxu0 0.0
    %7336 = vmatprep.subr.mxu0 0.0
    %7337 = vmatpush1.msra.mxu0 0.0
    %7338 = vmatprep.subr.mxu0 0.0
    %7339 = vmatpush1.msra.mxu0 0.0
    %7340 = vmatprep.subr.mxu0 0.0
    %7341 = vmatpush1.msra.mxu0 0.0
    %7342 = vmatprep.subr.mxu0 0.0
    %7343 = vmatpush1.msra.mxu0 0.0
    %7344 = vmatprep.subr.mxu0 0.0
    %7345 = vmatpush1.msra.mxu0 0.0
    %7346 = vmatprep.subr.mxu0 0.0
    %7347 = vmatpush1.msra.mxu0 0.0
    %7348 = vmatprep.subr.mxu0 0.0
    %7349 = vmatpush1.msra.mxu0 0.0
    %7350 = vmatprep.mubr.f32.mxu0 0.0
    %7351 = vmatmul.mubr.f32.gmra.mrb[0].mxu0 %v7214
    %v7352 = vpop.f32.mrb[0].mxu0
    %v7353 = vadd.f32 0.0, %v7352
    %v7354 = vpop.f32.mrb[0].mxu0
    %7355 = vdwg.mxu0
    %v7356 = vadd.f32 %v6168, %v7282
    %v7357 = vxor.u32 %v7356, 2147483648
    %v7358 = vmul.f32 %v7357, 1.442695
    %v7359 = vpow.pop %v7358
    %v7360 = vadd.f32 %v7359, 1.0
    %v7361 = vrcp.pop %v7360
    %v7362 = vmul.f32 1.0, %v7361
    %v7363 = vadd.f32 %v6170, %v7284
    %v7364 = vxor.u32 %v7363, 2147483648
    %v7365 = vmul.f32 %v7364, 1.442695
    %v7366 = vpow.pop %v7365
    %v7367 = vadd.f32 %v7366, 1.0
    %v7368 = vrcp.pop %v7367
    %v7369 = vmul.f32 1.0, %v7368
    %v7370 = vadd.f32 %v7353, %v6716
    %v7371 = vmul.f32 %v7362, %v7370
    %v7372 = vadd.f32 %v6450, %v7371
    %v7373 = vtanh.pop %v7372
    %v7374 = vsub.f32 1.0, %v7369
    %v7375 = vmul.f32 %v7374, %v7373
    %v7376 = vmul.f32 %v7369, %v7214
    %v7377 = vadd.f32 %v7375, %v7376
    %7378 = vmatprep.subr.mxu0 %v6509
    %7379 = vmatpush1.msra.mxu0 %v6508
    %7380 = vmatprep.subr.mxu0 %v6512
    %7381 = vmatpush1.msra.mxu0 %v6511
    %7382 = vmatprep.subr.mxu0 %v6515
    %7383 = vmatpush1.msra.mxu0 %v6514
    %7384 = vmatprep.subr.mxu0 %v6518
    %7385 = vmatpush1.msra.mxu0 %v6517
    %7386 = vmatprep.subr.mxu0 %v6521
    %7387 = vmatpush1.msra.mxu0 %v6520
    %7388 = vmatprep.subr.mxu0 %v6524
    %7389 = vmatpush1.msra.mxu0 %v6523
    %7390 = vmatprep.subr.mxu0 %v6527
    %7391 = vmatpush1.msra.mxu0 %v6526
    %7392 = vmatprep.subr.mxu0 %v6530
    %7393 = vmatpush1.msra.mxu0 %v6529
    %7394 = vmatprep.subr.mxu0 %v6533
    %7395 = vmatpush1.msra.mxu0 %v6532
    %7396 = vmatprep.subr.mxu0 %v6536
    %7397 = vmatpush1.msra.mxu0 %v6535
    %7398 = vmatprep.subr.mxu0 %v6539
    %7399 = vmatpush1.msra.mxu0 %v6538
    %7400 = vmatprep.subr.mxu0 %v6542
    %7401 = vmatpush1.msra.mxu0 %v6541
    %7402 = vmatprep.subr.mxu0 %v6545
    %7403 = vmatpush1.msra.mxu0 %v6544
    %7404 = vmatprep.subr.mxu0 %v6548
    %7405 = vmatpush1.msra.mxu0 %v6547
    %7406 = vmatprep.subr.mxu0 %v6551
    %7407 = vmatpush1.msra.mxu0 %v6550
    %7408 = vmatprep.subr.mxu0 %v6554
    %7409 = vmatpush1.msra.mxu0 %v6553
    %7410 = vmatprep.subr.mxu0 0.0
    %7411 = vmatpush1.msra.mxu0 0.0
    %7412 = vmatprep.subr.mxu0 0.0
    %7413 = vmatpush1.msra.mxu0 0.0
    %7414 = vmatprep.subr.mxu0 0.0
    %7415 = vmatpush1.msra.mxu0 0.0
    %7416 = vmatprep.subr.mxu0 0.0
    %7417 = vmatpush1.msra.mxu0 0.0
    %7418 = vmatprep.subr.mxu0 0.0
    %7419 = vmatpush1.msra.mxu0 0.0
    %7420 = vmatprep.subr.mxu0 0.0
    %7421 = vmatpush1.msra.mxu0 0.0
    %7422 = vmatprep.subr.mxu0 0.0
    %7423 = vmatpush1.msra.mxu0 0.0
    %7424 = vmatprep.subr.mxu0 0.0
    %7425 = vmatpush1.msra.mxu0 0.0
    %7426 = vmatprep.subr.mxu0 0.0
    %7427 = vmatpush1.msra.mxu0 0.0
    %7428 = vmatprep.subr.mxu0 0.0
    %7429 = vmatpush1.msra.mxu0 0.0
    %7430 = vmatprep.subr.mxu0 0.0
    %7431 = vmatpush1.msra.mxu0 0.0
    %7432 = vmatprep.subr.mxu0 0.0
    %7433 = vmatpush1.msra.mxu0 0.0
    %7434 = vmatprep.subr.mxu0 0.0
    %7435 = vmatpush1.msra.mxu0 0.0
    %7436 = vmatprep.subr.mxu0 0.0
    %7437 = vmatpush1.msra.mxu0 0.0
    %7438 = vmatprep.subr.mxu0 0.0
    %7439 = vmatpush1.msra.mxu0 0.0
    %7440 = vmatprep.subr.mxu0 0.0
    %7441 = vmatpush1.msra.mxu0 0.0
    %7442 = vmatprep.mubr.f32.mxu0 0.0
    %7443 = vmatmul.mubr.f32.gmra.mrb[0].mxu0 %v7377
    %v7444 = vpop.f32.mrb[0].mxu0
    %v7445 = vadd.f32 0.0, %v7444
    %v7446 = vpop.f32.mrb[0].mxu0
    %v7447 = vadd.f32 0.0, %v7446
    %7448 = vdwg.mxu0
    %7449 = vmatprep.subr.mxu0 0.0
    %7450 = vmatpush1.msra.mxu0 %v6510
    %7451 = vmatprep.subr.mxu0 0.0
    %7452 = vmatpush1.msra.mxu0 %v6513
    %7453 = vmatprep.subr.mxu0 0.0
    %7454 = vmatpush1.msra.mxu0 %v6516
    %7455 = vmatprep.subr.mxu0 0.0
    %7456 = vmatpush1.msra.mxu0 %v6519
    %7457 = vmatprep.subr.mxu0 0.0
    %7458 = vmatpush1.msra.mxu0 %v6522
    %7459 = vmatprep.subr.mxu0 0.0
    %7460 = vmatpush1.msra.mxu0 %v6525
    %7461 = vmatprep.subr.mxu0 0.0
    %7462 = vmatpush1.msra.mxu0 %v6528
    %7463 = vmatprep.subr.mxu0 0.0
    %7464 = vmatpush1.msra.mxu0 %v6531
    %7465 = vmatprep.subr.mxu0 0.0
    %7466 = vmatpush1.msra.mxu0 %v6534
    %7467 = vmatprep.subr.mxu0 0.0
    %7468 = vmatpush1.msra.mxu0 %v6537
    %7469 = vmatprep.subr.mxu0 0.0
    %7470 = vmatpush1.msra.mxu0 %v6540
    %7471 = vmatprep.subr.mxu0 0.0
    %7472 = vmatpush1.msra.mxu0 %v6543
    %7473 = vmatprep.subr.mxu0 0.0
    %7474 = vmatpush1.msra.mxu0 %v6546
    %7475 = vmatprep.subr.mxu0 0.0
    %7476 = vmatpush1.msra.mxu0 %v6549
    %7477 = vmatprep.subr.mxu0 0.0
    %7478 = vmatpush1.msra.mxu0 %v6552
    %7479 = vmatprep.subr.mxu0 0.0
    %7480 = vmatpush1.msra.mxu0 %v6555
    %7481 = vmatprep.subr.mxu0 0.0
    %7482 = vmatpush1.msra.mxu0 0.0
    %7483 = vmatprep.subr.mxu0 0.0
    %7484 = vmatpush1.msra.mxu0 0.0
    %7485 = vmatprep.subr.mxu0 0.0
    %7486 = vmatpush1.msra.mxu0 0.0
    %7487 = vmatprep.subr.mxu0 0.0
    %7488 = vmatpush1.msra.mxu0 0.0
    %7489 = vmatprep.subr.mxu0 0.0
    %7490 = vmatpush1.msra.mxu0 0.0
    %7491 = vmatprep.subr.mxu0 0.0
    %7492 = vmatpush1.msra.mxu0 0.0
    %7493 = vmatprep.subr.mxu0 0.0
    %7494 = vmatpush1.msra.mxu0 0.0
    %7495 = vmatprep.subr.mxu0 0.0
    %7496 = vmatpush1.msra.mxu0 0.0
    %7497 = vmatprep.subr.mxu0 0.0
    %7498 = vmatpush1.msra.mxu0 0.0
    %7499 = vmatprep.subr.mxu0 0.0
    %7500 = vmatpush1.msra.mxu0 0.0
    %7501 = vmatprep.subr.mxu0 0.0
    %7502 = vmatpush1.msra.mxu0 0.0
    %7503 = vmatprep.subr.mxu0 0.0
    %7504 = vmatpush1.msra.mxu0 0.0
    %7505 = vmatprep.subr.mxu0 0.0
    %7506 = vmatpush1.msra.mxu0 0.0
    %7507 = vmatprep.subr.mxu0 0.0
    %7508 = vmatpush1.msra.mxu0 0.0
    %7509 = vmatprep.subr.mxu0 0.0
    %7510 = vmatpush1.msra.mxu0 0.0
    %7511 = vmatprep.subr.mxu0 0.0
    %7512 = vmatpush1.msra.mxu0 0.0
    %7513 = vmatprep.mubr.f32.mxu0 0.0
    %7514 = vmatmul.mubr.f32.gmra.mrb[0].mxu0 %v7377
    %v7515 = vpop.f32.mrb[0].mxu0
    %v7516 = vadd.f32 0.0, %v7515
    %v7517 = vpop.f32.mrb[0].mxu0
    %7518 = vdwg.mxu0
    %v7519 = vadd.f32 %v6210, %v7445
    %v7520 = vxor.u32 %v7519, 2147483648
    %v7521 = vmul.f32 %v7520, 1.442695
    %v7522 = vpow.pop %v7521
    %v7523 = vadd.f32 %v7522, 1.0
    %v7524 = vrcp.pop %v7523
    %v7525 = vmul.f32 1.0, %v7524
    %v7526 = vadd.f32 %v6212, %v7447
    %v7527 = vxor.u32 %v7526, 2147483648
    %v7528 = vmul.f32 %v7527, 1.442695
    %v7529 = vpow.pop %v7528
    %v7530 = vadd.f32 %v7529, 1.0
    %v7531 = vrcp.pop %v7530
    %v7532 = vmul.f32 1.0, %v7531
    %v7533 = vadd.f32 %v7516, %v6716
    %v7534 = vmul.f32 %v7525, %v7533
    %v7535 = vadd.f32 %v6485, %v7534
    %v7536 = vtanh.pop %v7535
    %v7537 = vsub.f32 1.0, %v7532
    %v7538 = vmul.f32 %v7537, %v7536
    %v7539 = vmul.f32 %v7532, %v7377
    %v7540 = vadd.f32 %v7538, %v7539
    %7541 = vmatprep.subr.mxu0 %v6509
    %7542 = vmatpush1.msra.mxu0 %v6508
    %7543 = vmatprep.subr.mxu0 %v6512
    %7544 = vmatpush1.msra.mxu0 %v6511
    %7545 = vmatprep.subr.mxu0 %v6515
    %7546 = vmatpush1.msra.mxu0 %v6514
    %7547 = vmatprep.subr.mxu0 %v6518
    %7548 = vmatpush1.msra.mxu0 %v6517
    %7549 = vmatprep.subr.mxu0 %v6521
    %7550 = vmatpush1.msra.mxu0 %v6520
    %7551 = vmatprep.subr.mxu0 %v6524
    %7552 = vmatpush1.msra.mxu0 %v6523
    %7553 = vmatprep.subr.mxu0 %v6527
    %7554 = vmatpush1.msra.mxu0 %v6526
    %7555 = vmatprep.subr.mxu0 %v6530
    %7556 = vmatpush1.msra.mxu0 %v6529
    %7557 = vmatprep.subr.mxu0 %v6533
    %7558 = vmatpush1.msra.mxu0 %v6532
    %7559 = vmatprep.subr.mxu0 %v6536
    %7560 = vmatpush1.msra.mxu0 %v6535
    %7561 = vmatprep.subr.mxu0 %v6539
    %7562 = vmatpush1.msra.mxu0 %v6538
    %7563 = vmatprep.subr.mxu0 %v6542
    %7564 = vmatpush1.msra.mxu0 %v6541
    %7565 = vmatprep.subr.mxu0 %v6545
    %7566 = vmatpush1.msra.mxu0 %v6544
    %7567 = vmatprep.subr.mxu0 %v6548
    %7568 = vmatpush1.msra.mxu0 %v6547
    %7569 = vmatprep.subr.mxu0 %v6551
    %7570 = vmatpush1.msra.mxu0 %v6550
    %7571 = vmatprep.subr.mxu0 %v6554
    %7572 = vmatpush1.msra.mxu0 %v6553
    %7573 = vmatprep.subr.mxu0 0.0
    %7574 = vmatpush1.msra.mxu0 0.0
    %7575 = vmatprep.subr.mxu0 0.0
    %7576 = vmatpush1.msra.mxu0 0.0
    %7577 = vmatprep.subr.mxu0 0.0
    %7578 = vmatpush1.msra.mxu0 0.0
    %7579 = vmatprep.subr.mxu0 0.0
    %7580 = vmatpush1.msra.mxu0 0.0
    %7581 = vmatprep.subr.mxu0 0.0
    %7582 = vmatpush1.msra.mxu0 0.0
    %7583 = vmatprep.subr.mxu0 0.0
    %7584 = vmatpush1.msra.mxu0 0.0
    %7585 = vmatprep.subr.mxu0 0.0
    %7586 = vmatpush1.msra.mxu0 0.0
    %7587 = vmatprep.subr.mxu0 0.0
    %7588 = vmatpush1.msra.mxu0 0.0
    %7589 = vmatprep.subr.mxu0 0.0
    %7590 = vmatpush1.msra.mxu0 0.0
    %7591 = vmatprep.subr.mxu0 0.0
    %7592 = vmatpush1.msra.mxu0 0.0
    %7593 = vmatprep.subr.mxu0 0.0
    %7594 = vmatpush1.msra.mxu0 0.0
    %7595 = vmatprep.subr.mxu0 0.0
    %7596 = vmatpush1.msra.mxu0 0.0
    %7597 = vmatprep.subr.mxu0 0.0
    %7598 = vmatpush1.msra.mxu0 0.0
    %7599 = vmatprep.subr.mxu0 0.0
    %7600 = vmatpush1.msra.mxu0 0.0
    %7601 = vmatprep.subr.mxu0 0.0
    %7602 = vmatpush1.msra.mxu0 0.0
    %7603 = vmatprep.subr.mxu0 0.0
    %7604 = vmatpush1.msra.mxu0 0.0
    %7605 = vmatprep.mubr.f32.mxu0 0.0
    %7606 = vmatmul.mubr.f32.gmra.mrb[0].mxu0 %v7540
    %v7607 = vpop.f32.mrb[0].mxu0
    %v7608 = vadd.f32 0.0, %v7607
    %v7609 = vpop.f32.mrb[0].mxu0
    %v7610 = vadd.f32 0.0, %v7609
    %7611 = vdwg.mxu0
    %7612 = vmatprep.subr.mxu0 0.0
    %7613 = vmatpush1.msra.mxu0 %v6510
    %7614 = vmatprep.subr.mxu0 0.0
    %7615 = vmatpush1.msra.mxu0 %v6513
    %7616 = vmatprep.subr.mxu0 0.0
    %7617 = vmatpush1.msra.mxu0 %v6516
    %7618 = vmatprep.subr.mxu0 0.0
    %7619 = vmatpush1.msra.mxu0 %v6519
    %7620 = vmatprep.subr.mxu0 0.0
    %7621 = vmatpush1.msra.mxu0 %v6522
    %7622 = vmatprep.subr.mxu0 0.0
    %7623 = vmatpush1.msra.mxu0 %v6525
    %7624 = vmatprep.subr.mxu0 0.0
    %7625 = vmatpush1.msra.mxu0 %v6528
    %7626 = vmatprep.subr.mxu0 0.0
    %7627 = vmatpush1.msra.mxu0 %v6531
    %7628 = vmatprep.subr.mxu0 0.0
    %7629 = vmatpush1.msra.mxu0 %v6534
    %7630 = vmatprep.subr.mxu0 0.0
    %7631 = vmatpush1.msra.mxu0 %v6537
    %7632 = vmatprep.subr.mxu0 0.0
    %7633 = vmatpush1.msra.mxu0 %v6540
    %7634 = vmatprep.subr.mxu0 0.0
    %7635 = vmatpush1.msra.mxu0 %v6543
    %7636 = vmatprep.subr.mxu0 0.0
    %7637 = vmatpush1.msra.mxu0 %v6546
    %7638 = vmatprep.subr.mxu0 0.0
    %7639 = vmatpush1.msra.mxu0 %v6549
    %7640 = vmatprep.subr.mxu0 0.0
    %7641 = vmatpush1.msra.mxu0 %v6552
    %7642 = vmatprep.subr.mxu0 0.0
    %7643 = vmatpush1.msra.mxu0 %v6555
    %7644 = vmatprep.subr.mxu0 0.0
    %7645 = vmatpush1.msra.mxu0 0.0
    %7646 = vmatprep.subr.mxu0 0.0
    %7647 = vmatpush1.msra.mxu0 0.0
    %7648 = vmatprep.subr.mxu0 0.0
    %7649 = vmatpush1.msra.mxu0 0.0
    %7650 = vmatprep.subr.mxu0 0.0
    %7651 = vmatpush1.msra.mxu0 0.0
    %7652 = vmatprep.subr.mxu0 0.0
    %7653 = vmatpush1.msra.mxu0 0.0
    %7654 = vmatprep.subr.mxu0 0.0
    %7655 = vmatpush1.msra.mxu0 0.0
    %7656 = vmatprep.subr.mxu0 0.0
    %7657 = vmatpush1.msra.mxu0 0.0
    %7658 = vmatprep.subr.mxu0 0.0
    %7659 = vmatpush1.msra.mxu0 0.0
    %7660 = vmatprep.subr.mxu0 0.0
    %7661 = vmatpush1.msra.mxu0 0.0
    %7662 = vmatprep.subr.mxu0 0.0
    %7663 = vmatpush1.msra.mxu0 0.0
    %7664 = vmatprep.subr.mxu0 0.0
    %7665 = vmatpush1.msra.mxu0 0.0
    %7666 = vmatprep.subr.mxu0 0.0
    %7667 = vmatpush1.msra.mxu0 0.0
    %7668 = vmatprep.subr.mxu0 0.0
    %7669 = vmatpush1.msra.mxu0 0.0
    %7670 = vmatprep.subr.mxu0 0.0
    %7671 = vmatpush1.msra.mxu0 0.0
    %7672 = vmatprep.subr.mxu0 0.0
    %7673 = vmatpush1.msra.mxu0 0.0
    %7674 = vmatprep.subr.mxu0 0.0
    %7675 = vmatpush1.msra.mxu0 0.0
    %7676 = vmatprep.mubr.f32.mxu0 0.0
    %7677 = vmatmul.mubr.f32.gmra.mrb[0].mxu0 %v7540
    %v7678 = vpop.f32.mrb[0].mxu0
    %v7679 = vadd.f32 0.0, %v7678
    %v7680 = vpop.f32.mrb[0].mxu0
    %7681 = vdwg.mxu0
    %v7682 = vadd.f32 %v6174, %v7608
    %v7683 = vxor.u32 %v7682, 2147483648
    %v7684 = vmul.f32 %v7683, 1.442695
    %v7685 = vpow.pop %v7684
    %v7686 = vadd.f32 %v7685, 1.0
    %v7687 = vrcp.pop %v7686
    %v7688 = vmul.f32 1.0, %v7687
    %v7689 = vadd.f32 %v6176, %v7610
    %v7690 = vxor.u32 %v7689, 2147483648
    %v7691 = vmul.f32 %v7690, 1.442695
    %v7692 = vpow.pop %v7691
    %v7693 = vadd.f32 %v7692, 1.0
    %v7694 = vrcp.pop %v7693
    %v7695 = vmul.f32 1.0, %v7694
    %v7696 = vadd.f32 %v7679, %v6716
    %v7697 = vmul.f32 %v7688, %v7696
    %v7698 = vadd.f32 %v6455, %v7697
    %v7699 = vtanh.pop %v7698
    %v7700 = vsub.f32 1.0, %v7695
    %v7701 = vmul.f32 %v7700, %v7699
    %v7702 = vmul.f32 %v7695, %v7540
    %v7703 = vadd.f32 %v7701, %v7702
    %7704 = vmatprep.subr.mxu0 %v6509
    %7705 = vmatpush1.msra.mxu0 %v6508
    %7706 = vmatprep.subr.mxu0 %v6512
    %7707 = vmatpush1.msra.mxu0 %v6511
    %7708 = vmatprep.subr.mxu0 %v6515
    %7709 = vmatpush1.msra.mxu0 %v6514
    %7710 = vmatprep.subr.mxu0 %v6518
    %7711 = vmatpush1.msra.mxu0 %v6517
    %7712 = vmatprep.subr.mxu0 %v6521
    %7713 = vmatpush1.msra.mxu0 %v6520
    %7714 = vmatprep.subr.mxu0 %v6524
    %7715 = vmatpush1.msra.mxu0 %v6523
    %7716 = vmatprep.subr.mxu0 %v6527
    %7717 = vmatpush1.msra.mxu0 %v6526
    %7718 = vmatprep.subr.mxu0 %v6530
    %7719 = vmatpush1.msra.mxu0 %v6529
    %7720 = vmatprep.subr.mxu0 %v6533
    %7721 = vmatpush1.msra.mxu0 %v6532
    %7722 = vmatprep.subr.mxu0 %v6536
    %7723 = vmatpush1.msra.mxu0 %v6535
    %7724 = vmatprep.subr.mxu0 %v6539
    %7725 = vmatpush1.msra.mxu0 %v6538
    %7726 = vmatprep.subr.mxu0 %v6542
    %7727 = vmatpush1.msra.mxu0 %v6541
    %7728 = vmatprep.subr.mxu0 %v6545
    %7729 = vmatpush1.msra.mxu0 %v6544
    %7730 = vmatprep.subr.mxu0 %v6548
    %7731 = vmatpush1.msra.mxu0 %v6547
    %7732 = vmatprep.subr.mxu0 %v6551
    %7733 = vmatpush1.msra.mxu0 %v6550
    %7734 = vmatprep.subr.mxu0 %v6554
    %7735 = vmatpush1.msra.mxu0 %v6553
    %7736 = vmatprep.subr.mxu0 0.0
    %7737 = vmatpush1.msra.mxu0 0.0
    %7738 = vmatprep.subr.mxu0 0.0
    %7739 = vmatpush1.msra.mxu0 0.0
    %7740 = vmatprep.subr.mxu0 0.0
    %7741 = vmatpush1.msra.mxu0 0.0
    %7742 = vmatprep.subr.mxu0 0.0
    %7743 = vmatpush1.msra.mxu0 0.0
    %7744 = vmatprep.subr.mxu0 0.0
    %7745 = vmatpush1.msra.mxu0 0.0
    %7746 = vmatprep.subr.mxu0 0.0
    %7747 = vmatpush1.msra.mxu0 0.0
    %7748 = vmatprep.subr.mxu0 0.0
    %7749 = vmatpush1.msra.mxu0 0.0
    %7750 = vmatprep.subr.mxu0 0.0
    %7751 = vmatpush1.msra.mxu0 0.0
    %7752 = vmatprep.subr.mxu0 0.0
    %7753 = vmatpush1.msra.mxu0 0.0
    %7754 = vmatprep.subr.mxu0 0.0
    %7755 = vmatpush1.msra.mxu0 0.0
    %7756 = vmatprep.subr.mxu0 0.0
    %7757 = vmatpush1.msra.mxu0 0.0
    %7758 = vmatprep.subr.mxu0 0.0
    %7759 = vmatpush1.msra.mxu0 0.0
    %7760 = vmatprep.subr.mxu0 0.0
    %7761 = vmatpush1.msra.mxu0 0.0
    %7762 = vmatprep.subr.mxu0 0.0
    %7763 = vmatpush1.msra.mxu0 0.0
    %7764 = vmatprep.subr.mxu0 0.0
    %7765 = vmatpush1.msra.mxu0 0.0
    %7766 = vmatprep.subr.mxu0 0.0
    %7767 = vmatpush1.msra.mxu0 0.0
    %7768 = vmatprep.mubr.f32.mxu0 0.0
    %7769 = vmatmul.mubr.f32.gmra.mrb[0].mxu0 %v7703
    %v7770 = vpop.f32.mrb[0].mxu0
    %v7771 = vadd.f32 0.0, %v7770
    %v7772 = vpop.f32.mrb[0].mxu0
    %v7773 = vadd.f32 0.0, %v7772
    %7774 = vdwg.mxu0
    %7775 = vmatprep.subr.mxu0 0.0
    %7776 = vmatpush1.msra.mxu0 %v6510
    %7777 = vmatprep.subr.mxu0 0.0
    %7778 = vmatpush1.msra.mxu0 %v6513
    %7779 = vmatprep.subr.mxu0 0.0
    %7780 = vmatpush1.msra.mxu0 %v6516
    %7781 = vmatprep.subr.mxu0 0.0
    %7782 = vmatpush1.msra.mxu0 %v6519
    %7783 = vmatprep.subr.mxu0 0.0
    %7784 = vmatpush1.msra.mxu0 %v6522
    %7785 = vmatprep.subr.mxu0 0.0
    %7786 = vmatpush1.msra.mxu0 %v6525
    %7787 = vmatprep.subr.mxu0 0.0
    %7788 = vmatpush1.msra.mxu0 %v6528
    %7789 = vmatprep.subr.mxu0 0.0
    %7790 = vmatpush1.msra.mxu0 %v6531
    %7791 = vmatprep.subr.mxu0 0.0
    %7792 = vmatpush1.msra.mxu0 %v6534
    %7793 = vmatprep.subr.mxu0 0.0
    %7794 = vmatpush1.msra.mxu0 %v6537
    %7795 = vmatprep.subr.mxu0 0.0
    %7796 = vmatpush1.msra.mxu0 %v6540
    %7797 = vmatprep.subr.mxu0 0.0
    %7798 = vmatpush1.msra.mxu0 %v6543
    %7799 = vmatprep.subr.mxu0 0.0
    %7800 = vmatpush1.msra.mxu0 %v6546
    %7801 = vmatprep.subr.mxu0 0.0
    %7802 = vmatpush1.msra.mxu0 %v6549
    %7803 = vmatprep.subr.mxu0 0.0
    %7804 = vmatpush1.msra.mxu0 %v6552
    %7805 = vmatprep.subr.mxu0 0.0
    %7806 = vmatpush1.msra.mxu0 %v6555
    %7807 = vmatprep.subr.mxu0 0.0
    %7808 = vmatpush1.msra.mxu0 0.0
    %7809 = vmatprep.subr.mxu0 0.0
    %7810 = vmatpush1.msra.mxu0 0.0
    %7811 = vmatprep.subr.mxu0 0.0
    %7812 = vmatpush1.msra.mxu0 0.0
    %7813 = vmatprep.subr.mxu0 0.0
    %7814 = vmatpush1.msra.mxu0 0.0
    %7815 = vmatprep.subr.mxu0 0.0
    %7816 = vmatpush1.msra.mxu0 0.0
    %7817 = vmatprep.subr.mxu0 0.0
    %7818 = vmatpush1.msra.mxu0 0.0
    %7819 = vmatprep.subr.mxu0 0.0
    %7820 = vmatpush1.msra.mxu0 0.0
    %7821 = vmatprep.subr.mxu0 0.0
    %7822 = vmatpush1.msra.mxu0 0.0
    %7823 = vmatprep.subr.mxu0 0.0
    %7824 = vmatpush1.msra.mxu0 0.0
    %7825 = vmatprep.subr.mxu0 0.0
    %7826 = vmatpush1.msra.mxu0 0.0
    %7827 = vmatprep.subr.mxu0 0.0
    %7828 = vmatpush1.msra.mxu0 0.0
    %7829 = vmatprep.subr.mxu0 0.0
    %7830 = vmatpush1.msra.mxu0 0.0
    %7831 = vmatprep.subr.mxu0 0.0
    %7832 = vmatpush1.msra.mxu0 0.0
    %7833 = vmatprep.subr.mxu0 0.0
    %7834 = vmatpush1.msra.mxu0 0.0
    %7835 = vmatprep.subr.mxu0 0.0
    %7836 = vmatpush1.msra.mxu0 0.0
    %7837 = vmatprep.subr.mxu0 0.0
    %7838 = vmatpush1.msra.mxu0 0.0
    %7839 = vmatprep.mubr.f32.mxu0 0.0
    %7840 = vmatmul.mubr.f32.gmra.mrb[0].mxu0 %v7703
    %v7841 = vpop.f32.mrb[0].mxu0
    %v7842 = vadd.f32 0.0, %v7841
    %v7843 = vpop.f32.mrb[0].mxu0
    %7844 = vdwg.mxu0
    %v7845 = vadd.f32 %v6216, %v7771
    %v7846 = vxor.u32 %v7845, 2147483648
    %v7847 = vmul.f32 %v7846, 1.442695
    %v7848 = vpow.pop %v7847
    %v7849 = vadd.f32 %v7848, 1.0
    %v7850 = vrcp.pop %v7849
    %v7851 = vmul.f32 1.0, %v7850
    %v7852 = vadd.f32 %v6218, %v7773
    %v7853 = vxor.u32 %v7852, 2147483648
    %v7854 = vmul.f32 %v7853, 1.442695
    %v7855 = vpow.pop %v7854
    %v7856 = vadd.f32 %v7855, 1.0
    %v7857 = vrcp.pop %v7856
    %v7858 = vmul.f32 1.0, %v7857
    %v7859 = vadd.f32 %v7842, %v6716
    %v7860 = vmul.f32 %v7851, %v7859
    %v7861 = vadd.f32 %v6490, %v7860
    %v7862 = vtanh.pop %v7861
    %v7863 = vsub.f32 1.0, %v7858
    %v7864 = vmul.f32 %v7863, %v7862
    %v7865 = vmul.f32 %v7858, %v7703
    %v7866 = vadd.f32 %v7864, %v7865
    %7867 = vmatprep.subr.mxu0 %v6509
    %7868 = vmatpush1.msra.mxu0 %v6508
    %7869 = vmatprep.subr.mxu0 %v6512
    %7870 = vmatpush1.msra.mxu0 %v6511
    %7871 = vmatprep.subr.mxu0 %v6515
    %7872 = vmatpush1.msra.mxu0 %v6514
    %7873 = vmatprep.subr.mxu0 %v6518
    %7874 = vmatpush1.msra.mxu0 %v6517
    %7875 = vmatprep.subr.mxu0 %v6521
    %7876 = vmatpush1.msra.mxu0 %v6520
    %7877 = vmatprep.subr.mxu0 %v6524
    %7878 = vmatpush1.msra.mxu0 %v6523
    %7879 = vmatprep.subr.mxu0 %v6527
    %7880 = vmatpush1.msra.mxu0 %v6526
    %7881 = vmatprep.subr.mxu0 %v6530
    %7882 = vmatpush1.msra.mxu0 %v6529
    %7883 = vmatprep.subr.mxu0 %v6533
    %7884 = vmatpush1.msra.mxu0 %v6532
    %7885 = vmatprep.subr.mxu0 %v6536
    %7886 = vmatpush1.msra.mxu0 %v6535
    %7887 = vmatprep.subr.mxu0 %v6539
    %7888 = vmatpush1.msra.mxu0 %v6538
    %7889 = vmatprep.subr.mxu0 %v6542
    %7890 = vmatpush1.msra.mxu0 %v6541
    %7891 = vmatprep.subr.mxu0 %v6545
    %7892 = vmatpush1.msra.mxu0 %v6544
    %7893 = vmatprep.subr.mxu0 %v6548
    %7894 = vmatpush1.msra.mxu0 %v6547
    %7895 = vmatprep.subr.mxu0 %v6551
    %7896 = vmatpush1.msra.mxu0 %v6550
    %7897 = vmatprep.subr.mxu0 %v6554
    %7898 = vmatpush1.msra.mxu0 %v6553
    %7899 = vmatprep.subr.mxu0 0.0
    %7900 = vmatpush1.msra.mxu0 0.0
    %7901 = vmatprep.subr.mxu0 0.0
    %7902 = vmatpush1.msra.mxu0 0.0
    %7903 = vmatprep.subr.mxu0 0.0
    %7904 = vmatpush1.msra.mxu0 0.0
    %7905 = vmatprep.subr.mxu0 0.0
    %7906 = vmatpush1.msra.mxu0 0.0
    %7907 = vmatprep.subr.mxu0 0.0
    %7908 = vmatpush1.msra.mxu0 0.0
    %7909 = vmatprep.subr.mxu0 0.0
    %7910 = vmatpush1.msra.mxu0 0.0
    %7911 = vmatprep.subr.mxu0 0.0
    %7912 = vmatpush1.msra.mxu0 0.0
    %7913 = vmatprep.subr.mxu0 0.0
    %7914 = vmatpush1.msra.mxu0 0.0
    %7915 = vmatprep.subr.mxu0 0.0
    %7916 = vmatpush1.msra.mxu0 0.0
    %7917 = vmatprep.subr.mxu0 0.0
    %7918 = vmatpush1.msra.mxu0 0.0
    %7919 = vmatprep.subr.mxu0 0.0
    %7920 = vmatpush1.msra.mxu0 0.0
    %7921 = vmatprep.subr.mxu0 0.0
    %7922 = vmatpush1.msra.mxu0 0.0
    %7923 = vmatprep.subr.mxu0 0.0
    %7924 = vmatpush1.msra.mxu0 0.0
    %7925 = vmatprep.subr.mxu0 0.0
    %7926 = vmatpush1.msra.mxu0 0.0
    %7927 = vmatprep.subr.mxu0 0.0
    %7928 = vmatpush1.msra.mxu0 0.0
    %7929 = vmatprep.subr.mxu0 0.0
    %7930 = vmatpush1.msra.mxu0 0.0
    %7931 = vmatprep.mubr.f32.mxu0 0.0
    %7932 = vmatmul.mubr.f32.gmra.mrb[0].mxu0 %v7866
    %v7933 = vpop.f32.mrb[0].mxu0
    %v7934 = vadd.f32 0.0, %v7933
    %v7935 = vpop.f32.mrb[0].mxu0
    %v7936 = vadd.f32 0.0, %v7935
    %7937 = vdwg.mxu0
    %7938 = vmatprep.subr.mxu0 0.0
    %7939 = vmatpush1.msra.mxu0 %v6510
    %7940 = vmatprep.subr.mxu0 0.0
    %7941 = vmatpush1.msra.mxu0 %v6513
    %7942 = vmatprep.subr.mxu0 0.0
    %7943 = vmatpush1.msra.mxu0 %v6516
    %7944 = vmatprep.subr.mxu0 0.0
    %7945 = vmatpush1.msra.mxu0 %v6519
    %7946 = vmatprep.subr.mxu0 0.0
    %7947 = vmatpush1.msra.mxu0 %v6522
    %7948 = vmatprep.subr.mxu0 0.0
    %7949 = vmatpush1.msra.mxu0 %v6525
    %7950 = vmatprep.subr.mxu0 0.0
    %7951 = vmatpush1.msra.mxu0 %v6528
    %7952 = vmatprep.subr.mxu0 0.0
    %7953 = vmatpush1.msra.mxu0 %v6531
    %7954 = vmatprep.subr.mxu0 0.0
    %7955 = vmatpush1.msra.mxu0 %v6534
    %7956 = vmatprep.subr.mxu0 0.0
    %7957 = vmatpush1.msra.mxu0 %v6537
    %7958 = vmatprep.subr.mxu0 0.0
    %7959 = vmatpush1.msra.mxu0 %v6540
    %7960 = vmatprep.subr.mxu0 0.0
    %7961 = vmatpush1.msra.mxu0 %v6543
    %7962 = vmatprep.subr.mxu0 0.0
    %7963 = vmatpush1.msra.mxu0 %v6546
    %7964 = vmatprep.subr.mxu0 0.0
    %7965 = vmatpush1.msra.mxu0 %v6549
    %7966 = vmatprep.subr.mxu0 0.0
    %7967 = vmatpush1.msra.mxu0 %v6552
    %7968 = vmatprep.subr.mxu0 0.0
    %7969 = vmatpush1.msra.mxu0 %v6555
    %7970 = vmatprep.subr.mxu0 0.0
    %7971 = vmatpush1.msra.mxu0 0.0
    %7972 = vmatprep.subr.mxu0 0.0
    %7973 = vmatpush1.msra.mxu0 0.0
    %7974 = vmatprep.subr.mxu0 0.0
    %7975 = vmatpush1.msra.mxu0 0.0
    %7976 = vmatprep.subr.mxu0 0.0
    %7977 = vmatpush1.msra.mxu0 0.0
    %7978 = vmatprep.subr.mxu0 0.0
    %7979 = vmatpush1.msra.mxu0 0.0
    %7980 = vmatprep.subr.mxu0 0.0
    %7981 = vmatpush1.msra.mxu0 0.0
    %7982 = vmatprep.subr.mxu0 0.0
    %7983 = vmatpush1.msra.mxu0 0.0
    %7984 = vmatprep.subr.mxu0 0.0
    %7985 = vmatpush1.msra.mxu0 0.0
    %7986 = vmatprep.subr.mxu0 0.0
    %7987 = vmatpush1.msra.mxu0 0.0
    %7988 = vmatprep.subr.mxu0 0.0
    %7989 = vmatpush1.msra.mxu0 0.0
    %7990 = vmatprep.subr.mxu0 0.0
    %7991 = vmatpush1.msra.mxu0 0.0
    %7992 = vmatprep.subr.mxu0 0.0
    %7993 = vmatpush1.msra.mxu0 0.0
    %7994 = vmatprep.subr.mxu0 0.0
    %7995 = vmatpush1.msra.mxu0 0.0
    %7996 = vmatprep.subr.mxu0 0.0
    %7997 = vmatpush1.msra.mxu0 0.0
    %7998 = vmatprep.subr.mxu0 0.0
    %7999 = vmatpush1.msra.mxu0 0.0
    %8000 = vmatprep.subr.mxu0 0.0
    %8001 = vmatpush1.msra.mxu0 0.0
    %8002 = vmatprep.mubr.f32.mxu0 0.0
    %8003 = vmatmul.mubr.f32.gmra.mrb[0].mxu0 %v7866
    %v8004 = vpop.f32.mrb[0].mxu0
    %v8005 = vadd.f32 0.0, %v8004
    %v8006 = vpop.f32.mrb[0].mxu0
    %8007 = vdwg.mxu0
    %v8008 = vadd.f32 %v6180, %v7934
    %v8009 = vxor.u32 %v8008, 2147483648
    %v8010 = vmul.f32 %v8009, 1.442695
    %v8011 = vpow.pop %v8010
    %v8012 = vadd.f32 %v8011, 1.0
    %v8013 = vrcp.pop %v8012
    %v8014 = vmul.f32 1.0, %v8013
    %v8015 = vadd.f32 %v6182, %v7936
    %v8016 = vxor.u32 %v8015, 2147483648
    %v8017 = vmul.f32 %v8016, 1.442695
    %v8018 = vpow.pop %v8017
    %v8019 = vadd.f32 %v8018, 1.0
    %v8020 = vrcp.pop %v8019
    %v8021 = vmul.f32 1.0, %v8020
    %v8022 = vadd.f32 %v8005, %v6716
    %v8023 = vmul.f32 %v8014, %v8022
    %v8024 = vadd.f32 %v6460, %v8023
    %v8025 = vtanh.pop %v8024
    %v8026 = vsub.f32 1.0, %v8021
    %v8027 = vmul.f32 %v8026, %v8025
    %v8028 = vmul.f32 %v8021, %v7866
    %v8029 = vadd.f32 %v8027, %v8028
    %8030 = vmatprep.subr.mxu0 %v6509
    %8031 = vmatpush1.msra.mxu0 %v6508
    %8032 = vmatprep.subr.mxu0 %v6512
    %8033 = vmatpush1.msra.mxu0 %v6511
    %8034 = vmatprep.subr.mxu0 %v6515
    %8035 = vmatpush1.msra.mxu0 %v6514
    %8036 = vmatprep.subr.mxu0 %v6518
    %8037 = vmatpush1.msra.mxu0 %v6517
    %8038 = vmatprep.subr.mxu0 %v6521
    %8039 = vmatpush1.msra.mxu0 %v6520
    %8040 = vmatprep.subr.mxu0 %v6524
    %8041 = vmatpush1.msra.mxu0 %v6523
    %8042 = vmatprep.subr.mxu0 %v6527
    %8043 = vmatpush1.msra.mxu0 %v6526
    %8044 = vmatprep.subr.mxu0 %v6530
    %8045 = vmatpush1.msra.mxu0 %v6529
    %8046 = vmatprep.subr.mxu0 %v6533
    %8047 = vmatpush1.msra.mxu0 %v6532
    %8048 = vmatprep.subr.mxu0 %v6536
    %8049 = vmatpush1.msra.mxu0 %v6535
    %8050 = vmatprep.subr.mxu0 %v6539
    %8051 = vmatpush1.msra.mxu0 %v6538
    %8052 = vmatprep.subr.mxu0 %v6542
    %8053 = vmatpush1.msra.mxu0 %v6541
    %8054 = vmatprep.subr.mxu0 %v6545
    %8055 = vmatpush1.msra.mxu0 %v6544
    %8056 = vmatprep.subr.mxu0 %v6548
    %8057 = vmatpush1.msra.mxu0 %v6547
    %8058 = vmatprep.subr.mxu0 %v6551
    %8059 = vmatpush1.msra.mxu0 %v6550
    %8060 = vmatprep.subr.mxu0 %v6554
    %8061 = vmatpush1.msra.mxu0 %v6553
    %8062 = vmatprep.subr.mxu0 0.0
    %8063 = vmatpush1.msra.mxu0 0.0
    %8064 = vmatprep.subr.mxu0 0.0
    %8065 = vmatpush1.msra.mxu0 0.0
    %8066 = vmatprep.subr.mxu0 0.0
    %8067 = vmatpush1.msra.mxu0 0.0
    %8068 = vmatprep.subr.mxu0 0.0
    %8069 = vmatpush1.msra.mxu0 0.0
    %8070 = vmatprep.subr.mxu0 0.0
    %8071 = vmatpush1.msra.mxu0 0.0
    %8072 = vmatprep.subr.mxu0 0.0
    %8073 = vmatpush1.msra.mxu0 0.0
    %8074 = vmatprep.subr.mxu0 0.0
    %8075 = vmatpush1.msra.mxu0 0.0
    %8076 = vmatprep.subr.mxu0 0.0
    %8077 = vmatpush1.msra.mxu0 0.0
    %8078 = vmatprep.subr.mxu0 0.0
    %8079 = vmatpush1.msra.mxu0 0.0
    %8080 = vmatprep.subr.mxu0 0.0
    %8081 = vmatpush1.msra.mxu0 0.0
    %8082 = vmatprep.subr.mxu0 0.0
    %8083 = vmatpush1.msra.mxu0 0.0
    %8084 = vmatprep.subr.mxu0 0.0
    %8085 = vmatpush1.msra.mxu0 0.0
    %8086 = vmatprep.subr.mxu0 0.0
    %8087 = vmatpush1.msra.mxu0 0.0
    %8088 = vmatprep.subr.mxu0 0.0
    %8089 = vmatpush1.msra.mxu0 0.0
    %8090 = vmatprep.subr.mxu0 0.0
    %8091 = vmatpush1.msra.mxu0 0.0
    %8092 = vmatprep.subr.mxu0 0.0
    %8093 = vmatpush1.msra.mxu0 0.0
    %8094 = vmatprep.mubr.f32.mxu0 0.0
    %8095 = vmatmul.mubr.f32.gmra.mrb[0].mxu0 %v8029
    %v8096 = vpop.f32.mrb[0].mxu0
    %v8097 = vadd.f32 0.0, %v8096
    %v8098 = vpop.f32.mrb[0].mxu0
    %v8099 = vadd.f32 0.0, %v8098
    %8100 = vdwg.mxu0
    %8101 = vmatprep.subr.mxu0 0.0
    %8102 = vmatpush1.msra.mxu0 %v6510
    %8103 = vmatprep.subr.mxu0 0.0
    %8104 = vmatpush1.msra.mxu0 %v6513
    %8105 = vmatprep.subr.mxu0 0.0
    %8106 = vmatpush1.msra.mxu0 %v6516
    %8107 = vmatprep.subr.mxu0 0.0
    %8108 = vmatpush1.msra.mxu0 %v6519
    %8109 = vmatprep.subr.mxu0 0.0
    %8110 = vmatpush1.msra.mxu0 %v6522
    %8111 = vmatprep.subr.mxu0 0.0
    %8112 = vmatpush1.msra.mxu0 %v6525
    %8113 = vmatprep.subr.mxu0 0.0
    %8114 = vmatpush1.msra.mxu0 %v6528
    %8115 = vmatprep.subr.mxu0 0.0
    %8116 = vmatpush1.msra.mxu0 %v6531
    %8117 = vmatprep.subr.mxu0 0.0
    %8118 = vmatpush1.msra.mxu0 %v6534
    %8119 = vmatprep.subr.mxu0 0.0
    %8120 = vmatpush1.msra.mxu0 %v6537
    %8121 = vmatprep.subr.mxu0 0.0
    %8122 = vmatpush1.msra.mxu0 %v6540
    %8123 = vmatprep.subr.mxu0 0.0
    %8124 = vmatpush1.msra.mxu0 %v6543
    %8125 = vmatprep.subr.mxu0 0.0
    %8126 = vmatpush1.msra.mxu0 %v6546
    %8127 = vmatprep.subr.mxu0 0.0
    %8128 = vmatpush1.msra.mxu0 %v6549
    %8129 = vmatprep.subr.mxu0 0.0
    %8130 = vmatpush1.msra.mxu0 %v6552
    %8131 = vmatprep.subr.mxu0 0.0
    %8132 = vmatpush1.msra.mxu0 %v6555
    %8133 = vmatprep.subr.mxu0 0.0
    %8134 = vmatpush1.msra.mxu0 0.0
    %8135 = vmatprep.subr.mxu0 0.0
    %8136 = vmatpush1.msra.mxu0 0.0
    %8137 = vmatprep.subr.mxu0 0.0
    %8138 = vmatpush1.msra.mxu0 0.0
    %8139 = vmatprep.subr.mxu0 0.0
    %8140 = vmatpush1.msra.mxu0 0.0
    %8141 = vmatprep.subr.mxu0 0.0
    %8142 = vmatpush1.msra.mxu0 0.0
    %8143 = vmatprep.subr.mxu0 0.0
    %8144 = vmatpush1.msra.mxu0 0.0
    %8145 = vmatprep.subr.mxu0 0.0
    %8146 = vmatpush1.msra.mxu0 0.0
    %8147 = vmatprep.subr.mxu0 0.0
    %8148 = vmatpush1.msra.mxu0 0.0
    %8149 = vmatprep.subr.mxu0 0.0
    %8150 = vmatpush1.msra.mxu0 0.0
    %8151 = vmatprep.subr.mxu0 0.0
    %8152 = vmatpush1.msra.mxu0 0.0
    %8153 = vmatprep.subr.mxu0 0.0
    %8154 = vmatpush1.msra.mxu0 0.0
    %8155 = vmatprep.subr.mxu0 0.0
    %8156 = vmatpush1.msra.mxu0 0.0
    %8157 = vmatprep.subr.mxu0 0.0
    %8158 = vmatpush1.msra.mxu0 0.0
    %8159 = vmatprep.subr.mxu0 0.0
    %8160 = vmatpush1.msra.mxu0 0.0
    %8161 = vmatprep.subr.mxu0 0.0
    %8162 = vmatpush1.msra.mxu0 0.0
    %8163 = vmatprep.subr.mxu0 0.0
    %8164 = vmatpush1.msra.mxu0 0.0
    %8165 = vmatprep.mubr.f32.mxu0 0.0
    %8166 = vmatmul.mubr.f32.gmra.mrb[0].mxu0 %v8029
    %v8167 = vpop.f32.mrb[0].mxu0
    %v8168 = vadd.f32 0.0, %v8167
    %v8169 = vpop.f32.mrb[0].mxu0
    %8170 = vdwg.mxu0
    %v8171 = vadd.f32 %v6222, %v8097
    %v8172 = vxor.u32 %v8171, 2147483648
    %v8173 = vmul.f32 %v8172, 1.442695
    %v8174 = vpow.pop %v8173
    %v8175 = vadd.f32 %v8174, 1.0
    %v8176 = vrcp.pop %v8175
    %v8177 = vmul.f32 1.0, %v8176
    %v8178 = vadd.f32 %v6224, %v8099
    %v8179 = vxor.u32 %v8178, 2147483648
    %v8180 = vmul.f32 %v8179, 1.442695
    %v8181 = vpow.pop %v8180
    %v8182 = vadd.f32 %v8181, 1.0
    %v8183 = vrcp.pop %v8182
    %v8184 = vmul.f32 1.0, %v8183
    %v8185 = vadd.f32 %v8168, %v6716
    %v8186 = vmul.f32 %v8177, %v8185
    %v8187 = vadd.f32 %v6495, %v8186
    %v8188 = vtanh.pop %v8187
    %v8189 = vsub.f32 1.0, %v8184
    %v8190 = vmul.f32 %v8189, %v8188
    %v8191 = vmul.f32 %v8184, %v8029
    %v8192 = vadd.f32 %v8190, %v8191
    %8193 = vmatprep.subr.mxu0 %v6509
    %8194 = vmatpush1.msra.mxu0 %v6508
    %8195 = vmatprep.subr.mxu0 %v6512
    %8196 = vmatpush1.msra.mxu0 %v6511
    %8197 = vmatprep.subr.mxu0 %v6515
    %8198 = vmatpush1.msra.mxu0 %v6514
    %8199 = vmatprep.subr.mxu0 %v6518
    %8200 = vmatpush1.msra.mxu0 %v6517
    %8201 = vmatprep.subr.mxu0 %v6521
    %8202 = vmatpush1.msra.mxu0 %v6520
    %8203 = vmatprep.subr.mxu0 %v6524
    %8204 = vmatpush1.msra.mxu0 %v6523
    %8205 = vmatprep.subr.mxu0 %v6527
    %8206 = vmatpush1.msra.mxu0 %v6526
    %8207 = vmatprep.subr.mxu0 %v6530
    %8208 = vmatpush1.msra.mxu0 %v6529
    %8209 = vmatprep.subr.mxu0 %v6533
    %8210 = vmatpush1.msra.mxu0 %v6532
    %8211 = vmatprep.subr.mxu0 %v6536
    %8212 = vmatpush1.msra.mxu0 %v6535
    %8213 = vmatprep.subr.mxu0 %v6539
    %8214 = vmatpush1.msra.mxu0 %v6538
    %8215 = vmatprep.subr.mxu0 %v6542
    %8216 = vmatpush1.msra.mxu0 %v6541
    %8217 = vmatprep.subr.mxu0 %v6545
    %8218 = vmatpush1.msra.mxu0 %v6544
    %8219 = vmatprep.subr.mxu0 %v6548
    %8220 = vmatpush1.msra.mxu0 %v6547
    %8221 = vmatprep.subr.mxu0 %v6551
    %8222 = vmatpush1.msra.mxu0 %v6550
    %8223 = vmatprep.subr.mxu0 %v6554
    %8224 = vmatpush1.msra.mxu0 %v6553
    %8225 = vmatprep.subr.mxu0 0.0
    %8226 = vmatpush1.msra.mxu0 0.0
    %8227 = vmatprep.subr.mxu0 0.0
    %8228 = vmatpush1.msra.mxu0 0.0
    %8229 = vmatprep.subr.mxu0 0.0
    %8230 = vmatpush1.msra.mxu0 0.0
    %8231 = vmatprep.subr.mxu0 0.0
    %8232 = vmatpush1.msra.mxu0 0.0
    %8233 = vmatprep.subr.mxu0 0.0
    %8234 = vmatpush1.msra.mxu0 0.0
    %8235 = vmatprep.subr.mxu0 0.0
    %8236 = vmatpush1.msra.mxu0 0.0
    %8237 = vmatprep.subr.mxu0 0.0
    %8238 = vmatpush1.msra.mxu0 0.0
    %8239 = vmatprep.subr.mxu0 0.0
    %8240 = vmatpush1.msra.mxu0 0.0
    %8241 = vmatprep.subr.mxu0 0.0
    %8242 = vmatpush1.msra.mxu0 0.0
    %8243 = vmatprep.subr.mxu0 0.0
    %8244 = vmatpush1.msra.mxu0 0.0
    %8245 = vmatprep.subr.mxu0 0.0
    %8246 = vmatpush1.msra.mxu0 0.0
    %8247 = vmatprep.subr.mxu0 0.0
    %8248 = vmatpush1.msra.mxu0 0.0
    %8249 = vmatprep.subr.mxu0 0.0
    %8250 = vmatpush1.msra.mxu0 0.0
    %8251 = vmatprep.subr.mxu0 0.0
    %8252 = vmatpush1.msra.mxu0 0.0
    %8253 = vmatprep.subr.mxu0 0.0
    %8254 = vmatpush1.msra.mxu0 0.0
    %8255 = vmatprep.subr.mxu0 0.0
    %8256 = vmatpush1.msra.mxu0 0.0
    %8257 = vmatprep.mubr.f32.mxu0 0.0
    %8258 = vmatmul.mubr.f32.gmra.mrb[0].mxu0 %v8192
    %v8259 = vpop.f32.mrb[0].mxu0
    %v8260 = vadd.f32 0.0, %v8259
    %v8261 = vpop.f32.mrb[0].mxu0
    %v8262 = vadd.f32 0.0, %v8261
    %8263 = vdwg.mxu0
    %8264 = vmatprep.subr.mxu0 0.0
    %8265 = vmatpush1.msra.mxu0 %v6510
    %8266 = vmatprep.subr.mxu0 0.0
    %8267 = vmatpush1.msra.mxu0 %v6513
    %8268 = vmatprep.subr.mxu0 0.0
    %8269 = vmatpush1.msra.mxu0 %v6516
    %8270 = vmatprep.subr.mxu0 0.0
    %8271 = vmatpush1.msra.mxu0 %v6519
    %8272 = vmatprep.subr.mxu0 0.0
    %8273 = vmatpush1.msra.mxu0 %v6522
    %8274 = vmatprep.subr.mxu0 0.0
    %8275 = vmatpush1.msra.mxu0 %v6525
    %8276 = vmatprep.subr.mxu0 0.0
    %8277 = vmatpush1.msra.mxu0 %v6528
    %8278 = vmatprep.subr.mxu0 0.0
    %8279 = vmatpush1.msra.mxu0 %v6531
    %8280 = vmatprep.subr.mxu0 0.0
    %8281 = vmatpush1.msra.mxu0 %v6534
    %8282 = vmatprep.subr.mxu0 0.0
    %8283 = vmatpush1.msra.mxu0 %v6537
    %8284 = vmatprep.subr.mxu0 0.0
    %8285 = vmatpush1.msra.mxu0 %v6540
    %8286 = vmatprep.subr.mxu0 0.0
    %8287 = vmatpush1.msra.mxu0 %v6543
    %8288 = vmatprep.subr.mxu0 0.0
    %8289 = vmatpush1.msra.mxu0 %v6546
    %8290 = vmatprep.subr.mxu0 0.0
    %8291 = vmatpush1.msra.mxu0 %v6549
    %8292 = vmatprep.subr.mxu0 0.0
    %8293 = vmatpush1.msra.mxu0 %v6552
    %8294 = vmatprep.subr.mxu0 0.0
    %8295 = vmatpush1.msra.mxu0 %v6555
    %8296 = vmatprep.subr.mxu0 0.0
    %8297 = vmatpush1.msra.mxu0 0.0
    %8298 = vmatprep.subr.mxu0 0.0
    %8299 = vmatpush1.msra.mxu0 0.0
    %8300 = vmatprep.subr.mxu0 0.0
    %8301 = vmatpush1.msra.mxu0 0.0
    %8302 = vmatprep.subr.mxu0 0.0
    %8303 = vmatpush1.msra.mxu0 0.0
    %8304 = vmatprep.subr.mxu0 0.0
    %8305 = vmatpush1.msra.mxu0 0.0
    %8306 = vmatprep.subr.mxu0 0.0
    %8307 = vmatpush1.msra.mxu0 0.0
    %8308 = vmatprep.subr.mxu0 0.0
    %8309 = vmatpush1.msra.mxu0 0.0
    %8310 = vmatprep.subr.mxu0 0.0
    %8311 = vmatpush1.msra.mxu0 0.0
    %8312 = vmatprep.subr.mxu0 0.0
    %8313 = vmatpush1.msra.mxu0 0.0
    %8314 = vmatprep.subr.mxu0 0.0
    %8315 = vmatpush1.msra.mxu0 0.0
    %8316 = vmatprep.subr.mxu0 0.0
    %8317 = vmatpush1.msra.mxu0 0.0
    %8318 = vmatprep.subr.mxu0 0.0
    %8319 = vmatpush1.msra.mxu0 0.0
    %8320 = vmatprep.subr.mxu0 0.0
    %8321 = vmatpush1.msra.mxu0 0.0
    %8322 = vmatprep.subr.mxu0 0.0
    %8323 = vmatpush1.msra.mxu0 0.0
    %8324 = vmatprep.subr.mxu0 0.0
    %8325 = vmatpush1.msra.mxu0 0.0
    %8326 = vmatprep.subr.mxu0 0.0
    %8327 = vmatpush1.msra.mxu0 0.0
    %8328 = vmatprep.mubr.f32.mxu0 0.0
    %8329 = vmatmul.mubr.f32.gmra.mrb[0].mxu0 %v8192
    %v8330 = vpop.f32.mrb[0].mxu0
    %v8331 = vadd.f32 0.0, %v8330
    %v8332 = vpop.f32.mrb[0].mxu0
    %8333 = vdwg.mxu0
    %v8334 = vadd.f32 %v6186, %v8260
    %v8335 = vxor.u32 %v8334, 2147483648
    %v8336 = vmul.f32 %v8335, 1.442695
    %v8337 = vpow.pop %v8336
    %v8338 = vadd.f32 %v8337, 1.0
    %v8339 = vrcp.pop %v8338
    %v8340 = vmul.f32 1.0, %v8339
    %v8341 = vadd.f32 %v6188, %v8262
    %v8342 = vxor.u32 %v8341, 2147483648
    %v8343 = vmul.f32 %v8342, 1.442695
    %v8344 = vpow.pop %v8343
    %v8345 = vadd.f32 %v8344, 1.0
    %v8346 = vrcp.pop %v8345
    %v8347 = vmul.f32 1.0, %v8346
    %v8348 = vadd.f32 %v8331, %v6716
    %v8349 = vmul.f32 %v8340, %v8348
    %v8350 = vadd.f32 %v6465, %v8349
    %v8351 = vtanh.pop %v8350
    %v8352 = vsub.f32 1.0, %v8347
    %v8353 = vmul.f32 %v8352, %v8351
    %v8354 = vmul.f32 %v8347, %v8192
    %v8355 = vadd.f32 %v8353, %v8354
    %8356 = vmatprep.subr.mxu0 %v6509
    %8357 = vmatpush1.msra.mxu0 %v6508
    %8358 = vmatprep.subr.mxu0 %v6512
    %8359 = vmatpush1.msra.mxu0 %v6511
    %8360 = vmatprep.subr.mxu0 %v6515
    %8361 = vmatpush1.msra.mxu0 %v6514
    %8362 = vmatprep.subr.mxu0 %v6518
    %8363 = vmatpush1.msra.mxu0 %v6517
    %8364 = vmatprep.subr.mxu0 %v6521
    %8365 = vmatpush1.msra.mxu0 %v6520
    %8366 = vmatprep.subr.mxu0 %v6524
    %8367 = vmatpush1.msra.mxu0 %v6523
    %8368 = vmatprep.subr.mxu0 %v6527
    %8369 = vmatpush1.msra.mxu0 %v6526
    %8370 = vmatprep.subr.mxu0 %v6530
    %8371 = vmatpush1.msra.mxu0 %v6529
    %8372 = vmatprep.subr.mxu0 %v6533
    %8373 = vmatpush1.msra.mxu0 %v6532
    %8374 = vmatprep.subr.mxu0 %v6536
    %8375 = vmatpush1.msra.mxu0 %v6535
    %8376 = vmatprep.subr.mxu0 %v6539
    %8377 = vmatpush1.msra.mxu0 %v6538
    %8378 = vmatprep.subr.mxu0 %v6542
    %8379 = vmatpush1.msra.mxu0 %v6541
    %8380 = vmatprep.subr.mxu0 %v6545
    %8381 = vmatpush1.msra.mxu0 %v6544
    %8382 = vmatprep.subr.mxu0 %v6548
    %8383 = vmatpush1.msra.mxu0 %v6547
    %8384 = vmatprep.subr.mxu0 %v6551
    %8385 = vmatpush1.msra.mxu0 %v6550
    %8386 = vmatprep.subr.mxu0 %v6554
    %8387 = vmatpush1.msra.mxu0 %v6553
    %8388 = vmatprep.subr.mxu0 0.0
    %8389 = vmatpush1.msra.mxu0 0.0
    %8390 = vmatprep.subr.mxu0 0.0
    %8391 = vmatpush1.msra.mxu0 0.0
    %8392 = vmatprep.subr.mxu0 0.0
    %8393 = vmatpush1.msra.mxu0 0.0
    %8394 = vmatprep.subr.mxu0 0.0
    %8395 = vmatpush1.msra.mxu0 0.0
    %8396 = vmatprep.subr.mxu0 0.0
    %8397 = vmatpush1.msra.mxu0 0.0
    %8398 = vmatprep.subr.mxu0 0.0
    %8399 = vmatpush1.msra.mxu0 0.0
    %8400 = vmatprep.subr.mxu0 0.0
    %8401 = vmatpush1.msra.mxu0 0.0
    %8402 = vmatprep.subr.mxu0 0.0
    %8403 = vmatpush1.msra.mxu0 0.0
    %8404 = vmatprep.subr.mxu0 0.0
    %8405 = vmatpush1.msra.mxu0 0.0
    %8406 = vmatprep.subr.mxu0 0.0
    %8407 = vmatpush1.msra.mxu0 0.0
    %8408 = vmatprep.subr.mxu0 0.0
    %8409 = vmatpush1.msra.mxu0 0.0
    %8410 = vmatprep.subr.mxu0 0.0
    %8411 = vmatpush1.msra.mxu0 0.0
    %8412 = vmatprep.subr.mxu0 0.0
    %8413 = vmatpush1.msra.mxu0 0.0
    %8414 = vmatprep.subr.mxu0 0.0
    %8415 = vmatpush1.msra.mxu0 0.0
    %8416 = vmatprep.subr.mxu0 0.0
    %8417 = vmatpush1.msra.mxu0 0.0
    %8418 = vmatprep.subr.mxu0 0.0
    %8419 = vmatpush1.msra.mxu0 0.0
    %8420 = vmatprep.mubr.f32.mxu0 0.0
    %8421 = vmatmul.mubr.f32.gmra.mrb[0].mxu0 %v8355
    %v8422 = vpop.f32.mrb[0].mxu0
    %v8423 = vadd.f32 0.0, %v8422
    %v8424 = vpop.f32.mrb[0].mxu0
    %v8425 = vadd.f32 0.0, %v8424
    %8426 = vdwg.mxu0
    %8427 = vmatprep.subr.mxu0 0.0
    %8428 = vmatpush1.msra.mxu0 %v6510
    %8429 = vmatprep.subr.mxu0 0.0
    %8430 = vmatpush1.msra.mxu0 %v6513
    %8431 = vmatprep.subr.mxu0 0.0
    %8432 = vmatpush1.msra.mxu0 %v6516
    %8433 = vmatprep.subr.mxu0 0.0
    %8434 = vmatpush1.msra.mxu0 %v6519
    %8435 = vmatprep.subr.mxu0 0.0
    %8436 = vmatpush1.msra.mxu0 %v6522
    %8437 = vmatprep.subr.mxu0 0.0
    %8438 = vmatpush1.msra.mxu0 %v6525
    %8439 = vmatprep.subr.mxu0 0.0
    %8440 = vmatpush1.msra.mxu0 %v6528
    %8441 = vmatprep.subr.mxu0 0.0
    %8442 = vmatpush1.msra.mxu0 %v6531
    %8443 = vmatprep.subr.mxu0 0.0
    %8444 = vmatpush1.msra.mxu0 %v6534
    %8445 = vmatprep.subr.mxu0 0.0
    %8446 = vmatpush1.msra.mxu0 %v6537
    %8447 = vmatprep.subr.mxu0 0.0
    %8448 = vmatpush1.msra.mxu0 %v6540
    %8449 = vmatprep.subr.mxu0 0.0
    %8450 = vmatpush1.msra.mxu0 %v6543
    %8451 = vmatprep.subr.mxu0 0.0
    %8452 = vmatpush1.msra.mxu0 %v6546
    %8453 = vmatprep.subr.mxu0 0.0
    %8454 = vmatpush1.msra.mxu0 %v6549
    %8455 = vmatprep.subr.mxu0 0.0
    %8456 = vmatpush1.msra.mxu0 %v6552
    %8457 = vmatprep.subr.mxu0 0.0
    %8458 = vmatpush1.msra.mxu0 %v6555
    %8459 = vmatprep.subr.mxu0 0.0
    %8460 = vmatpush1.msra.mxu0 0.0
    %8461 = vmatprep.subr.mxu0 0.0
    %8462 = vmatpush1.msra.mxu0 0.0
    %8463 = vmatprep.subr.mxu0 0.0
    %8464 = vmatpush1.msra.mxu0 0.0
    %8465 = vmatprep.subr.mxu0 0.0
    %8466 = vmatpush1.msra.mxu0 0.0
    %8467 = vmatprep.subr.mxu0 0.0
    %8468 = vmatpush1.msra.mxu0 0.0
    %8469 = vmatprep.subr.mxu0 0.0
    %8470 = vmatpush1.msra.mxu0 0.0
    %8471 = vmatprep.subr.mxu0 0.0
    %8472 = vmatpush1.msra.mxu0 0.0
    %8473 = vmatprep.subr.mxu0 0.0
    %8474 = vmatpush1.msra.mxu0 0.0
    %8475 = vmatprep.subr.mxu0 0.0
    %8476 = vmatpush1.msra.mxu0 0.0
    %8477 = vmatprep.subr.mxu0 0.0
    %8478 = vmatpush1.msra.mxu0 0.0
    %8479 = vmatprep.subr.mxu0 0.0
    %8480 = vmatpush1.msra.mxu0 0.0
    %8481 = vmatprep.subr.mxu0 0.0
    %8482 = vmatpush1.msra.mxu0 0.0
    %8483 = vmatprep.subr.mxu0 0.0
    %8484 = vmatpush1.msra.mxu0 0.0
    %8485 = vmatprep.subr.mxu0 0.0
    %8486 = vmatpush1.msra.mxu0 0.0
    %8487 = vmatprep.subr.mxu0 0.0
    %8488 = vmatpush1.msra.mxu0 0.0
    %8489 = vmatprep.subr.mxu0 0.0
    %8490 = vmatpush1.msra.mxu0 0.0
    %8491 = vmatprep.mubr.f32.mxu0 0.0
    %8492 = vmatmul.mubr.f32.gmra.mrb[0].mxu0 %v8355
    %v8493 = vpop.f32.mrb[0].mxu0
    %v8494 = vadd.f32 0.0, %v8493
    %v8495 = vpop.f32.mrb[0].mxu0
    %8496 = vdwg.mxu0
    %v8497 = vadd.f32 %v6228, %v8423
    %v8498 = vxor.u32 %v8497, 2147483648
    %v8499 = vmul.f32 %v8498, 1.442695
    %v8500 = vpow.pop %v8499
    %v8501 = vadd.f32 %v8500, 1.0
    %v8502 = vrcp.pop %v8501
    %v8503 = vmul.f32 1.0, %v8502
    %v8504 = vadd.f32 %v6230, %v8425
    %v8505 = vxor.u32 %v8504, 2147483648
    %v8506 = vmul.f32 %v8505, 1.442695
    %v8507 = vpow.pop %v8506
    %v8508 = vadd.f32 %v8507, 1.0
    %v8509 = vrcp.pop %v8508
    %v8510 = vmul.f32 1.0, %v8509
    %v8511 = vadd.f32 %v8494, %v6716
    %v8512 = vmul.f32 %v8503, %v8511
    %v8513 = vadd.f32 %v6500, %v8512
    %v8514 = vtanh.pop %v8513
    %v8515 = vsub.f32 1.0, %v8510
    %v8516 = vmul.f32 %v8515, %v8514
    %v8517 = vmul.f32 %v8510, %v8355
    %v8518 = vadd.f32 %v8516, %v8517
    %8519 = vmatprep.subr.mxu0 %v6509
    %8520 = vmatpush1.msra.mxu0 %v6508
    %8521 = vmatprep.subr.mxu0 %v6512
    %8522 = vmatpush1.msra.mxu0 %v6511
    %8523 = vmatprep.subr.mxu0 %v6515
    %8524 = vmatpush1.msra.mxu0 %v6514
    %8525 = vmatprep.subr.mxu0 %v6518
    %8526 = vmatpush1.msra.mxu0 %v6517
    %8527 = vmatprep.subr.mxu0 %v6521
    %8528 = vmatpush1.msra.mxu0 %v6520
    %8529 = vmatprep.subr.mxu0 %v6524
    %8530 = vmatpush1.msra.mxu0 %v6523
    %8531 = vmatprep.subr.mxu0 %v6527
    %8532 = vmatpush1.msra.mxu0 %v6526
    %8533 = vmatprep.subr.mxu0 %v6530
    %8534 = vmatpush1.msra.mxu0 %v6529
    %8535 = vmatprep.subr.mxu0 %v6533
    %8536 = vmatpush1.msra.mxu0 %v6532
    %8537 = vmatprep.subr.mxu0 %v6536
    %8538 = vmatpush1.msra.mxu0 %v6535
    %8539 = vmatprep.subr.mxu0 %v6539
    %8540 = vmatpush1.msra.mxu0 %v6538
    %8541 = vmatprep.subr.mxu0 %v6542
    %8542 = vmatpush1.msra.mxu0 %v6541
    %8543 = vmatprep.subr.mxu0 %v6545
    %8544 = vmatpush1.msra.mxu0 %v6544
    %8545 = vmatprep.subr.mxu0 %v6548
    %8546 = vmatpush1.msra.mxu0 %v6547
    %8547 = vmatprep.subr.mxu0 %v6551
    %8548 = vmatpush1.msra.mxu0 %v6550
    %8549 = vmatprep.subr.mxu0 %v6554
    %8550 = vmatpush1.msra.mxu0 %v6553
    %8551 = vmatprep.subr.mxu0 0.0
    %8552 = vmatpush1.msra.mxu0 0.0
    %8553 = vmatprep.subr.mxu0 0.0
    %8554 = vmatpush1.msra.mxu0 0.0
    %8555 = vmatprep.subr.mxu0 0.0
    %8556 = vmatpush1.msra.mxu0 0.0
    %8557 = vmatprep.subr.mxu0 0.0
    %8558 = vmatpush1.msra.mxu0 0.0
    %8559 = vmatprep.subr.mxu0 0.0
    %8560 = vmatpush1.msra.mxu0 0.0
    %8561 = vmatprep.subr.mxu0 0.0
    %8562 = vmatpush1.msra.mxu0 0.0
    %8563 = vmatprep.subr.mxu0 0.0
    %8564 = vmatpush1.msra.mxu0 0.0
    %8565 = vmatprep.subr.mxu0 0.0
    %8566 = vmatpush1.msra.mxu0 0.0
    %8567 = vmatprep.subr.mxu0 0.0
    %8568 = vmatpush1.msra.mxu0 0.0
    %8569 = vmatprep.subr.mxu0 0.0
    %8570 = vmatpush1.msra.mxu0 0.0
    %8571 = vmatprep.subr.mxu0 0.0
    %8572 = vmatpush1.msra.mxu0 0.0
    %8573 = vmatprep.subr.mxu0 0.0
    %8574 = vmatpush1.msra.mxu0 0.0
    %8575 = vmatprep.subr.mxu0 0.0
    %8576 = vmatpush1.msra.mxu0 0.0
    %8577 = vmatprep.subr.mxu0 0.0
    %8578 = vmatpush1.msra.mxu0 0.0
    %8579 = vmatprep.subr.mxu0 0.0
    %8580 = vmatpush1.msra.mxu0 0.0
    %8581 = vmatprep.subr.mxu0 0.0
    %8582 = vmatpush1.msra.mxu0 0.0
    %8583 = vmatprep.mubr.f32.mxu0 0.0
    %8584 = vmatmul.mubr.f32.gmra.mrb[0].mxu0 %v8518
    %v8585 = vpop.f32.mrb[0].mxu0
    %v8586 = vadd.f32 0.0, %v8585
    %v8587 = vpop.f32.mrb[0].mxu0
    %v8588 = vadd.f32 0.0, %v8587
    %8589 = vdwg.mxu0
    %8590 = vmatprep.subr.mxu0 0.0
    %8591 = vmatpush1.msra.mxu0 %v6510
    %8592 = vmatprep.subr.mxu0 0.0
    %8593 = vmatpush1.msra.mxu0 %v6513
    %8594 = vmatprep.subr.mxu0 0.0
    %8595 = vmatpush1.msra.mxu0 %v6516
    %8596 = vmatprep.subr.mxu0 0.0
    %8597 = vmatpush1.msra.mxu0 %v6519
    %8598 = vmatprep.subr.mxu0 0.0
    %8599 = vmatpush1.msra.mxu0 %v6522
    %8600 = vmatprep.subr.mxu0 0.0
    %8601 = vmatpush1.msra.mxu0 %v6525
    %8602 = vmatprep.subr.mxu0 0.0
    %8603 = vmatpush1.msra.mxu0 %v6528
    %8604 = vmatprep.subr.mxu0 0.0
    %8605 = vmatpush1.msra.mxu0 %v6531
    %8606 = vmatprep.subr.mxu0 0.0
    %8607 = vmatpush1.msra.mxu0 %v6534
    %8608 = vmatprep.subr.mxu0 0.0
    %8609 = vmatpush1.msra.mxu0 %v6537
    %8610 = vmatprep.subr.mxu0 0.0
    %8611 = vmatpush1.msra.mxu0 %v6540
    %8612 = vmatprep.subr.mxu0 0.0
    %8613 = vmatpush1.msra.mxu0 %v6543
    %8614 = vmatprep.subr.mxu0 0.0
    %8615 = vmatpush1.msra.mxu0 %v6546
    %8616 = vmatprep.subr.mxu0 0.0
    %8617 = vmatpush1.msra.mxu0 %v6549
    %8618 = vmatprep.subr.mxu0 0.0
    %8619 = vmatpush1.msra.mxu0 %v6552
    %8620 = vmatprep.subr.mxu0 0.0
    %8621 = vmatpush1.msra.mxu0 %v6555
    %8622 = vmatprep.subr.mxu0 0.0
    %8623 = vmatpush1.msra.mxu0 0.0
    %8624 = vmatprep.subr.mxu0 0.0
    %8625 = vmatpush1.msra.mxu0 0.0
    %8626 = vmatprep.subr.mxu0 0.0
    %8627 = vmatpush1.msra.mxu0 0.0
    %8628 = vmatprep.subr.mxu0 0.0
    %8629 = vmatpush1.msra.mxu0 0.0
    %8630 = vmatprep.subr.mxu0 0.0
    %8631 = vmatpush1.msra.mxu0 0.0
    %8632 = vmatprep.subr.mxu0 0.0
    %8633 = vmatpush1.msra.mxu0 0.0
    %8634 = vmatprep.subr.mxu0 0.0
    %8635 = vmatpush1.msra.mxu0 0.0
    %8636 = vmatprep.subr.mxu0 0.0
    %8637 = vmatpush1.msra.mxu0 0.0
    %8638 = vmatprep.subr.mxu0 0.0
    %8639 = vmatpush1.msra.mxu0 0.0
    %8640 = vmatprep.subr.mxu0 0.0
    %8641 = vmatpush1.msra.mxu0 0.0
    %8642 = vmatprep.subr.mxu0 0.0
    %8643 = vmatpush1.msra.mxu0 0.0
    %8644 = vmatprep.subr.mxu0 0.0
    %8645 = vmatpush1.msra.mxu0 0.0
    %8646 = vmatprep.subr.mxu0 0.0
    %8647 = vmatpush1.msra.mxu0 0.0
    %8648 = vmatprep.subr.mxu0 0.0
    %8649 = vmatpush1.msra.mxu0 0.0
    %8650 = vmatprep.subr.mxu0 0.0
    %8651 = vmatpush1.msra.mxu0 0.0
    %8652 = vmatprep.subr.mxu0 0.0
    %8653 = vmatpush1.msra.mxu0 0.0
    %8654 = vmatprep.mubr.f32.mxu0 0.0
    %8655 = vmatmul.mubr.f32.gmra.mrb[0].mxu0 %v8518
    %v8656 = vpop.f32.mrb[0].mxu0
    %v8657 = vadd.f32 0.0, %v8656
    %v8658 = vpop.f32.mrb[0].mxu0
    %8659 = vdwg.mxu0
    %v8660 = vadd.f32 %v6192, %v8586
    %v8661 = vxor.u32 %v8660, 2147483648
    %v8662 = vmul.f32 %v8661, 1.442695
    %v8663 = vpow.pop %v8662
    %v8664 = vadd.f32 %v8663, 1.0
    %v8665 = vrcp.pop %v8664
    %v8666 = vmul.f32 1.0, %v8665
    %v8667 = vadd.f32 %v6194, %v8588
    %v8668 = vxor.u32 %v8667, 2147483648
    %v8669 = vmul.f32 %v8668, 1.442695
    %v8670 = vpow.pop %v8669
    %v8671 = vadd.f32 %v8670, 1.0
    %v8672 = vrcp.pop %v8671
    %v8673 = vmul.f32 1.0, %v8672
    %v8674 = vadd.f32 %v8657, %v6716
    %v8675 = vmul.f32 %v8666, %v8674
    %v8676 = vadd.f32 %v6470, %v8675
    %v8677 = vtanh.pop %v8676
    %v8678 = vsub.f32 1.0, %v8673
    %v8679 = vmul.f32 %v8678, %v8677
    %v8680 = vmul.f32 %v8673, %v8518
    %v8681 = vadd.f32 %v8679, %v8680
    %8682 = vmatprep.subr.mxu0 %v6509
    %8683 = vmatpush1.msra.mxu0 %v6508
    %8684 = vmatprep.subr.mxu0 %v6512
    %8685 = vmatpush1.msra.mxu0 %v6511
    %8686 = vmatprep.subr.mxu0 %v6515
    %8687 = vmatpush1.msra.mxu0 %v6514
    %8688 = vmatprep.subr.mxu0 %v6518
    %8689 = vmatpush1.msra.mxu0 %v6517
    %8690 = vmatprep.subr.mxu0 %v6521
    %8691 = vmatpush1.msra.mxu0 %v6520
    %8692 = vmatprep.subr.mxu0 %v6524
    %8693 = vmatpush1.msra.mxu0 %v6523
    %8694 = vmatprep.subr.mxu0 %v6527
    %8695 = vmatpush1.msra.mxu0 %v6526
    %8696 = vmatprep.subr.mxu0 %v6530
    %8697 = vmatpush1.msra.mxu0 %v6529
    %8698 = vmatprep.subr.mxu0 %v6533
    %8699 = vmatpush1.msra.mxu0 %v6532
    %8700 = vmatprep.subr.mxu0 %v6536
    %8701 = vmatpush1.msra.mxu0 %v6535
    %8702 = vmatprep.subr.mxu0 %v6539
    %8703 = vmatpush1.msra.mxu0 %v6538
    %8704 = vmatprep.subr.mxu0 %v6542
    %8705 = vmatpush1.msra.mxu0 %v6541
    %8706 = vmatprep.subr.mxu0 %v6545
    %8707 = vmatpush1.msra.mxu0 %v6544
    %8708 = vmatprep.subr.mxu0 %v6548
    %8709 = vmatpush1.msra.mxu0 %v6547
    %8710 = vmatprep.subr.mxu0 %v6551
    %8711 = vmatpush1.msra.mxu0 %v6550
    %8712 = vmatprep.subr.mxu0 %v6554
    %8713 = vmatpush1.msra.mxu0 %v6553
    %8714 = vmatprep.subr.mxu0 0.0
    %8715 = vmatpush1.msra.mxu0 0.0
    %8716 = vmatprep.subr.mxu0 0.0
    %8717 = vmatpush1.msra.mxu0 0.0
    %8718 = vmatprep.subr.mxu0 0.0
    %8719 = vmatpush1.msra.mxu0 0.0
    %8720 = vmatprep.subr.mxu0 0.0
    %8721 = vmatpush1.msra.mxu0 0.0
    %8722 = vmatprep.subr.mxu0 0.0
    %8723 = vmatpush1.msra.mxu0 0.0
    %8724 = vmatprep.subr.mxu0 0.0
    %8725 = vmatpush1.msra.mxu0 0.0
    %8726 = vmatprep.subr.mxu0 0.0
    %8727 = vmatpush1.msra.mxu0 0.0
    %8728 = vmatprep.subr.mxu0 0.0
    %8729 = vmatpush1.msra.mxu0 0.0
    %8730 = vmatprep.subr.mxu0 0.0
    %8731 = vmatpush1.msra.mxu0 0.0
    %8732 = vmatprep.subr.mxu0 0.0
    %8733 = vmatpush1.msra.mxu0 0.0
    %8734 = vmatprep.subr.mxu0 0.0
    %8735 = vmatpush1.msra.mxu0 0.0
    %8736 = vmatprep.subr.mxu0 0.0
    %8737 = vmatpush1.msra.mxu0 0.0
    %8738 = vmatprep.subr.mxu0 0.0
    %8739 = vmatpush1.msra.mxu0 0.0
    %8740 = vmatprep.subr.mxu0 0.0
    %8741 = vmatpush1.msra.mxu0 0.0
    %8742 = vmatprep.subr.mxu0 0.0
    %8743 = vmatpush1.msra.mxu0 0.0
    %8744 = vmatprep.subr.mxu0 0.0
    %8745 = vmatpush1.msra.mxu0 0.0
    %8746 = vmatprep.mubr.f32.mxu0 0.0
    %8747 = vmatmul.mubr.f32.gmra.mrb[0].mxu0 %v8681
    %v8748 = vpop.f32.mrb[0].mxu0
    %v8749 = vadd.f32 0.0, %v8748
    %v8750 = vpop.f32.mrb[0].mxu0
    %v8751 = vadd.f32 0.0, %v8750
    %8752 = vdwg.mxu0
    %8753 = vmatprep.subr.mxu0 0.0
    %8754 = vmatpush1.msra.mxu0 %v6510
    %8755 = vmatprep.subr.mxu0 0.0
    %8756 = vmatpush1.msra.mxu0 %v6513
    %8757 = vmatprep.subr.mxu0 0.0
    %8758 = vmatpush1.msra.mxu0 %v6516
    %8759 = vmatprep.subr.mxu0 0.0
    %8760 = vmatpush1.msra.mxu0 %v6519
    %8761 = vmatprep.subr.mxu0 0.0
    %8762 = vmatpush1.msra.mxu0 %v6522
    %8763 = vmatprep.subr.mxu0 0.0
    %8764 = vmatpush1.msra.mxu0 %v6525
    %8765 = vmatprep.subr.mxu0 0.0
    %8766 = vmatpush1.msra.mxu0 %v6528
    %8767 = vmatprep.subr.mxu0 0.0
    %8768 = vmatpush1.msra.mxu0 %v6531
    %8769 = vmatprep.subr.mxu0 0.0
    %8770 = vmatpush1.msra.mxu0 %v6534
    %8771 = vmatprep.subr.mxu0 0.0
    %8772 = vmatpush1.msra.mxu0 %v6537
    %8773 = vmatprep.subr.mxu0 0.0
    %8774 = vmatpush1.msra.mxu0 %v6540
    %8775 = vmatprep.subr.mxu0 0.0
    %8776 = vmatpush1.msra.mxu0 %v6543
    %8777 = vmatprep.subr.mxu0 0.0
    %8778 = vmatpush1.msra.mxu0 %v6546
    %8779 = vmatprep.subr.mxu0 0.0
    %8780 = vmatpush1.msra.mxu0 %v6549
    %8781 = vmatprep.subr.mxu0 0.0
    %8782 = vmatpush1.msra.mxu0 %v6552
    %8783 = vmatprep.subr.mxu0 0.0
    %8784 = vmatpush1.msra.mxu0 %v6555
    %8785 = vmatprep.subr.mxu0 0.0
    %8786 = vmatpush1.msra.mxu0 0.0
    %8787 = vmatprep.subr.mxu0 0.0
    %8788 = vmatpush1.msra.mxu0 0.0
    %8789 = vmatprep.subr.mxu0 0.0
    %8790 = vmatpush1.msra.mxu0 0.0
    %8791 = vmatprep.subr.mxu0 0.0
    %8792 = vmatpush1.msra.mxu0 0.0
    %8793 = vmatprep.subr.mxu0 0.0
    %8794 = vmatpush1.msra.mxu0 0.0
    %8795 = vmatprep.subr.mxu0 0.0
    %8796 = vmatpush1.msra.mxu0 0.0
    %8797 = vmatprep.subr.mxu0 0.0
    %8798 = vmatpush1.msra.mxu0 0.0
    %8799 = vmatprep.subr.mxu0 0.0
    %8800 = vmatpush1.msra.mxu0 0.0
    %8801 = vmatprep.subr.mxu0 0.0
    %8802 = vmatpush1.msra.mxu0 0.0
    %8803 = vmatprep.subr.mxu0 0.0
    %8804 = vmatpush1.msra.mxu0 0.0
    %8805 = vmatprep.subr.mxu0 0.0
    %8806 = vmatpush1.msra.mxu0 0.0
    %8807 = vmatprep.subr.mxu0 0.0
    %8808 = vmatpush1.msra.mxu0 0.0
    %8809 = vmatprep.subr.mxu0 0.0
    %8810 = vmatpush1.msra.mxu0 0.0
    %8811 = vmatprep.subr.mxu0 0.0
    %8812 = vmatpush1.msra.mxu0 0.0
    %8813 = vmatprep.subr.mxu0 0.0
    %8814 = vmatpush1.msra.mxu0 0.0
    %8815 = vmatprep.subr.mxu0 0.0
    %8816 = vmatpush1.msra.mxu0 0.0
    %8817 = vmatprep.mubr.f32.mxu0 0.0
    %8818 = vmatmul.mubr.f32.gmra.mrb[0].mxu0 %v8681
    %v8819 = vpop.f32.mrb[0].mxu0
    %v8820 = vadd.f32 0.0, %v8819
    %v8821 = vpop.f32.mrb[0].mxu0
    %8822 = vdwg.mxu0
    %v8823 = vadd.f32 %v6234, %v8749
    %v8824 = vxor.u32 %v8823, 2147483648
    %v8825 = vmul.f32 %v8824, 1.442695
    %v8826 = vpow.pop %v8825
    %v8827 = vadd.f32 %v8826, 1.0
    %v8828 = vrcp.pop %v8827
    %v8829 = vmul.f32 1.0, %v8828
    %v8830 = vadd.f32 %v6236, %v8751
    %v8831 = vxor.u32 %v8830, 2147483648
    %v8832 = vmul.f32 %v8831, 1.442695
    %v8833 = vpow.pop %v8832
    %v8834 = vadd.f32 %v8833, 1.0
    %v8835 = vrcp.pop %v8834
    %v8836 = vmul.f32 1.0, %v8835
    %v8837 = vadd.f32 %v8820, %v6716
    %v8838 = vmul.f32 %v8829, %v8837
    %v8839 = vadd.f32 %v6505, %v8838
    %v8840 = vtanh.pop %v8839
    %v8841 = vsub.f32 1.0, %v8836
    %v8842 = vmul.f32 %v8841, %v8840
    %v8843 = vmul.f32 %v8836, %v8681
    %v8844 = vadd.f32 %v8842, %v8843
    %8845 = vst [vmem:[%s14] sm:$0xff] %v8844
    // Predicated region
    $region66: #{qcnn_forward.1} parent=1 // pred_check
      _
    $region67: #{qcnn_forward.1} parent=1 // pred_check_branch
      %8847 = sbr.rel (0) target = $region69
    $region68: #{qcnn_forward.1} parent=1 // pred_region
      _
    $region69: #{qcnn_forward.1} parent=1 // pred_fallthru
      _
    // Predicated region
    $region70: #{qcnn_forward.1} parent=1 // pred_check
      _
    $region71: #{qcnn_forward.1} parent=1 // pred_check_branch
      %8849 = sbr.rel (0) target = $region73
    $region72: #{qcnn_forward.1} parent=1 // pred_region
      _
    $region73: #{qcnn_forward.1} parent=1 // pred_fallthru
      _
    %8850 = vsyncpa [#allocation3], 1
    %8851 = vsyncpa [#allocation4], 1

</llo_original>
